<compile_context>
chip_gen: v6e
topology: v6e:2x2x1
jax: 0.10.0
libtpu: 0.0.40
codegen_flags: <defaults>
</compile_context>

<pallas_src>
import functools

import numpy as np
import jax
import jax.numpy as jnp
from jax.experimental import pallas as pl
from jax.experimental.pallas import tpu as pltpu


# ---------------------------------------------------------------------------
# Fused kernel
# ---------------------------------------------------------------------------

def _encoder_block_kernel(prelu_ref, x_ref, w1_ref, b1_ref, w2_ref, b2_ref,
                          g_ref, gt_ref, *rest, dims, has_skip, downsample):
    """Fused ResidualBlock (+ optional k=2,s=2 downConv) for one batch item.

    Layouts (channels-last, W*C folded onto the lane axis):
      x_ref  : (1, D, H, W*Cin)            bf16
      w1_ref : (9, W*Cin,  W*Cout)         bf16  lane-Toeplitz 3x3x3 conv1
      w2_ref : (9, W*Cout, W*Cout)         bf16  lane-Toeplitz 3x3x3 conv2
      g_ref  : (W*Cout, Cout) f32 / gt_ref: (Cout, W*Cout) f32  group-sum /
               broadcast matrices for per-channel InstanceNorm in folded layout
      wsk_ref: (W*Cin, W*Cout)             bf16  block-diagonal 1x1x1 skip conv
      sel_ref: (4, Dd*Hd, D*H)             bf16  (kd,kh) row selection, stride 2
      wd_ref : (4, W*Cout, Wd*Cout)        bf16  lane-Toeplitz kw + stride-2
      o_ref  : (1, Dd*Hd, Wd*Cout) f32  or  (1, D*H, W*Cout) f32
    """
    D, H, W, Cin, Cout, Dd, Hd, Wd = dims
    DH, WCi, WCo = D * H, W * Cin, W * Cout

    rest = list(rest)
    if has_skip:
        wsk_ref, bsk_ref = rest.pop(0), rest.pop(0)
    if downsample:
        sel_ref, wd_ref, bd_ref = rest.pop(0), rest.pop(0), rest.pop(0)
    o_ref, xp_ref, yp_ref = rest

    a1 = prelu_ref[0]
    a2 = prelu_ref[1]
    inv_n = 1.0 / float(DH * W)

    def instance_norm(acc):
        # InstanceNorm3d (affine=False, biased variance, eps=1e-5) on the
        # (D*H, W*Cout) layout.  Per-channel stats via tiny group-sum matmuls
        # (avoids lane<->sublane reshapes inside the kernel).
        s = jnp.sum(acc, axis=0, keepdims=True)                      # (1, W*Cout)
        mean = jnp.dot(s, g_ref[...], preferred_element_type=jnp.float32) * inv_n
        mean_b = jnp.dot(mean, gt_ref[...], preferred_element_type=jnp.float32)
        d = acc - mean_b
        v = jnp.sum(d * d, axis=0, keepdims=True)
        var = jnp.dot(v, g_ref[...], preferred_element_type=jnp.float32) * inv_n
        inv = jax.lax.rsqrt(var + 1e-5)
        inv_b = jnp.dot(inv, gt_ref[...], preferred_element_type=jnp.float32)
        return d * inv_b

    def conv3x3x3(src_ref, w_ref, b_ref, k_in):
        # 9 lane-Toeplitz matmuls; kw taps + channels folded into K = W*C_in.
        acc = b_ref[...] + jnp.zeros((DH, WCo), jnp.float32)
        for kd in range(3):
            for kh in range(3):
                xs = src_ref[kd:kd + D, kh:kh + H, :]        # (D, H, W*C_in) bf16
                acc = acc + jnp.dot(xs.reshape(DH, k_in), w_ref[kd * 3 + kh],
                                    preferred_element_type=jnp.float32)
        return acc

    # ---- conv1: zero-haloed VMEM scratch (no jnp.pad round trip through HBM) ----
    xp_ref[...] = jnp.zeros_like(xp_ref)
    xp_ref[1:1 + D, 1:1 + H, :] = x_ref[0]
    y1 = instance_norm(conv3x3x3(xp_ref, w1_ref, b1_ref, WCi))
    y1 = jnp.where(y1 > 0, y1, a1 * y1)                      # PReLU(a1)

    # ---- conv2 on the VMEM-resident intermediate ----
    yp_ref[...] = jnp.zeros_like(yp_ref)
    yp_ref[1:1 + D, 1:1 + H, :] = y1.astype(jnp.bfloat16).reshape(D, H, WCo)
    y2 = instance_norm(conv3x3x3(yp_ref, w2_ref, b2_ref, WCo))

    # ---- residual: (optionally 1x1x1-conv'd) identity + add + PReLU(a2) ----
    x2d = x_ref[0].reshape(DH, WCi)
    if has_skip:
        identity = jnp.dot(x2d, wsk_ref[...],
                           preferred_element_type=jnp.float32) + bsk_ref[...]
    else:
        identity = x2d.astype(jnp.float32)
    y2 = y2 + identity
    y2 = jnp.where(y2 > 0, y2, a2 * y2)

    if downsample:
        # ---- downConv k=2 s=2: row-selection matmul over (D, H) and
        #      lane-Toeplitz matmul over (W, C) -> stays on the MXU, no strided
        #      gathers or in-kernel pixel-unshuffle relayouts.
        y2b = y2.astype(jnp.bfloat16)
        accd = bd_ref[...] + jnp.zeros((Dd * Hd, Wd * Cout), jnp.float32)
        for t in range(4):                                   # t = kd*2 + kh
            rows = jnp.dot(sel_ref[t], y2b,
                           preferred_element_type=jnp.float32).astype(jnp.bfloat16)
            accd = accd + jnp.dot(rows, wd_ref[t],
                                  preferred_element_type=jnp.float32)
        o_ref[0] = accd                                      # lane-dense store
    else:
        o_ref[0] = y2                                        # lane-dense store


# ---------------------------------------------------------------------------
# Weight pre-processing (tiny einsums; traceable under jit)
# ---------------------------------------------------------------------------

def _conv3_toeplitz(w, W):
    """Conv3d weight (Cout, Cin, 3,3,3), padding=1 -> (9, W*Cin, W*Cout) lane-Toeplitz."""
    Cout, Cin = w.shape[0], w.shape[1]
    pat = np.zeros((3, W, W), np.float32)
    for kw in range(3):
        for wq in range(W):
            wp = wq + kw - 1
            if 0 <= wp < W:
                pat[kw, wp, wq] = 1.0
    wt = jnp.transpose(w, (2, 3, 4, 1, 0))                    # (3,3,3,Cin,Cout)
    t = jnp.einsum('kpq,dhkio->dhpiqo', jnp.asarray(pat), wt)
    return t.reshape(9, W * Cin, W * Cout).astype(jnp.bfloat16)


def _down_toeplitz(w, W):
    """Conv3d weight (Cout, Cin, 2,2,2), stride=2 -> (4, W*Cin, (W//2)*Cout)."""
    Cout, Cin = w.shape[0], w.shape[1]
    Wd = W // 2
    pat = np.zeros((2, W, Wd), np.float32)
    for kw in range(2):
        for wq in range(Wd):
            pat[kw, 2 * wq + kw, wq] = 1.0
    wt = jnp.transpose(w, (2, 3, 4, 1, 0))                    # (2,2,2,Cin,Cout)
    t = jnp.einsum('kpq,dhkio->dhpiqo', jnp.asarray(pat), wt)
    return t.reshape(4, W * Cin, Wd * Cout).astype(jnp.bfloat16)


def _down_row_select(D, H):
    """(4, (D//2)*(H//2), D*H) 0/1 matrices selecting rows (2dd+kd, 2hd+kh)."""
    Dd, Hd = D // 2, H // 2
    s = np.zeros((4, Dd * Hd, D * H), np.float32)
    for kd in range(2):
        for kh in range(2):
            for dd in range(Dd):
                for hd in range(Hd):
                    s[kd * 2 + kh, dd * Hd + hd, (2 * dd + kd) * H + (2 * hd + kh)] = 1.0
    return jnp.asarray(s, jnp.bfloat16)


def _skip_blockdiag(w, W):
    """Conv3d 1x1x1 weight (Cout, Cin, 1,1,1) -> block-diagonal (W*Cin, W*Cout)."""
    Cout, Cin = w.shape[0], w.shape[1]
    wt = w.reshape(Cout, Cin).T                               # (Cin, Cout)
    t = jnp.einsum('pq,io->piqo', jnp.eye(W, dtype=jnp.float32), wt)
    return t.reshape(W * Cin, W * Cout).astype(jnp.bfloat16)


def _tile_bias(b, W):
    return jnp.tile(b.astype(jnp.float32), W).reshape(1, W * b.shape[0])


# ---------------------------------------------------------------------------
# Parameters (deterministic, synthetic; PyTorch parameter shapes)
# ---------------------------------------------------------------------------

def init_params(key, in_ch, out_ch, downsample=True):
    ks = jax.random.split(key, 8)

    def w(k, shape, fan_in):
        return jax.random.normal(k, shape, jnp.float32) / np.sqrt(float(fan_in))

    p = {
        'conv1_w': w(ks[0], (out_ch, in_ch, 3, 3, 3), in_ch * 27),
        'conv1_b': w(ks[1], (out_ch,), in_ch * 27),
        'conv2_w': w(ks[2], (out_ch, out_ch, 3, 3, 3), out_ch * 27),
        'conv2_b': w(ks[3], (out_ch,), out_ch * 27),
        'prelu1': jnp.asarray(0.25, jnp.float32),   # nn.PReLU() default
        'prelu2': jnp.asarray(0.25, jnp.float32),
    }
    if in_ch != out_ch:
        p['skip_w'] = w(ks[4], (out_ch, in_ch, 1, 1, 1), in_ch)
        p['skip_b'] = w(ks[5], (out_ch,), in_ch)
    if downsample:
        p['down_w'] = w(ks[6], (out_ch, out_ch, 2, 2, 2), out_ch * 8)
        p['down_b'] = w(ks[7], (out_ch,), out_ch * 8)
    return p


# ---------------------------------------------------------------------------
# Forward pass (wrapper around the single fused pallas_call)
# ---------------------------------------------------------------------------

def encoder_block(params, x_ncdhw, *, downsample=True):
    N, Cin, D, H, W = x_ncdhw.shape
    Cout = params['conv1_w'].shape[0]
    has_skip = 'skip_w' in params
    if downsample:
        assert D % 2 == 0 and H % 2 == 0 and W % 2 == 0
        Dd, Hd, Wd = D // 2, H // 2, W // 2
    else:
        Dd = Hd = Wd = 0
    DH, WCi, WCo = D * H, W * Cin, W * Cout

    # NCDHW -> channels-last with (W, Cin) folded onto the lane axis; bf16 operands.
    x_in = (jnp.transpose(x_ncdhw, (0, 2, 3, 4, 1))
            .reshape(N, D, H, WCi).astype(jnp.bfloat16))

    w1 = _conv3_toeplitz(params['conv1_w'], W)
    b1 = _tile_bias(params['conv1_b'], W)
    w2 = _conv3_toeplitz(params['conv2_w'], W)
    b2 = _tile_bias(params['conv2_b'], W)
    g = jnp.tile(jnp.eye(Cout, dtype=jnp.float32), (W, 1))    # (W*Cout, Cout)
    gt = g.T                                                   # (Cout, W*Cout)
    prelu = jnp.stack([params['prelu1'], params['prelu2']]).astype(jnp.float32)

    inputs = [prelu, x_in, w1, b1, w2, b2, g, gt]
    in_specs = [
        pl.BlockSpec(memory_space=pltpu.MemorySpace.SMEM),
        pl.BlockSpec((1, D, H, WCi), lambda n: (n, 0, 0, 0)),
        pl.BlockSpec((9, WCi, WCo), lambda n: (0, 0, 0)),
        pl.BlockSpec((1, WCo), lambda n: (0, 0)),
        pl.BlockSpec((9, WCo, WCo), lambda n: (0, 0, 0)),
        pl.BlockSpec((1, WCo), lambda n: (0, 0)),
        pl.BlockSpec((WCo, Cout), lambda n: (0, 0)),
        pl.BlockSpec((Cout, WCo), lambda n: (0, 0)),
    ]
    if has_skip:
        inputs += [_skip_blockdiag(params['skip_w'], W), _tile_bias(params['skip_b'], W)]
        in_specs += [pl.BlockSpec((WCi, WCo), lambda n: (0, 0)),
                     pl.BlockSpec((1, WCo), lambda n: (0, 0))]
    if downsample:
        inputs += [_down_row_select(D, H), _down_toeplitz(params['down_w'], W),
                   _tile_bias(params['down_b'], Wd)]
        in_specs += [pl.BlockSpec((4, Dd * Hd, DH), lambda n: (0, 0, 0)),
                     pl.BlockSpec((4, WCo, Wd * Cout), lambda n: (0, 0, 0)),
                     pl.BlockSpec((1, Wd * Cout), lambda n: (0, 0))]
        out_shape = jax.ShapeDtypeStruct((N, Dd * Hd, Wd * Cout), jnp.float32)
        out_spec = pl.BlockSpec((1, Dd * Hd, Wd * Cout), lambda n: (n, 0, 0))
    else:
        out_shape = jax.ShapeDtypeStruct((N, DH, WCo), jnp.float32)
        out_spec = pl.BlockSpec((1, DH, WCo), lambda n: (n, 0, 0))

    kernel = functools.partial(
        _encoder_block_kernel,
        dims=(D, H, W, Cin, Cout, Dd, Hd, Wd),
        has_skip=has_skip, downsample=downsample)

    out = pl.pallas_call(
        kernel,
        out_shape=out_shape,
        grid=(N,),
        in_specs=in_specs,
        out_specs=out_spec,
        scratch_shapes=[pltpu.VMEM((D + 2, H + 2, WCi), jnp.bfloat16),   # haloed input
                        pltpu.VMEM((D + 2, H + 2, WCo), jnp.bfloat16)],  # haloed conv1 out
        compiler_params=pltpu.CompilerParams(
            dimension_semantics=("parallel",),
            vmem_limit_bytes=32 * 1024 * 1024),
    )(*inputs)

    if downsample:
        out = out.reshape(N, Dd, Hd, Wd, Cout)
    else:
        out = out.reshape(N, D, H, W, Cout)
    return jnp.transpose(out, (0, 4, 1, 2, 3))                 # back to NCDHW


# ---------------------------------------------------------------------------
# Pure-JAX reference (PyTorch semantics) for a correctness sanity check
# ---------------------------------------------------------------------------

def _ref_forward(params, x, downsample):
    dn = ('NCDHW', 'OIDHW', 'NCDHW')

    def conv(x, w, b, stride, pad):
        y = jax.lax.conv_general_dilated(
            x, w, (stride,) * 3, [(pad, pad)] * 3, dimension_numbers=dn,
            precision=jax.lax.Precision.HIGHEST)
        return y + b.reshape(1, -1, 1, 1, 1)

    def inorm(y):
        m = y.mean(axis=(2, 3, 4), keepdims=True)
        v = ((y - m) ** 2).mean(axis=(2, 3, 4), keepdims=True)
        return (y - m) * jax.lax.rsqrt(v + 1e-5)

    def prelu(y, a):
        return jnp.where(y > 0, y, a * y)

    out = prelu(inorm(conv(x, params['conv1_w'], params['conv1_b'], 1, 1)), params['prelu1'])
    out = inorm(conv(out, params['conv2_w'], params['conv2_b'], 1, 1))
    ident = conv(x, params['skip_w'], params['skip_b'], 1, 0) if 'skip_w' in params else x
    out = prelu(out + ident, params['prelu2'])
    if downsample:
        out = conv(out, params['down_w'], params['down_b'], 2, 0)
    return out


# ---------------------------------------------------------------------------

if __name__ == "__main__":
    key = jax.random.PRNGKey(0)
    kx, kp, kx2, kp2 = jax.random.split(key, 4)

    # EncoderBlock(in_ch=4, out_ch=32, downsample=True) at D=H=W=8, batch=2.
    N, in_ch, out_ch, D = 2, 4, 32, 8
    x = jax.random.normal(kx, (N, in_ch, D, D, D), jnp.float32)
    params = init_params(kp, in_ch, out_ch, downsample=True)
    fwd = jax.jit(functools.partial(encoder_block, downsample=True))
    out = jax.block_until_ready(fwd(params, x))
    assert out.shape == (N, out_ch, D // 2, D // 2, D // 2), out.shape
    ref = jax.block_until_ready(_ref_forward(params, x, True))
    np.testing.assert_allclose(np.asarray(out), np.asarray(ref), atol=0.25, rtol=0.0)

    # EncoderBlock(in_ch=out_ch=32, downsample=False): identity-skip / no-downConv path.
    x2 = jax.random.normal(kx2, (N, out_ch, D, D, D), jnp.float32)
    params2 = init_params(kp2, out_ch, out_ch, downsample=False)
    fwd2 = jax.jit(functools.partial(encoder_block, downsample=False))
    out2 = jax.block_until_ready(fwd2(params2, x2))
    assert out2.shape == (N, out_ch, D, D, D), out2.shape
    ref2 = jax.block_until_ready(_ref_forward(params2, x2, False))
    np.testing.assert_allclose(np.asarray(out2), np.asarray(ref2), atol=0.25, rtol=0.0)

    print("KERNEL_OK")
</pallas_src>

<mosaic_0001>
module attributes {stable_mosaic.version = 11 : i64} {
  func.func @_encoder_block_kernel(%arg0: i32, %arg1: memref<2xf32, #tpu.memory_space<smem>>, %arg2: memref<1x8x8x32xbf16, #tpu.memory_space<vmem>>, %arg3: memref<9x32x256xbf16, #tpu.memory_space<vmem>>, %arg4: memref<1x256xf32, #tpu.memory_space<vmem>>, %arg5: memref<9x256x256xbf16, #tpu.memory_space<vmem>>, %arg6: memref<1x256xf32, #tpu.memory_space<vmem>>, %arg7: memref<256x32xf32, #tpu.memory_space<vmem>>, %arg8: memref<32x256xf32, #tpu.memory_space<vmem>>, %arg9: memref<32x256xbf16, #tpu.memory_space<vmem>>, %arg10: memref<1x256xf32, #tpu.memory_space<vmem>>, %arg11: memref<4x16x64xbf16, #tpu.memory_space<vmem>>, %arg12: memref<4x256x128xbf16, #tpu.memory_space<vmem>>, %arg13: memref<1x128xf32, #tpu.memory_space<vmem>>, %arg14: memref<1x16x128xf32, #tpu.memory_space<vmem>>, %arg15: memref<10x10x32xbf16, #tpu.memory_space<vmem>>, %arg16: memref<10x10x256xbf16, #tpu.memory_space<vmem>>) attributes {dimension_semantics = [#tpu.dimension_semantics<parallel>], iteration_bounds = array<i64: 2>, scalar_prefetch = 0 : i64, scratch_operands = 2 : i64, tpu.core_type = #tpu.core_type<tc>, window_params = [{transform_indices = @transform_0, window_bounds = array<i64: 2>}, {transform_indices = @transform_1, window_bounds = array<i64: 1, 8, 8, 32>}, {pipeline_mode = #tpu.pipeline_mode<synchronous>, transform_indices = @transform_2, window_bounds = array<i64: 9, 32, 256>}, {pipeline_mode = #tpu.pipeline_mode<synchronous>, transform_indices = @transform_3, window_bounds = array<i64: 1, 256>}, {pipeline_mode = #tpu.pipeline_mode<synchronous>, transform_indices = @transform_4, window_bounds = array<i64: 9, 256, 256>}, {pipeline_mode = #tpu.pipeline_mode<synchronous>, transform_indices = @transform_5, window_bounds = array<i64: 1, 256>}, {pipeline_mode = #tpu.pipeline_mode<synchronous>, transform_indices = @transform_6, window_bounds = array<i64: 256, 32>}, {pipeline_mode = #tpu.pipeline_mode<synchronous>, transform_indices = @transform_7, window_bounds = array<i64: 32, 256>}, {pipeline_mode = #tpu.pipeline_mode<synchronous>, transform_indices = @transform_8, window_bounds = array<i64: 32, 256>}, {pipeline_mode = #tpu.pipeline_mode<synchronous>, transform_indices = @transform_9, window_bounds = array<i64: 1, 256>}, {pipeline_mode = #tpu.pipeline_mode<synchronous>, transform_indices = @transform_10, window_bounds = array<i64: 4, 16, 64>}, {pipeline_mode = #tpu.pipeline_mode<synchronous>, transform_indices = @transform_11, window_bounds = array<i64: 4, 256, 128>}, {pipeline_mode = #tpu.pipeline_mode<synchronous>, transform_indices = @transform_12, window_bounds = array<i64: 1, 128>}, {transform_indices = @transform_13, window_bounds = array<i64: 1, 16, 128>}]} {
    %c0 = arith.constant 0 : index
    %0 = memref.load %arg1[%c0] : memref<2xf32, #tpu.memory_space<smem>>
    %c1 = arith.constant 1 : index
    %1 = memref.load %arg1[%c1] : memref<2xf32, #tpu.memory_space<smem>>
    %cst = arith.constant 0.000000e+00 : bf16
    %2 = vector.broadcast %cst : bf16 to vector<10x10x32xbf16>
    %c0_0 = arith.constant 0 : index
    %c0_1 = arith.constant 0 : index
    %c0_2 = arith.constant 0 : index
    %3 = vector.load %arg15[%c0_0, %c0_1, %c0_2] : memref<10x10x32xbf16, #tpu.memory_space<vmem>>, vector<10x10x32xbf16>
    tpu.vector_store %arg15[%c0_0, %c0_1, %c0_2], %2 {strides = array<i32>} : memref<10x10x32xbf16, #tpu.memory_space<vmem>>, vector<10x10x32xbf16>,
    %c0_3 = arith.constant 0 : index
    %c0_4 = arith.constant 0 : index
    %c0_5 = arith.constant 0 : index
    %c0_6 = arith.constant 0 : index
    %4 = vector.load %arg2[%c0_3, %c0_4, %c0_5, %c0_6] : memref<1x8x8x32xbf16, #tpu.memory_space<vmem>>, vector<1x8x8x32xbf16>
    %5 = vector.shape_cast %4 : vector<1x8x8x32xbf16> to vector<8x8x32xbf16>
    %c1_7 = arith.constant 1 : index
    %c1_8 = arith.constant 1 : index
    %c0_9 = arith.constant 0 : index
    %6 = vector.load %arg15[%c1_7, %c1_8, %c0_9] : memref<10x10x32xbf16, #tpu.memory_space<vmem>>, vector<8x8x32xbf16>
    tpu.vector_store %arg15[%c1_7, %c1_8, %c0_9], %5 {strides = array<i32>} : memref<10x10x32xbf16, #tpu.memory_space<vmem>>, vector<8x8x32xbf16>,
    %c0_10 = arith.constant 0 : index
    %c0_11 = arith.constant 0 : index
    %7 = vector.load %arg4[%c0_10, %c0_11] : memref<1x256xf32, #tpu.memory_space<vmem>>, vector<1x256xf32>
    %cst_12 = arith.constant 0.000000e+00 : f32
    %8 = vector.broadcast %cst_12 : f32 to vector<64x256xf32>
    %9 = vector.broadcast %7 : vector<1x256xf32> to vector<64x256xf32>
    %10 = arith.addf %9, %8 : vector<64x256xf32>
    %c0_13 = arith.constant 0 : index
    %c0_14 = arith.constant 0 : index
    %c0_15 = arith.constant 0 : index
    %11 = vector.load %arg15[%c0_13, %c0_14, %c0_15] : memref<10x10x32xbf16, #tpu.memory_space<vmem>>, vector<8x8x32xbf16>
    %12 = vector.shape_cast %11 : vector<8x8x32xbf16> to vector<64x32xbf16>
    %c0_16 = arith.constant 0 : index
    %c0_17 = arith.constant 0 : index
    %c0_18 = arith.constant 0 : index
    %13 = vector.load %arg3[%c0_16, %c0_17, %c0_18] : memref<9x32x256xbf16, #tpu.memory_space<vmem>>, vector<1x32x256xbf16>
    %14 = vector.shape_cast %13 : vector<1x32x256xbf16> to vector<32x256xbf16>
    %cst_19 = arith.constant dense<0.000000e+00> : vector<64x256xf32>
    %15 = tpu.matmul %12, %14, %cst_19 {dimension_numbers = #tpu.dot_dimension_numbers<[1], [0], [0], [1], [0, 0, 1, 1], [], []>} : vector<64x32xbf16>, vector<32x256xbf16>, vector<64x256xf32> -> vector<64x256xf32>
    %16 = arith.addf %10, %15 : vector<64x256xf32>
    %c0_20 = arith.constant 0 : index
    %c1_21 = arith.constant 1 : index
    %c0_22 = arith.constant 0 : index
    %17 = vector.load %arg15[%c0_20, %c1_21, %c0_22] : memref<10x10x32xbf16, #tpu.memory_space<vmem>>, vector<8x8x32xbf16>
    %18 = vector.shape_cast %17 : vector<8x8x32xbf16> to vector<64x32xbf16>
    %c1_23 = arith.constant 1 : index
    %c0_24 = arith.constant 0 : index
    %c0_25 = arith.constant 0 : index
    %19 = vector.load %arg3[%c1_23, %c0_24, %c0_25] : memref<9x32x256xbf16, #tpu.memory_space<vmem>>, vector<1x32x256xbf16>
    %20 = vector.shape_cast %19 : vector<1x32x256xbf16> to vector<32x256xbf16>
    %cst_26 = arith.constant dense<0.000000e+00> : vector<64x256xf32>
    %21 = tpu.matmul %18, %20, %cst_26 {dimension_numbers = #tpu.dot_dimension_numbers<[1], [0], [0], [1], [0, 0, 1, 1], [], []>} : vector<64x32xbf16>, vector<32x256xbf16>, vector<64x256xf32> -> vector<64x256xf32>
    %22 = arith.addf %16, %21 : vector<64x256xf32>
    %c0_27 = arith.constant 0 : index
    %c2 = arith.constant 2 : index
    %c0_28 = arith.constant 0 : index
    %23 = vector.load %arg15[%c0_27, %c2, %c0_28] : memref<10x10x32xbf16, #tpu.memory_space<vmem>>, vector<8x8x32xbf16>
    %24 = vector.shape_cast %23 : vector<8x8x32xbf16> to vector<64x32xbf16>
    %c2_29 = arith.constant 2 : index
    %c0_30 = arith.constant 0 : index
    %c0_31 = arith.constant 0 : index
    %25 = vector.load %arg3[%c2_29, %c0_30, %c0_31] : memref<9x32x256xbf16, #tpu.memory_space<vmem>>, vector<1x32x256xbf16>
    %26 = vector.shape_cast %25 : vector<1x32x256xbf16> to vector<32x256xbf16>
    %cst_32 = arith.constant dense<0.000000e+00> : vector<64x256xf32>
    %27 = tpu.matmul %24, %26, %cst_32 {dimension_numbers = #tpu.dot_dimension_numbers<[1], [0], [0], [1], [0, 0, 1, 1], [], []>} : vector<64x32xbf16>, vector<32x256xbf16>, vector<64x256xf32> -> vector<64x256xf32>
    %28 = arith.addf %22, %27 : vector<64x256xf32>
    %c1_33 = arith.constant 1 : index
    %c0_34 = arith.constant 0 : index
    %c0_35 = arith.constant 0 : index
    %29 = vector.load %arg15[%c1_33, %c0_34, %c0_35] : memref<10x10x32xbf16, #tpu.memory_space<vmem>>, vector<8x8x32xbf16>
    %30 = vector.shape_cast %29 : vector<8x8x32xbf16> to vector<64x32xbf16>
    %c3 = arith.constant 3 : index
    %c0_36 = arith.constant 0 : index
    %c0_37 = arith.constant 0 : index
    %31 = vector.load %arg3[%c3, %c0_36, %c0_37] : memref<9x32x256xbf16, #tpu.memory_space<vmem>>, vector<1x32x256xbf16>
    %32 = vector.shape_cast %31 : vector<1x32x256xbf16> to vector<32x256xbf16>
    %cst_38 = arith.constant dense<0.000000e+00> : vector<64x256xf32>
    %33 = tpu.matmul %30, %32, %cst_38 {dimension_numbers = #tpu.dot_dimension_numbers<[1], [0], [0], [1], [0, 0, 1, 1], [], []>} : vector<64x32xbf16>, vector<32x256xbf16>, vector<64x256xf32> -> vector<64x256xf32>
    %34 = arith.addf %28, %33 : vector<64x256xf32>
    %c1_39 = arith.constant 1 : index
    %c1_40 = arith.constant 1 : index
    %c0_41 = arith.constant 0 : index
    %35 = vector.load %arg15[%c1_39, %c1_40, %c0_41] : memref<10x10x32xbf16, #tpu.memory_space<vmem>>, vector<8x8x32xbf16>
    %36 = vector.shape_cast %35 : vector<8x8x32xbf16> to vector<64x32xbf16>
    %c4 = arith.constant 4 : index
    %c0_42 = arith.constant 0 : index
    %c0_43 = arith.constant 0 : index
    %37 = vector.load %arg3[%c4, %c0_42, %c0_43] : memref<9x32x256xbf16, #tpu.memory_space<vmem>>, vector<1x32x256xbf16>
    %38 = vector.shape_cast %37 : vector<1x32x256xbf16> to vector<32x256xbf16>
    %cst_44 = arith.constant dense<0.000000e+00> : vector<64x256xf32>
    %39 = tpu.matmul %36, %38, %cst_44 {dimension_numbers = #tpu.dot_dimension_numbers<[1], [0], [0], [1], [0, 0, 1, 1], [], []>} : vector<64x32xbf16>, vector<32x256xbf16>, vector<64x256xf32> -> vector<64x256xf32>
    %40 = arith.addf %34, %39 : vector<64x256xf32>
    %c1_45 = arith.constant 1 : index
    %c2_46 = arith.constant 2 : index
    %c0_47 = arith.constant 0 : index
    %41 = vector.load %arg15[%c1_45, %c2_46, %c0_47] : memref<10x10x32xbf16, #tpu.memory_space<vmem>>, vector<8x8x32xbf16>
    %42 = vector.shape_cast %41 : vector<8x8x32xbf16> to vector<64x32xbf16>
    %c5 = arith.constant 5 : index
    %c0_48 = arith.constant 0 : index
    %c0_49 = arith.constant 0 : index
    %43 = vector.load %arg3[%c5, %c0_48, %c0_49] : memref<9x32x256xbf16, #tpu.memory_space<vmem>>, vector<1x32x256xbf16>
    %44 = vector.shape_cast %43 : vector<1x32x256xbf16> to vector<32x256xbf16>
    %cst_50 = arith.constant dense<0.000000e+00> : vector<64x256xf32>
    %45 = tpu.matmul %42, %44, %cst_50 {dimension_numbers = #tpu.dot_dimension_numbers<[1], [0], [0], [1], [0, 0, 1, 1], [], []>} : vector<64x32xbf16>, vector<32x256xbf16>, vector<64x256xf32> -> vector<64x256xf32>
    %46 = arith.addf %40, %45 : vector<64x256xf32>
    %c2_51 = arith.constant 2 : index
    %c0_52 = arith.constant 0 : index
    %c0_53 = arith.constant 0 : index
    %47 = vector.load %arg15[%c2_51, %c0_52, %c0_53] : memref<10x10x32xbf16, #tpu.memory_space<vmem>>, vector<8x8x32xbf16>
    %48 = vector.shape_cast %47 : vector<8x8x32xbf16> to vector<64x32xbf16>
    %c6 = arith.constant 6 : index
    %c0_54 = arith.constant 0 : index
    %c0_55 = arith.constant 0 : index
    %49 = vector.load %arg3[%c6, %c0_54, %c0_55] : memref<9x32x256xbf16, #tpu.memory_space<vmem>>, vector<1x32x256xbf16>
    %50 = vector.shape_cast %49 : vector<1x32x256xbf16> to vector<32x256xbf16>
    %cst_56 = arith.constant dense<0.000000e+00> : vector<64x256xf32>
    %51 = tpu.matmul %48, %50, %cst_56 {dimension_numbers = #tpu.dot_dimension_numbers<[1], [0], [0], [1], [0, 0, 1, 1], [], []>} : vector<64x32xbf16>, vector<32x256xbf16>, vector<64x256xf32> -> vector<64x256xf32>
    %52 = arith.addf %46, %51 : vector<64x256xf32>
    %c2_57 = arith.constant 2 : index
    %c1_58 = arith.constant 1 : index
    %c0_59 = arith.constant 0 : index
    %53 = vector.load %arg15[%c2_57, %c1_58, %c0_59] : memref<10x10x32xbf16, #tpu.memory_space<vmem>>, vector<8x8x32xbf16>
    %54 = vector.shape_cast %53 : vector<8x8x32xbf16> to vector<64x32xbf16>
    %c7 = arith.constant 7 : index
    %c0_60 = arith.constant 0 : index
    %c0_61 = arith.constant 0 : index
    %55 = vector.load %arg3[%c7, %c0_60, %c0_61] : memref<9x32x256xbf16, #tpu.memory_space<vmem>>, vector<1x32x256xbf16>
    %56 = vector.shape_cast %55 : vector<1x32x256xbf16> to vector<32x256xbf16>
    %cst_62 = arith.constant dense<0.000000e+00> : vector<64x256xf32>
    %57 = tpu.matmul %54, %56, %cst_62 {dimension_numbers = #tpu.dot_dimension_numbers<[1], [0], [0], [1], [0, 0, 1, 1], [], []>} : vector<64x32xbf16>, vector<32x256xbf16>, vector<64x256xf32> -> vector<64x256xf32>
    %58 = arith.addf %52, %57 : vector<64x256xf32>
    %c2_63 = arith.constant 2 : index
    %c2_64 = arith.constant 2 : index
    %c0_65 = arith.constant 0 : index
    %59 = vector.load %arg15[%c2_63, %c2_64, %c0_65] : memref<10x10x32xbf16, #tpu.memory_space<vmem>>, vector<8x8x32xbf16>
    %60 = vector.shape_cast %59 : vector<8x8x32xbf16> to vector<64x32xbf16>
    %c8 = arith.constant 8 : index
    %c0_66 = arith.constant 0 : index
    %c0_67 = arith.constant 0 : index
    %61 = vector.load %arg3[%c8, %c0_66, %c0_67] : memref<9x32x256xbf16, #tpu.memory_space<vmem>>, vector<1x32x256xbf16>
    %62 = vector.shape_cast %61 : vector<1x32x256xbf16> to vector<32x256xbf16>
    %cst_68 = arith.constant dense<0.000000e+00> : vector<64x256xf32>
    %63 = tpu.matmul %60, %62, %cst_68 {dimension_numbers = #tpu.dot_dimension_numbers<[1], [0], [0], [1], [0, 0, 1, 1], [], []>} : vector<64x32xbf16>, vector<32x256xbf16>, vector<64x256xf32> -> vector<64x256xf32>
    %64 = arith.addf %58, %63 : vector<64x256xf32>
    %cst_69 = arith.constant dense<0.000000e+00> : vector<256xf32>
    %65 = vector.multi_reduction <add>, %64, %cst_69 [0] : vector<64x256xf32> to vector<256xf32>
    %66 = vector.shape_cast %65 : vector<256xf32> to vector<1x256xf32>
    %c0_70 = arith.constant 0 : index
    %c0_71 = arith.constant 0 : index
    %67 = vector.load %arg7[%c0_70, %c0_71] : memref<256x32xf32, #tpu.memory_space<vmem>>, vector<256x32xf32>
    %cst_72 = arith.constant dense<0.000000e+00> : vector<1x32xf32>
    %68 = tpu.matmul %66, %67, %cst_72 {dimension_numbers = #tpu.dot_dimension_numbers<[1], [0], [0], [1], [0, 0, 1, 1], [], []>} : vector<1x256xf32>, vector<256x32xf32>, vector<1x32xf32> -> vector<1x32xf32>
    %cst_73 = arith.constant 0.001953125 : f32
    %69 = vector.broadcast %cst_73 : f32 to vector<1x32xf32>
    %70 = arith.mulf %68, %69 : vector<1x32xf32>
    %c0_74 = arith.constant 0 : index
    %c0_75 = arith.constant 0 : index
    %71 = vector.load %arg8[%c0_74, %c0_75] : memref<32x256xf32, #tpu.memory_space<vmem>>, vector<32x256xf32>
    %cst_76 = arith.constant dense<0.000000e+00> : vector<1x256xf32>
    %72 = tpu.matmul %70, %71, %cst_76 {dimension_numbers = #tpu.dot_dimension_numbers<[1], [0], [0], [1], [0, 0, 1, 1], [], []>} : vector<1x32xf32>, vector<32x256xf32>, vector<1x256xf32> -> vector<1x256xf32>
    %73 = vector.broadcast %72 : vector<1x256xf32> to vector<64x256xf32>
    %74 = arith.subf %64, %73 : vector<64x256xf32>
    %75 = arith.mulf %74, %74 : vector<64x256xf32>
    %cst_77 = arith.constant dense<0.000000e+00> : vector<256xf32>
    %76 = vector.multi_reduction <add>, %75, %cst_77 [0] : vector<64x256xf32> to vector<256xf32>
    %77 = vector.shape_cast %76 : vector<256xf32> to vector<1x256xf32>
    %c0_78 = arith.constant 0 : index
    %c0_79 = arith.constant 0 : index
    %78 = vector.load %arg7[%c0_78, %c0_79] : memref<256x32xf32, #tpu.memory_space<vmem>>, vector<256x32xf32>
    %cst_80 = arith.constant dense<0.000000e+00> : vector<1x32xf32>
    %79 = tpu.matmul %77, %78, %cst_80 {dimension_numbers = #tpu.dot_dimension_numbers<[1], [0], [0], [1], [0, 0, 1, 1], [], []>} : vector<1x256xf32>, vector<256x32xf32>, vector<1x32xf32> -> vector<1x32xf32>
    %cst_81 = arith.constant 0.001953125 : f32
    %80 = vector.broadcast %cst_81 : f32 to vector<1x32xf32>
    %81 = arith.mulf %79, %80 : vector<1x32xf32>
    %cst_82 = arith.constant 9.99999974E-6 : f32
    %82 = vector.broadcast %cst_82 : f32 to vector<1x32xf32>
    %83 = arith.addf %81, %82 : vector<1x32xf32>
    %84 = math.rsqrt %83 : vector<1x32xf32>
    %c0_83 = arith.constant 0 : index
    %c0_84 = arith.constant 0 : index
    %85 = vector.load %arg8[%c0_83, %c0_84] : memref<32x256xf32, #tpu.memory_space<vmem>>, vector<32x256xf32>
    %cst_85 = arith.constant dense<0.000000e+00> : vector<1x256xf32>
    %86 = tpu.matmul %84, %85, %cst_85 {dimension_numbers = #tpu.dot_dimension_numbers<[1], [0], [0], [1], [0, 0, 1, 1], [], []>} : vector<1x32xf32>, vector<32x256xf32>, vector<1x256xf32> -> vector<1x256xf32>
    %87 = vector.broadcast %86 : vector<1x256xf32> to vector<64x256xf32>
    %88 = arith.mulf %74, %87 : vector<64x256xf32>
    %cst_86 = arith.constant 0.000000e+00 : f32
    %89 = vector.broadcast %cst_86 : f32 to vector<64x256xf32>
    %90 = arith.cmpf ogt, %88, %89 : vector<64x256xf32>
    %91 = vector.broadcast %0 : f32 to vector<64x256xf32>
    %92 = arith.mulf %91, %88 : vector<64x256xf32>
    %93 = arith.select %90, %88, %92 : vector<64x256xi1>, vector<64x256xf32>
    %cst_87 = arith.constant 0.000000e+00 : bf16
    %94 = vector.broadcast %cst_87 : bf16 to vector<10x10x256xbf16>
    %c0_88 = arith.constant 0 : index
    %c0_89 = arith.constant 0 : index
    %c0_90 = arith.constant 0 : index
    %95 = vector.load %arg16[%c0_88, %c0_89, %c0_90] : memref<10x10x256xbf16, #tpu.memory_space<vmem>>, vector<10x10x256xbf16>
    tpu.vector_store %arg16[%c0_88, %c0_89, %c0_90], %94 {strides = array<i32>} : memref<10x10x256xbf16, #tpu.memory_space<vmem>>, vector<10x10x256xbf16>,
    %96 = arith.truncf %93 : vector<64x256xf32> to vector<64x256xbf16>
    %97 = vector.shape_cast %96 : vector<64x256xbf16> to vector<8x8x256xbf16>
    %c1_91 = arith.constant 1 : index
    %c1_92 = arith.constant 1 : index
    %c0_93 = arith.constant 0 : index
    %98 = vector.load %arg16[%c1_91, %c1_92, %c0_93] : memref<10x10x256xbf16, #tpu.memory_space<vmem>>, vector<8x8x256xbf16>
    tpu.vector_store %arg16[%c1_91, %c1_92, %c0_93], %97 {strides = array<i32>} : memref<10x10x256xbf16, #tpu.memory_space<vmem>>, vector<8x8x256xbf16>,
    %c0_94 = arith.constant 0 : index
    %c0_95 = arith.constant 0 : index
    %99 = vector.load %arg6[%c0_94, %c0_95] : memref<1x256xf32, #tpu.memory_space<vmem>>, vector<1x256xf32>
    %cst_96 = arith.constant 0.000000e+00 : f32
    %100 = vector.broadcast %cst_96 : f32 to vector<64x256xf32>
    %101 = vector.broadcast %99 : vector<1x256xf32> to vector<64x256xf32>
    %102 = arith.addf %101, %100 : vector<64x256xf32>
    %c0_97 = arith.constant 0 : index
    %c0_98 = arith.constant 0 : index
    %c0_99 = arith.constant 0 : index
    %103 = vector.load %arg16[%c0_97, %c0_98, %c0_99] : memref<10x10x256xbf16, #tpu.memory_space<vmem>>, vector<8x8x256xbf16>
    %104 = vector.shape_cast %103 : vector<8x8x256xbf16> to vector<64x256xbf16>
    %c0_100 = arith.constant 0 : index
    %c0_101 = arith.constant 0 : index
    %c0_102 = arith.constant 0 : index
    %105 = vector.load %arg5[%c0_100, %c0_101, %c0_102] : memref<9x256x256xbf16, #tpu.memory_space<vmem>>, vector<1x256x256xbf16>
    %106 = vector.shape_cast %105 : vector<1x256x256xbf16> to vector<256x256xbf16>
    %cst_103 = arith.constant dense<0.000000e+00> : vector<64x256xf32>
    %107 = tpu.matmul %104, %106, %cst_103 {dimension_numbers = #tpu.dot_dimension_numbers<[1], [0], [0], [1], [0, 0, 1, 1], [], []>} : vector<64x256xbf16>, vector<256x256xbf16>, vector<64x256xf32> -> vector<64x256xf32>
    %108 = arith.addf %102, %107 : vector<64x256xf32>
    %c0_104 = arith.constant 0 : index
    %c1_105 = arith.constant 1 : index
    %c0_106 = arith.constant 0 : index
    %109 = vector.load %arg16[%c0_104, %c1_105, %c0_106] : memref<10x10x256xbf16, #tpu.memory_space<vmem>>, vector<8x8x256xbf16>
    %110 = vector.shape_cast %109 : vector<8x8x256xbf16> to vector<64x256xbf16>
    %c1_107 = arith.constant 1 : index
    %c0_108 = arith.constant 0 : index
    %c0_109 = arith.constant 0 : index
    %111 = vector.load %arg5[%c1_107, %c0_108, %c0_109] : memref<9x256x256xbf16, #tpu.memory_space<vmem>>, vector<1x256x256xbf16>
    %112 = vector.shape_cast %111 : vector<1x256x256xbf16> to vector<256x256xbf16>
    %cst_110 = arith.constant dense<0.000000e+00> : vector<64x256xf32>
    %113 = tpu.matmul %110, %112, %cst_110 {dimension_numbers = #tpu.dot_dimension_numbers<[1], [0], [0], [1], [0, 0, 1, 1], [], []>} : vector<64x256xbf16>, vector<256x256xbf16>, vector<64x256xf32> -> vector<64x256xf32>
    %114 = arith.addf %108, %113 : vector<64x256xf32>
    %c0_111 = arith.constant 0 : index
    %c2_112 = arith.constant 2 : index
    %c0_113 = arith.constant 0 : index
    %115 = vector.load %arg16[%c0_111, %c2_112, %c0_113] : memref<10x10x256xbf16, #tpu.memory_space<vmem>>, vector<8x8x256xbf16>
    %116 = vector.shape_cast %115 : vector<8x8x256xbf16> to vector<64x256xbf16>
    %c2_114 = arith.constant 2 : index
    %c0_115 = arith.constant 0 : index
    %c0_116 = arith.constant 0 : index
    %117 = vector.load %arg5[%c2_114, %c0_115, %c0_116] : memref<9x256x256xbf16, #tpu.memory_space<vmem>>, vector<1x256x256xbf16>
    %118 = vector.shape_cast %117 : vector<1x256x256xbf16> to vector<256x256xbf16>
    %cst_117 = arith.constant dense<0.000000e+00> : vector<64x256xf32>
    %119 = tpu.matmul %116, %118, %cst_117 {dimension_numbers = #tpu.dot_dimension_numbers<[1], [0], [0], [1], [0, 0, 1, 1], [], []>} : vector<64x256xbf16>, vector<256x256xbf16>, vector<64x256xf32> -> vector<64x256xf32>
    %120 = arith.addf %114, %119 : vector<64x256xf32>
    %c1_118 = arith.constant 1 : index
    %c0_119 = arith.constant 0 : index
    %c0_120 = arith.constant 0 : index
    %121 = vector.load %arg16[%c1_118, %c0_119, %c0_120] : memref<10x10x256xbf16, #tpu.memory_space<vmem>>, vector<8x8x256xbf16>
    %122 = vector.shape_cast %121 : vector<8x8x256xbf16> to vector<64x256xbf16>
    %c3_121 = arith.constant 3 : index
    %c0_122 = arith.constant 0 : index
    %c0_123 = arith.constant 0 : index
    %123 = vector.load %arg5[%c3_121, %c0_122, %c0_123] : memref<9x256x256xbf16, #tpu.memory_space<vmem>>, vector<1x256x256xbf16>
    %124 = vector.shape_cast %123 : vector<1x256x256xbf16> to vector<256x256xbf16>
    %cst_124 = arith.constant dense<0.000000e+00> : vector<64x256xf32>
    %125 = tpu.matmul %122, %124, %cst_124 {dimension_numbers = #tpu.dot_dimension_numbers<[1], [0], [0], [1], [0, 0, 1, 1], [], []>} : vector<64x256xbf16>, vector<256x256xbf16>, vector<64x256xf32> -> vector<64x256xf32>
    %126 = arith.addf %120, %125 : vector<64x256xf32>
    %c1_125 = arith.constant 1 : index
    %c1_126 = arith.constant 1 : index
    %c0_127 = arith.constant 0 : index
    %127 = vector.load %arg16[%c1_125, %c1_126, %c0_127] : memref<10x10x256xbf16, #tpu.memory_space<vmem>>, vector<8x8x256xbf16>
    %128 = vector.shape_cast %127 : vector<8x8x256xbf16> to vector<64x256xbf16>
    %c4_128 = arith.constant 4 : index
    %c0_129 = arith.constant 0 : index
    %c0_130 = arith.constant 0 : index
    %129 = vector.load %arg5[%c4_128, %c0_129, %c0_130] : memref<9x256x256xbf16, #tpu.memory_space<vmem>>, vector<1x256x256xbf16>
    %130 = vector.shape_cast %129 : vector<1x256x256xbf16> to vector<256x256xbf16>
    %cst_131 = arith.constant dense<0.000000e+00> : vector<64x256xf32>
    %131 = tpu.matmul %128, %130, %cst_131 {dimension_numbers = #tpu.dot_dimension_numbers<[1], [0], [0], [1], [0, 0, 1, 1], [], []>} : vector<64x256xbf16>, vector<256x256xbf16>, vector<64x256xf32> -> vector<64x256xf32>
    %132 = arith.addf %126, %131 : vector<64x256xf32>
    %c1_132 = arith.constant 1 : index
    %c2_133 = arith.constant 2 : index
    %c0_134 = arith.constant 0 : index
    %133 = vector.load %arg16[%c1_132, %c2_133, %c0_134] : memref<10x10x256xbf16, #tpu.memory_space<vmem>>, vector<8x8x256xbf16>
    %134 = vector.shape_cast %133 : vector<8x8x256xbf16> to vector<64x256xbf16>
    %c5_135 = arith.constant 5 : index
    %c0_136 = arith.constant 0 : index
    %c0_137 = arith.constant 0 : index
    %135 = vector.load %arg5[%c5_135, %c0_136, %c0_137] : memref<9x256x256xbf16, #tpu.memory_space<vmem>>, vector<1x256x256xbf16>
    %136 = vector.shape_cast %135 : vector<1x256x256xbf16> to vector<256x256xbf16>
    %cst_138 = arith.constant dense<0.000000e+00> : vector<64x256xf32>
    %137 = tpu.matmul %134, %136, %cst_138 {dimension_numbers = #tpu.dot_dimension_numbers<[1], [0], [0], [1], [0, 0, 1, 1], [], []>} : vector<64x256xbf16>, vector<256x256xbf16>, vector<64x256xf32> -> vector<64x256xf32>
    %138 = arith.addf %132, %137 : vector<64x256xf32>
    %c2_139 = arith.constant 2 : index
    %c0_140 = arith.constant 0 : index
    %c0_141 = arith.constant 0 : index
    %139 = vector.load %arg16[%c2_139, %c0_140, %c0_141] : memref<10x10x256xbf16, #tpu.memory_space<vmem>>, vector<8x8x256xbf16>
    %140 = vector.shape_cast %139 : vector<8x8x256xbf16> to vector<64x256xbf16>
    %c6_142 = arith.constant 6 : index
    %c0_143 = arith.constant 0 : index
    %c0_144 = arith.constant 0 : index
    %141 = vector.load %arg5[%c6_142, %c0_143, %c0_144] : memref<9x256x256xbf16, #tpu.memory_space<vmem>>, vector<1x256x256xbf16>
    %142 = vector.shape_cast %141 : vector<1x256x256xbf16> to vector<256x256xbf16>
    %cst_145 = arith.constant dense<0.000000e+00> : vector<64x256xf32>
    %143 = tpu.matmul %140, %142, %cst_145 {dimension_numbers = #tpu.dot_dimension_numbers<[1], [0], [0], [1], [0, 0, 1, 1], [], []>} : vector<64x256xbf16>, vector<256x256xbf16>, vector<64x256xf32> -> vector<64x256xf32>
    %144 = arith.addf %138, %143 : vector<64x256xf32>
    %c2_146 = arith.constant 2 : index
    %c1_147 = arith.constant 1 : index
    %c0_148 = arith.constant 0 : index
    %145 = vector.load %arg16[%c2_146, %c1_147, %c0_148] : memref<10x10x256xbf16, #tpu.memory_space<vmem>>, vector<8x8x256xbf16>
    %146 = vector.shape_cast %145 : vector<8x8x256xbf16> to vector<64x256xbf16>
    %c7_149 = arith.constant 7 : index
    %c0_150 = arith.constant 0 : index
    %c0_151 = arith.constant 0 : index
    %147 = vector.load %arg5[%c7_149, %c0_150, %c0_151] : memref<9x256x256xbf16, #tpu.memory_space<vmem>>, vector<1x256x256xbf16>
    %148 = vector.shape_cast %147 : vector<1x256x256xbf16> to vector<256x256xbf16>
    %cst_152 = arith.constant dense<0.000000e+00> : vector<64x256xf32>
    %149 = tpu.matmul %146, %148, %cst_152 {dimension_numbers = #tpu.dot_dimension_numbers<[1], [0], [0], [1], [0, 0, 1, 1], [], []>} : vector<64x256xbf16>, vector<256x256xbf16>, vector<64x256xf32> -> vector<64x256xf32>
    %150 = arith.addf %144, %149 : vector<64x256xf32>
    %c2_153 = arith.constant 2 : index
    %c2_154 = arith.constant 2 : index
    %c0_155 = arith.constant 0 : index
    %151 = vector.load %arg16[%c2_153, %c2_154, %c0_155] : memref<10x10x256xbf16, #tpu.memory_space<vmem>>, vector<8x8x256xbf16>
    %152 = vector.shape_cast %151 : vector<8x8x256xbf16> to vector<64x256xbf16>
    %c8_156 = arith.constant 8 : index
    %c0_157 = arith.constant 0 : index
    %c0_158 = arith.constant 0 : index
    %153 = vector.load %arg5[%c8_156, %c0_157, %c0_158] : memref<9x256x256xbf16, #tpu.memory_space<vmem>>, vector<1x256x256xbf16>
    %154 = vector.shape_cast %153 : vector<1x256x256xbf16> to vector<256x256xbf16>
    %cst_159 = arith.constant dense<0.000000e+00> : vector<64x256xf32>
    %155 = tpu.matmul %152, %154, %cst_159 {dimension_numbers = #tpu.dot_dimension_numbers<[1], [0], [0], [1], [0, 0, 1, 1], [], []>} : vector<64x256xbf16>, vector<256x256xbf16>, vector<64x256xf32> -> vector<64x256xf32>
    %156 = arith.addf %150, %155 : vector<64x256xf32>
    %cst_160 = arith.constant dense<0.000000e+00> : vector<256xf32>
    %157 = vector.multi_reduction <add>, %156, %cst_160 [0] : vector<64x256xf32> to vector<256xf32>
    %158 = vector.shape_cast %157 : vector<256xf32> to vector<1x256xf32>
    %c0_161 = arith.constant 0 : index
    %c0_162 = arith.constant 0 : index
    %159 = vector.load %arg7[%c0_161, %c0_162] : memref<256x32xf32, #tpu.memory_space<vmem>>, vector<256x32xf32>
    %cst_163 = arith.constant dense<0.000000e+00> : vector<1x32xf32>
    %160 = tpu.matmul %158, %159, %cst_163 {dimension_numbers = #tpu.dot_dimension_numbers<[1], [0], [0], [1], [0, 0, 1, 1], [], []>} : vector<1x256xf32>, vector<256x32xf32>, vector<1x32xf32> -> vector<1x32xf32>
    %cst_164 = arith.constant 0.001953125 : f32
    %161 = vector.broadcast %cst_164 : f32 to vector<1x32xf32>
    %162 = arith.mulf %160, %161 : vector<1x32xf32>
    %c0_165 = arith.constant 0 : index
    %c0_166 = arith.constant 0 : index
    %163 = vector.load %arg8[%c0_165, %c0_166] : memref<32x256xf32, #tpu.memory_space<vmem>>, vector<32x256xf32>
    %cst_167 = arith.constant dense<0.000000e+00> : vector<1x256xf32>
    %164 = tpu.matmul %162, %163, %cst_167 {dimension_numbers = #tpu.dot_dimension_numbers<[1], [0], [0], [1], [0, 0, 1, 1], [], []>} : vector<1x32xf32>, vector<32x256xf32>, vector<1x256xf32> -> vector<1x256xf32>
    %165 = vector.broadcast %164 : vector<1x256xf32> to vector<64x256xf32>
    %166 = arith.subf %156, %165 : vector<64x256xf32>
    %167 = arith.mulf %166, %166 : vector<64x256xf32>
    %cst_168 = arith.constant dense<0.000000e+00> : vector<256xf32>
    %168 = vector.multi_reduction <add>, %167, %cst_168 [0] : vector<64x256xf32> to vector<256xf32>
    %169 = vector.shape_cast %168 : vector<256xf32> to vector<1x256xf32>
    %c0_169 = arith.constant 0 : index
    %c0_170 = arith.constant 0 : index
    %170 = vector.load %arg7[%c0_169, %c0_170] : memref<256x32xf32, #tpu.memory_space<vmem>>, vector<256x32xf32>
    %cst_171 = arith.constant dense<0.000000e+00> : vector<1x32xf32>
    %171 = tpu.matmul %169, %170, %cst_171 {dimension_numbers = #tpu.dot_dimension_numbers<[1], [0], [0], [1], [0, 0, 1, 1], [], []>} : vector<1x256xf32>, vector<256x32xf32>, vector<1x32xf32> -> vector<1x32xf32>
    %cst_172 = arith.constant 0.001953125 : f32
    %172 = vector.broadcast %cst_172 : f32 to vector<1x32xf32>
    %173 = arith.mulf %171, %172 : vector<1x32xf32>
    %cst_173 = arith.constant 9.99999974E-6 : f32
    %174 = vector.broadcast %cst_173 : f32 to vector<1x32xf32>
    %175 = arith.addf %173, %174 : vector<1x32xf32>
    %176 = math.rsqrt %175 : vector<1x32xf32>
    %c0_174 = arith.constant 0 : index
    %c0_175 = arith.constant 0 : index
    %177 = vector.load %arg8[%c0_174, %c0_175] : memref<32x256xf32, #tpu.memory_space<vmem>>, vector<32x256xf32>
    %cst_176 = arith.constant dense<0.000000e+00> : vector<1x256xf32>
    %178 = tpu.matmul %176, %177, %cst_176 {dimension_numbers = #tpu.dot_dimension_numbers<[1], [0], [0], [1], [0, 0, 1, 1], [], []>} : vector<1x32xf32>, vector<32x256xf32>, vector<1x256xf32> -> vector<1x256xf32>
    %179 = vector.broadcast %178 : vector<1x256xf32> to vector<64x256xf32>
    %180 = arith.mulf %166, %179 : vector<64x256xf32>
    %c0_177 = arith.constant 0 : index
    %c0_178 = arith.constant 0 : index
    %c0_179 = arith.constant 0 : index
    %c0_180 = arith.constant 0 : index
    %181 = vector.load %arg2[%c0_177, %c0_178, %c0_179, %c0_180] : memref<1x8x8x32xbf16, #tpu.memory_space<vmem>>, vector<1x8x8x32xbf16>
    %182 = vector.shape_cast %181 : vector<1x8x8x32xbf16> to vector<8x8x32xbf16>
    %183 = vector.shape_cast %182 : vector<8x8x32xbf16> to vector<64x32xbf16>
    %c0_181 = arith.constant 0 : index
    %c0_182 = arith.constant 0 : index
    %184 = vector.load %arg9[%c0_181, %c0_182] : memref<32x256xbf16, #tpu.memory_space<vmem>>, vector<32x256xbf16>
    %cst_183 = arith.constant dense<0.000000e+00> : vector<64x256xf32>
    %185 = tpu.matmul %183, %184, %cst_183 {dimension_numbers = #tpu.dot_dimension_numbers<[1], [0], [0], [1], [0, 0, 1, 1], [], []>} : vector<64x32xbf16>, vector<32x256xbf16>, vector<64x256xf32> -> vector<64x256xf32>
    %c0_184 = arith.constant 0 : index
    %c0_185 = arith.constant 0 : index
    %186 = vector.load %arg10[%c0_184, %c0_185] : memref<1x256xf32, #tpu.memory_space<vmem>>, vector<1x256xf32>
    %187 = vector.broadcast %186 : vector<1x256xf32> to vector<64x256xf32>
    %188 = arith.addf %185, %187 : vector<64x256xf32>
    %189 = arith.addf %180, %188 : vector<64x256xf32>
    %cst_186 = arith.constant 0.000000e+00 : f32
    %190 = vector.broadcast %cst_186 : f32 to vector<64x256xf32>
    %191 = arith.cmpf ogt, %189, %190 : vector<64x256xf32>
    %192 = vector.broadcast %1 : f32 to vector<64x256xf32>
    %193 = arith.mulf %192, %189 : vector<64x256xf32>
    %194 = arith.select %191, %189, %193 : vector<64x256xi1>, vector<64x256xf32>
    %195 = arith.truncf %194 : vector<64x256xf32> to vector<64x256xbf16>
    %c0_187 = arith.constant 0 : index
    %c0_188 = arith.constant 0 : index
    %196 = vector.load %arg13[%c0_187, %c0_188] : memref<1x128xf32, #tpu.memory_space<vmem>>, vector<1x128xf32>
    %cst_189 = arith.constant 0.000000e+00 : f32
    %197 = vector.broadcast %cst_189 : f32 to vector<16x128xf32>
    %198 = vector.broadcast %196 : vector<1x128xf32> to vector<16x128xf32>
    %199 = arith.addf %198, %197 : vector<16x128xf32>
    %c0_190 = arith.constant 0 : index
    %c0_191 = arith.constant 0 : index
    %c0_192 = arith.constant 0 : index
    %200 = vector.load %arg11[%c0_190, %c0_191, %c0_192] : memref<4x16x64xbf16, #tpu.memory_space<vmem>>, vector<1x16x64xbf16>
    %201 = vector.shape_cast %200 : vector<1x16x64xbf16> to vector<16x64xbf16>
    %cst_193 = arith.constant dense<0.000000e+00> : vector<16x256xf32>
    %202 = tpu.matmul %201, %195, %cst_193 {dimension_numbers = #tpu.dot_dimension_numbers<[1], [0], [0], [1], [0, 0, 1, 1], [], []>} : vector<16x64xbf16>, vector<64x256xbf16>, vector<16x256xf32> -> vector<16x256xf32>
    %203 = arith.truncf %202 : vector<16x256xf32> to vector<16x256xbf16>
    %c0_194 = arith.constant 0 : index
    %c0_195 = arith.constant 0 : index
    %c0_196 = arith.constant 0 : index
    %204 = vector.load %arg12[%c0_194, %c0_195, %c0_196] : memref<4x256x128xbf16, #tpu.memory_space<vmem>>, vector<1x256x128xbf16>
    %205 = vector.shape_cast %204 : vector<1x256x128xbf16> to vector<256x128xbf16>
    %cst_197 = arith.constant dense<0.000000e+00> : vector<16x128xf32>
    %206 = tpu.matmul %203, %205, %cst_197 {dimension_numbers = #tpu.dot_dimension_numbers<[1], [0], [0], [1], [0, 0, 1, 1], [], []>} : vector<16x256xbf16>, vector<256x128xbf16>, vector<16x128xf32> -> vector<16x128xf32>
    %207 = arith.addf %199, %206 : vector<16x128xf32>
    %c1_198 = arith.constant 1 : index
    %c0_199 = arith.constant 0 : index
    %c0_200 = arith.constant 0 : index
    %208 = vector.load %arg11[%c1_198, %c0_199, %c0_200] : memref<4x16x64xbf16, #tpu.memory_space<vmem>>, vector<1x16x64xbf16>
    %209 = vector.shape_cast %208 : vector<1x16x64xbf16> to vector<16x64xbf16>
    %cst_201 = arith.constant dense<0.000000e+00> : vector<16x256xf32>
    %210 = tpu.matmul %209, %195, %cst_201 {dimension_numbers = #tpu.dot_dimension_numbers<[1], [0], [0], [1], [0, 0, 1, 1], [], []>} : vector<16x64xbf16>, vector<64x256xbf16>, vector<16x256xf32> -> vector<16x256xf32>
    %211 = arith.truncf %210 : vector<16x256xf32> to vector<16x256xbf16>
    %c1_202 = arith.constant 1 : index
    %c0_203 = arith.constant 0 : index
    %c0_204 = arith.constant 0 : index
    %212 = vector.load %arg12[%c1_202, %c0_203, %c0_204] : memref<4x256x128xbf16, #tpu.memory_space<vmem>>, vector<1x256x128xbf16>
    %213 = vector.shape_cast %212 : vector<1x256x128xbf16> to vector<256x128xbf16>
    %cst_205 = arith.constant dense<0.000000e+00> : vector<16x128xf32>
    %214 = tpu.matmul %211, %213, %cst_205 {dimension_numbers = #tpu.dot_dimension_numbers<[1], [0], [0], [1], [0, 0, 1, 1], [], []>} : vector<16x256xbf16>, vector<256x128xbf16>, vector<16x128xf32> -> vector<16x128xf32>
    %215 = arith.addf %207, %214 : vector<16x128xf32>
    %c2_206 = arith.constant 2 : index
    %c0_207 = arith.constant 0 : index
    %c0_208 = arith.constant 0 : index
    %216 = vector.load %arg11[%c2_206, %c0_207, %c0_208] : memref<4x16x64xbf16, #tpu.memory_space<vmem>>, vector<1x16x64xbf16>
    %217 = vector.shape_cast %216 : vector<1x16x64xbf16> to vector<16x64xbf16>
    %cst_209 = arith.constant dense<0.000000e+00> : vector<16x256xf32>
    %218 = tpu.matmul %217, %195, %cst_209 {dimension_numbers = #tpu.dot_dimension_numbers<[1], [0], [0], [1], [0, 0, 1, 1], [], []>} : vector<16x64xbf16>, vector<64x256xbf16>, vector<16x256xf32> -> vector<16x256xf32>
    %219 = arith.truncf %218 : vector<16x256xf32> to vector<16x256xbf16>
    %c2_210 = arith.constant 2 : index
    %c0_211 = arith.constant 0 : index
    %c0_212 = arith.constant 0 : index
    %220 = vector.load %arg12[%c2_210, %c0_211, %c0_212] : memref<4x256x128xbf16, #tpu.memory_space<vmem>>, vector<1x256x128xbf16>
    %221 = vector.shape_cast %220 : vector<1x256x128xbf16> to vector<256x128xbf16>
    %cst_213 = arith.constant dense<0.000000e+00> : vector<16x128xf32>
    %222 = tpu.matmul %219, %221, %cst_213 {dimension_numbers = #tpu.dot_dimension_numbers<[1], [0], [0], [1], [0, 0, 1, 1], [], []>} : vector<16x256xbf16>, vector<256x128xbf16>, vector<16x128xf32> -> vector<16x128xf32>
    %223 = arith.addf %215, %222 : vector<16x128xf32>
    %c3_214 = arith.constant 3 : index
    %c0_215 = arith.constant 0 : index
    %c0_216 = arith.constant 0 : index
    %224 = vector.load %arg11[%c3_214, %c0_215, %c0_216] : memref<4x16x64xbf16, #tpu.memory_space<vmem>>, vector<1x16x64xbf16>
    %225 = vector.shape_cast %224 : vector<1x16x64xbf16> to vector<16x64xbf16>
    %cst_217 = arith.constant dense<0.000000e+00> : vector<16x256xf32>
    %226 = tpu.matmul %225, %195, %cst_217 {dimension_numbers = #tpu.dot_dimension_numbers<[1], [0], [0], [1], [0, 0, 1, 1], [], []>} : vector<16x64xbf16>, vector<64x256xbf16>, vector<16x256xf32> -> vector<16x256xf32>
    %227 = arith.truncf %226 : vector<16x256xf32> to vector<16x256xbf16>
    %c3_218 = arith.constant 3 : index
    %c0_219 = arith.constant 0 : index
    %c0_220 = arith.constant 0 : index
    %228 = vector.load %arg12[%c3_218, %c0_219, %c0_220] : memref<4x256x128xbf16, #tpu.memory_space<vmem>>, vector<1x256x128xbf16>
    %229 = vector.shape_cast %228 : vector<1x256x128xbf16> to vector<256x128xbf16>
    %cst_221 = arith.constant dense<0.000000e+00> : vector<16x128xf32>
    %230 = tpu.matmul %227, %229, %cst_221 {dimension_numbers = #tpu.dot_dimension_numbers<[1], [0], [0], [1], [0, 0, 1, 1], [], []>} : vector<16x256xbf16>, vector<256x128xbf16>, vector<16x128xf32> -> vector<16x128xf32>
    %231 = arith.addf %223, %230 : vector<16x128xf32>
    %c0_222 = arith.constant 0 : index
    %c0_223 = arith.constant 0 : index
    %c0_224 = arith.constant 0 : index
    %232 = vector.load %arg14[%c0_222, %c0_223, %c0_224] : memref<1x16x128xf32, #tpu.memory_space<vmem>>, vector<1x16x128xf32>
    %233 = vector.shape_cast %232 : vector<1x16x128xf32> to vector<16x128xf32>
    %234 = vector.shape_cast %231 : vector<16x128xf32> to vector<1x16x128xf32>
    tpu.vector_store %arg14[%c0_222, %c0_223, %c0_224], %234 {strides = array<i32>} : memref<1x16x128xf32, #tpu.memory_space<vmem>>, vector<1x16x128xf32>,
    return
  }
  func.func @transform_0(%arg0: i32) -> i32 {
    %c0_i32 = arith.constant 0 : i32
    %c0_i32_0 = arith.constant 0 : i32
    return %c0_i32 : i32
  }
  func.func @transform_1(%arg0: i32) -> (i32, i32, i32, i32) {
    %c0_i32 = arith.constant 0 : i32
    %c0_i32_0 = arith.constant 0 : i32
    %c0_i32_1 = arith.constant 0 : i32
    %c0_i32_2 = arith.constant 0 : i32
    return %arg0, %c0_i32, %c0_i32_0, %c0_i32_1 : i32, i32, i32, i32
  }
  func.func @transform_2(%arg0: i32) -> (i32, i32, i32) {
    %c0_i32 = arith.constant 0 : i32
    %c0_i32_0 = arith.constant 0 : i32
    %c0_i32_1 = arith.constant 0 : i32
    %c0_i32_2 = arith.constant 0 : i32
    return %c0_i32, %c0_i32_0, %c0_i32_1 : i32, i32, i32
  }
  func.func @transform_3(%arg0: i32) -> (i32, i32) {
    %c0_i32 = arith.constant 0 : i32
    %c0_i32_0 = arith.constant 0 : i32
    %c0_i32_1 = arith.constant 0 : i32
    return %c0_i32, %c0_i32_0 : i32, i32
  }
  func.func @transform_4(%arg0: i32) -> (i32, i32, i32) {
    %c0_i32 = arith.constant 0 : i32
    %c0_i32_0 = arith.constant 0 : i32
    %c0_i32_1 = arith.constant 0 : i32
    %c0_i32_2 = arith.constant 0 : i32
    return %c0_i32, %c0_i32_0, %c0_i32_1 : i32, i32, i32
  }
  func.func @transform_5(%arg0: i32) -> (i32, i32) {
    %c0_i32 = arith.constant 0 : i32
    %c0_i32_0 = arith.constant 0 : i32
    %c0_i32_1 = arith.constant 0 : i32
    return %c0_i32, %c0_i32_0 : i32, i32
  }
  func.func @transform_6(%arg0: i32) -> (i32, i32) {
    %c0_i32 = arith.constant 0 : i32
    %c0_i32_0 = arith.constant 0 : i32
    %c0_i32_1 = arith.constant 0 : i32
    return %c0_i32, %c0_i32_0 : i32, i32
  }
  func.func @transform_7(%arg0: i32) -> (i32, i32) {
    %c0_i32 = arith.constant 0 : i32
    %c0_i32_0 = arith.constant 0 : i32
    %c0_i32_1 = arith.constant 0 : i32
    return %c0_i32, %c0_i32_0 : i32, i32
  }
  func.func @transform_8(%arg0: i32) -> (i32, i32) {
    %c0_i32 = arith.constant 0 : i32
    %c0_i32_0 = arith.constant 0 : i32
    %c0_i32_1 = arith.constant 0 : i32
    return %c0_i32, %c0_i32_0 : i32, i32
  }
  func.func @transform_9(%arg0: i32) -> (i32, i32) {
    %c0_i32 = arith.constant 0 : i32
    %c0_i32_0 = arith.constant 0 : i32
    %c0_i32_1 = arith.constant 0 : i32
    return %c0_i32, %c0_i32_0 : i32, i32
  }
  func.func @transform_10(%arg0: i32) -> (i32, i32, i32) {
    %c0_i32 = arith.constant 0 : i32
    %c0_i32_0 = arith.constant 0 : i32
    %c0_i32_1 = arith.constant 0 : i32
    %c0_i32_2 = arith.constant 0 : i32
    return %c0_i32, %c0_i32_0, %c0_i32_1 : i32, i32, i32
  }
  func.func @transform_11(%arg0: i32) -> (i32, i32, i32) {
    %c0_i32 = arith.constant 0 : i32
    %c0_i32_0 = arith.constant 0 : i32
    %c0_i32_1 = arith.constant 0 : i32
    %c0_i32_2 = arith.constant 0 : i32
    return %c0_i32, %c0_i32_0, %c0_i32_1 : i32, i32, i32
  }
  func.func @transform_12(%arg0: i32) -> (i32, i32) {
    %c0_i32 = arith.constant 0 : i32
    %c0_i32_0 = arith.constant 0 : i32
    %c0_i32_1 = arith.constant 0 : i32
    return %c0_i32, %c0_i32_0 : i32, i32
  }
  func.func @transform_13(%arg0: i32) -> (i32, i32, i32) {
    %c0_i32 = arith.constant 0 : i32
    %c0_i32_0 = arith.constant 0 : i32
    %c0_i32_1 = arith.constant 0 : i32
    return %arg0, %c0_i32, %c0_i32_0 : i32, i32, i32
  }
}

</mosaic_0001>

<llo_original>
// kernel: tile.39
$region0: #{tile.39}
  %s0 = inlined_call_operand.vmem [shape: f32[8,32,32], index: 0, kind: input, shape index: {}]
  %s1 = inlined_call_operand.vmem [shape: f32[256,32], index: 1, kind: output, shape index: {}]
  %v2 = vld [vmem:[%s0] ss:$4 sm:$0xff]
  %vm3 = vcmask 261120
  %4 = vst.msk [vmem:[%s1] ss:$8 sm:$0x3] %vm3, %v2
  %s5 = scalar_lea.vmem %s1, 4294967281
  %6 = vst.msk [vmem:[%s5] ss:$8 sm:$0xc] %vm3, %v2
  %s7 = scalar_lea.vmem %s1, 4294967266
  %8 = vst.msk [vmem:[%s7] ss:$8 sm:$0x30] %vm3, %v2
  %s9 = scalar_lea.vmem %s1, 4294967251
  %10 = vst.msk [vmem:[%s9] ss:$8 sm:$0xc0] %vm3, %v2
  %s11 = scalar_lea.vmem %s0, 32
  %v12 = vld [vmem:[%s11] ss:$4 sm:$0xff]
  %vm13 = vcmask 261120
  %s14 = scalar_lea.vmem %s1, 4
  %15 = vst.msk [vmem:[%s14] ss:$8 sm:$0x3] %vm13, %v12
  %s16 = scalar_lea.vmem %s1, 4294967285
  %17 = vst.msk [vmem:[%s16] ss:$8 sm:$0xc] %vm13, %v12
  %s18 = scalar_lea.vmem %s1, 4294967270
  %19 = vst.msk [vmem:[%s18] ss:$8 sm:$0x30] %vm13, %v12
  %s20 = scalar_lea.vmem %s1, 4294967255
  %21 = vst.msk [vmem:[%s20] ss:$8 sm:$0xc0] %vm13, %v12
  %s22 = scalar_lea.vmem %s0, 64
  %v23 = vld [vmem:[%s22] ss:$4 sm:$0xff]
  %vm24 = vcmask 261120
  %s25 = scalar_lea.vmem %s1, 16
  %26 = vst.msk [vmem:[%s25] ss:$8 sm:$0x3] %vm24, %v23
  %s27 = scalar_lea.vmem %s1, 1
  %28 = vst.msk [vmem:[%s27] ss:$8 sm:$0xc] %vm24, %v23
  %s29 = scalar_lea.vmem %s1, 4294967282
  %30 = vst.msk [vmem:[%s29] ss:$8 sm:$0x30] %vm24, %v23
  %s31 = scalar_lea.vmem %s1, 4294967267
  %32 = vst.msk [vmem:[%s31] ss:$8 sm:$0xc0] %vm24, %v23
  %s33 = scalar_lea.vmem %s0, 96
  %v34 = vld [vmem:[%s33] ss:$4 sm:$0xff]
  %vm35 = vcmask 261120
  %s36 = scalar_lea.vmem %s1, 20
  %37 = vst.msk [vmem:[%s36] ss:$8 sm:$0x3] %vm35, %v34
  %s38 = scalar_lea.vmem %s1, 5
  %39 = vst.msk [vmem:[%s38] ss:$8 sm:$0xc] %vm35, %v34
  %s40 = scalar_lea.vmem %s1, 4294967286
  %41 = vst.msk [vmem:[%s40] ss:$8 sm:$0x30] %vm35, %v34
  %s42 = scalar_lea.vmem %s1, 4294967271
  %43 = vst.msk [vmem:[%s42] ss:$8 sm:$0xc0] %vm35, %v34
  %s44 = scalar_lea.vmem %s0, 128
  %v45 = vld [vmem:[%s44] ss:$4 sm:$0xff]
  %vm46 = vcmask 261120
  %s47 = scalar_lea.vmem %s1, 32
  %48 = vst.msk [vmem:[%s47] ss:$8 sm:$0x3] %vm46, %v45
  %s49 = scalar_lea.vmem %s1, 17
  %50 = vst.msk [vmem:[%s49] ss:$8 sm:$0xc] %vm46, %v45
  %s51 = scalar_lea.vmem %s1, 2
  %52 = vst.msk [vmem:[%s51] ss:$8 sm:$0x30] %vm46, %v45
  %s53 = scalar_lea.vmem %s1, 4294967283
  %54 = vst.msk [vmem:[%s53] ss:$8 sm:$0xc0] %vm46, %v45
  %s55 = scalar_lea.vmem %s0, 160
  %v56 = vld [vmem:[%s55] ss:$4 sm:$0xff]
  %vm57 = vcmask 261120
  %s58 = scalar_lea.vmem %s1, 36
  %59 = vst.msk [vmem:[%s58] ss:$8 sm:$0x3] %vm57, %v56
  %s60 = scalar_lea.vmem %s1, 21
  %61 = vst.msk [vmem:[%s60] ss:$8 sm:$0xc] %vm57, %v56
  %s62 = scalar_lea.vmem %s1, 6
  %63 = vst.msk [vmem:[%s62] ss:$8 sm:$0x30] %vm57, %v56
  %s64 = scalar_lea.vmem %s1, 4294967287
  %65 = vst.msk [vmem:[%s64] ss:$8 sm:$0xc0] %vm57, %v56
  %s66 = scalar_lea.vmem %s0, 192
  %v67 = vld [vmem:[%s66] ss:$4 sm:$0xff]
  %vm68 = vcmask 261120
  %s69 = scalar_lea.vmem %s1, 48
  %70 = vst.msk [vmem:[%s69] ss:$8 sm:$0x3] %vm68, %v67
  %s71 = scalar_lea.vmem %s1, 33
  %72 = vst.msk [vmem:[%s71] ss:$8 sm:$0xc] %vm68, %v67
  %s73 = scalar_lea.vmem %s1, 18
  %74 = vst.msk [vmem:[%s73] ss:$8 sm:$0x30] %vm68, %v67
  %s75 = scalar_lea.vmem %s1, 3
  %76 = vst.msk [vmem:[%s75] ss:$8 sm:$0xc0] %vm68, %v67
  %s77 = scalar_lea.vmem %s0, 224
  %v78 = vld [vmem:[%s77] ss:$4 sm:$0xff]
  %vm79 = vcmask 261120
  %s80 = scalar_lea.vmem %s1, 52
  %81 = vst.msk [vmem:[%s80] ss:$8 sm:$0x3] %vm79, %v78
  %s82 = scalar_lea.vmem %s1, 37
  %83 = vst.msk [vmem:[%s82] ss:$8 sm:$0xc] %vm79, %v78
  %s84 = scalar_lea.vmem %s1, 22
  %85 = vst.msk [vmem:[%s84] ss:$8 sm:$0x30] %vm79, %v78
  %s86 = scalar_lea.vmem %s1, 7
  %87 = vst.msk [vmem:[%s86] ss:$8 sm:$0xc0] %vm79, %v78
  %s88 = scalar_lea.vmem %s0, 3
  %v89 = vld [vmem:[%s88] ss:$8 sm:$0xf]
  %s90 = scalar_lea.vmem %s0, 3
  %v91 = vld [vmem:[%s90] ss:$8 sm:$0xf0]
  %vm92 = vcmask 1047556
  %v93 = vsel %vm92, %v91, %v89
  %94 = vrot.lane.b32.xlu0 %v93, 96
  %v95 = vpop.permute.xlu0 %94
  %vm96 = vcmask 1048320
  %97 = vst.msk [vmem:[%s1] sm:$0xff] %vm96, %v95
  %s98 = scalar_lea.vmem %s0, 131
  %v99 = vld [vmem:[%s98] ss:$8 sm:$0xf]
  %s100 = scalar_lea.vmem %s0, 131
  %v101 = vld [vmem:[%s100] ss:$8 sm:$0xf0]
  %vm102 = vcmask 1047556
  %v103 = vsel %vm102, %v101, %v99
  %104 = vrot.lane.b32.xlu0 %v103, 96
  %v105 = vpop.permute.xlu0 %104
  %vm106 = vcmask 1048320
  %s107 = scalar_lea.vmem %s1, 32
  %108 = vst.msk [vmem:[%s107] sm:$0xff] %vm106, %v105
  %s109 = scalar_lea.vmem %s0, 7
  %v110 = vld [vmem:[%s109] ss:$8 sm:$0xf]
  %s111 = scalar_lea.vmem %s0, 7
  %v112 = vld [vmem:[%s111] ss:$8 sm:$0xf0]
  %vm113 = vcmask 1047556
  %v114 = vsel %vm113, %v112, %v110
  %115 = vrot.lane.b32.xlu0 %v114, 96
  %v116 = vpop.permute.xlu0 %115
  %vm117 = vcmask 1048320
  %s118 = scalar_lea.vmem %s1, 8
  %119 = vst.msk [vmem:[%s118] sm:$0xff] %vm117, %v116
  %s120 = scalar_lea.vmem %s0, 135
  %v121 = vld [vmem:[%s120] ss:$8 sm:$0xf]
  %s122 = scalar_lea.vmem %s0, 135
  %v123 = vld [vmem:[%s122] ss:$8 sm:$0xf0]
  %vm124 = vcmask 1047556
  %v125 = vsel %vm124, %v123, %v121
  %126 = vrot.lane.b32.xlu0 %v125, 96
  %v127 = vpop.permute.xlu0 %126
  %vm128 = vcmask 1048320
  %s129 = scalar_lea.vmem %s1, 40
  %130 = vst.msk [vmem:[%s129] sm:$0xff] %vm128, %v127
  %s131 = scalar_lea.vmem %s0, 67
  %v132 = vld [vmem:[%s131] ss:$8 sm:$0xf]
  %s133 = scalar_lea.vmem %s0, 67
  %v134 = vld [vmem:[%s133] ss:$8 sm:$0xf0]
  %vm135 = vcmask 1047556
  %v136 = vsel %vm135, %v134, %v132
  %137 = vrot.lane.b32.xlu0 %v136, 96
  %v138 = vpop.permute.xlu0 %137
  %vm139 = vcmask 1048320
  %s140 = scalar_lea.vmem %s1, 16
  %141 = vst.msk [vmem:[%s140] sm:$0xff] %vm139, %v138
  %s142 = scalar_lea.vmem %s0, 195
  %v143 = vld [vmem:[%s142] ss:$8 sm:$0xf]
  %s144 = scalar_lea.vmem %s0, 195
  %v145 = vld [vmem:[%s144] ss:$8 sm:$0xf0]
  %vm146 = vcmask 1047556
  %v147 = vsel %vm146, %v145, %v143
  %148 = vrot.lane.b32.xlu0 %v147, 96
  %v149 = vpop.permute.xlu0 %148
  %vm150 = vcmask 1048320
  %s151 = scalar_lea.vmem %s1, 48
  %152 = vst.msk [vmem:[%s151] sm:$0xff] %vm150, %v149
  %s153 = scalar_lea.vmem %s0, 71
  %v154 = vld [vmem:[%s153] ss:$8 sm:$0xf]
  %s155 = scalar_lea.vmem %s0, 71
  %v156 = vld [vmem:[%s155] ss:$8 sm:$0xf0]
  %vm157 = vcmask 1047556
  %v158 = vsel %vm157, %v156, %v154
  %159 = vrot.lane.b32.xlu0 %v158, 96
  %v160 = vpop.permute.xlu0 %159
  %vm161 = vcmask 1048320
  %s162 = scalar_lea.vmem %s1, 24
  %163 = vst.msk [vmem:[%s162] sm:$0xff] %vm161, %v160
  %s164 = scalar_lea.vmem %s0, 199
  %v165 = vld [vmem:[%s164] ss:$8 sm:$0xf]
  %s166 = scalar_lea.vmem %s0, 199
  %v167 = vld [vmem:[%s166] ss:$8 sm:$0xf0]
  %vm168 = vcmask 1047556
  %v169 = vsel %vm168, %v167, %v165
  %170 = vrot.lane.b32.xlu0 %v169, 96
  %v171 = vpop.permute.xlu0 %170
  %vm172 = vcmask 1048320
  %s173 = scalar_lea.vmem %s1, 56
  %174 = vst.msk [vmem:[%s173] sm:$0xff] %vm172, %v171
  %s175 = scalar_lea.vmem %s0, 2
  %v176 = vld [vmem:[%s175] ss:$8 sm:$0xf]
  %s177 = scalar_lea.vmem %s0, 2
  %v178 = vld [vmem:[%s177] ss:$8 sm:$0xf0]
  %vm179 = vcmask 1047556
  %v180 = vsel %vm179, %v178, %v176
  %181 = vrot.lane.b32.xlu0 %v180, 64
  %v182 = vpop.permute.xlu0 %181
  %vm183 = vcmask 785920
  %184 = vst.msk [vmem:[%s1] sm:$0xff] %vm183, %v182
  %s185 = scalar_lea.vmem %s0, 130
  %v186 = vld [vmem:[%s185] ss:$8 sm:$0xf]
  %s187 = scalar_lea.vmem %s0, 130
  %v188 = vld [vmem:[%s187] ss:$8 sm:$0xf0]
  %vm189 = vcmask 1047556
  %v190 = vsel %vm189, %v188, %v186
  %191 = vrot.lane.b32.xlu0 %v190, 64
  %v192 = vpop.permute.xlu0 %191
  %vm193 = vcmask 785920
  %s194 = scalar_lea.vmem %s1, 32
  %195 = vst.msk [vmem:[%s194] sm:$0xff] %vm193, %v192
  %s196 = scalar_lea.vmem %s0, 6
  %v197 = vld [vmem:[%s196] ss:$8 sm:$0xf]
  %s198 = scalar_lea.vmem %s0, 6
  %v199 = vld [vmem:[%s198] ss:$8 sm:$0xf0]
  %vm200 = vcmask 1047556
  %v201 = vsel %vm200, %v199, %v197
  %202 = vrot.lane.b32.xlu0 %v201, 64
  %v203 = vpop.permute.xlu0 %202
  %vm204 = vcmask 785920
  %s205 = scalar_lea.vmem %s1, 8
  %206 = vst.msk [vmem:[%s205] sm:$0xff] %vm204, %v203
  %s207 = scalar_lea.vmem %s0, 134
  %v208 = vld [vmem:[%s207] ss:$8 sm:$0xf]
  %s209 = scalar_lea.vmem %s0, 134
  %v210 = vld [vmem:[%s209] ss:$8 sm:$0xf0]
  %vm211 = vcmask 1047556
  %v212 = vsel %vm211, %v210, %v208
  %213 = vrot.lane.b32.xlu0 %v212, 64
  %v214 = vpop.permute.xlu0 %213
  %vm215 = vcmask 785920
  %s216 = scalar_lea.vmem %s1, 40
  %217 = vst.msk [vmem:[%s216] sm:$0xff] %vm215, %v214
  %s218 = scalar_lea.vmem %s0, 66
  %v219 = vld [vmem:[%s218] ss:$8 sm:$0xf]
  %s220 = scalar_lea.vmem %s0, 66
  %v221 = vld [vmem:[%s220] ss:$8 sm:$0xf0]
  %vm222 = vcmask 1047556
  %v223 = vsel %vm222, %v221, %v219
  %224 = vrot.lane.b32.xlu0 %v223, 64
  %v225 = vpop.permute.xlu0 %224
  %vm226 = vcmask 785920
  %s227 = scalar_lea.vmem %s1, 16
  %228 = vst.msk [vmem:[%s227] sm:$0xff] %vm226, %v225
  %s229 = scalar_lea.vmem %s0, 194
  %v230 = vld [vmem:[%s229] ss:$8 sm:$0xf]
  %s231 = scalar_lea.vmem %s0, 194
  %v232 = vld [vmem:[%s231] ss:$8 sm:$0xf0]
  %vm233 = vcmask 1047556
  %v234 = vsel %vm233, %v232, %v230
  %235 = vrot.lane.b32.xlu0 %v234, 64
  %v236 = vpop.permute.xlu0 %235
  %vm237 = vcmask 785920
  %s238 = scalar_lea.vmem %s1, 48
  %239 = vst.msk [vmem:[%s238] sm:$0xff] %vm237, %v236
  %s240 = scalar_lea.vmem %s0, 70
  %v241 = vld [vmem:[%s240] ss:$8 sm:$0xf]
  %s242 = scalar_lea.vmem %s0, 70
  %v243 = vld [vmem:[%s242] ss:$8 sm:$0xf0]
  %vm244 = vcmask 1047556
  %v245 = vsel %vm244, %v243, %v241
  %246 = vrot.lane.b32.xlu0 %v245, 64
  %v247 = vpop.permute.xlu0 %246
  %vm248 = vcmask 785920
  %s249 = scalar_lea.vmem %s1, 24
  %250 = vst.msk [vmem:[%s249] sm:$0xff] %vm248, %v247
  %s251 = scalar_lea.vmem %s0, 198
  %v252 = vld [vmem:[%s251] ss:$8 sm:$0xf]
  %s253 = scalar_lea.vmem %s0, 198
  %v254 = vld [vmem:[%s253] ss:$8 sm:$0xf0]
  %vm255 = vcmask 1047556
  %v256 = vsel %vm255, %v254, %v252
  %257 = vrot.lane.b32.xlu0 %v256, 64
  %v258 = vpop.permute.xlu0 %257
  %vm259 = vcmask 785920
  %s260 = scalar_lea.vmem %s1, 56
  %261 = vst.msk [vmem:[%s260] sm:$0xff] %vm259, %v258
  %s262 = scalar_lea.vmem %s0, 1
  %v263 = vld [vmem:[%s262] ss:$8 sm:$0xf]
  %s264 = scalar_lea.vmem %s0, 1
  %v265 = vld [vmem:[%s264] ss:$8 sm:$0xf0]
  %vm266 = vcmask 1047556
  %v267 = vsel %vm266, %v265, %v263
  %268 = vrot.lane.b32.xlu0 %v267, 32
  %v269 = vpop.permute.xlu0 %268
  %vm270 = vcmask 523520
  %271 = vst.msk [vmem:[%s1] sm:$0xff] %vm270, %v269
  %s272 = scalar_lea.vmem %s0, 129
  %v273 = vld [vmem:[%s272] ss:$8 sm:$0xf]
  %s274 = scalar_lea.vmem %s0, 129
  %v275 = vld [vmem:[%s274] ss:$8 sm:$0xf0]
  %vm276 = vcmask 1047556
  %v277 = vsel %vm276, %v275, %v273
  %278 = vrot.lane.b32.xlu0 %v277, 32
  %v279 = vpop.permute.xlu0 %278
  %vm280 = vcmask 523520
  %s281 = scalar_lea.vmem %s1, 32
  %282 = vst.msk [vmem:[%s281] sm:$0xff] %vm280, %v279
  %s283 = scalar_lea.vmem %s0, 5
  %v284 = vld [vmem:[%s283] ss:$8 sm:$0xf]
  %s285 = scalar_lea.vmem %s0, 5
  %v286 = vld [vmem:[%s285] ss:$8 sm:$0xf0]
  %vm287 = vcmask 1047556
  %v288 = vsel %vm287, %v286, %v284
  %289 = vrot.lane.b32.xlu0 %v288, 32
  %v290 = vpop.permute.xlu0 %289
  %vm291 = vcmask 523520
  %s292 = scalar_lea.vmem %s1, 8
  %293 = vst.msk [vmem:[%s292] sm:$0xff] %vm291, %v290
  %s294 = scalar_lea.vmem %s0, 133
  %v295 = vld [vmem:[%s294] ss:$8 sm:$0xf]
  %s296 = scalar_lea.vmem %s0, 133
  %v297 = vld [vmem:[%s296] ss:$8 sm:$0xf0]
  %vm298 = vcmask 1047556
  %v299 = vsel %vm298, %v297, %v295
  %300 = vrot.lane.b32.xlu0 %v299, 32
  %v301 = vpop.permute.xlu0 %300
  %vm302 = vcmask 523520
  %s303 = scalar_lea.vmem %s1, 40
  %304 = vst.msk [vmem:[%s303] sm:$0xff] %vm302, %v301
  %s305 = scalar_lea.vmem %s0, 65
  %v306 = vld [vmem:[%s305] ss:$8 sm:$0xf]
  %s307 = scalar_lea.vmem %s0, 65
  %v308 = vld [vmem:[%s307] ss:$8 sm:$0xf0]
  %vm309 = vcmask 1047556
  %v310 = vsel %vm309, %v308, %v306
  %311 = vrot.lane.b32.xlu0 %v310, 32
  %v312 = vpop.permute.xlu0 %311
  %vm313 = vcmask 523520
  %s314 = scalar_lea.vmem %s1, 16
  %315 = vst.msk [vmem:[%s314] sm:$0xff] %vm313, %v312
  %s316 = scalar_lea.vmem %s0, 193
  %v317 = vld [vmem:[%s316] ss:$8 sm:$0xf]
  %s318 = scalar_lea.vmem %s0, 193
  %v319 = vld [vmem:[%s318] ss:$8 sm:$0xf0]
  %vm320 = vcmask 1047556
  %v321 = vsel %vm320, %v319, %v317
  %322 = vrot.lane.b32.xlu0 %v321, 32
  %v323 = vpop.permute.xlu0 %322
  %vm324 = vcmask 523520
  %s325 = scalar_lea.vmem %s1, 48
  %326 = vst.msk [vmem:[%s325] sm:$0xff] %vm324, %v323
  %s327 = scalar_lea.vmem %s0, 69
  %v328 = vld [vmem:[%s327] ss:$8 sm:$0xf]
  %s329 = scalar_lea.vmem %s0, 69
  %v330 = vld [vmem:[%s329] ss:$8 sm:$0xf0]
  %vm331 = vcmask 1047556
  %v332 = vsel %vm331, %v330, %v328
  %333 = vrot.lane.b32.xlu0 %v332, 32
  %v334 = vpop.permute.xlu0 %333
  %vm335 = vcmask 523520
  %s336 = scalar_lea.vmem %s1, 24
  %337 = vst.msk [vmem:[%s336] sm:$0xff] %vm335, %v334
  %s338 = scalar_lea.vmem %s0, 197
  %v339 = vld [vmem:[%s338] ss:$8 sm:$0xf]
  %s340 = scalar_lea.vmem %s0, 197
  %v341 = vld [vmem:[%s340] ss:$8 sm:$0xf0]
  %vm342 = vcmask 1047556
  %v343 = vsel %vm342, %v341, %v339
  %344 = vrot.lane.b32.xlu0 %v343, 32
  %v345 = vpop.permute.xlu0 %344
  %vm346 = vcmask 523520
  %s347 = scalar_lea.vmem %s1, 56
  %348 = vst.msk [vmem:[%s347] sm:$0xff] %vm346, %v345

// kernel: tile.28
$region0: #{tile.28}
  #allocation0 [shape = 's32[1]{0}', space=sflag, size = 0x4, scoped, tag = 'scoped memory for tile.28']
  %s0 = inlined_call_operand.vmem [shape: f32[32], index: 0, kind: input, shape index: {}]
  %s1 = inlined_call_operand.vmem [shape: f32[8,32], index: 1, kind: output, shape index: {}]
  // Predicated region
  $region2: #{tile.28} parent=0 // pred_check
    _
  $region3: #{tile.28} parent=0 // pred_check_branch
    %3 = sbr.rel (0) target = $region5
  $region4: #{tile.28} parent=0 // pred_region
    _
  $region5: #{tile.28} parent=0 // pred_fallthru
    _
  %v4 = vld [vmem:[%s0] ss:$0 sm:$0xff]
  %5 = vst [vmem:[%s1] sm:$0xff] %v4

// kernel: tile.29
$region0: #{tile.29}
  %s0 = inlined_call_operand.vmem [shape: f32[8,32], index: 0, kind: input, shape index: {}]
  %s1 = inlined_call_operand.vmem [shape: f32[1,256], index: 1, kind: output, shape index: {}]
  $region1: #{tile.29} parent=0
    #allocation0 [shape = 'u8[8192]{0}', space=vmem, size = 0x2000, scoped, tag = 'scoped mem for output reshape']
    %s2 = smov 3
    %v3 = vld [vmem:[%s0] ss:$4 sm:%s2]
    %vm4 = vcmask 261120
    %5 = vst.msk [vmem:[#allocation0] ss:$8 sm:$0x3] %vm4, %v3
    %s6 = scalar_lea.vmem %s0, 3
    %s7 = smov 3
    %v8 = vld [vmem:[%s6] ss:$4 sm:%s7]
    %9 = vrot.lane.b32.xlu0 %v8, 96
    %v10 = vpop.permute.xlu0 %9
    %vm11 = vcmask 1048320
    %12 = vst.msk [vmem:[#allocation0] ss:$8 sm:$0x3] %vm11, %v10
    %s13 = scalar_lea.vmem %s0, 2
    %s14 = smov 3
    %v15 = vld [vmem:[%s13] ss:$4 sm:%s14]
    %16 = vrot.lane.b32.xlu0 %v15, 64
    %v17 = vpop.permute.xlu0 %16
    %vm18 = vcmask 785920
    %19 = vst.msk [vmem:[#allocation0] ss:$8 sm:$0x3] %vm18, %v17
    %s20 = scalar_lea.vmem %s0, 1
    %s21 = smov 3
    %v22 = vld [vmem:[%s20] ss:$4 sm:%s21]
    %23 = vrot.lane.b32.xlu0 %v22, 32
    %v24 = vpop.permute.xlu0 %23
    %vm25 = vcmask 523520
    %26 = vst.msk [vmem:[#allocation0] ss:$8 sm:$0x3] %vm25, %v24
    %s28 = sshll.u32 1, 1
    %s29 = ssub.s32 %s28, 1
    %v31 = vld [vmem:[#allocation0] sm:%s29]
    %s32 = sshll.u32 1, 1
    %s33 = ssub.s32 %s32, 1
    %34 = vst [vmem:[%s1] sm:%s33] %v31
    %s35 = scalar_lea.vmem [#allocation0], 8
    %v36 = vld [vmem:[%s35] sm:%s29]
    %s37 = sshll.u32 1, 1
    %s38 = ssub.s32 %s37, 1
    %s39 = scalar_lea.vmem %s1, 1
    %40 = vst [vmem:[%s39] sm:%s38] %v36

// kernel: tile.48
$region0: #{tile.48}
  #allocation0 [shape = 's32[1]{0}', space=sflag, size = 0x4, scoped, tag = 'scoped memory for tile.48']
  %s0 = inlined_call_operand.vmem [shape: f32[32], index: 0, kind: input, shape index: {}]
  %s1 = inlined_call_operand.vmem [shape: f32[4,32], index: 1, kind: output, shape index: {}]
  // Predicated region
  $region2: #{tile.48} parent=0 // pred_check
    _
  $region3: #{tile.48} parent=0 // pred_check_branch
    %3 = sbr.rel (0) target = $region5
  $region4: #{tile.48} parent=0 // pred_region
    _
  $region5: #{tile.48} parent=0 // pred_fallthru
    _
  %v4 = vld [vmem:[%s0] ss:$0 sm:$0xff]
  %5 = vst [vmem:[%s1] sm:$0xf] %v4

// kernel: tile.49
$region0: #{tile.49}
  %s0 = inlined_call_operand.vmem [shape: f32[4,32], index: 0, kind: input, shape index: {}]
  %s1 = inlined_call_operand.vmem [shape: f32[1,128], index: 1, kind: output, shape index: {}]
  $region1: #{tile.49} parent=0
    #allocation0 [shape = 'u8[4096]{0}', space=vmem, size = 0x1000, scoped, tag = 'scoped mem for output reshape']
    #allocation1 [shape = 'u8[4096]{0}', space=vmem, size = 0x1000, scoped, tag = 'scoped mem for input reshape']
    %s3 = sshll.u32 1, 4
    %s4 = ssub.s32 %s3, 1
    %v5 = vld [vmem:[%s0] sm:%s4]
    %6 = vst [vmem:[#allocation1] sm:%s4] %v5
    %v7 = vld [vmem:[#allocation1] sm:$0x1]
    %vm8 = vcmask 261120
    %9 = vst.msk [vmem:[#allocation0] sm:$0x1] %vm8, %v7
    %s10 = scalar_lea.vmem [#allocation1], 3
    %v11 = vld [vmem:[%s10] sm:$0x1]
    %12 = vrot.lane.b32.xlu0 %v11, 96
    %v13 = vpop.permute.xlu0 %12
    %vm14 = vcmask 1048320
    %15 = vst.msk [vmem:[#allocation0] sm:$0x1] %vm14, %v13
    %s16 = scalar_lea.vmem [#allocation1], 2
    %v17 = vld [vmem:[%s16] sm:$0x1]
    %18 = vrot.lane.b32.xlu0 %v17, 64
    %v19 = vpop.permute.xlu0 %18
    %vm20 = vcmask 785920
    %21 = vst.msk [vmem:[#allocation0] sm:$0x1] %vm20, %v19
    %s22 = scalar_lea.vmem [#allocation1], 1
    %v23 = vld [vmem:[%s22] sm:$0x1]
    %24 = vrot.lane.b32.xlu0 %v23, 32
    %v25 = vpop.permute.xlu0 %24
    %vm26 = vcmask 523520
    %27 = vst.msk [vmem:[#allocation0] sm:$0x1] %vm26, %v25
    %s29 = sshll.u32 1, 1
    %s30 = ssub.s32 %s29, 1
    %v32 = vld [vmem:[#allocation0] sm:%s30]
    %s33 = sshll.u32 1, 1
    %s34 = ssub.s32 %s33, 1
    %35 = vst [vmem:[%s1] sm:%s34] %v32

// kernel: encoder_block.1
$region0: #{encoder_block.1}
  #allocation0 [shape = 'u32[]', space=smem, size = 0x4, offset = 0x4, fixed_abs, tag = 'smem constant byte address 0x4 - core index']
  #allocation1 [shape = 'u32[144,128]{1,0:T(1,128)}', space=vmem, size = 0x12000, scoped, tag = 'internal scratch']
  #allocation2 [shape = 'bf16[10,10,32]{2,1,0:T(8,128)(2,1)}', space=vmem, size = 0xa000, scoped, tag = 'scratch operand']
  #allocation3 [shape = 'bf16[10,10,256]{2,1,0:T(8,128)(2,1)}', space=vmem, size = 0x14000, scoped, tag = 'scratch operand']
  %s0 = inlined_call_operand.vmem [shape: f32[2], index: 0, kind: input, shape index: {}]
  %s1 = inlined_call_operand.vmem [shape: bf16[2,8,8,32], index: 1, kind: input, shape index: {}]
  %s2 = inlined_call_operand.vmem [shape: bf16[9,32,256], index: 2, kind: input, shape index: {}]
  %s3 = inlined_call_operand.vmem [shape: f32[1,256], index: 3, kind: input, shape index: {}]
  %s4 = inlined_call_operand.vmem [shape: bf16[9,256,256], index: 4, kind: input, shape index: {}]
  %s5 = inlined_call_operand.vmem [shape: f32[1,256], index: 5, kind: input, shape index: {}]
  %s6 = inlined_call_operand.vmem [shape: f32[256,32], index: 6, kind: input, shape index: {}]
  %s7 = inlined_call_operand.vmem [shape: f32[32,256], index: 7, kind: input, shape index: {}]
  %s8 = inlined_call_operand.vmem [shape: bf16[32,256], index: 8, kind: input, shape index: {}]
  %s9 = inlined_call_operand.vmem [shape: f32[1,256], index: 9, kind: input, shape index: {}]
  %s10 = inlined_call_operand.vmem [shape: bf16[4,16,64], index: 10, kind: input, shape index: {}]
  %s11 = inlined_call_operand.vmem [shape: bf16[4,256,128], index: 11, kind: input, shape index: {}]
  %s12 = inlined_call_operand.vmem [shape: f32[1,128], index: 12, kind: input, shape index: {}]
  %s13 = inlined_call_operand.vmem [shape: f32[2,16,128], index: 13, kind: output, shape index: {}]
  %s14 = sld [smem:[#allocation0]]
  $region89: #{encoder_block.1} parent=0
    _
  %s16 = ssub.s32 1, %s14
  %s17 = scalar_select 0, %s16, %s14
  $region1: #{encoder_block.1} parent=0
    #allocation4 [shape = 'u8[512]{0}', space=smem, size = 0x200, scoped, tag = 'input window, operand 0, single buffered']
    #allocation5 [shape = 's32[2]{0}', space=sflag, size = 0x8, scoped, tag = 'scoped memory for encoder_block.1']
    %18 = vsyncpa [#allocation5], 0
    loop: start=0, step=1, limit=4
    $region2: #{encoder_block.1} parent=1 // loop_pre_header
      _
    $region3: #{encoder_block.1} parent=1 // loop_header
      %s20 = sphi 0, %s24
      %p21 = scmp.ge.s32.totalorder %s20, 4
      %s28 = sphi 0, %s28
      %s30 = sphi 0, %s28
      %s31 = sphi 0, %s30
      %s45 = sphi 0, %s31
      %s51 = sphi 0, %s53
      %s54 = sphi 0, %s51
      %s55 = sphi 0, %s54
      %s71 = sphi 0, %s55
      %s75 = sphi 0, %s75
      %s77 = sphi 0, %s75
      %s78 = sphi 0, %s77
      %s92 = sphi 0, %s78
      %s96 = sphi 0, %s96
      %s98 = sphi 0, %s96
      %s99 = sphi 0, %s98
      %s113 = sphi 0, %s99
      %s117 = sphi 0, %s117
      %s119 = sphi 0, %s117
      %s120 = sphi 0, %s119
      %s134 = sphi 0, %s120
      %s138 = sphi 0, %s138
      %s140 = sphi 0, %s138
      %s141 = sphi 0, %s140
      %s155 = sphi 0, %s141
      %s159 = sphi 0, %s159
      %s161 = sphi 0, %s159
      %s162 = sphi 0, %s161
      %s176 = sphi 0, %s162
      %s180 = sphi 0, %s180
      %s182 = sphi 0, %s180
      %s183 = sphi 0, %s182
      %s197 = sphi 0, %s183
      %s201 = sphi 0, %s201
      %s203 = sphi 0, %s201
      %s204 = sphi 0, %s203
      %s218 = sphi 0, %s204
      %s222 = sphi 0, %s222
      %s224 = sphi 0, %s222
      %s225 = sphi 0, %s224
      %s239 = sphi 0, %s225
      %s243 = sphi 0, %s243
      %s245 = sphi 0, %s243
      %s246 = sphi 0, %s245
      %s260 = sphi 0, %s246
      %s264 = sphi 0, %s264
      %s266 = sphi 0, %s264
      %s267 = sphi 0, %s266
      %s281 = sphi 0, %s267
      %s285 = sphi 0, %s285
      %s287 = sphi 0, %s285
      %s288 = sphi 0, %s287
      %s302 = sphi 0, %s288
      %s308 = sphi 0, %s310
      %s311 = sphi 0, %s308
      %s312 = sphi 0, %s311
      %s328 = sphi 0, %s312
    $region4: #{encoder_block.1} parent=1 // loop_header_branch
      %23 = sbr.rel (%p21) target = $region8
    $region5: #{encoder_block.1} parent=1 // loop_body
      %s25 = ssub.s32 %s20, 1
      %s26 = ssub.s32 %s20, 2
      %s27 = sadd.s32 %s20, 1
      %s29 = sadd.s32 %s28, 1
      %p32 = scmp.eq.s32.totalorder %s20, 1
      %p33 = scmp.ne.s32.totalorder %s28, %s30
      %p34 = scmp.eq.s32.totalorder %s20, 0
      %p35 = por %p33, %p34
      %p36 = scmp.ne.s32.totalorder %s28, %s30
      %p37 = scmp.eq.s32.totalorder %s25, 1
      %p38 = por %p36, %p37
      %p39 = scmp.ne.s32.totalorder %s30, %s31
      %p40 = scmp.eq.s32.totalorder %s25, 0
      %p41 = por %p39, %p40
      %p42 = scmp.ne.s32.totalorder %s30, %s31
      %p43 = scmp.eq.s32.totalorder %s26, 1
      %p44 = por %p42, %p43
      %p46 = scmp.ne.s32.totalorder %s31, %s45
      %p47 = scmp.eq.s32.totalorder %s26, 0
      %p48 = por %p46, %p47
      %s49 = ssub.s32 %s20, %s27
      %p50 = scmp.eq.s32.totalorder %s49, 0
      %s52 = sadd.s32 %s51, 1
      %s53 = scalar_select %p50, %s51, %s52
      %p56 = pneg %p50
      %p57 = scmp.eq.s32.totalorder %s20, 1
      %p58 = por %p56, %p57
      %p59 = scmp.ne.s32.totalorder %s51, %s54
      %p60 = scmp.eq.s32.totalorder %s20, 0
      %p61 = por %p59, %p60
      %p62 = scmp.ne.s32.totalorder %s51, %s54
      %p63 = scmp.eq.s32.totalorder %s25, 1
      %p64 = por %p62, %p63
      %p65 = scmp.ne.s32.totalorder %s54, %s55
      %p66 = scmp.eq.s32.totalorder %s25, 0
      %p67 = por %p65, %p66
      %p68 = scmp.ne.s32.totalorder %s54, %s55
      %p69 = scmp.eq.s32.totalorder %s26, 1
      %p70 = por %p68, %p69
      %p72 = scmp.ne.s32.totalorder %s55, %s71
      %p73 = scmp.eq.s32.totalorder %s26, 0
      %p74 = por %p72, %p73
      %s76 = sadd.s32 %s75, 1
      %p79 = scmp.eq.s32.totalorder %s20, 1
      %p80 = scmp.ne.s32.totalorder %s75, %s77
      %p81 = scmp.eq.s32.totalorder %s20, 0
      %p82 = por %p80, %p81
      %p83 = scmp.ne.s32.totalorder %s75, %s77
      %p84 = scmp.eq.s32.totalorder %s25, 1
      %p85 = por %p83, %p84
      %p86 = scmp.ne.s32.totalorder %s77, %s78
      %p87 = scmp.eq.s32.totalorder %s25, 0
      %p88 = por %p86, %p87
      %p89 = scmp.ne.s32.totalorder %s77, %s78
      %p90 = scmp.eq.s32.totalorder %s26, 1
      %p91 = por %p89, %p90
      %p93 = scmp.ne.s32.totalorder %s78, %s92
      %p94 = scmp.eq.s32.totalorder %s26, 0
      %p95 = por %p93, %p94
      %s97 = sadd.s32 %s96, 1
      %p100 = scmp.eq.s32.totalorder %s20, 1
      %p101 = scmp.ne.s32.totalorder %s96, %s98
      %p102 = scmp.eq.s32.totalorder %s20, 0
      %p103 = por %p101, %p102
      %p104 = scmp.ne.s32.totalorder %s96, %s98
      %p105 = scmp.eq.s32.totalorder %s25, 1
      %p106 = por %p104, %p105
      %p107 = scmp.ne.s32.totalorder %s98, %s99
      %p108 = scmp.eq.s32.totalorder %s25, 0
      %p109 = por %p107, %p108
      %p110 = scmp.ne.s32.totalorder %s98, %s99
      %p111 = scmp.eq.s32.totalorder %s26, 1
      %p112 = por %p110, %p111
      %p114 = scmp.ne.s32.totalorder %s99, %s113
      %p115 = scmp.eq.s32.totalorder %s26, 0
      %p116 = por %p114, %p115
      %s118 = sadd.s32 %s117, 1
      %p121 = scmp.eq.s32.totalorder %s20, 1
      %p122 = scmp.ne.s32.totalorder %s117, %s119
      %p123 = scmp.eq.s32.totalorder %s20, 0
      %p124 = por %p122, %p123
      %p125 = scmp.ne.s32.totalorder %s117, %s119
      %p126 = scmp.eq.s32.totalorder %s25, 1
      %p127 = por %p125, %p126
      %p128 = scmp.ne.s32.totalorder %s119, %s120
      %p129 = scmp.eq.s32.totalorder %s25, 0
      %p130 = por %p128, %p129
      %p131 = scmp.ne.s32.totalorder %s119, %s120
      %p132 = scmp.eq.s32.totalorder %s26, 1
      %p133 = por %p131, %p132
      %p135 = scmp.ne.s32.totalorder %s120, %s134
      %p136 = scmp.eq.s32.totalorder %s26, 0
      %p137 = por %p135, %p136
      %s139 = sadd.s32 %s138, 1
      %p142 = scmp.eq.s32.totalorder %s20, 1
      %p143 = scmp.ne.s32.totalorder %s138, %s140
      %p144 = scmp.eq.s32.totalorder %s20, 0
      %p145 = por %p143, %p144
      %p146 = scmp.ne.s32.totalorder %s138, %s140
      %p147 = scmp.eq.s32.totalorder %s25, 1
      %p148 = por %p146, %p147
      %p149 = scmp.ne.s32.totalorder %s140, %s141
      %p150 = scmp.eq.s32.totalorder %s25, 0
      %p151 = por %p149, %p150
      %p152 = scmp.ne.s32.totalorder %s140, %s141
      %p153 = scmp.eq.s32.totalorder %s26, 1
      %p154 = por %p152, %p153
      %p156 = scmp.ne.s32.totalorder %s141, %s155
      %p157 = scmp.eq.s32.totalorder %s26, 0
      %p158 = por %p156, %p157
      %s160 = sadd.s32 %s159, 1
      %p163 = scmp.eq.s32.totalorder %s20, 1
      %p164 = scmp.ne.s32.totalorder %s159, %s161
      %p165 = scmp.eq.s32.totalorder %s20, 0
      %p166 = por %p164, %p165
      %p167 = scmp.ne.s32.totalorder %s159, %s161
      %p168 = scmp.eq.s32.totalorder %s25, 1
      %p169 = por %p167, %p168
      %p170 = scmp.ne.s32.totalorder %s161, %s162
      %p171 = scmp.eq.s32.totalorder %s25, 0
      %p172 = por %p170, %p171
      %p173 = scmp.ne.s32.totalorder %s161, %s162
      %p174 = scmp.eq.s32.totalorder %s26, 1
      %p175 = por %p173, %p174
      %p177 = scmp.ne.s32.totalorder %s162, %s176
      %p178 = scmp.eq.s32.totalorder %s26, 0
      %p179 = por %p177, %p178
      %s181 = sadd.s32 %s180, 1
      %p184 = scmp.eq.s32.totalorder %s20, 1
      %p185 = scmp.ne.s32.totalorder %s180, %s182
      %p186 = scmp.eq.s32.totalorder %s20, 0
      %p187 = por %p185, %p186
      %p188 = scmp.ne.s32.totalorder %s180, %s182
      %p189 = scmp.eq.s32.totalorder %s25, 1
      %p190 = por %p188, %p189
      %p191 = scmp.ne.s32.totalorder %s182, %s183
      %p192 = scmp.eq.s32.totalorder %s25, 0
      %p193 = por %p191, %p192
      %p194 = scmp.ne.s32.totalorder %s182, %s183
      %p195 = scmp.eq.s32.totalorder %s26, 1
      %p196 = por %p194, %p195
      %p198 = scmp.ne.s32.totalorder %s183, %s197
      %p199 = scmp.eq.s32.totalorder %s26, 0
      %p200 = por %p198, %p199
      %s202 = sadd.s32 %s201, 1
      %p205 = scmp.eq.s32.totalorder %s20, 1
      %p206 = scmp.ne.s32.totalorder %s201, %s203
      %p207 = scmp.eq.s32.totalorder %s20, 0
      %p208 = por %p206, %p207
      %p209 = scmp.ne.s32.totalorder %s201, %s203
      %p210 = scmp.eq.s32.totalorder %s25, 1
      %p211 = por %p209, %p210
      %p212 = scmp.ne.s32.totalorder %s203, %s204
      %p213 = scmp.eq.s32.totalorder %s25, 0
      %p214 = por %p212, %p213
      %p215 = scmp.ne.s32.totalorder %s203, %s204
      %p216 = scmp.eq.s32.totalorder %s26, 1
      %p217 = por %p215, %p216
      %p219 = scmp.ne.s32.totalorder %s204, %s218
      %p220 = scmp.eq.s32.totalorder %s26, 0
      %p221 = por %p219, %p220
      %s223 = sadd.s32 %s222, 1
      %p226 = scmp.eq.s32.totalorder %s20, 1
      %p227 = scmp.ne.s32.totalorder %s222, %s224
      %p228 = scmp.eq.s32.totalorder %s20, 0
      %p229 = por %p227, %p228
      %p230 = scmp.ne.s32.totalorder %s222, %s224
      %p231 = scmp.eq.s32.totalorder %s25, 1
      %p232 = por %p230, %p231
      %p233 = scmp.ne.s32.totalorder %s224, %s225
      %p234 = scmp.eq.s32.totalorder %s25, 0
      %p235 = por %p233, %p234
      %p236 = scmp.ne.s32.totalorder %s224, %s225
      %p237 = scmp.eq.s32.totalorder %s26, 1
      %p238 = por %p236, %p237
      %p240 = scmp.ne.s32.totalorder %s225, %s239
      %p241 = scmp.eq.s32.totalorder %s26, 0
      %p242 = por %p240, %p241
      %s244 = sadd.s32 %s243, 1
      %p247 = scmp.eq.s32.totalorder %s20, 1
      %p248 = scmp.ne.s32.totalorder %s243, %s245
      %p249 = scmp.eq.s32.totalorder %s20, 0
      %p250 = por %p248, %p249
      %p251 = scmp.ne.s32.totalorder %s243, %s245
      %p252 = scmp.eq.s32.totalorder %s25, 1
      %p253 = por %p251, %p252
      %p254 = scmp.ne.s32.totalorder %s245, %s246
      %p255 = scmp.eq.s32.totalorder %s25, 0
      %p256 = por %p254, %p255
      %p257 = scmp.ne.s32.totalorder %s245, %s246
      %p258 = scmp.eq.s32.totalorder %s26, 1
      %p259 = por %p257, %p258
      %p261 = scmp.ne.s32.totalorder %s246, %s260
      %p262 = scmp.eq.s32.totalorder %s26, 0
      %p263 = por %p261, %p262
      %s265 = sadd.s32 %s264, 1
      %p268 = scmp.eq.s32.totalorder %s20, 1
      %p269 = scmp.ne.s32.totalorder %s264, %s266
      %p270 = scmp.eq.s32.totalorder %s20, 0
      %p271 = por %p269, %p270
      %p272 = scmp.ne.s32.totalorder %s264, %s266
      %p273 = scmp.eq.s32.totalorder %s25, 1
      %p274 = por %p272, %p273
      %p275 = scmp.ne.s32.totalorder %s266, %s267
      %p276 = scmp.eq.s32.totalorder %s25, 0
      %p277 = por %p275, %p276
      %p278 = scmp.ne.s32.totalorder %s266, %s267
      %p279 = scmp.eq.s32.totalorder %s26, 1
      %p280 = por %p278, %p279
      %p282 = scmp.ne.s32.totalorder %s267, %s281
      %p283 = scmp.eq.s32.totalorder %s26, 0
      %p284 = por %p282, %p283
      %s286 = sadd.s32 %s285, 1
      %p289 = scmp.eq.s32.totalorder %s20, 1
      %p290 = scmp.ne.s32.totalorder %s285, %s287
      %p291 = scmp.eq.s32.totalorder %s20, 0
      %p292 = por %p290, %p291
      %p293 = scmp.ne.s32.totalorder %s285, %s287
      %p294 = scmp.eq.s32.totalorder %s25, 1
      %p295 = por %p293, %p294
      %p296 = scmp.ne.s32.totalorder %s287, %s288
      %p297 = scmp.eq.s32.totalorder %s25, 0
      %p298 = por %p296, %p297
      %p299 = scmp.ne.s32.totalorder %s287, %s288
      %p300 = scmp.eq.s32.totalorder %s26, 1
      %p301 = por %p299, %p300
      %p303 = scmp.ne.s32.totalorder %s288, %s302
      %p304 = scmp.eq.s32.totalorder %s26, 0
      %p305 = por %p303, %p304
      %s306 = ssub.s32 %s20, %s27
      %p307 = scmp.eq.s32.totalorder %s306, 0
      %s309 = sadd.s32 %s308, 1
      %s310 = scalar_select %p307, %s308, %s309
      %p313 = pneg %p307
      %p314 = scmp.eq.s32.totalorder %s20, 1
      %p315 = por %p313, %p314
      %p316 = scmp.ne.s32.totalorder %s308, %s311
      %p317 = scmp.eq.s32.totalorder %s20, 0
      %p318 = por %p316, %p317
      %p319 = scmp.ne.s32.totalorder %s308, %s311
      %p320 = scmp.eq.s32.totalorder %s25, 1
      %p321 = por %p319, %p320
      %p322 = scmp.ne.s32.totalorder %s311, %s312
      %p323 = scmp.eq.s32.totalorder %s25, 0
      %p324 = por %p322, %p323
      %p325 = scmp.ne.s32.totalorder %s311, %s312
      %p326 = scmp.eq.s32.totalorder %s26, 1
      %p327 = por %p325, %p326
      %p329 = scmp.ne.s32.totalorder %s312, %s328
      %p330 = scmp.eq.s32.totalorder %s26, 0
      %p331 = por %p329, %p330
      %p332 = scmp.le.s32.totalorder 1, %s20
      %p333 = scmp.lt.s32.totalorder %s20, 3
      %p334 = pnand %p332, %p333
      %p335 = pneg %p334
      // Predicated region
      $region9: #{encoder_block.1} parent=5 // pred_check
        _
      $region10: #{encoder_block.1} parent=5 // pred_check_branch
        %337 = sbr.rel (%p334) target = $region12
      $region11: #{encoder_block.1} parent=5 // pred_region
        %s338 = ssub.s32 %s20, 1
        // Predicated region
        $region13: #{encoder_block.1} parent=11 // pred_check
          %p339 = pneg %p41
        $region14: #{encoder_block.1} parent=11 // pred_check_branch
          %341 = sbr.rel (%p339) target = $region16
        $region15: #{encoder_block.1} parent=11 // pred_region
          %s343 = ssub.s32 16, 16
          %344 = vsyncadd [#allocation5], %s343
          %s346 = sshll.u32 %s0, 4
          %s347 = int_to_ptr.vmem [resolvable:$true] %s346
          %349 = dma.vmem_to_smem %s347, 16, [#allocation4], [#allocation5]
        $region16: #{encoder_block.1} parent=11 // pred_fallthru
          _
        // Predicated region
        $region17: #{encoder_block.1} parent=11 // pred_check
          %p350 = pneg %p88
        $region18: #{encoder_block.1} parent=11 // pred_check_branch
          %352 = sbr.rel (%p350) target = $region20
        $region19: #{encoder_block.1} parent=11 // pred_region
          _
        $region20: #{encoder_block.1} parent=11 // pred_fallthru
          _
        // Predicated region
        $region21: #{encoder_block.1} parent=11 // pred_check
          %p353 = pneg %p109
        $region22: #{encoder_block.1} parent=11 // pred_check_branch
          %355 = sbr.rel (%p353) target = $region24
        $region23: #{encoder_block.1} parent=11 // pred_region
          _
        $region24: #{encoder_block.1} parent=11 // pred_fallthru
          _
        // Predicated region
        $region25: #{encoder_block.1} parent=11 // pred_check
          %p356 = pneg %p130
        $region26: #{encoder_block.1} parent=11 // pred_check_branch
          %358 = sbr.rel (%p356) target = $region28
        $region27: #{encoder_block.1} parent=11 // pred_region
          _
        $region28: #{encoder_block.1} parent=11 // pred_fallthru
          _
        // Predicated region
        $region29: #{encoder_block.1} parent=11 // pred_check
          %p359 = pneg %p151
        $region30: #{encoder_block.1} parent=11 // pred_check_branch
          %361 = sbr.rel (%p359) target = $region32
        $region31: #{encoder_block.1} parent=11 // pred_region
          _
        $region32: #{encoder_block.1} parent=11 // pred_fallthru
          _
        // Predicated region
        $region33: #{encoder_block.1} parent=11 // pred_check
          %p362 = pneg %p172
        $region34: #{encoder_block.1} parent=11 // pred_check_branch
          %364 = sbr.rel (%p362) target = $region36
        $region35: #{encoder_block.1} parent=11 // pred_region
          _
        $region36: #{encoder_block.1} parent=11 // pred_fallthru
          _
        // Predicated region
        $region37: #{encoder_block.1} parent=11 // pred_check
          %p365 = pneg %p193
        $region38: #{encoder_block.1} parent=11 // pred_check_branch
          %367 = sbr.rel (%p365) target = $region40
        $region39: #{encoder_block.1} parent=11 // pred_region
          _
        $region40: #{encoder_block.1} parent=11 // pred_fallthru
          _
        // Predicated region
        $region41: #{encoder_block.1} parent=11 // pred_check
          %p368 = pneg %p214
        $region42: #{encoder_block.1} parent=11 // pred_check_branch
          %370 = sbr.rel (%p368) target = $region44
        $region43: #{encoder_block.1} parent=11 // pred_region
          _
        $region44: #{encoder_block.1} parent=11 // pred_fallthru
          _
        // Predicated region
        $region45: #{encoder_block.1} parent=11 // pred_check
          %p371 = pneg %p235
        $region46: #{encoder_block.1} parent=11 // pred_check_branch
          %373 = sbr.rel (%p371) target = $region48
        $region47: #{encoder_block.1} parent=11 // pred_region
          _
        $region48: #{encoder_block.1} parent=11 // pred_fallthru
          _
        // Predicated region
        $region49: #{encoder_block.1} parent=11 // pred_check
          %p374 = pneg %p256
        $region50: #{encoder_block.1} parent=11 // pred_check_branch
          %376 = sbr.rel (%p374) target = $region52
        $region51: #{encoder_block.1} parent=11 // pred_region
          _
        $region52: #{encoder_block.1} parent=11 // pred_fallthru
          _
        // Predicated region
        $region53: #{encoder_block.1} parent=11 // pred_check
          %p377 = pneg %p277
        $region54: #{encoder_block.1} parent=11 // pred_check_branch
          %379 = sbr.rel (%p377) target = $region56
        $region55: #{encoder_block.1} parent=11 // pred_region
          _
        $region56: #{encoder_block.1} parent=11 // pred_fallthru
          _
        // Predicated region
        $region57: #{encoder_block.1} parent=11 // pred_check
          %p380 = pneg %p298
        $region58: #{encoder_block.1} parent=11 // pred_check_branch
          %382 = sbr.rel (%p380) target = $region60
        $region59: #{encoder_block.1} parent=11 // pred_region
          _
        $region60: #{encoder_block.1} parent=11 // pred_fallthru
          _
      $region12: #{encoder_block.1} parent=5 // pred_fallthru
        _
      %p383 = scmp.lt.s32.totalorder %s20, 2
      // Predicated region
      $region61: #{encoder_block.1} parent=5 // pred_check
        %p384 = pneg %p383
      $region62: #{encoder_block.1} parent=5 // pred_check_branch
        %386 = sbr.rel (%p384) target = $region64
      $region63: #{encoder_block.1} parent=5 // pred_region
        // Predicated region
        $region65: #{encoder_block.1} parent=63 // pred_check
          %p387 = pneg %p61
        $region66: #{encoder_block.1} parent=63 // pred_check_branch
          %389 = sbr.rel (%p387) target = $region68
        $region67: #{encoder_block.1} parent=63 // pred_region
          %p390 = scmp.lt.s32.totalorder %s20, 1
          %s391 = scalar_select %p390, %s20, 1
          %s392 = smul.addr %s391, 8
          %s393 = smul.addr %s392, 4
          %s394 = scalar_lea.vmem %s1, %s393
        $region68: #{encoder_block.1} parent=63 // pred_fallthru
          _
      $region64: #{encoder_block.1} parent=5 // pred_fallthru
        _
      %p395 = scmp.le.s32.totalorder 1, %s20
      %p396 = scmp.lt.s32.totalorder %s20, 3
      %p397 = pnand %p395, %p396
      %p398 = pneg %p397
      // Predicated region
      $region69: #{encoder_block.1} parent=5 // pred_check
        _
      $region70: #{encoder_block.1} parent=5 // pred_check_branch
        %400 = sbr.rel (%p397) target = $region72
      $region71: #{encoder_block.1} parent=5 // pred_region
        %s401 = ssub.s32 %s20, 1
        // Predicated region
        $region73: #{encoder_block.1} parent=71 // pred_check
          %p402 = pneg %p41
        $region74: #{encoder_block.1} parent=71 // pred_check_branch
          %404 = sbr.rel (%p402) target = $region76
        $region75: #{encoder_block.1} parent=71 // pred_region
          %405 = dma.done [#allocation5], 16
        $region76: #{encoder_block.1} parent=71 // pred_fallthru
          _
        %406 = sfence
        %p407 = pneg %p41
        %p408 = pneg %p38
        %p409 = scmp.lt.s32.totalorder %s25, 1
        %s410 = scalar_select %p409, %s25, 1
        %s411 = smul.addr %s410, 8
        %s412 = smul.addr %s411, 4
        %s413 = scalar_lea.vmem %s1, %s412
        %p414 = pneg %p67
        %p415 = pneg %p64
        %p416 = pneg %p88
        %p417 = pneg %p85
        %p418 = pneg %p109
        %p419 = pneg %p106
        %p420 = pneg %p130
        %p421 = pneg %p127
        %p422 = pneg %p151
        %p423 = pneg %p148
        %p424 = pneg %p172
        %p425 = pneg %p169
        %p426 = pneg %p193
        %p427 = pneg %p190
        %p428 = pneg %p214
        %p429 = pneg %p211
        %p430 = pneg %p235
        %p431 = pneg %p232
        %p432 = pneg %p256
        %p433 = pneg %p253
        %p434 = pneg %p277
        %p435 = pneg %p274
        %p436 = pneg %p298
        %p437 = pneg %p295
        %p438 = pneg %p324
        %p439 = pneg %p321
        %p440 = scmp.lt.s32.totalorder %s25, 1
        %s441 = scalar_select %p440, %s25, 1
        %s442 = smul.addr %s441, 2
        %s443 = smul.addr %s442, 8
        %s444 = scalar_lea.vmem %s13, %s443
        %p445 = scmp.lt.s32.totalorder %s25, 1
        %s446 = scalar_select %p445, %s25, 1
        %s447 = smul.addr %s446, 8
        %s448 = smul.addr %s447, 4
        %s449 = scalar_lea.vmem %s1, %s448
        %p450 = scmp.lt.s32.totalorder %s25, 1
        %s451 = scalar_select %p450, %s25, 1
        %s452 = smul.addr %s451, 2
        %s453 = smul.addr %s452, 8
        %s454 = scalar_lea.vmem %s13, %s453
        %s456 = sld [smem:[#allocation4]]
        %s457 = sld [smem:[#allocation4 + $0x1]]
        %vm458 = vcmask 257024
        %459 = vst.msk [vmem:[#allocation2] sm:$0xf] %vm458, 0
        %vm460 = vcmask 253952
        %461 = vst.msk [vmem:[#allocation2 + $0x4] sm:$0x1] %vm460, 0
        %462 = vst.msk [vmem:[#allocation2 + $0x8] sm:$0xf] %vm458, 0
        %463 = vst.msk [vmem:[#allocation2 + $0xc] sm:$0x1] %vm460, 0
        %464 = vst.msk [vmem:[#allocation2 + $0x10] sm:$0xf] %vm458, 0
        %465 = vst.msk [vmem:[#allocation2 + $0x14] sm:$0x1] %vm460, 0
        %466 = vst.msk [vmem:[#allocation2 + $0x18] sm:$0xf] %vm458, 0
        %467 = vst.msk [vmem:[#allocation2 + $0x1c] sm:$0x1] %vm460, 0
        %468 = vst.msk [vmem:[#allocation2 + $0x20] sm:$0xf] %vm458, 0
        %469 = vst.msk [vmem:[#allocation2 + $0x24] sm:$0x1] %vm460, 0
        %470 = vst.msk [vmem:[#allocation2 + $0x28] sm:$0xf] %vm458, 0
        %471 = vst.msk [vmem:[#allocation2 + $0x2c] sm:$0x1] %vm460, 0
        %472 = vst.msk [vmem:[#allocation2 + $0x30] sm:$0xf] %vm458, 0
        %473 = vst.msk [vmem:[#allocation2 + $0x34] sm:$0x1] %vm460, 0
        %474 = vst.msk [vmem:[#allocation2 + $0x38] sm:$0xf] %vm458, 0
        %475 = vst.msk [vmem:[#allocation2 + $0x3c] sm:$0x1] %vm460, 0
        %476 = vst.msk [vmem:[#allocation2 + $0x40] sm:$0xf] %vm458, 0
        %477 = vst.msk [vmem:[#allocation2 + $0x44] sm:$0x1] %vm460, 0
        %478 = vst.msk [vmem:[#allocation2 + $0x48] sm:$0xf] %vm458, 0
        %479 = vst.msk [vmem:[#allocation2 + $0x4c] sm:$0x1] %vm460, 0
        %v480 = vld [vmem:[%s449] sm:$0xf]
        %v481 = vld [vmem:[%s449 + $0x4] sm:$0xf]
        %v482 = vld [vmem:[%s449 + $0x8] sm:$0xf]
        %v483 = vld [vmem:[%s449 + $0xc] sm:$0xf]
        %v484 = vld [vmem:[%s449 + $0x10] sm:$0xf]
        %v485 = vld [vmem:[%s449 + $0x14] sm:$0xf]
        %v486 = vld [vmem:[%s449 + $0x18] sm:$0xf]
        %v487 = vld [vmem:[%s449 + $0x1c] sm:$0xf]
        %v489 = vshrl.u32 %v480, 16
        %v491 = vrot.slane %v489, 7
        %v492 = vshll.u32 %v480, 16
        %v494 = vor.u32 %v491, %v492
        %v495 = vrot.slane %v491, 4
        %v497 = vshrl.u32 %v481, 16
        %v499 = vrot.slane %v497, 7
        %v500 = vshll.u32 %v481, 16
        %v502 = vor.u32 %v499, %v500
        %v503 = vrot.slane %v499, 4
        %v505 = vshrl.u32 %v482, 16
        %v507 = vrot.slane %v505, 7
        %v508 = vshll.u32 %v482, 16
        %v510 = vor.u32 %v507, %v508
        %v511 = vrot.slane %v507, 4
        %v513 = vshrl.u32 %v483, 16
        %v515 = vrot.slane %v513, 7
        %v516 = vshll.u32 %v483, 16
        %v518 = vor.u32 %v515, %v516
        %v519 = vrot.slane %v515, 4
        %v521 = vshrl.u32 %v484, 16
        %v523 = vrot.slane %v521, 7
        %v524 = vshll.u32 %v484, 16
        %v526 = vor.u32 %v523, %v524
        %v527 = vrot.slane %v523, 4
        %v529 = vshrl.u32 %v485, 16
        %v531 = vrot.slane %v529, 7
        %v532 = vshll.u32 %v485, 16
        %v534 = vor.u32 %v531, %v532
        %v535 = vrot.slane %v531, 4
        %v537 = vshrl.u32 %v486, 16
        %v539 = vrot.slane %v537, 7
        %v540 = vshll.u32 %v486, 16
        %v542 = vor.u32 %v539, %v540
        %v543 = vrot.slane %v539, 4
        %v545 = vshrl.u32 %v487, 16
        %v547 = vrot.slane %v545, 7
        %v548 = vshll.u32 %v487, 16
        %v550 = vor.u32 %v547, %v548
        %v551 = vrot.slane %v547, 4
        %s568 = scalar_lea.vmem [#allocation2], 8
        %vm569 = vcmask 257024
        %vm570 = vsmask.f32 7938
        %vm571 = vmand %vm569, %vm570
        %v572 = vld [vmem:[%s568] sm:$0xf]
        %v573 = vsel %vm571, %v494, %v572
        %574 = vst [vmem:[%s568] sm:$0xf] %v573
        %vm575 = vcmask 253952
        %vm576 = vsmask.f32 256
        %vm577 = vmand %vm575, %vm576
        %v578 = vld [vmem:[%s568 + $0x4] sm:$0x1]
        %v579 = vsel %vm577, %v495, %v578
        %580 = vst [vmem:[%s568 + $0x4] sm:$0x1] %v579
        %v581 = vld [vmem:[%s568 + $0x8] sm:$0xf]
        %v582 = vsel %vm571, %v502, %v581
        %583 = vst [vmem:[%s568 + $0x8] sm:$0xf] %v582
        %v584 = vld [vmem:[%s568 + $0xc] sm:$0x1]
        %v585 = vsel %vm577, %v503, %v584
        %586 = vst [vmem:[%s568 + $0xc] sm:$0x1] %v585
        %v587 = vld [vmem:[%s568 + $0x10] sm:$0xf]
        %v588 = vsel %vm571, %v510, %v587
        %589 = vst [vmem:[%s568 + $0x10] sm:$0xf] %v588
        %v590 = vld [vmem:[%s568 + $0x14] sm:$0x1]
        %v591 = vsel %vm577, %v511, %v590
        %592 = vst [vmem:[%s568 + $0x14] sm:$0x1] %v591
        %v593 = vld [vmem:[%s568 + $0x18] sm:$0xf]
        %v594 = vsel %vm571, %v518, %v593
        %595 = vst [vmem:[%s568 + $0x18] sm:$0xf] %v594
        %v596 = vld [vmem:[%s568 + $0x1c] sm:$0x1]
        %v597 = vsel %vm577, %v519, %v596
        %598 = vst [vmem:[%s568 + $0x1c] sm:$0x1] %v597
        %v599 = vld [vmem:[%s568 + $0x20] sm:$0xf]
        %v600 = vsel %vm571, %v526, %v599
        %601 = vst [vmem:[%s568 + $0x20] sm:$0xf] %v600
        %v602 = vld [vmem:[%s568 + $0x24] sm:$0x1]
        %v603 = vsel %vm577, %v527, %v602
        %604 = vst [vmem:[%s568 + $0x24] sm:$0x1] %v603
        %v605 = vld [vmem:[%s568 + $0x28] sm:$0xf]
        %v606 = vsel %vm571, %v534, %v605
        %607 = vst [vmem:[%s568 + $0x28] sm:$0xf] %v606
        %v608 = vld [vmem:[%s568 + $0x2c] sm:$0x1]
        %v609 = vsel %vm577, %v535, %v608
        %610 = vst [vmem:[%s568 + $0x2c] sm:$0x1] %v609
        %v611 = vld [vmem:[%s568 + $0x30] sm:$0xf]
        %v612 = vsel %vm571, %v542, %v611
        %613 = vst [vmem:[%s568 + $0x30] sm:$0xf] %v612
        %v614 = vld [vmem:[%s568 + $0x34] sm:$0x1]
        %v615 = vsel %vm577, %v543, %v614
        %616 = vst [vmem:[%s568 + $0x34] sm:$0x1] %v615
        %v617 = vld [vmem:[%s568 + $0x38] sm:$0xf]
        %v618 = vsel %vm571, %v550, %v617
        %619 = vst [vmem:[%s568 + $0x38] sm:$0xf] %v618
        %v620 = vld [vmem:[%s568 + $0x3c] sm:$0x1]
        %v621 = vsel %vm577, %v551, %v620
        %622 = vst [vmem:[%s568 + $0x3c] sm:$0x1] %v621
        %v623 = vld [vmem:[%s3] sm:$0x3]
        %v625 = vlaneseq
        %v626 = vshrl.u32 %v625, 7
        %v627 = vsub.s32 0, %v626
        %v628 = vrot.slane %v623, %v627
        %v629 = vlaneseq
        %v630 = vshrl.u32 %v629, 7
        %v631 = vsub.s32 1, %v630
        %v632 = vrot.slane %v623, %v631
        %v635 = vadd.f32 %v628, 0.0
        %v636 = vadd.f32 %v632, 0.0
        %v637 = vld [vmem:[#allocation2] sm:$0xf]
        %v638 = vld [vmem:[#allocation2 + $0x8] sm:$0xf]
        %v639 = vld [vmem:[#allocation2 + $0x10] sm:$0xf]
        %v640 = vld [vmem:[#allocation2 + $0x18] sm:$0xf]
        %v641 = vld [vmem:[#allocation2 + $0x20] sm:$0xf]
        %v642 = vld [vmem:[#allocation2 + $0x28] sm:$0xf]
        %v643 = vld [vmem:[#allocation2 + $0x30] sm:$0xf]
        %v644 = vld [vmem:[#allocation2 + $0x38] sm:$0xf]
        %v645 = vld [vmem:[%s2] sm:$0xff]
        %v646 = vld [vmem:[%s2 + $0x8] sm:$0xff]
        %v647 = vld [vmem:[%s2 + $0x10] sm:$0xff]
        %v648 = vld [vmem:[%s2 + $0x18] sm:$0xff]
        %v657 = vunpack.c.l.b16 %v637
        %v658 = vunpack.c.l.b16 %v638
        %v659 = vunpack.c.l.b16 %v639
        %v660 = vunpack.c.l.b16 %v640
        %v661 = vunpack.c.l.b16 %v641
        %v662 = vunpack.c.l.b16 %v642
        %v663 = vunpack.c.l.b16 %v643
        %v664 = vunpack.c.l.b16 %v644
        %v665 = vpack.c.b16 %v658, %v657
        %v666 = vpack.c.b16 %v660, %v659
        %v667 = vpack.c.b16 %v662, %v661
        %v668 = vpack.c.b16 %v664, %v663
        %v673 = vunpack.c.l.b16 %v645
        %v674 = vunpack.c.h.b16 %v645
        %v675 = vunpack.c.l.b16 %v646
        %v676 = vunpack.c.h.b16 %v646
        %v677 = vunpack.c.l.b16 %v647
        %v678 = vunpack.c.h.b16 %v647
        %v679 = vunpack.c.l.b16 %v648
        %v680 = vunpack.c.h.b16 %v648
        %v681 = vpack.c.b16 %v675, %v673
        %v682 = vpack.c.b16 %v676, %v674
        %v683 = vpack.c.b16 %v679, %v677
        %v684 = vpack.c.b16 %v680, %v678
        %vm689 = vcmask 261120
        %v691 = vsel %vm689, %v665, 0
        %v694 = vsel %vm689, %v666, 0
        %v697 = vsel %vm689, %v667, 0
        %v700 = vsel %vm689, %v668, 0
        %702 = vmatprep.subr.bf16.mxu0 0
        %703 = vmatpush1.bf16.msra.mxu0 0
        %704 = vmatprep.subr.bf16.mxu0 0
        %705 = vmatpush1.bf16.msra.mxu0 0
        %706 = vmatprep.subr.bf16.mxu0 0
        %707 = vmatpush1.bf16.msra.mxu0 0
        %708 = vmatprep.subr.bf16.mxu0 0
        %709 = vmatpush1.bf16.msra.mxu0 0
        %710 = vmatprep.subr.bf16.mxu0 0
        %711 = vmatpush1.bf16.msra.mxu0 0
        %712 = vmatprep.subr.bf16.mxu0 0
        %713 = vmatpush1.bf16.msra.mxu0 0
        %714 = vmatprep.subr.bf16.mxu0 %v684
        %715 = vmatpush1.bf16.msra.mxu0 %v683
        %716 = vmatprep.subr.bf16.mxu0 %v682
        %717 = vmatpush1.bf16.msra.mxu0 %v681
        %718 = vmatprep.subr.bf16.mxu0 0
        %719 = vmatpush2.bf16.msra.mxu0 0
        %720 = vmatprep.subr.bf16.mxu0 0
        %721 = vmatpush2.bf16.msra.mxu0 0
        %722 = vmatprep.subr.bf16.mxu0 0
        %723 = vmatpush2.bf16.msra.mxu0 0
        %724 = vmatprep.subr.bf16.mxu0 0
        %725 = vmatpush2.bf16.msra.mxu0 0
        %726 = vmatprep.subr.bf16.mxu0 0
        %727 = vmatpush2.bf16.msra.mxu0 0
        %728 = vmatprep.subr.bf16.mxu0 0
        %729 = vmatpush2.bf16.msra.mxu0 0
        %730 = vmatprep.subr.bf16.mxu0 0
        %731 = vmatpush2.bf16.msra.mxu0 0
        %732 = vmatprep.subr.bf16.mxu0 0
        %733 = vmatpush2.bf16.msra.mxu0 0
        %734 = vmatprep.mubr.bf16.mxu0 0
        %735 = vmatmul.mubr.bf16.gmra.mxu0 %v691
        %v736 = vpop.f32.mrf.mxu0
        %v737 = vadd.f32 0.0, %v736
        %v738 = vpop.f32.mrf.mxu0
        %v739 = vadd.f32 0.0, %v738
        %v740 = vpop.f32.mrf.mxu0
        %v741 = vadd.f32 0.0, %v740
        %v742 = vpop.f32.mrf.mxu0
        %v743 = vadd.f32 0.0, %v742
        %744 = vmatprep.mubr.bf16.mxu0 0
        %745 = vmatmul.mubr.bf16.gmra.mxu0 %v694
        %v746 = vpop.f32.mrf.mxu0
        %v747 = vadd.f32 0.0, %v746
        %v748 = vpop.f32.mrf.mxu0
        %v749 = vadd.f32 0.0, %v748
        %v750 = vpop.f32.mrf.mxu0
        %v751 = vadd.f32 0.0, %v750
        %v752 = vpop.f32.mrf.mxu0
        %v753 = vadd.f32 0.0, %v752
        %754 = vmatprep.mubr.bf16.mxu0 0
        %755 = vmatmul.mubr.bf16.gmra.mxu0 %v697
        %v756 = vpop.f32.mrf.mxu0
        %v757 = vadd.f32 0.0, %v756
        %v758 = vpop.f32.mrf.mxu0
        %v759 = vadd.f32 0.0, %v758
        %v760 = vpop.f32.mrf.mxu0
        %v761 = vadd.f32 0.0, %v760
        %v762 = vpop.f32.mrf.mxu0
        %v763 = vadd.f32 0.0, %v762
        %764 = vmatprep.mubr.bf16.mxu0 0
        %765 = vmatmul.mubr.bf16.gmra.mxu0 %v700
        %v766 = vpop.f32.mrf.mxu0
        %v767 = vadd.f32 0.0, %v766
        %v768 = vpop.f32.mrf.mxu0
        %v769 = vadd.f32 0.0, %v768
        %v770 = vpop.f32.mrf.mxu0
        %v771 = vadd.f32 0.0, %v770
        %v772 = vpop.f32.mrf.mxu0
        %v773 = vadd.f32 0.0, %v772
        %774 = vdwg.mxu0
        %v775 = vadd.f32 %v635, %v737
        %v776 = vadd.f32 %v636, %v739
        %v777 = vadd.f32 %v635, %v741
        %v778 = vadd.f32 %v636, %v743
        %v779 = vadd.f32 %v635, %v747
        %v780 = vadd.f32 %v636, %v749
        %v781 = vadd.f32 %v635, %v751
        %v782 = vadd.f32 %v636, %v753
        %v783 = vadd.f32 %v635, %v757
        %v784 = vadd.f32 %v636, %v759
        %v785 = vadd.f32 %v635, %v761
        %v786 = vadd.f32 %v636, %v763
        %v787 = vadd.f32 %v635, %v767
        %v788 = vadd.f32 %v636, %v769
        %v789 = vadd.f32 %v635, %v771
        %v790 = vadd.f32 %v636, %v773
        %v791 = vld [vmem:[#allocation2] sm:$0xf]
        %v792 = vld [vmem:[#allocation2 + $0x4] sm:$0x1]
        %v793 = vld [vmem:[#allocation2 + $0x8] sm:$0xf]
        %v794 = vld [vmem:[#allocation2 + $0xc] sm:$0x1]
        %v795 = vld [vmem:[#allocation2 + $0x10] sm:$0xf]
        %v796 = vld [vmem:[#allocation2 + $0x14] sm:$0x1]
        %v797 = vld [vmem:[#allocation2 + $0x18] sm:$0xf]
        %v798 = vld [vmem:[#allocation2 + $0x1c] sm:$0x1]
        %v799 = vld [vmem:[#allocation2 + $0x20] sm:$0xf]
        %v800 = vld [vmem:[#allocation2 + $0x24] sm:$0x1]
        %v801 = vld [vmem:[#allocation2 + $0x28] sm:$0xf]
        %v802 = vld [vmem:[#allocation2 + $0x2c] sm:$0x1]
        %v803 = vld [vmem:[#allocation2 + $0x30] sm:$0xf]
        %v804 = vld [vmem:[#allocation2 + $0x34] sm:$0x1]
        %v805 = vld [vmem:[#allocation2 + $0x38] sm:$0xf]
        %v806 = vld [vmem:[#allocation2 + $0x3c] sm:$0x1]
        %vm807 = vsmask.f32 3328
        %vm808 = vsmask.f32 7440
        %vm809 = vmor %vm807, %vm808
        %v811 = vshrl.u32 %v791, 16
        %v813 = vrot.slane %v811, 4
        %v814 = vshll.u32 %v791, 16
        %v816 = vrot.slane %v814, 5
        %v817 = vor.u32 %v813, %v816
        %v818 = vrot.slane %v817, 4
        %v820 = vshll.u32 %v792, 16
        %v822 = vrot.slane %v820, 5
        %v823 = vsel %vm809, %v818, %v822
        %v825 = vshrl.u32 %v793, 16
        %v827 = vrot.slane %v825, 4
        %v828 = vshll.u32 %v793, 16
        %v830 = vrot.slane %v828, 5
        %v831 = vor.u32 %v827, %v830
        %v832 = vrot.slane %v831, 4
        %v834 = vshll.u32 %v794, 16
        %v836 = vrot.slane %v834, 5
        %v837 = vsel %vm809, %v832, %v836
        %v839 = vshrl.u32 %v795, 16
        %v841 = vrot.slane %v839, 4
        %v842 = vshll.u32 %v795, 16
        %v844 = vrot.slane %v842, 5
        %v845 = vor.u32 %v841, %v844
        %v846 = vrot.slane %v845, 4
        %v848 = vshll.u32 %v796, 16
        %v850 = vrot.slane %v848, 5
        %v851 = vsel %vm809, %v846, %v850
        %v853 = vshrl.u32 %v797, 16
        %v855 = vrot.slane %v853, 4
        %v856 = vshll.u32 %v797, 16
        %v858 = vrot.slane %v856, 5
        %v859 = vor.u32 %v855, %v858
        %v860 = vrot.slane %v859, 4
        %v862 = vshll.u32 %v798, 16
        %v864 = vrot.slane %v862, 5
        %v865 = vsel %vm809, %v860, %v864
        %v867 = vshrl.u32 %v799, 16
        %v869 = vrot.slane %v867, 4
        %v870 = vshll.u32 %v799, 16
        %v872 = vrot.slane %v870, 5
        %v873 = vor.u32 %v869, %v872
        %v874 = vrot.slane %v873, 4
        %v876 = vshll.u32 %v800, 16
        %v878 = vrot.slane %v876, 5
        %v879 = vsel %vm809, %v874, %v878
        %v881 = vshrl.u32 %v801, 16
        %v883 = vrot.slane %v881, 4
        %v884 = vshll.u32 %v801, 16
        %v886 = vrot.slane %v884, 5
        %v887 = vor.u32 %v883, %v886
        %v888 = vrot.slane %v887, 4
        %v890 = vshll.u32 %v802, 16
        %v892 = vrot.slane %v890, 5
        %v893 = vsel %vm809, %v888, %v892
        %v895 = vshrl.u32 %v803, 16
        %v897 = vrot.slane %v895, 4
        %v898 = vshll.u32 %v803, 16
        %v900 = vrot.slane %v898, 5
        %v901 = vor.u32 %v897, %v900
        %v902 = vrot.slane %v901, 4
        %v904 = vshll.u32 %v804, 16
        %v906 = vrot.slane %v904, 5
        %v907 = vsel %vm809, %v902, %v906
        %v909 = vshrl.u32 %v805, 16
        %v911 = vrot.slane %v909, 4
        %v912 = vshll.u32 %v805, 16
        %v914 = vrot.slane %v912, 5
        %v915 = vor.u32 %v911, %v914
        %v916 = vrot.slane %v915, 4
        %v918 = vshll.u32 %v806, 16
        %v920 = vrot.slane %v918, 5
        %v921 = vsel %vm809, %v916, %v920
        %s922 = scalar_lea.vmem %s2, 32
        %v923 = vld [vmem:[%s922] sm:$0xff]
        %v924 = vld [vmem:[%s922 + $0x8] sm:$0xff]
        %v925 = vld [vmem:[%s922 + $0x10] sm:$0xff]
        %v926 = vld [vmem:[%s922 + $0x18] sm:$0xff]
        %v927 = vunpack.c.l.b16 %v823
        %v928 = vunpack.c.l.b16 %v837
        %v929 = vunpack.c.l.b16 %v851
        %v930 = vunpack.c.l.b16 %v865
        %v931 = vunpack.c.l.b16 %v879
        %v932 = vunpack.c.l.b16 %v893
        %v933 = vunpack.c.l.b16 %v907
        %v934 = vunpack.c.l.b16 %v921
        %v935 = vpack.c.b16 %v928, %v927
        %v936 = vpack.c.b16 %v930, %v929
        %v937 = vpack.c.b16 %v932, %v931
        %v938 = vpack.c.b16 %v934, %v933
        %v943 = vunpack.c.l.b16 %v923
        %v944 = vunpack.c.h.b16 %v923
        %v945 = vunpack.c.l.b16 %v924
        %v946 = vunpack.c.h.b16 %v924
        %v947 = vunpack.c.l.b16 %v925
        %v948 = vunpack.c.h.b16 %v925
        %v949 = vunpack.c.l.b16 %v926
        %v950 = vunpack.c.h.b16 %v926
        %v951 = vpack.c.b16 %v945, %v943
        %v952 = vpack.c.b16 %v946, %v944
        %v953 = vpack.c.b16 %v949, %v947
        %v954 = vpack.c.b16 %v950, %v948
        %v960 = vsel %vm689, %v935, 0
        %v963 = vsel %vm689, %v936, 0
        %v966 = vsel %vm689, %v937, 0
        %v969 = vsel %vm689, %v938, 0
        %971 = vmatprep.subr.bf16.mxu0 0
        %972 = vmatpush1.bf16.msra.mxu0 0
        %973 = vmatprep.subr.bf16.mxu0 0
        %974 = vmatpush1.bf16.msra.mxu0 0
        %975 = vmatprep.subr.bf16.mxu0 0
        %976 = vmatpush1.bf16.msra.mxu0 0
        %977 = vmatprep.subr.bf16.mxu0 0
        %978 = vmatpush1.bf16.msra.mxu0 0
        %979 = vmatprep.subr.bf16.mxu0 0
        %980 = vmatpush1.bf16.msra.mxu0 0
        %981 = vmatprep.subr.bf16.mxu0 0
        %982 = vmatpush1.bf16.msra.mxu0 0
        %983 = vmatprep.subr.bf16.mxu0 %v954
        %984 = vmatpush1.bf16.msra.mxu0 %v953
        %985 = vmatprep.subr.bf16.mxu0 %v952
        %986 = vmatpush1.bf16.msra.mxu0 %v951
        %987 = vmatprep.subr.bf16.mxu0 0
        %988 = vmatpush2.bf16.msra.mxu0 0
        %989 = vmatprep.subr.bf16.mxu0 0
        %990 = vmatpush2.bf16.msra.mxu0 0
        %991 = vmatprep.subr.bf16.mxu0 0
        %992 = vmatpush2.bf16.msra.mxu0 0
        %993 = vmatprep.subr.bf16.mxu0 0
        %994 = vmatpush2.bf16.msra.mxu0 0
        %995 = vmatprep.subr.bf16.mxu0 0
        %996 = vmatpush2.bf16.msra.mxu0 0
        %997 = vmatprep.subr.bf16.mxu0 0
        %998 = vmatpush2.bf16.msra.mxu0 0
        %999 = vmatprep.subr.bf16.mxu0 0
        %1000 = vmatpush2.bf16.msra.mxu0 0
        %1001 = vmatprep.subr.bf16.mxu0 0
        %1002 = vmatpush2.bf16.msra.mxu0 0
        %1003 = vmatprep.mubr.bf16.mxu0 0
        %1004 = vmatmul.mubr.bf16.gmra.mxu0 %v960
        %v1005 = vpop.f32.mrf.mxu0
        %v1006 = vadd.f32 0.0, %v1005
        %v1007 = vpop.f32.mrf.mxu0
        %v1008 = vadd.f32 0.0, %v1007
        %v1009 = vpop.f32.mrf.mxu0
        %v1010 = vadd.f32 0.0, %v1009
        %v1011 = vpop.f32.mrf.mxu0
        %v1012 = vadd.f32 0.0, %v1011
        %1013 = vmatprep.mubr.bf16.mxu0 0
        %1014 = vmatmul.mubr.bf16.gmra.mxu0 %v963
        %v1015 = vpop.f32.mrf.mxu0
        %v1016 = vadd.f32 0.0, %v1015
        %v1017 = vpop.f32.mrf.mxu0
        %v1018 = vadd.f32 0.0, %v1017
        %v1019 = vpop.f32.mrf.mxu0
        %v1020 = vadd.f32 0.0, %v1019
        %v1021 = vpop.f32.mrf.mxu0
        %v1022 = vadd.f32 0.0, %v1021
        %1023 = vmatprep.mubr.bf16.mxu0 0
        %1024 = vmatmul.mubr.bf16.gmra.mxu0 %v966
        %v1025 = vpop.f32.mrf.mxu0
        %v1026 = vadd.f32 0.0, %v1025
        %v1027 = vpop.f32.mrf.mxu0
        %v1028 = vadd.f32 0.0, %v1027
        %v1029 = vpop.f32.mrf.mxu0
        %v1030 = vadd.f32 0.0, %v1029
        %v1031 = vpop.f32.mrf.mxu0
        %v1032 = vadd.f32 0.0, %v1031
        %1033 = vmatprep.mubr.bf16.mxu0 0
        %1034 = vmatmul.mubr.bf16.gmra.mxu0 %v969
        %v1035 = vpop.f32.mrf.mxu0
        %v1036 = vadd.f32 0.0, %v1035
        %v1037 = vpop.f32.mrf.mxu0
        %v1038 = vadd.f32 0.0, %v1037
        %v1039 = vpop.f32.mrf.mxu0
        %v1040 = vadd.f32 0.0, %v1039
        %v1041 = vpop.f32.mrf.mxu0
        %v1042 = vadd.f32 0.0, %v1041
        %1043 = vdwg.mxu0
        %v1044 = vadd.f32 %v775, %v1006
        %v1045 = vadd.f32 %v776, %v1008
        %v1046 = vadd.f32 %v777, %v1010
        %v1047 = vadd.f32 %v778, %v1012
        %v1048 = vadd.f32 %v779, %v1016
        %v1049 = vadd.f32 %v780, %v1018
        %v1050 = vadd.f32 %v781, %v1020
        %v1051 = vadd.f32 %v782, %v1022
        %v1052 = vadd.f32 %v783, %v1026
        %v1053 = vadd.f32 %v784, %v1028
        %v1054 = vadd.f32 %v785, %v1030
        %v1055 = vadd.f32 %v786, %v1032
        %v1056 = vadd.f32 %v787, %v1036
        %v1057 = vadd.f32 %v788, %v1038
        %v1058 = vadd.f32 %v789, %v1040
        %v1059 = vadd.f32 %v790, %v1042
        %v1060 = vld [vmem:[#allocation2] sm:$0xe]
        %v1061 = vld [vmem:[#allocation2 + $0x8] sm:$0xe]
        %v1062 = vld [vmem:[#allocation2 + $0x10] sm:$0xe]
        %v1063 = vld [vmem:[#allocation2 + $0x18] sm:$0xe]
        %v1064 = vld [vmem:[#allocation2 + $0x20] sm:$0xe]
        %v1065 = vld [vmem:[#allocation2 + $0x28] sm:$0xe]
        %v1066 = vld [vmem:[#allocation2 + $0x30] sm:$0xe]
        %v1067 = vld [vmem:[#allocation2 + $0x38] sm:$0xe]
        %vm1084 = vcmask 1042432
        %vm1085 = vcmask 1046532
        %vm1086 = vmor %vm1084, %vm1085
        %v1087 = vrot.slane %v1060, 5
        %v1088 = vrot.slane %v1087, 4
        %v1089 = vrot.slane %v792, 5
        %v1090 = vsel %vm1086, %v1088, %v1089
        %v1091 = vrot.slane %v1061, 5
        %v1092 = vrot.slane %v1091, 4
        %v1093 = vrot.slane %v794, 5
        %v1094 = vsel %vm1086, %v1092, %v1093
        %v1095 = vrot.slane %v1062, 5
        %v1096 = vrot.slane %v1095, 4
        %v1097 = vrot.slane %v796, 5
        %v1098 = vsel %vm1086, %v1096, %v1097
        %v1099 = vrot.slane %v1063, 5
        %v1100 = vrot.slane %v1099, 4
        %v1101 = vrot.slane %v798, 5
        %v1102 = vsel %vm1086, %v1100, %v1101
        %v1103 = vrot.slane %v1064, 5
        %v1104 = vrot.slane %v1103, 4
        %v1105 = vrot.slane %v800, 5
        %v1106 = vsel %vm1086, %v1104, %v1105
        %v1107 = vrot.slane %v1065, 5
        %v1108 = vrot.slane %v1107, 4
        %v1109 = vrot.slane %v802, 5
        %v1110 = vsel %vm1086, %v1108, %v1109
        %v1111 = vrot.slane %v1066, 5
        %v1112 = vrot.slane %v1111, 4
        %v1113 = vrot.slane %v804, 5
        %v1114 = vsel %vm1086, %v1112, %v1113
        %v1115 = vrot.slane %v1067, 5
        %v1116 = vrot.slane %v1115, 4
        %v1117 = vrot.slane %v806, 5
        %v1118 = vsel %vm1086, %v1116, %v1117
        %s1119 = scalar_lea.vmem %s2, 64
        %v1120 = vld [vmem:[%s1119] sm:$0xff]
        %v1121 = vld [vmem:[%s1119 + $0x8] sm:$0xff]
        %v1122 = vld [vmem:[%s1119 + $0x10] sm:$0xff]
        %v1123 = vld [vmem:[%s1119 + $0x18] sm:$0xff]
        %v1124 = vunpack.c.l.b16 %v1090
        %v1125 = vunpack.c.l.b16 %v1094
        %v1126 = vunpack.c.l.b16 %v1098
        %v1127 = vunpack.c.l.b16 %v1102
        %v1128 = vunpack.c.l.b16 %v1106
        %v1129 = vunpack.c.l.b16 %v1110
        %v1130 = vunpack.c.l.b16 %v1114
        %v1131 = vunpack.c.l.b16 %v1118
        %v1132 = vpack.c.b16 %v1125, %v1124
        %v1133 = vpack.c.b16 %v1127, %v1126
        %v1134 = vpack.c.b16 %v1129, %v1128
        %v1135 = vpack.c.b16 %v1131, %v1130
        %v1140 = vunpack.c.l.b16 %v1120
        %v1141 = vunpack.c.h.b16 %v1120
        %v1142 = vunpack.c.l.b16 %v1121
        %v1143 = vunpack.c.h.b16 %v1121
        %v1144 = vunpack.c.l.b16 %v1122
        %v1145 = vunpack.c.h.b16 %v1122
        %v1146 = vunpack.c.l.b16 %v1123
        %v1147 = vunpack.c.h.b16 %v1123
        %v1148 = vpack.c.b16 %v1142, %v1140
        %v1149 = vpack.c.b16 %v1143, %v1141
        %v1150 = vpack.c.b16 %v1146, %v1144
        %v1151 = vpack.c.b16 %v1147, %v1145
        %v1157 = vsel %vm689, %v1132, 0
        %v1160 = vsel %vm689, %v1133, 0
        %v1163 = vsel %vm689, %v1134, 0
        %v1166 = vsel %vm689, %v1135, 0
        %1168 = vmatprep.subr.bf16.mxu0 0
        %1169 = vmatpush1.bf16.msra.mxu0 0
        %1170 = vmatprep.subr.bf16.mxu0 0
        %1171 = vmatpush1.bf16.msra.mxu0 0
        %1172 = vmatprep.subr.bf16.mxu0 0
        %1173 = vmatpush1.bf16.msra.mxu0 0
        %1174 = vmatprep.subr.bf16.mxu0 0
        %1175 = vmatpush1.bf16.msra.mxu0 0
        %1176 = vmatprep.subr.bf16.mxu0 0
        %1177 = vmatpush1.bf16.msra.mxu0 0
        %1178 = vmatprep.subr.bf16.mxu0 0
        %1179 = vmatpush1.bf16.msra.mxu0 0
        %1180 = vmatprep.subr.bf16.mxu0 %v1151
        %1181 = vmatpush1.bf16.msra.mxu0 %v1150
        %1182 = vmatprep.subr.bf16.mxu0 %v1149
        %1183 = vmatpush1.bf16.msra.mxu0 %v1148
        %1184 = vmatprep.subr.bf16.mxu0 0
        %1185 = vmatpush2.bf16.msra.mxu0 0
        %1186 = vmatprep.subr.bf16.mxu0 0
        %1187 = vmatpush2.bf16.msra.mxu0 0
        %1188 = vmatprep.subr.bf16.mxu0 0
        %1189 = vmatpush2.bf16.msra.mxu0 0
        %1190 = vmatprep.subr.bf16.mxu0 0
        %1191 = vmatpush2.bf16.msra.mxu0 0
        %1192 = vmatprep.subr.bf16.mxu0 0
        %1193 = vmatpush2.bf16.msra.mxu0 0
        %1194 = vmatprep.subr.bf16.mxu0 0
        %1195 = vmatpush2.bf16.msra.mxu0 0
        %1196 = vmatprep.subr.bf16.mxu0 0
        %1197 = vmatpush2.bf16.msra.mxu0 0
        %1198 = vmatprep.subr.bf16.mxu0 0
        %1199 = vmatpush2.bf16.msra.mxu0 0
        %1200 = vmatprep.mubr.bf16.mxu0 0
        %1201 = vmatmul.mubr.bf16.gmra.mxu0 %v1157
        %v1202 = vpop.f32.mrf.mxu0
        %v1203 = vadd.f32 0.0, %v1202
        %v1204 = vpop.f32.mrf.mxu0
        %v1205 = vadd.f32 0.0, %v1204
        %v1206 = vpop.f32.mrf.mxu0
        %v1207 = vadd.f32 0.0, %v1206
        %v1208 = vpop.f32.mrf.mxu0
        %v1209 = vadd.f32 0.0, %v1208
        %1210 = vmatprep.mubr.bf16.mxu0 0
        %1211 = vmatmul.mubr.bf16.gmra.mxu0 %v1160
        %v1212 = vpop.f32.mrf.mxu0
        %v1213 = vadd.f32 0.0, %v1212
        %v1214 = vpop.f32.mrf.mxu0
        %v1215 = vadd.f32 0.0, %v1214
        %v1216 = vpop.f32.mrf.mxu0
        %v1217 = vadd.f32 0.0, %v1216
        %v1218 = vpop.f32.mrf.mxu0
        %v1219 = vadd.f32 0.0, %v1218
        %1220 = vmatprep.mubr.bf16.mxu0 0
        %1221 = vmatmul.mubr.bf16.gmra.mxu0 %v1163
        %v1222 = vpop.f32.mrf.mxu0
        %v1223 = vadd.f32 0.0, %v1222
        %v1224 = vpop.f32.mrf.mxu0
        %v1225 = vadd.f32 0.0, %v1224
        %v1226 = vpop.f32.mrf.mxu0
        %v1227 = vadd.f32 0.0, %v1226
        %v1228 = vpop.f32.mrf.mxu0
        %v1229 = vadd.f32 0.0, %v1228
        %1230 = vmatprep.mubr.bf16.mxu0 0
        %1231 = vmatmul.mubr.bf16.gmra.mxu0 %v1166
        %v1232 = vpop.f32.mrf.mxu0
        %v1233 = vadd.f32 0.0, %v1232
        %v1234 = vpop.f32.mrf.mxu0
        %v1235 = vadd.f32 0.0, %v1234
        %v1236 = vpop.f32.mrf.mxu0
        %v1237 = vadd.f32 0.0, %v1236
        %v1238 = vpop.f32.mrf.mxu0
        %v1239 = vadd.f32 0.0, %v1238
        %1240 = vdwg.mxu0
        %v1241 = vadd.f32 %v1044, %v1203
        %v1242 = vadd.f32 %v1045, %v1205
        %v1243 = vadd.f32 %v1046, %v1207
        %v1244 = vadd.f32 %v1047, %v1209
        %v1245 = vadd.f32 %v1048, %v1213
        %v1246 = vadd.f32 %v1049, %v1215
        %v1247 = vadd.f32 %v1050, %v1217
        %v1248 = vadd.f32 %v1051, %v1219
        %v1249 = vadd.f32 %v1052, %v1223
        %v1250 = vadd.f32 %v1053, %v1225
        %v1251 = vadd.f32 %v1054, %v1227
        %v1252 = vadd.f32 %v1055, %v1229
        %v1253 = vadd.f32 %v1056, %v1233
        %v1254 = vadd.f32 %v1057, %v1235
        %v1255 = vadd.f32 %v1058, %v1237
        %v1256 = vadd.f32 %v1059, %v1239
        %v1257 = vld [vmem:[%s568] sm:$0xf]
        %v1258 = vld [vmem:[%s568 + $0x8] sm:$0xf]
        %v1259 = vld [vmem:[%s568 + $0x10] sm:$0xf]
        %v1260 = vld [vmem:[%s568 + $0x18] sm:$0xf]
        %v1261 = vld [vmem:[%s568 + $0x20] sm:$0xf]
        %v1262 = vld [vmem:[%s568 + $0x28] sm:$0xf]
        %v1263 = vld [vmem:[%s568 + $0x30] sm:$0xf]
        %v1264 = vld [vmem:[%s568 + $0x38] sm:$0xf]
        %s1265 = scalar_lea.vmem %s2, 96
        %v1266 = vld [vmem:[%s1265] sm:$0xff]
        %v1267 = vld [vmem:[%s1265 + $0x8] sm:$0xff]
        %v1268 = vld [vmem:[%s1265 + $0x10] sm:$0xff]
        %v1269 = vld [vmem:[%s1265 + $0x18] sm:$0xff]
        %v1278 = vunpack.c.l.b16 %v1257
        %v1279 = vunpack.c.l.b16 %v1258
        %v1280 = vunpack.c.l.b16 %v1259
        %v1281 = vunpack.c.l.b16 %v1260
        %v1282 = vunpack.c.l.b16 %v1261
        %v1283 = vunpack.c.l.b16 %v1262
        %v1284 = vunpack.c.l.b16 %v1263
        %v1285 = vunpack.c.l.b16 %v1264
        %v1286 = vpack.c.b16 %v1279, %v1278
        %v1287 = vpack.c.b16 %v1281, %v1280
        %v1288 = vpack.c.b16 %v1283, %v1282
        %v1289 = vpack.c.b16 %v1285, %v1284
        %v1294 = vunpack.c.l.b16 %v1266
        %v1295 = vunpack.c.h.b16 %v1266
        %v1296 = vunpack.c.l.b16 %v1267
        %v1297 = vunpack.c.h.b16 %v1267
        %v1298 = vunpack.c.l.b16 %v1268
        %v1299 = vunpack.c.h.b16 %v1268
        %v1300 = vunpack.c.l.b16 %v1269
        %v1301 = vunpack.c.h.b16 %v1269
        %v1302 = vpack.c.b16 %v1296, %v1294
        %v1303 = vpack.c.b16 %v1297, %v1295
        %v1304 = vpack.c.b16 %v1300, %v1298
        %v1305 = vpack.c.b16 %v1301, %v1299
        %v1311 = vsel %vm689, %v1286, 0
        %v1314 = vsel %vm689, %v1287, 0
        %v1317 = vsel %vm689, %v1288, 0
        %v1320 = vsel %vm689, %v1289, 0
        %1322 = vmatprep.subr.bf16.mxu0 0
        %1323 = vmatpush1.bf16.msra.mxu0 0
        %1324 = vmatprep.subr.bf16.mxu0 0
        %1325 = vmatpush1.bf16.msra.mxu0 0
        %1326 = vmatprep.subr.bf16.mxu0 0
        %1327 = vmatpush1.bf16.msra.mxu0 0
        %1328 = vmatprep.subr.bf16.mxu0 0
        %1329 = vmatpush1.bf16.msra.mxu0 0
        %1330 = vmatprep.subr.bf16.mxu0 0
        %1331 = vmatpush1.bf16.msra.mxu0 0
        %1332 = vmatprep.subr.bf16.mxu0 0
        %1333 = vmatpush1.bf16.msra.mxu0 0
        %1334 = vmatprep.subr.bf16.mxu0 %v1305
        %1335 = vmatpush1.bf16.msra.mxu0 %v1304
        %1336 = vmatprep.subr.bf16.mxu0 %v1303
        %1337 = vmatpush1.bf16.msra.mxu0 %v1302
        %1338 = vmatprep.subr.bf16.mxu0 0
        %1339 = vmatpush2.bf16.msra.mxu0 0
        %1340 = vmatprep.subr.bf16.mxu0 0
        %1341 = vmatpush2.bf16.msra.mxu0 0
        %1342 = vmatprep.subr.bf16.mxu0 0
        %1343 = vmatpush2.bf16.msra.mxu0 0
        %1344 = vmatprep.subr.bf16.mxu0 0
        %1345 = vmatpush2.bf16.msra.mxu0 0
        %1346 = vmatprep.subr.bf16.mxu0 0
        %1347 = vmatpush2.bf16.msra.mxu0 0
        %1348 = vmatprep.subr.bf16.mxu0 0
        %1349 = vmatpush2.bf16.msra.mxu0 0
        %1350 = vmatprep.subr.bf16.mxu0 0
        %1351 = vmatpush2.bf16.msra.mxu0 0
        %1352 = vmatprep.subr.bf16.mxu0 0
        %1353 = vmatpush2.bf16.msra.mxu0 0
        %1354 = vmatprep.mubr.bf16.mxu0 0
        %1355 = vmatmul.mubr.bf16.gmra.mxu0 %v1311
        %v1356 = vpop.f32.mrf.mxu0
        %v1357 = vadd.f32 0.0, %v1356
        %v1358 = vpop.f32.mrf.mxu0
        %v1359 = vadd.f32 0.0, %v1358
        %v1360 = vpop.f32.mrf.mxu0
        %v1361 = vadd.f32 0.0, %v1360
        %v1362 = vpop.f32.mrf.mxu0
        %v1363 = vadd.f32 0.0, %v1362
        %1364 = vmatprep.mubr.bf16.mxu0 0
        %1365 = vmatmul.mubr.bf16.gmra.mxu0 %v1314
        %v1366 = vpop.f32.mrf.mxu0
        %v1367 = vadd.f32 0.0, %v1366
        %v1368 = vpop.f32.mrf.mxu0
        %v1369 = vadd.f32 0.0, %v1368
        %v1370 = vpop.f32.mrf.mxu0
        %v1371 = vadd.f32 0.0, %v1370
        %v1372 = vpop.f32.mrf.mxu0
        %v1373 = vadd.f32 0.0, %v1372
        %1374 = vmatprep.mubr.bf16.mxu0 0
        %1375 = vmatmul.mubr.bf16.gmra.mxu0 %v1317
        %v1376 = vpop.f32.mrf.mxu0
        %v1377 = vadd.f32 0.0, %v1376
        %v1378 = vpop.f32.mrf.mxu0
        %v1379 = vadd.f32 0.0, %v1378
        %v1380 = vpop.f32.mrf.mxu0
        %v1381 = vadd.f32 0.0, %v1380
        %v1382 = vpop.f32.mrf.mxu0
        %v1383 = vadd.f32 0.0, %v1382
        %1384 = vmatprep.mubr.bf16.mxu0 0
        %1385 = vmatmul.mubr.bf16.gmra.mxu0 %v1320
        %v1386 = vpop.f32.mrf.mxu0
        %v1387 = vadd.f32 0.0, %v1386
        %v1388 = vpop.f32.mrf.mxu0
        %v1389 = vadd.f32 0.0, %v1388
        %v1390 = vpop.f32.mrf.mxu0
        %v1391 = vadd.f32 0.0, %v1390
        %v1392 = vpop.f32.mrf.mxu0
        %v1393 = vadd.f32 0.0, %v1392
        %1394 = vdwg.mxu0
        %v1395 = vadd.f32 %v1241, %v1357
        %v1396 = vadd.f32 %v1242, %v1359
        %v1397 = vadd.f32 %v1243, %v1361
        %v1398 = vadd.f32 %v1244, %v1363
        %v1399 = vadd.f32 %v1245, %v1367
        %v1400 = vadd.f32 %v1246, %v1369
        %v1401 = vadd.f32 %v1247, %v1371
        %v1402 = vadd.f32 %v1248, %v1373
        %v1403 = vadd.f32 %v1249, %v1377
        %v1404 = vadd.f32 %v1250, %v1379
        %v1405 = vadd.f32 %v1251, %v1381
        %v1406 = vadd.f32 %v1252, %v1383
        %v1407 = vadd.f32 %v1253, %v1387
        %v1408 = vadd.f32 %v1254, %v1389
        %v1409 = vadd.f32 %v1255, %v1391
        %v1410 = vadd.f32 %v1256, %v1393
        %v1411 = vld [vmem:[%s568] sm:$0xf]
        %v1412 = vld [vmem:[%s568 + $0x4] sm:$0x1]
        %v1413 = vld [vmem:[%s568 + $0x8] sm:$0xf]
        %v1414 = vld [vmem:[%s568 + $0xc] sm:$0x1]
        %v1415 = vld [vmem:[%s568 + $0x10] sm:$0xf]
        %v1416 = vld [vmem:[%s568 + $0x14] sm:$0x1]
        %v1417 = vld [vmem:[%s568 + $0x18] sm:$0xf]
        %v1418 = vld [vmem:[%s568 + $0x1c] sm:$0x1]
        %v1419 = vld [vmem:[%s568 + $0x20] sm:$0xf]
        %v1420 = vld [vmem:[%s568 + $0x24] sm:$0x1]
        %v1421 = vld [vmem:[%s568 + $0x28] sm:$0xf]
        %v1422 = vld [vmem:[%s568 + $0x2c] sm:$0x1]
        %v1423 = vld [vmem:[%s568 + $0x30] sm:$0xf]
        %v1424 = vld [vmem:[%s568 + $0x34] sm:$0x1]
        %v1425 = vld [vmem:[%s568 + $0x38] sm:$0xf]
        %v1426 = vld [vmem:[%s568 + $0x3c] sm:$0x1]
        %v1428 = vshrl.u32 %v1411, 16
        %v1430 = vrot.slane %v1428, 4
        %v1431 = vshll.u32 %v1411, 16
        %v1433 = vrot.slane %v1431, 5
        %v1434 = vor.u32 %v1430, %v1433
        %v1435 = vrot.slane %v1434, 4
        %v1437 = vshll.u32 %v1412, 16
        %v1439 = vrot.slane %v1437, 5
        %v1440 = vsel %vm809, %v1435, %v1439
        %v1442 = vshrl.u32 %v1413, 16
        %v1444 = vrot.slane %v1442, 4
        %v1445 = vshll.u32 %v1413, 16
        %v1447 = vrot.slane %v1445, 5
        %v1448 = vor.u32 %v1444, %v1447
        %v1449 = vrot.slane %v1448, 4
        %v1451 = vshll.u32 %v1414, 16
        %v1453 = vrot.slane %v1451, 5
        %v1454 = vsel %vm809, %v1449, %v1453
        %v1456 = vshrl.u32 %v1415, 16
        %v1458 = vrot.slane %v1456, 4
        %v1459 = vshll.u32 %v1415, 16
        %v1461 = vrot.slane %v1459, 5
        %v1462 = vor.u32 %v1458, %v1461
        %v1463 = vrot.slane %v1462, 4
        %v1465 = vshll.u32 %v1416, 16
        %v1467 = vrot.slane %v1465, 5
        %v1468 = vsel %vm809, %v1463, %v1467
        %v1470 = vshrl.u32 %v1417, 16
        %v1472 = vrot.slane %v1470, 4
        %v1473 = vshll.u32 %v1417, 16
        %v1475 = vrot.slane %v1473, 5
        %v1476 = vor.u32 %v1472, %v1475
        %v1477 = vrot.slane %v1476, 4
        %v1479 = vshll.u32 %v1418, 16
        %v1481 = vrot.slane %v1479, 5
        %v1482 = vsel %vm809, %v1477, %v1481
        %v1484 = vshrl.u32 %v1419, 16
        %v1486 = vrot.slane %v1484, 4
        %v1487 = vshll.u32 %v1419, 16
        %v1489 = vrot.slane %v1487, 5
        %v1490 = vor.u32 %v1486, %v1489
        %v1491 = vrot.slane %v1490, 4
        %v1493 = vshll.u32 %v1420, 16
        %v1495 = vrot.slane %v1493, 5
        %v1496 = vsel %vm809, %v1491, %v1495
        %v1498 = vshrl.u32 %v1421, 16
        %v1500 = vrot.slane %v1498, 4
        %v1501 = vshll.u32 %v1421, 16
        %v1503 = vrot.slane %v1501, 5
        %v1504 = vor.u32 %v1500, %v1503
        %v1505 = vrot.slane %v1504, 4
        %v1507 = vshll.u32 %v1422, 16
        %v1509 = vrot.slane %v1507, 5
        %v1510 = vsel %vm809, %v1505, %v1509
        %v1512 = vshrl.u32 %v1423, 16
        %v1514 = vrot.slane %v1512, 4
        %v1515 = vshll.u32 %v1423, 16
        %v1517 = vrot.slane %v1515, 5
        %v1518 = vor.u32 %v1514, %v1517
        %v1519 = vrot.slane %v1518, 4
        %v1521 = vshll.u32 %v1424, 16
        %v1523 = vrot.slane %v1521, 5
        %v1524 = vsel %vm809, %v1519, %v1523
        %v1526 = vshrl.u32 %v1425, 16
        %v1528 = vrot.slane %v1526, 4
        %v1529 = vshll.u32 %v1425, 16
        %v1531 = vrot.slane %v1529, 5
        %v1532 = vor.u32 %v1528, %v1531
        %v1533 = vrot.slane %v1532, 4
        %v1535 = vshll.u32 %v1426, 16
        %v1537 = vrot.slane %v1535, 5
        %v1538 = vsel %vm809, %v1533, %v1537
        %s1539 = scalar_lea.vmem %s2, 128
        %v1540 = vld [vmem:[%s1539] sm:$0xff]
        %v1541 = vld [vmem:[%s1539 + $0x8] sm:$0xff]
        %v1542 = vld [vmem:[%s1539 + $0x10] sm:$0xff]
        %v1543 = vld [vmem:[%s1539 + $0x18] sm:$0xff]
        %v1544 = vunpack.c.l.b16 %v1440
        %v1545 = vunpack.c.l.b16 %v1454
        %v1546 = vunpack.c.l.b16 %v1468
        %v1547 = vunpack.c.l.b16 %v1482
        %v1548 = vunpack.c.l.b16 %v1496
        %v1549 = vunpack.c.l.b16 %v1510
        %v1550 = vunpack.c.l.b16 %v1524
        %v1551 = vunpack.c.l.b16 %v1538
        %v1552 = vpack.c.b16 %v1545, %v1544
        %v1553 = vpack.c.b16 %v1547, %v1546
        %v1554 = vpack.c.b16 %v1549, %v1548
        %v1555 = vpack.c.b16 %v1551, %v1550
        %v1560 = vunpack.c.l.b16 %v1540
        %v1561 = vunpack.c.h.b16 %v1540
        %v1562 = vunpack.c.l.b16 %v1541
        %v1563 = vunpack.c.h.b16 %v1541
        %v1564 = vunpack.c.l.b16 %v1542
        %v1565 = vunpack.c.h.b16 %v1542
        %v1566 = vunpack.c.l.b16 %v1543
        %v1567 = vunpack.c.h.b16 %v1543
        %v1568 = vpack.c.b16 %v1562, %v1560
        %v1569 = vpack.c.b16 %v1563, %v1561
        %v1570 = vpack.c.b16 %v1566, %v1564
        %v1571 = vpack.c.b16 %v1567, %v1565
        %v1577 = vsel %vm689, %v1552, 0
        %v1580 = vsel %vm689, %v1553, 0
        %v1583 = vsel %vm689, %v1554, 0
        %v1586 = vsel %vm689, %v1555, 0
        %1588 = vmatprep.subr.bf16.mxu0 0
        %1589 = vmatpush1.bf16.msra.mxu0 0
        %1590 = vmatprep.subr.bf16.mxu0 0
        %1591 = vmatpush1.bf16.msra.mxu0 0
        %1592 = vmatprep.subr.bf16.mxu0 0
        %1593 = vmatpush1.bf16.msra.mxu0 0
        %1594 = vmatprep.subr.bf16.mxu0 0
        %1595 = vmatpush1.bf16.msra.mxu0 0
        %1596 = vmatprep.subr.bf16.mxu0 0
        %1597 = vmatpush1.bf16.msra.mxu0 0
        %1598 = vmatprep.subr.bf16.mxu0 0
        %1599 = vmatpush1.bf16.msra.mxu0 0
        %1600 = vmatprep.subr.bf16.mxu0 %v1571
        %1601 = vmatpush1.bf16.msra.mxu0 %v1570
        %1602 = vmatprep.subr.bf16.mxu0 %v1569
        %1603 = vmatpush1.bf16.msra.mxu0 %v1568
        %1604 = vmatprep.subr.bf16.mxu0 0
        %1605 = vmatpush2.bf16.msra.mxu0 0
        %1606 = vmatprep.subr.bf16.mxu0 0
        %1607 = vmatpush2.bf16.msra.mxu0 0
        %1608 = vmatprep.subr.bf16.mxu0 0
        %1609 = vmatpush2.bf16.msra.mxu0 0
        %1610 = vmatprep.subr.bf16.mxu0 0
        %1611 = vmatpush2.bf16.msra.mxu0 0
        %1612 = vmatprep.subr.bf16.mxu0 0
        %1613 = vmatpush2.bf16.msra.mxu0 0
        %1614 = vmatprep.subr.bf16.mxu0 0
        %1615 = vmatpush2.bf16.msra.mxu0 0
        %1616 = vmatprep.subr.bf16.mxu0 0
        %1617 = vmatpush2.bf16.msra.mxu0 0
        %1618 = vmatprep.subr.bf16.mxu0 0
        %1619 = vmatpush2.bf16.msra.mxu0 0
        %1620 = vmatprep.mubr.bf16.mxu0 0
        %1621 = vmatmul.mubr.bf16.gmra.mxu0 %v1577
        %v1622 = vpop.f32.mrf.mxu0
        %v1623 = vadd.f32 0.0, %v1622
        %v1624 = vpop.f32.mrf.mxu0
        %v1625 = vadd.f32 0.0, %v1624
        %v1626 = vpop.f32.mrf.mxu0
        %v1627 = vadd.f32 0.0, %v1626
        %v1628 = vpop.f32.mrf.mxu0
        %v1629 = vadd.f32 0.0, %v1628
        %1630 = vmatprep.mubr.bf16.mxu0 0
        %1631 = vmatmul.mubr.bf16.gmra.mxu0 %v1580
        %v1632 = vpop.f32.mrf.mxu0
        %v1633 = vadd.f32 0.0, %v1632
        %v1634 = vpop.f32.mrf.mxu0
        %v1635 = vadd.f32 0.0, %v1634
        %v1636 = vpop.f32.mrf.mxu0
        %v1637 = vadd.f32 0.0, %v1636
        %v1638 = vpop.f32.mrf.mxu0
        %v1639 = vadd.f32 0.0, %v1638
        %1640 = vmatprep.mubr.bf16.mxu0 0
        %1641 = vmatmul.mubr.bf16.gmra.mxu0 %v1583
        %v1642 = vpop.f32.mrf.mxu0
        %v1643 = vadd.f32 0.0, %v1642
        %v1644 = vpop.f32.mrf.mxu0
        %v1645 = vadd.f32 0.0, %v1644
        %v1646 = vpop.f32.mrf.mxu0
        %v1647 = vadd.f32 0.0, %v1646
        %v1648 = vpop.f32.mrf.mxu0
        %v1649 = vadd.f32 0.0, %v1648
        %1650 = vmatprep.mubr.bf16.mxu0 0
        %1651 = vmatmul.mubr.bf16.gmra.mxu0 %v1586
        %v1652 = vpop.f32.mrf.mxu0
        %v1653 = vadd.f32 0.0, %v1652
        %v1654 = vpop.f32.mrf.mxu0
        %v1655 = vadd.f32 0.0, %v1654
        %v1656 = vpop.f32.mrf.mxu0
        %v1657 = vadd.f32 0.0, %v1656
        %v1658 = vpop.f32.mrf.mxu0
        %v1659 = vadd.f32 0.0, %v1658
        %1660 = vdwg.mxu0
        %v1661 = vadd.f32 %v1395, %v1623
        %v1662 = vadd.f32 %v1396, %v1625
        %v1663 = vadd.f32 %v1397, %v1627
        %v1664 = vadd.f32 %v1398, %v1629
        %v1665 = vadd.f32 %v1399, %v1633
        %v1666 = vadd.f32 %v1400, %v1635
        %v1667 = vadd.f32 %v1401, %v1637
        %v1668 = vadd.f32 %v1402, %v1639
        %v1669 = vadd.f32 %v1403, %v1643
        %v1670 = vadd.f32 %v1404, %v1645
        %v1671 = vadd.f32 %v1405, %v1647
        %v1672 = vadd.f32 %v1406, %v1649
        %v1673 = vadd.f32 %v1407, %v1653
        %v1674 = vadd.f32 %v1408, %v1655
        %v1675 = vadd.f32 %v1409, %v1657
        %v1676 = vadd.f32 %v1410, %v1659
        %v1677 = vld [vmem:[%s568] sm:$0xe]
        %v1678 = vld [vmem:[%s568 + $0x8] sm:$0xe]
        %v1679 = vld [vmem:[%s568 + $0x10] sm:$0xe]
        %v1680 = vld [vmem:[%s568 + $0x18] sm:$0xe]
        %v1681 = vld [vmem:[%s568 + $0x20] sm:$0xe]
        %v1682 = vld [vmem:[%s568 + $0x28] sm:$0xe]
        %v1683 = vld [vmem:[%s568 + $0x30] sm:$0xe]
        %v1684 = vld [vmem:[%s568 + $0x38] sm:$0xe]
        %v1701 = vrot.slane %v1677, 5
        %v1702 = vrot.slane %v1701, 4
        %v1703 = vrot.slane %v1412, 5
        %v1704 = vsel %vm1086, %v1702, %v1703
        %v1705 = vrot.slane %v1678, 5
        %v1706 = vrot.slane %v1705, 4
        %v1707 = vrot.slane %v1414, 5
        %v1708 = vsel %vm1086, %v1706, %v1707
        %v1709 = vrot.slane %v1679, 5
        %v1710 = vrot.slane %v1709, 4
        %v1711 = vrot.slane %v1416, 5
        %v1712 = vsel %vm1086, %v1710, %v1711
        %v1713 = vrot.slane %v1680, 5
        %v1714 = vrot.slane %v1713, 4
        %v1715 = vrot.slane %v1418, 5
        %v1716 = vsel %vm1086, %v1714, %v1715
        %v1717 = vrot.slane %v1681, 5
        %v1718 = vrot.slane %v1717, 4
        %v1719 = vrot.slane %v1420, 5
        %v1720 = vsel %vm1086, %v1718, %v1719
        %v1721 = vrot.slane %v1682, 5
        %v1722 = vrot.slane %v1721, 4
        %v1723 = vrot.slane %v1422, 5
        %v1724 = vsel %vm1086, %v1722, %v1723
        %v1725 = vrot.slane %v1683, 5
        %v1726 = vrot.slane %v1725, 4
        %v1727 = vrot.slane %v1424, 5
        %v1728 = vsel %vm1086, %v1726, %v1727
        %v1729 = vrot.slane %v1684, 5
        %v1730 = vrot.slane %v1729, 4
        %v1731 = vrot.slane %v1426, 5
        %v1732 = vsel %vm1086, %v1730, %v1731
        %s1733 = scalar_lea.vmem %s2, 160
        %v1734 = vld [vmem:[%s1733] sm:$0xff]
        %v1735 = vld [vmem:[%s1733 + $0x8] sm:$0xff]
        %v1736 = vld [vmem:[%s1733 + $0x10] sm:$0xff]
        %v1737 = vld [vmem:[%s1733 + $0x18] sm:$0xff]
        %v1738 = vunpack.c.l.b16 %v1704
        %v1739 = vunpack.c.l.b16 %v1708
        %v1740 = vunpack.c.l.b16 %v1712
        %v1741 = vunpack.c.l.b16 %v1716
        %v1742 = vunpack.c.l.b16 %v1720
        %v1743 = vunpack.c.l.b16 %v1724
        %v1744 = vunpack.c.l.b16 %v1728
        %v1745 = vunpack.c.l.b16 %v1732
        %v1746 = vpack.c.b16 %v1739, %v1738
        %v1747 = vpack.c.b16 %v1741, %v1740
        %v1748 = vpack.c.b16 %v1743, %v1742
        %v1749 = vpack.c.b16 %v1745, %v1744
        %v1754 = vunpack.c.l.b16 %v1734
        %v1755 = vunpack.c.h.b16 %v1734
        %v1756 = vunpack.c.l.b16 %v1735
        %v1757 = vunpack.c.h.b16 %v1735
        %v1758 = vunpack.c.l.b16 %v1736
        %v1759 = vunpack.c.h.b16 %v1736
        %v1760 = vunpack.c.l.b16 %v1737
        %v1761 = vunpack.c.h.b16 %v1737
        %v1762 = vpack.c.b16 %v1756, %v1754
        %v1763 = vpack.c.b16 %v1757, %v1755
        %v1764 = vpack.c.b16 %v1760, %v1758
        %v1765 = vpack.c.b16 %v1761, %v1759
        %v1771 = vsel %vm689, %v1746, 0
        %v1774 = vsel %vm689, %v1747, 0
        %v1777 = vsel %vm689, %v1748, 0
        %v1780 = vsel %vm689, %v1749, 0
        %1782 = vmatprep.subr.bf16.mxu0 0
        %1783 = vmatpush1.bf16.msra.mxu0 0
        %1784 = vmatprep.subr.bf16.mxu0 0
        %1785 = vmatpush1.bf16.msra.mxu0 0
        %1786 = vmatprep.subr.bf16.mxu0 0
        %1787 = vmatpush1.bf16.msra.mxu0 0
        %1788 = vmatprep.subr.bf16.mxu0 0
        %1789 = vmatpush1.bf16.msra.mxu0 0
        %1790 = vmatprep.subr.bf16.mxu0 0
        %1791 = vmatpush1.bf16.msra.mxu0 0
        %1792 = vmatprep.subr.bf16.mxu0 0
        %1793 = vmatpush1.bf16.msra.mxu0 0
        %1794 = vmatprep.subr.bf16.mxu0 %v1765
        %1795 = vmatpush1.bf16.msra.mxu0 %v1764
        %1796 = vmatprep.subr.bf16.mxu0 %v1763
        %1797 = vmatpush1.bf16.msra.mxu0 %v1762
        %1798 = vmatprep.subr.bf16.mxu0 0
        %1799 = vmatpush2.bf16.msra.mxu0 0
        %1800 = vmatprep.subr.bf16.mxu0 0
        %1801 = vmatpush2.bf16.msra.mxu0 0
        %1802 = vmatprep.subr.bf16.mxu0 0
        %1803 = vmatpush2.bf16.msra.mxu0 0
        %1804 = vmatprep.subr.bf16.mxu0 0
        %1805 = vmatpush2.bf16.msra.mxu0 0
        %1806 = vmatprep.subr.bf16.mxu0 0
        %1807 = vmatpush2.bf16.msra.mxu0 0
        %1808 = vmatprep.subr.bf16.mxu0 0
        %1809 = vmatpush2.bf16.msra.mxu0 0
        %1810 = vmatprep.subr.bf16.mxu0 0
        %1811 = vmatpush2.bf16.msra.mxu0 0
        %1812 = vmatprep.subr.bf16.mxu0 0
        %1813 = vmatpush2.bf16.msra.mxu0 0
        %1814 = vmatprep.mubr.bf16.mxu0 0
        %1815 = vmatmul.mubr.bf16.gmra.mxu0 %v1771
        %v1816 = vpop.f32.mrf.mxu0
        %v1817 = vadd.f32 0.0, %v1816
        %v1818 = vpop.f32.mrf.mxu0
        %v1819 = vadd.f32 0.0, %v1818
        %v1820 = vpop.f32.mrf.mxu0
        %v1821 = vadd.f32 0.0, %v1820
        %v1822 = vpop.f32.mrf.mxu0
        %v1823 = vadd.f32 0.0, %v1822
        %1824 = vmatprep.mubr.bf16.mxu0 0
        %1825 = vmatmul.mubr.bf16.gmra.mxu0 %v1774
        %v1826 = vpop.f32.mrf.mxu0
        %v1827 = vadd.f32 0.0, %v1826
        %v1828 = vpop.f32.mrf.mxu0
        %v1829 = vadd.f32 0.0, %v1828
        %v1830 = vpop.f32.mrf.mxu0
        %v1831 = vadd.f32 0.0, %v1830
        %v1832 = vpop.f32.mrf.mxu0
        %v1833 = vadd.f32 0.0, %v1832
        %1834 = vmatprep.mubr.bf16.mxu0 0
        %1835 = vmatmul.mubr.bf16.gmra.mxu0 %v1777
        %v1836 = vpop.f32.mrf.mxu0
        %v1837 = vadd.f32 0.0, %v1836
        %v1838 = vpop.f32.mrf.mxu0
        %v1839 = vadd.f32 0.0, %v1838
        %v1840 = vpop.f32.mrf.mxu0
        %v1841 = vadd.f32 0.0, %v1840
        %v1842 = vpop.f32.mrf.mxu0
        %v1843 = vadd.f32 0.0, %v1842
        %1844 = vmatprep.mubr.bf16.mxu0 0
        %1845 = vmatmul.mubr.bf16.gmra.mxu0 %v1780
        %v1846 = vpop.f32.mrf.mxu0
        %v1847 = vadd.f32 0.0, %v1846
        %v1848 = vpop.f32.mrf.mxu0
        %v1849 = vadd.f32 0.0, %v1848
        %v1850 = vpop.f32.mrf.mxu0
        %v1851 = vadd.f32 0.0, %v1850
        %v1852 = vpop.f32.mrf.mxu0
        %v1853 = vadd.f32 0.0, %v1852
        %1854 = vdwg.mxu0
        %v1855 = vadd.f32 %v1661, %v1817
        %v1856 = vadd.f32 %v1662, %v1819
        %v1857 = vadd.f32 %v1663, %v1821
        %v1858 = vadd.f32 %v1664, %v1823
        %v1859 = vadd.f32 %v1665, %v1827
        %v1860 = vadd.f32 %v1666, %v1829
        %v1861 = vadd.f32 %v1667, %v1831
        %v1862 = vadd.f32 %v1668, %v1833
        %v1863 = vadd.f32 %v1669, %v1837
        %v1864 = vadd.f32 %v1670, %v1839
        %v1865 = vadd.f32 %v1671, %v1841
        %v1866 = vadd.f32 %v1672, %v1843
        %v1867 = vadd.f32 %v1673, %v1847
        %v1868 = vadd.f32 %v1674, %v1849
        %v1869 = vadd.f32 %v1675, %v1851
        %v1870 = vadd.f32 %v1676, %v1853
        %s1871 = scalar_lea.vmem [#allocation2], 16
        %v1872 = vld [vmem:[%s1871] sm:$0xf]
        %v1873 = vld [vmem:[%s1871 + $0x8] sm:$0xf]
        %v1874 = vld [vmem:[%s1871 + $0x10] sm:$0xf]
        %v1875 = vld [vmem:[%s1871 + $0x18] sm:$0xf]
        %v1876 = vld [vmem:[%s1871 + $0x20] sm:$0xf]
        %v1877 = vld [vmem:[%s1871 + $0x28] sm:$0xf]
        %v1878 = vld [vmem:[%s1871 + $0x30] sm:$0xf]
        %v1879 = vld [vmem:[%s1871 + $0x38] sm:$0xf]
        %s1880 = scalar_lea.vmem %s2, 192
        %v1881 = vld [vmem:[%s1880] sm:$0xff]
        %v1882 = vld [vmem:[%s1880 + $0x8] sm:$0xff]
        %v1883 = vld [vmem:[%s1880 + $0x10] sm:$0xff]
        %v1884 = vld [vmem:[%s1880 + $0x18] sm:$0xff]
        %v1893 = vunpack.c.l.b16 %v1872
        %v1894 = vunpack.c.l.b16 %v1873
        %v1895 = vunpack.c.l.b16 %v1874
        %v1896 = vunpack.c.l.b16 %v1875
        %v1897 = vunpack.c.l.b16 %v1876
        %v1898 = vunpack.c.l.b16 %v1877
        %v1899 = vunpack.c.l.b16 %v1878
        %v1900 = vunpack.c.l.b16 %v1879
        %v1901 = vpack.c.b16 %v1894, %v1893
        %v1902 = vpack.c.b16 %v1896, %v1895
        %v1903 = vpack.c.b16 %v1898, %v1897
        %v1904 = vpack.c.b16 %v1900, %v1899
        %v1909 = vunpack.c.l.b16 %v1881
        %v1910 = vunpack.c.h.b16 %v1881
        %v1911 = vunpack.c.l.b16 %v1882
        %v1912 = vunpack.c.h.b16 %v1882
        %v1913 = vunpack.c.l.b16 %v1883
        %v1914 = vunpack.c.h.b16 %v1883
        %v1915 = vunpack.c.l.b16 %v1884
        %v1916 = vunpack.c.h.b16 %v1884
        %v1917 = vpack.c.b16 %v1911, %v1909
        %v1918 = vpack.c.b16 %v1912, %v1910
        %v1919 = vpack.c.b16 %v1915, %v1913
        %v1920 = vpack.c.b16 %v1916, %v1914
        %v1926 = vsel %vm689, %v1901, 0
        %v1929 = vsel %vm689, %v1902, 0
        %v1932 = vsel %vm689, %v1903, 0
        %v1935 = vsel %vm689, %v1904, 0
        %1937 = vmatprep.subr.bf16.mxu0 0
        %1938 = vmatpush1.bf16.msra.mxu0 0
        %1939 = vmatprep.subr.bf16.mxu0 0
        %1940 = vmatpush1.bf16.msra.mxu0 0
        %1941 = vmatprep.subr.bf16.mxu0 0
        %1942 = vmatpush1.bf16.msra.mxu0 0
        %1943 = vmatprep.subr.bf16.mxu0 0
        %1944 = vmatpush1.bf16.msra.mxu0 0
        %1945 = vmatprep.subr.bf16.mxu0 0
        %1946 = vmatpush1.bf16.msra.mxu0 0
        %1947 = vmatprep.subr.bf16.mxu0 0
        %1948 = vmatpush1.bf16.msra.mxu0 0
        %1949 = vmatprep.subr.bf16.mxu0 %v1920
        %1950 = vmatpush1.bf16.msra.mxu0 %v1919
        %1951 = vmatprep.subr.bf16.mxu0 %v1918
        %1952 = vmatpush1.bf16.msra.mxu0 %v1917
        %1953 = vmatprep.subr.bf16.mxu0 0
        %1954 = vmatpush2.bf16.msra.mxu0 0
        %1955 = vmatprep.subr.bf16.mxu0 0
        %1956 = vmatpush2.bf16.msra.mxu0 0
        %1957 = vmatprep.subr.bf16.mxu0 0
        %1958 = vmatpush2.bf16.msra.mxu0 0
        %1959 = vmatprep.subr.bf16.mxu0 0
        %1960 = vmatpush2.bf16.msra.mxu0 0
        %1961 = vmatprep.subr.bf16.mxu0 0
        %1962 = vmatpush2.bf16.msra.mxu0 0
        %1963 = vmatprep.subr.bf16.mxu0 0
        %1964 = vmatpush2.bf16.msra.mxu0 0
        %1965 = vmatprep.subr.bf16.mxu0 0
        %1966 = vmatpush2.bf16.msra.mxu0 0
        %1967 = vmatprep.subr.bf16.mxu0 0
        %1968 = vmatpush2.bf16.msra.mxu0 0
        %1969 = vmatprep.mubr.bf16.mxu0 0
        %1970 = vmatmul.mubr.bf16.gmra.mxu0 %v1926
        %v1971 = vpop.f32.mrf.mxu0
        %v1972 = vadd.f32 0.0, %v1971
        %v1973 = vpop.f32.mrf.mxu0
        %v1974 = vadd.f32 0.0, %v1973
        %v1975 = vpop.f32.mrf.mxu0
        %v1976 = vadd.f32 0.0, %v1975
        %v1977 = vpop.f32.mrf.mxu0
        %v1978 = vadd.f32 0.0, %v1977
        %1979 = vmatprep.mubr.bf16.mxu0 0
        %1980 = vmatmul.mubr.bf16.gmra.mxu0 %v1929
        %v1981 = vpop.f32.mrf.mxu0
        %v1982 = vadd.f32 0.0, %v1981
        %v1983 = vpop.f32.mrf.mxu0
        %v1984 = vadd.f32 0.0, %v1983
        %v1985 = vpop.f32.mrf.mxu0
        %v1986 = vadd.f32 0.0, %v1985
        %v1987 = vpop.f32.mrf.mxu0
        %v1988 = vadd.f32 0.0, %v1987
        %1989 = vmatprep.mubr.bf16.mxu0 0
        %1990 = vmatmul.mubr.bf16.gmra.mxu0 %v1932
        %v1991 = vpop.f32.mrf.mxu0
        %v1992 = vadd.f32 0.0, %v1991
        %v1993 = vpop.f32.mrf.mxu0
        %v1994 = vadd.f32 0.0, %v1993
        %v1995 = vpop.f32.mrf.mxu0
        %v1996 = vadd.f32 0.0, %v1995
        %v1997 = vpop.f32.mrf.mxu0
        %v1998 = vadd.f32 0.0, %v1997
        %1999 = vmatprep.mubr.bf16.mxu0 0
        %2000 = vmatmul.mubr.bf16.gmra.mxu0 %v1935
        %v2001 = vpop.f32.mrf.mxu0
        %v2002 = vadd.f32 0.0, %v2001
        %v2003 = vpop.f32.mrf.mxu0
        %v2004 = vadd.f32 0.0, %v2003
        %v2005 = vpop.f32.mrf.mxu0
        %v2006 = vadd.f32 0.0, %v2005
        %v2007 = vpop.f32.mrf.mxu0
        %v2008 = vadd.f32 0.0, %v2007
        %2009 = vdwg.mxu0
        %v2010 = vadd.f32 %v1855, %v1972
        %v2011 = vadd.f32 %v1856, %v1974
        %v2012 = vadd.f32 %v1857, %v1976
        %v2013 = vadd.f32 %v1858, %v1978
        %v2014 = vadd.f32 %v1859, %v1982
        %v2015 = vadd.f32 %v1860, %v1984
        %v2016 = vadd.f32 %v1861, %v1986
        %v2017 = vadd.f32 %v1862, %v1988
        %v2018 = vadd.f32 %v1863, %v1992
        %v2019 = vadd.f32 %v1864, %v1994
        %v2020 = vadd.f32 %v1865, %v1996
        %v2021 = vadd.f32 %v1866, %v1998
        %v2022 = vadd.f32 %v1867, %v2002
        %v2023 = vadd.f32 %v1868, %v2004
        %v2024 = vadd.f32 %v1869, %v2006
        %v2025 = vadd.f32 %v1870, %v2008
        %v2026 = vld [vmem:[%s1871] sm:$0xf]
        %v2027 = vld [vmem:[%s1871 + $0x4] sm:$0x1]
        %v2028 = vld [vmem:[%s1871 + $0x8] sm:$0xf]
        %v2029 = vld [vmem:[%s1871 + $0xc] sm:$0x1]
        %v2030 = vld [vmem:[%s1871 + $0x10] sm:$0xf]
        %v2031 = vld [vmem:[%s1871 + $0x14] sm:$0x1]
        %v2032 = vld [vmem:[%s1871 + $0x18] sm:$0xf]
        %v2033 = vld [vmem:[%s1871 + $0x1c] sm:$0x1]
        %v2034 = vld [vmem:[%s1871 + $0x20] sm:$0xf]
        %v2035 = vld [vmem:[%s1871 + $0x24] sm:$0x1]
        %v2036 = vld [vmem:[%s1871 + $0x28] sm:$0xf]
        %v2037 = vld [vmem:[%s1871 + $0x2c] sm:$0x1]
        %v2038 = vld [vmem:[%s1871 + $0x30] sm:$0xf]
        %v2039 = vld [vmem:[%s1871 + $0x34] sm:$0x1]
        %v2040 = vld [vmem:[%s1871 + $0x38] sm:$0xf]
        %v2041 = vld [vmem:[%s1871 + $0x3c] sm:$0x1]
        %v2043 = vshrl.u32 %v2026, 16
        %v2045 = vrot.slane %v2043, 4
        %v2046 = vshll.u32 %v2026, 16
        %v2048 = vrot.slane %v2046, 5
        %v2049 = vor.u32 %v2045, %v2048
        %v2050 = vrot.slane %v2049, 4
        %v2052 = vshll.u32 %v2027, 16
        %v2054 = vrot.slane %v2052, 5
        %v2055 = vsel %vm809, %v2050, %v2054
        %v2057 = vshrl.u32 %v2028, 16
        %v2059 = vrot.slane %v2057, 4
        %v2060 = vshll.u32 %v2028, 16
        %v2062 = vrot.slane %v2060, 5
        %v2063 = vor.u32 %v2059, %v2062
        %v2064 = vrot.slane %v2063, 4
        %v2066 = vshll.u32 %v2029, 16
        %v2068 = vrot.slane %v2066, 5
        %v2069 = vsel %vm809, %v2064, %v2068
        %v2071 = vshrl.u32 %v2030, 16
        %v2073 = vrot.slane %v2071, 4
        %v2074 = vshll.u32 %v2030, 16
        %v2076 = vrot.slane %v2074, 5
        %v2077 = vor.u32 %v2073, %v2076
        %v2078 = vrot.slane %v2077, 4
        %v2080 = vshll.u32 %v2031, 16
        %v2082 = vrot.slane %v2080, 5
        %v2083 = vsel %vm809, %v2078, %v2082
        %v2085 = vshrl.u32 %v2032, 16
        %v2087 = vrot.slane %v2085, 4
        %v2088 = vshll.u32 %v2032, 16
        %v2090 = vrot.slane %v2088, 5
        %v2091 = vor.u32 %v2087, %v2090
        %v2092 = vrot.slane %v2091, 4
        %v2094 = vshll.u32 %v2033, 16
        %v2096 = vrot.slane %v2094, 5
        %v2097 = vsel %vm809, %v2092, %v2096
        %v2099 = vshrl.u32 %v2034, 16
        %v2101 = vrot.slane %v2099, 4
        %v2102 = vshll.u32 %v2034, 16
        %v2104 = vrot.slane %v2102, 5
        %v2105 = vor.u32 %v2101, %v2104
        %v2106 = vrot.slane %v2105, 4
        %v2108 = vshll.u32 %v2035, 16
        %v2110 = vrot.slane %v2108, 5
        %v2111 = vsel %vm809, %v2106, %v2110
        %v2113 = vshrl.u32 %v2036, 16
        %v2115 = vrot.slane %v2113, 4
        %v2116 = vshll.u32 %v2036, 16
        %v2118 = vrot.slane %v2116, 5
        %v2119 = vor.u32 %v2115, %v2118
        %v2120 = vrot.slane %v2119, 4
        %v2122 = vshll.u32 %v2037, 16
        %v2124 = vrot.slane %v2122, 5
        %v2125 = vsel %vm809, %v2120, %v2124
        %v2127 = vshrl.u32 %v2038, 16
        %v2129 = vrot.slane %v2127, 4
        %v2130 = vshll.u32 %v2038, 16
        %v2132 = vrot.slane %v2130, 5
        %v2133 = vor.u32 %v2129, %v2132
        %v2134 = vrot.slane %v2133, 4
        %v2136 = vshll.u32 %v2039, 16
        %v2138 = vrot.slane %v2136, 5
        %v2139 = vsel %vm809, %v2134, %v2138
        %v2141 = vshrl.u32 %v2040, 16
        %v2143 = vrot.slane %v2141, 4
        %v2144 = vshll.u32 %v2040, 16
        %v2146 = vrot.slane %v2144, 5
        %v2147 = vor.u32 %v2143, %v2146
        %v2148 = vrot.slane %v2147, 4
        %v2150 = vshll.u32 %v2041, 16
        %v2152 = vrot.slane %v2150, 5
        %v2153 = vsel %vm809, %v2148, %v2152
        %s2154 = scalar_lea.vmem %s2, 224
        %v2155 = vld [vmem:[%s2154] sm:$0xff]
        %v2156 = vld [vmem:[%s2154 + $0x8] sm:$0xff]
        %v2157 = vld [vmem:[%s2154 + $0x10] sm:$0xff]
        %v2158 = vld [vmem:[%s2154 + $0x18] sm:$0xff]
        %v2159 = vunpack.c.l.b16 %v2055
        %v2160 = vunpack.c.l.b16 %v2069
        %v2161 = vunpack.c.l.b16 %v2083
        %v2162 = vunpack.c.l.b16 %v2097
        %v2163 = vunpack.c.l.b16 %v2111
        %v2164 = vunpack.c.l.b16 %v2125
        %v2165 = vunpack.c.l.b16 %v2139
        %v2166 = vunpack.c.l.b16 %v2153
        %v2167 = vpack.c.b16 %v2160, %v2159
        %v2168 = vpack.c.b16 %v2162, %v2161
        %v2169 = vpack.c.b16 %v2164, %v2163
        %v2170 = vpack.c.b16 %v2166, %v2165
        %v2175 = vunpack.c.l.b16 %v2155
        %v2176 = vunpack.c.h.b16 %v2155
        %v2177 = vunpack.c.l.b16 %v2156
        %v2178 = vunpack.c.h.b16 %v2156
        %v2179 = vunpack.c.l.b16 %v2157
        %v2180 = vunpack.c.h.b16 %v2157
        %v2181 = vunpack.c.l.b16 %v2158
        %v2182 = vunpack.c.h.b16 %v2158
        %v2183 = vpack.c.b16 %v2177, %v2175
        %v2184 = vpack.c.b16 %v2178, %v2176
        %v2185 = vpack.c.b16 %v2181, %v2179
        %v2186 = vpack.c.b16 %v2182, %v2180
        %v2192 = vsel %vm689, %v2167, 0
        %v2195 = vsel %vm689, %v2168, 0
        %v2198 = vsel %vm689, %v2169, 0
        %v2201 = vsel %vm689, %v2170, 0
        %2203 = vmatprep.subr.bf16.mxu0 0
        %2204 = vmatpush1.bf16.msra.mxu0 0
        %2205 = vmatprep.subr.bf16.mxu0 0
        %2206 = vmatpush1.bf16.msra.mxu0 0
        %2207 = vmatprep.subr.bf16.mxu0 0
        %2208 = vmatpush1.bf16.msra.mxu0 0
        %2209 = vmatprep.subr.bf16.mxu0 0
        %2210 = vmatpush1.bf16.msra.mxu0 0
        %2211 = vmatprep.subr.bf16.mxu0 0
        %2212 = vmatpush1.bf16.msra.mxu0 0
        %2213 = vmatprep.subr.bf16.mxu0 0
        %2214 = vmatpush1.bf16.msra.mxu0 0
        %2215 = vmatprep.subr.bf16.mxu0 %v2186
        %2216 = vmatpush1.bf16.msra.mxu0 %v2185
        %2217 = vmatprep.subr.bf16.mxu0 %v2184
        %2218 = vmatpush1.bf16.msra.mxu0 %v2183
        %2219 = vmatprep.subr.bf16.mxu0 0
        %2220 = vmatpush2.bf16.msra.mxu0 0
        %2221 = vmatprep.subr.bf16.mxu0 0
        %2222 = vmatpush2.bf16.msra.mxu0 0
        %2223 = vmatprep.subr.bf16.mxu0 0
        %2224 = vmatpush2.bf16.msra.mxu0 0
        %2225 = vmatprep.subr.bf16.mxu0 0
        %2226 = vmatpush2.bf16.msra.mxu0 0
        %2227 = vmatprep.subr.bf16.mxu0 0
        %2228 = vmatpush2.bf16.msra.mxu0 0
        %2229 = vmatprep.subr.bf16.mxu0 0
        %2230 = vmatpush2.bf16.msra.mxu0 0
        %2231 = vmatprep.subr.bf16.mxu0 0
        %2232 = vmatpush2.bf16.msra.mxu0 0
        %2233 = vmatprep.subr.bf16.mxu0 0
        %2234 = vmatpush2.bf16.msra.mxu0 0
        %2235 = vmatprep.mubr.bf16.mxu0 0
        %2236 = vmatmul.mubr.bf16.gmra.mxu0 %v2192
        %v2237 = vpop.f32.mrf.mxu0
        %v2238 = vadd.f32 0.0, %v2237
        %v2239 = vpop.f32.mrf.mxu0
        %v2240 = vadd.f32 0.0, %v2239
        %v2241 = vpop.f32.mrf.mxu0
        %v2242 = vadd.f32 0.0, %v2241
        %v2243 = vpop.f32.mrf.mxu0
        %v2244 = vadd.f32 0.0, %v2243
        %2245 = vmatprep.mubr.bf16.mxu0 0
        %2246 = vmatmul.mubr.bf16.gmra.mxu0 %v2195
        %v2247 = vpop.f32.mrf.mxu0
        %v2248 = vadd.f32 0.0, %v2247
        %v2249 = vpop.f32.mrf.mxu0
        %v2250 = vadd.f32 0.0, %v2249
        %v2251 = vpop.f32.mrf.mxu0
        %v2252 = vadd.f32 0.0, %v2251
        %v2253 = vpop.f32.mrf.mxu0
        %v2254 = vadd.f32 0.0, %v2253
        %2255 = vmatprep.mubr.bf16.mxu0 0
        %2256 = vmatmul.mubr.bf16.gmra.mxu0 %v2198
        %v2257 = vpop.f32.mrf.mxu0
        %v2258 = vadd.f32 0.0, %v2257
        %v2259 = vpop.f32.mrf.mxu0
        %v2260 = vadd.f32 0.0, %v2259
        %v2261 = vpop.f32.mrf.mxu0
        %v2262 = vadd.f32 0.0, %v2261
        %v2263 = vpop.f32.mrf.mxu0
        %v2264 = vadd.f32 0.0, %v2263
        %2265 = vmatprep.mubr.bf16.mxu0 0
        %2266 = vmatmul.mubr.bf16.gmra.mxu0 %v2201
        %v2267 = vpop.f32.mrf.mxu0
        %v2268 = vadd.f32 0.0, %v2267
        %v2269 = vpop.f32.mrf.mxu0
        %v2270 = vadd.f32 0.0, %v2269
        %v2271 = vpop.f32.mrf.mxu0
        %v2272 = vadd.f32 0.0, %v2271
        %v2273 = vpop.f32.mrf.mxu0
        %v2274 = vadd.f32 0.0, %v2273
        %2275 = vdwg.mxu0
        %v2276 = vadd.f32 %v2010, %v2238
        %v2277 = vadd.f32 %v2011, %v2240
        %v2278 = vadd.f32 %v2012, %v2242
        %v2279 = vadd.f32 %v2013, %v2244
        %v2280 = vadd.f32 %v2014, %v2248
        %v2281 = vadd.f32 %v2015, %v2250
        %v2282 = vadd.f32 %v2016, %v2252
        %v2283 = vadd.f32 %v2017, %v2254
        %v2284 = vadd.f32 %v2018, %v2258
        %v2285 = vadd.f32 %v2019, %v2260
        %v2286 = vadd.f32 %v2020, %v2262
        %v2287 = vadd.f32 %v2021, %v2264
        %v2288 = vadd.f32 %v2022, %v2268
        %v2289 = vadd.f32 %v2023, %v2270
        %v2290 = vadd.f32 %v2024, %v2272
        %v2291 = vadd.f32 %v2025, %v2274
        %v2292 = vld [vmem:[%s1871] sm:$0xe]
        %v2293 = vld [vmem:[%s1871 + $0x8] sm:$0xe]
        %v2294 = vld [vmem:[%s1871 + $0x10] sm:$0xe]
        %v2295 = vld [vmem:[%s1871 + $0x18] sm:$0xe]
        %v2296 = vld [vmem:[%s1871 + $0x20] sm:$0xe]
        %v2297 = vld [vmem:[%s1871 + $0x28] sm:$0xe]
        %v2298 = vld [vmem:[%s1871 + $0x30] sm:$0xe]
        %v2299 = vld [vmem:[%s1871 + $0x38] sm:$0xe]
        %v2316 = vrot.slane %v2292, 5
        %v2317 = vrot.slane %v2316, 4
        %v2318 = vrot.slane %v2027, 5
        %v2319 = vsel %vm1086, %v2317, %v2318
        %v2320 = vrot.slane %v2293, 5
        %v2321 = vrot.slane %v2320, 4
        %v2322 = vrot.slane %v2029, 5
        %v2323 = vsel %vm1086, %v2321, %v2322
        %v2324 = vrot.slane %v2294, 5
        %v2325 = vrot.slane %v2324, 4
        %v2326 = vrot.slane %v2031, 5
        %v2327 = vsel %vm1086, %v2325, %v2326
        %v2328 = vrot.slane %v2295, 5
        %v2329 = vrot.slane %v2328, 4
        %v2330 = vrot.slane %v2033, 5
        %v2331 = vsel %vm1086, %v2329, %v2330
        %v2332 = vrot.slane %v2296, 5
        %v2333 = vrot.slane %v2332, 4
        %v2334 = vrot.slane %v2035, 5
        %v2335 = vsel %vm1086, %v2333, %v2334
        %v2336 = vrot.slane %v2297, 5
        %v2337 = vrot.slane %v2336, 4
        %v2338 = vrot.slane %v2037, 5
        %v2339 = vsel %vm1086, %v2337, %v2338
        %v2340 = vrot.slane %v2298, 5
        %v2341 = vrot.slane %v2340, 4
        %v2342 = vrot.slane %v2039, 5
        %v2343 = vsel %vm1086, %v2341, %v2342
        %v2344 = vrot.slane %v2299, 5
        %v2345 = vrot.slane %v2344, 4
        %v2346 = vrot.slane %v2041, 5
        %v2347 = vsel %vm1086, %v2345, %v2346
        %s2348 = scalar_lea.vmem %s2, 256
        %v2349 = vld [vmem:[%s2348] sm:$0xff]
        %v2350 = vld [vmem:[%s2348 + $0x8] sm:$0xff]
        %v2351 = vld [vmem:[%s2348 + $0x10] sm:$0xff]
        %v2352 = vld [vmem:[%s2348 + $0x18] sm:$0xff]
        %v2353 = vunpack.c.l.b16 %v2319
        %v2354 = vunpack.c.l.b16 %v2323
        %v2355 = vunpack.c.l.b16 %v2327
        %v2356 = vunpack.c.l.b16 %v2331
        %v2357 = vunpack.c.l.b16 %v2335
        %v2358 = vunpack.c.l.b16 %v2339
        %v2359 = vunpack.c.l.b16 %v2343
        %v2360 = vunpack.c.l.b16 %v2347
        %v2361 = vpack.c.b16 %v2354, %v2353
        %v2362 = vpack.c.b16 %v2356, %v2355
        %v2363 = vpack.c.b16 %v2358, %v2357
        %v2364 = vpack.c.b16 %v2360, %v2359
        %v2369 = vunpack.c.l.b16 %v2349
        %v2370 = vunpack.c.h.b16 %v2349
        %v2371 = vunpack.c.l.b16 %v2350
        %v2372 = vunpack.c.h.b16 %v2350
        %v2373 = vunpack.c.l.b16 %v2351
        %v2374 = vunpack.c.h.b16 %v2351
        %v2375 = vunpack.c.l.b16 %v2352
        %v2376 = vunpack.c.h.b16 %v2352
        %v2377 = vpack.c.b16 %v2371, %v2369
        %v2378 = vpack.c.b16 %v2372, %v2370
        %v2379 = vpack.c.b16 %v2375, %v2373
        %v2380 = vpack.c.b16 %v2376, %v2374
        %v2386 = vsel %vm689, %v2361, 0
        %v2389 = vsel %vm689, %v2362, 0
        %v2392 = vsel %vm689, %v2363, 0
        %v2395 = vsel %vm689, %v2364, 0
        %2397 = vmatprep.subr.bf16.mxu0 0
        %2398 = vmatpush1.bf16.msra.mxu0 0
        %2399 = vmatprep.subr.bf16.mxu0 0
        %2400 = vmatpush1.bf16.msra.mxu0 0
        %2401 = vmatprep.subr.bf16.mxu0 0
        %2402 = vmatpush1.bf16.msra.mxu0 0
        %2403 = vmatprep.subr.bf16.mxu0 0
        %2404 = vmatpush1.bf16.msra.mxu0 0
        %2405 = vmatprep.subr.bf16.mxu0 0
        %2406 = vmatpush1.bf16.msra.mxu0 0
        %2407 = vmatprep.subr.bf16.mxu0 0
        %2408 = vmatpush1.bf16.msra.mxu0 0
        %2409 = vmatprep.subr.bf16.mxu0 %v2380
        %2410 = vmatpush1.bf16.msra.mxu0 %v2379
        %2411 = vmatprep.subr.bf16.mxu0 %v2378
        %2412 = vmatpush1.bf16.msra.mxu0 %v2377
        %2413 = vmatprep.subr.bf16.mxu0 0
        %2414 = vmatpush2.bf16.msra.mxu0 0
        %2415 = vmatprep.subr.bf16.mxu0 0
        %2416 = vmatpush2.bf16.msra.mxu0 0
        %2417 = vmatprep.subr.bf16.mxu0 0
        %2418 = vmatpush2.bf16.msra.mxu0 0
        %2419 = vmatprep.subr.bf16.mxu0 0
        %2420 = vmatpush2.bf16.msra.mxu0 0
        %2421 = vmatprep.subr.bf16.mxu0 0
        %2422 = vmatpush2.bf16.msra.mxu0 0
        %2423 = vmatprep.subr.bf16.mxu0 0
        %2424 = vmatpush2.bf16.msra.mxu0 0
        %2425 = vmatprep.subr.bf16.mxu0 0
        %2426 = vmatpush2.bf16.msra.mxu0 0
        %2427 = vmatprep.subr.bf16.mxu0 0
        %2428 = vmatpush2.bf16.msra.mxu0 0
        %2429 = vmatprep.mubr.bf16.mxu0 0
        %2430 = vmatmul.mubr.bf16.gmra.mxu0 %v2386
        %v2431 = vpop.f32.mrf.mxu0
        %v2432 = vadd.f32 0.0, %v2431
        %v2433 = vpop.f32.mrf.mxu0
        %v2434 = vadd.f32 0.0, %v2433
        %v2435 = vpop.f32.mrf.mxu0
        %v2436 = vadd.f32 0.0, %v2435
        %v2437 = vpop.f32.mrf.mxu0
        %v2438 = vadd.f32 0.0, %v2437
        %2439 = vmatprep.mubr.bf16.mxu0 0
        %2440 = vmatmul.mubr.bf16.gmra.mxu0 %v2389
        %v2441 = vpop.f32.mrf.mxu0
        %v2442 = vadd.f32 0.0, %v2441
        %v2443 = vpop.f32.mrf.mxu0
        %v2444 = vadd.f32 0.0, %v2443
        %v2445 = vpop.f32.mrf.mxu0
        %v2446 = vadd.f32 0.0, %v2445
        %v2447 = vpop.f32.mrf.mxu0
        %v2448 = vadd.f32 0.0, %v2447
        %2449 = vmatprep.mubr.bf16.mxu0 0
        %2450 = vmatmul.mubr.bf16.gmra.mxu0 %v2392
        %v2451 = vpop.f32.mrf.mxu0
        %v2452 = vadd.f32 0.0, %v2451
        %v2453 = vpop.f32.mrf.mxu0
        %v2454 = vadd.f32 0.0, %v2453
        %v2455 = vpop.f32.mrf.mxu0
        %v2456 = vadd.f32 0.0, %v2455
        %v2457 = vpop.f32.mrf.mxu0
        %v2458 = vadd.f32 0.0, %v2457
        %2459 = vmatprep.mubr.bf16.mxu0 0
        %2460 = vmatmul.mubr.bf16.gmra.mxu0 %v2395
        %v2461 = vpop.f32.mrf.mxu0
        %v2462 = vadd.f32 0.0, %v2461
        %v2463 = vpop.f32.mrf.mxu0
        %v2464 = vadd.f32 0.0, %v2463
        %v2465 = vpop.f32.mrf.mxu0
        %v2466 = vadd.f32 0.0, %v2465
        %v2467 = vpop.f32.mrf.mxu0
        %v2468 = vadd.f32 0.0, %v2467
        %2469 = vdwg.mxu0
        %v2470 = vadd.f32 %v2276, %v2432
        %v2471 = vadd.f32 %v2277, %v2434
        %v2472 = vadd.f32 %v2278, %v2436
        %v2473 = vadd.f32 %v2279, %v2438
        %v2474 = vadd.f32 %v2280, %v2442
        %v2475 = vadd.f32 %v2281, %v2444
        %v2476 = vadd.f32 %v2282, %v2446
        %v2477 = vadd.f32 %v2283, %v2448
        %v2478 = vadd.f32 %v2284, %v2452
        %v2479 = vadd.f32 %v2285, %v2454
        %v2480 = vadd.f32 %v2286, %v2456
        %v2481 = vadd.f32 %v2287, %v2458
        %v2482 = vadd.f32 %v2288, %v2462
        %v2483 = vadd.f32 %v2289, %v2464
        %v2484 = vadd.f32 %v2290, %v2466
        %v2485 = vadd.f32 %v2291, %v2468
        %v2486 = vadd.f32 %v2470, %v2472
        %v2487 = vadd.f32 %v2486, %v2474
        %v2488 = vadd.f32 %v2487, %v2476
        %v2489 = vadd.f32 %v2488, %v2478
        %v2490 = vadd.f32 %v2489, %v2480
        %v2491 = vadd.f32 %v2490, %v2482
        %v2492 = vadd.f32 %v2491, %v2484
        %v2493 = vrot.slane %v2492, 4
        %v2494 = vadd.f32 %v2492, %v2493
        %v2495 = vrot.slane %v2494, 2
        %v2496 = vadd.f32 %v2494, %v2495
        %v2497 = vrot.slane %v2496, 1
        %v2498 = vadd.f32 %v2496, %v2497
        %v2499 = vadd.f32 %v2471, %v2473
        %v2500 = vadd.f32 %v2499, %v2475
        %v2501 = vadd.f32 %v2500, %v2477
        %v2502 = vadd.f32 %v2501, %v2479
        %v2503 = vadd.f32 %v2502, %v2481
        %v2504 = vadd.f32 %v2503, %v2483
        %v2505 = vadd.f32 %v2504, %v2485
        %v2506 = vrot.slane %v2505, 4
        %v2507 = vadd.f32 %v2505, %v2506
        %v2508 = vrot.slane %v2507, 2
        %v2509 = vadd.f32 %v2507, %v2508
        %v2510 = vrot.slane %v2509, 1
        %v2511 = vadd.f32 %v2509, %v2510
        %v2512 = vld [vmem:[%s6] sm:$0xff]
        %v2513 = vld [vmem:[%s6 + $0x8] sm:$0xff]
        %v2514 = vld [vmem:[%s6 + $0x10] sm:$0xff]
        %v2515 = vld [vmem:[%s6 + $0x18] sm:$0xff]
        %v2516 = vld [vmem:[%s6 + $0x20] sm:$0xff]
        %v2517 = vld [vmem:[%s6 + $0x28] sm:$0xff]
        %v2518 = vld [vmem:[%s6 + $0x30] sm:$0xff]
        %v2519 = vld [vmem:[%s6 + $0x38] sm:$0xff]
        %v2520 = vld [vmem:[%s6 + $0x40] sm:$0xff]
        %v2521 = vld [vmem:[%s6 + $0x48] sm:$0xff]
        %v2522 = vld [vmem:[%s6 + $0x50] sm:$0xff]
        %v2523 = vld [vmem:[%s6 + $0x58] sm:$0xff]
        %v2524 = vld [vmem:[%s6 + $0x60] sm:$0xff]
        %v2525 = vld [vmem:[%s6 + $0x68] sm:$0xff]
        %v2526 = vld [vmem:[%s6 + $0x70] sm:$0xff]
        %v2527 = vld [vmem:[%s6 + $0x78] sm:$0xff]
        %v2528 = vld [vmem:[%s6 + $0x80] sm:$0xff]
        %v2529 = vld [vmem:[%s6 + $0x88] sm:$0xff]
        %v2530 = vld [vmem:[%s6 + $0x90] sm:$0xff]
        %v2531 = vld [vmem:[%s6 + $0x98] sm:$0xff]
        %v2532 = vld [vmem:[%s6 + $0xa0] sm:$0xff]
        %v2533 = vld [vmem:[%s6 + $0xa8] sm:$0xff]
        %v2534 = vld [vmem:[%s6 + $0xb0] sm:$0xff]
        %v2535 = vld [vmem:[%s6 + $0xb8] sm:$0xff]
        %v2536 = vld [vmem:[%s6 + $0xc0] sm:$0xff]
        %v2537 = vld [vmem:[%s6 + $0xc8] sm:$0xff]
        %v2538 = vld [vmem:[%s6 + $0xd0] sm:$0xff]
        %v2539 = vld [vmem:[%s6 + $0xd8] sm:$0xff]
        %v2540 = vld [vmem:[%s6 + $0xe0] sm:$0xff]
        %v2541 = vld [vmem:[%s6 + $0xe8] sm:$0xff]
        %v2542 = vld [vmem:[%s6 + $0xf0] sm:$0xff]
        %v2543 = vld [vmem:[%s6 + $0xf8] sm:$0xff]
        %2544 = vmatprep.subr.mxu0 0.0
        %2545 = vmatpush1.msra.mxu0 %v2527
        %2546 = vmatprep.subr.mxu0 0.0
        %2547 = vmatpush1.msra.mxu0 %v2526
        %2548 = vmatprep.subr.mxu0 0.0
        %2549 = vmatpush1.msra.mxu0 %v2525
        %2550 = vmatprep.subr.mxu0 0.0
        %2551 = vmatpush1.msra.mxu0 %v2524
        %2552 = vmatprep.subr.mxu0 0.0
        %2553 = vmatpush1.msra.mxu0 %v2523
        %2554 = vmatprep.subr.mxu0 0.0
        %2555 = vmatpush1.msra.mxu0 %v2522
        %2556 = vmatprep.subr.mxu0 0.0
        %2557 = vmatpush1.msra.mxu0 %v2521
        %2558 = vmatprep.subr.mxu0 0.0
        %2559 = vmatpush1.msra.mxu0 %v2520
        %2560 = vmatprep.subr.mxu0 0.0
        %2561 = vmatpush1.msra.mxu0 %v2519
        %2562 = vmatprep.subr.mxu0 0.0
        %2563 = vmatpush1.msra.mxu0 %v2518
        %2564 = vmatprep.subr.mxu0 0.0
        %2565 = vmatpush1.msra.mxu0 %v2517
        %2566 = vmatprep.subr.mxu0 0.0
        %2567 = vmatpush1.msra.mxu0 %v2516
        %2568 = vmatprep.subr.mxu0 0.0
        %2569 = vmatpush1.msra.mxu0 %v2515
        %2570 = vmatprep.subr.mxu0 0.0
        %2571 = vmatpush1.msra.mxu0 %v2514
        %2572 = vmatprep.subr.mxu0 0.0
        %2573 = vmatpush1.msra.mxu0 %v2513
        %2574 = vmatprep.subr.mxu0 0.0
        %2575 = vmatpush1.msra.mxu0 %v2512
        %2576 = vmatprep.subr.mxu0 0.0
        %2577 = vmatpush2.msra.mxu0 %v2543
        %2578 = vmatprep.subr.mxu0 0.0
        %2579 = vmatpush2.msra.mxu0 %v2542
        %2580 = vmatprep.subr.mxu0 0.0
        %2581 = vmatpush2.msra.mxu0 %v2541
        %2582 = vmatprep.subr.mxu0 0.0
        %2583 = vmatpush2.msra.mxu0 %v2540
        %2584 = vmatprep.subr.mxu0 0.0
        %2585 = vmatpush2.msra.mxu0 %v2539
        %2586 = vmatprep.subr.mxu0 0.0
        %2587 = vmatpush2.msra.mxu0 %v2538
        %2588 = vmatprep.subr.mxu0 0.0
        %2589 = vmatpush2.msra.mxu0 %v2537
        %2590 = vmatprep.subr.mxu0 0.0
        %2591 = vmatpush2.msra.mxu0 %v2536
        %2592 = vmatprep.subr.mxu0 0.0
        %2593 = vmatpush2.msra.mxu0 %v2535
        %2594 = vmatprep.subr.mxu0 0.0
        %2595 = vmatpush2.msra.mxu0 %v2534
        %2596 = vmatprep.subr.mxu0 0.0
        %2597 = vmatpush2.msra.mxu0 %v2533
        %2598 = vmatprep.subr.mxu0 0.0
        %2599 = vmatpush2.msra.mxu0 %v2532
        %2600 = vmatprep.subr.mxu0 0.0
        %2601 = vmatpush2.msra.mxu0 %v2531
        %2602 = vmatprep.subr.mxu0 0.0
        %2603 = vmatpush2.msra.mxu0 %v2530
        %2604 = vmatprep.subr.mxu0 0.0
        %2605 = vmatpush2.msra.mxu0 %v2529
        %2606 = vmatprep.subr.mxu0 0.0
        %2607 = vmatpush2.msra.mxu0 %v2528
        %2608 = vmatprep.mubr.f32.mxu0 %v2511
        %2609 = vmatmul.mubr.f32.gmra.mxu0 %v2498
        %v2610 = vpop.f32.mrf.mxu0
        %v2611 = vadd.f32 0.0, %v2610
        %v2612 = vpop.f32.mrf.mxu0
        %2613 = vdwg.mxu0
        %v2614 = vmul.f32 %v2611, 0.001953125
        %v2615 = vld [vmem:[%s7] sm:$0xff]
        %v2616 = vld [vmem:[%s7 + $0x8] sm:$0xff]
        %v2617 = vld [vmem:[%s7 + $0x10] sm:$0xff]
        %v2618 = vld [vmem:[%s7 + $0x18] sm:$0xff]
        %v2619 = vld [vmem:[%s7 + $0x20] sm:$0xff]
        %v2620 = vld [vmem:[%s7 + $0x28] sm:$0xff]
        %v2621 = vld [vmem:[%s7 + $0x30] sm:$0xff]
        %v2622 = vld [vmem:[%s7 + $0x38] sm:$0xff]
        %v2624 = vsel %vm689, %v2614, 0
        %2626 = vmatprep.subr.mxu0 0.0
        %2627 = vmatpush1.msra.mxu0 0.0
        %2628 = vmatprep.subr.mxu0 0.0
        %2629 = vmatpush1.msra.mxu0 0.0
        %2630 = vmatprep.subr.mxu0 0.0
        %2631 = vmatpush1.msra.mxu0 0.0
        %2632 = vmatprep.subr.mxu0 0.0
        %2633 = vmatpush1.msra.mxu0 0.0
        %2634 = vmatprep.subr.mxu0 0.0
        %2635 = vmatpush1.msra.mxu0 0.0
        %2636 = vmatprep.subr.mxu0 0.0
        %2637 = vmatpush1.msra.mxu0 0.0
        %2638 = vmatprep.subr.mxu0 0.0
        %2639 = vmatpush1.msra.mxu0 0.0
        %2640 = vmatprep.subr.mxu0 0.0
        %2641 = vmatpush1.msra.mxu0 0.0
        %2642 = vmatprep.subr.mxu0 0.0
        %2643 = vmatpush1.msra.mxu0 0.0
        %2644 = vmatprep.subr.mxu0 0.0
        %2645 = vmatpush1.msra.mxu0 0.0
        %2646 = vmatprep.subr.mxu0 0.0
        %2647 = vmatpush1.msra.mxu0 0.0
        %2648 = vmatprep.subr.mxu0 0.0
        %2649 = vmatpush1.msra.mxu0 0.0
        %2650 = vmatprep.subr.mxu0 %v2622
        %2651 = vmatpush1.msra.mxu0 %v2621
        %2652 = vmatprep.subr.mxu0 %v2620
        %2653 = vmatpush1.msra.mxu0 %v2619
        %2654 = vmatprep.subr.mxu0 %v2618
        %2655 = vmatpush1.msra.mxu0 %v2617
        %2656 = vmatprep.subr.mxu0 %v2616
        %2657 = vmatpush1.msra.mxu0 %v2615
        %2658 = vmatprep.subr.mxu0 0.0
        %2659 = vmatpush2.msra.mxu0 0.0
        %2660 = vmatprep.subr.mxu0 0.0
        %2661 = vmatpush2.msra.mxu0 0.0
        %2662 = vmatprep.subr.mxu0 0.0
        %2663 = vmatpush2.msra.mxu0 0.0
        %2664 = vmatprep.subr.mxu0 0.0
        %2665 = vmatpush2.msra.mxu0 0.0
        %2666 = vmatprep.subr.mxu0 0.0
        %2667 = vmatpush2.msra.mxu0 0.0
        %2668 = vmatprep.subr.mxu0 0.0
        %2669 = vmatpush2.msra.mxu0 0.0
        %2670 = vmatprep.subr.mxu0 0.0
        %2671 = vmatpush2.msra.mxu0 0.0
        %2672 = vmatprep.subr.mxu0 0.0
        %2673 = vmatpush2.msra.mxu0 0.0
        %2674 = vmatprep.subr.mxu0 0.0
        %2675 = vmatpush2.msra.mxu0 0.0
        %2676 = vmatprep.subr.mxu0 0.0
        %2677 = vmatpush2.msra.mxu0 0.0
        %2678 = vmatprep.subr.mxu0 0.0
        %2679 = vmatpush2.msra.mxu0 0.0
        %2680 = vmatprep.subr.mxu0 0.0
        %2681 = vmatpush2.msra.mxu0 0.0
        %2682 = vmatprep.subr.mxu0 0.0
        %2683 = vmatpush2.msra.mxu0 0.0
        %2684 = vmatprep.subr.mxu0 0.0
        %2685 = vmatpush2.msra.mxu0 0.0
        %2686 = vmatprep.subr.mxu0 0.0
        %2687 = vmatpush2.msra.mxu0 0.0
        %2688 = vmatprep.subr.mxu0 0.0
        %2689 = vmatpush2.msra.mxu0 0.0
        %2690 = vmatprep.mubr.f32.mxu0 0.0
        %2691 = vmatmul.mubr.f32.gmra.mxu0 %v2624
        %v2692 = vpop.f32.mrf.mxu0
        %v2693 = vadd.f32 0.0, %v2692
        %v2694 = vpop.f32.mrf.mxu0
        %v2695 = vadd.f32 0.0, %v2694
        %2696 = vdwg.mxu0
        %v2697 = vlaneseq
        %v2698 = vshrl.u32 %v2697, 7
        %v2699 = vsub.s32 0, %v2698
        %v2700 = vrot.slane %v2693, %v2699
        %v2701 = vlaneseq
        %v2702 = vshrl.u32 %v2701, 7
        %v2703 = vsub.s32 0, %v2702
        %v2704 = vrot.slane %v2695, %v2703
        %v2705 = vsub.f32 %v2470, %v2700
        %v2706 = vsub.f32 %v2471, %v2704
        %v2707 = vsub.f32 %v2472, %v2700
        %v2708 = vsub.f32 %v2473, %v2704
        %v2709 = vsub.f32 %v2474, %v2700
        %v2710 = vsub.f32 %v2475, %v2704
        %v2711 = vsub.f32 %v2476, %v2700
        %v2712 = vsub.f32 %v2477, %v2704
        %v2713 = vsub.f32 %v2478, %v2700
        %v2714 = vsub.f32 %v2479, %v2704
        %v2715 = vsub.f32 %v2480, %v2700
        %v2716 = vsub.f32 %v2481, %v2704
        %v2717 = vsub.f32 %v2482, %v2700
        %v2718 = vsub.f32 %v2483, %v2704
        %v2719 = vsub.f32 %v2484, %v2700
        %v2720 = vsub.f32 %v2485, %v2704
        %v2721 = vmul.f32 %v2705, %v2705
        %v2722 = vmul.f32 %v2706, %v2706
        %v2723 = vmul.f32 %v2707, %v2707
        %v2724 = vmul.f32 %v2708, %v2708
        %v2725 = vmul.f32 %v2709, %v2709
        %v2726 = vmul.f32 %v2710, %v2710
        %v2727 = vmul.f32 %v2711, %v2711
        %v2728 = vmul.f32 %v2712, %v2712
        %v2729 = vmul.f32 %v2713, %v2713
        %v2730 = vmul.f32 %v2714, %v2714
        %v2731 = vmul.f32 %v2715, %v2715
        %v2732 = vmul.f32 %v2716, %v2716
        %v2733 = vmul.f32 %v2717, %v2717
        %v2734 = vmul.f32 %v2718, %v2718
        %v2735 = vmul.f32 %v2719, %v2719
        %v2736 = vmul.f32 %v2720, %v2720
        %v2737 = vadd.f32 %v2721, %v2723
        %v2738 = vadd.f32 %v2737, %v2725
        %v2739 = vadd.f32 %v2738, %v2727
        %v2740 = vadd.f32 %v2739, %v2729
        %v2741 = vadd.f32 %v2740, %v2731
        %v2742 = vadd.f32 %v2741, %v2733
        %v2743 = vadd.f32 %v2742, %v2735
        %v2744 = vrot.slane %v2743, 4
        %v2745 = vadd.f32 %v2743, %v2744
        %v2746 = vrot.slane %v2745, 2
        %v2747 = vadd.f32 %v2745, %v2746
        %v2748 = vrot.slane %v2747, 1
        %v2749 = vadd.f32 %v2747, %v2748
        %v2750 = vadd.f32 %v2722, %v2724
        %v2751 = vadd.f32 %v2750, %v2726
        %v2752 = vadd.f32 %v2751, %v2728
        %v2753 = vadd.f32 %v2752, %v2730
        %v2754 = vadd.f32 %v2753, %v2732
        %v2755 = vadd.f32 %v2754, %v2734
        %v2756 = vadd.f32 %v2755, %v2736
        %v2757 = vrot.slane %v2756, 4
        %v2758 = vadd.f32 %v2756, %v2757
        %v2759 = vrot.slane %v2758, 2
        %v2760 = vadd.f32 %v2758, %v2759
        %v2761 = vrot.slane %v2760, 1
        %v2762 = vadd.f32 %v2760, %v2761
        %2763 = vmatprep.subr.mxu0 0.0
        %2764 = vmatpush1.msra.mxu0 %v2527
        %2765 = vmatprep.subr.mxu0 0.0
        %2766 = vmatpush1.msra.mxu0 %v2526
        %2767 = vmatprep.subr.mxu0 0.0
        %2768 = vmatpush1.msra.mxu0 %v2525
        %2769 = vmatprep.subr.mxu0 0.0
        %2770 = vmatpush1.msra.mxu0 %v2524
        %2771 = vmatprep.subr.mxu0 0.0
        %2772 = vmatpush1.msra.mxu0 %v2523
        %2773 = vmatprep.subr.mxu0 0.0
        %2774 = vmatpush1.msra.mxu0 %v2522
        %2775 = vmatprep.subr.mxu0 0.0
        %2776 = vmatpush1.msra.mxu0 %v2521
        %2777 = vmatprep.subr.mxu0 0.0
        %2778 = vmatpush1.msra.mxu0 %v2520
        %2779 = vmatprep.subr.mxu0 0.0
        %2780 = vmatpush1.msra.mxu0 %v2519
        %2781 = vmatprep.subr.mxu0 0.0
        %2782 = vmatpush1.msra.mxu0 %v2518
        %2783 = vmatprep.subr.mxu0 0.0
        %2784 = vmatpush1.msra.mxu0 %v2517
        %2785 = vmatprep.subr.mxu0 0.0
        %2786 = vmatpush1.msra.mxu0 %v2516
        %2787 = vmatprep.subr.mxu0 0.0
        %2788 = vmatpush1.msra.mxu0 %v2515
        %2789 = vmatprep.subr.mxu0 0.0
        %2790 = vmatpush1.msra.mxu0 %v2514
        %2791 = vmatprep.subr.mxu0 0.0
        %2792 = vmatpush1.msra.mxu0 %v2513
        %2793 = vmatprep.subr.mxu0 0.0
        %2794 = vmatpush1.msra.mxu0 %v2512
        %2795 = vmatprep.subr.mxu0 0.0
        %2796 = vmatpush2.msra.mxu0 %v2543
        %2797 = vmatprep.subr.mxu0 0.0
        %2798 = vmatpush2.msra.mxu0 %v2542
        %2799 = vmatprep.subr.mxu0 0.0
        %2800 = vmatpush2.msra.mxu0 %v2541
        %2801 = vmatprep.subr.mxu0 0.0
        %2802 = vmatpush2.msra.mxu0 %v2540
        %2803 = vmatprep.subr.mxu0 0.0
        %2804 = vmatpush2.msra.mxu0 %v2539
        %2805 = vmatprep.subr.mxu0 0.0
        %2806 = vmatpush2.msra.mxu0 %v2538
        %2807 = vmatprep.subr.mxu0 0.0
        %2808 = vmatpush2.msra.mxu0 %v2537
        %2809 = vmatprep.subr.mxu0 0.0
        %2810 = vmatpush2.msra.mxu0 %v2536
        %2811 = vmatprep.subr.mxu0 0.0
        %2812 = vmatpush2.msra.mxu0 %v2535
        %2813 = vmatprep.subr.mxu0 0.0
        %2814 = vmatpush2.msra.mxu0 %v2534
        %2815 = vmatprep.subr.mxu0 0.0
        %2816 = vmatpush2.msra.mxu0 %v2533
        %2817 = vmatprep.subr.mxu0 0.0
        %2818 = vmatpush2.msra.mxu0 %v2532
        %2819 = vmatprep.subr.mxu0 0.0
        %2820 = vmatpush2.msra.mxu0 %v2531
        %2821 = vmatprep.subr.mxu0 0.0
        %2822 = vmatpush2.msra.mxu0 %v2530
        %2823 = vmatprep.subr.mxu0 0.0
        %2824 = vmatpush2.msra.mxu0 %v2529
        %2825 = vmatprep.subr.mxu0 0.0
        %2826 = vmatpush2.msra.mxu0 %v2528
        %2827 = vmatprep.mubr.f32.mxu0 %v2762
        %2828 = vmatmul.mubr.f32.gmra.mxu0 %v2749
        %v2829 = vpop.f32.mrf.mxu0
        %v2830 = vadd.f32 0.0, %v2829
        %v2831 = vpop.f32.mrf.mxu0
        %2832 = vdwg.mxu0
        %v2833 = vmul.f32 %v2830, 0.001953125
        %v2834 = vadd.f32 %v2833, 1e-05
        %v2835 = vrsqrt.pop %v2834
        %v2837 = vsel %vm689, %v2835, 0
        %2839 = vmatprep.subr.mxu0 0.0
        %2840 = vmatpush1.msra.mxu0 0.0
        %2841 = vmatprep.subr.mxu0 0.0
        %2842 = vmatpush1.msra.mxu0 0.0
        %2843 = vmatprep.subr.mxu0 0.0
        %2844 = vmatpush1.msra.mxu0 0.0
        %2845 = vmatprep.subr.mxu0 0.0
        %2846 = vmatpush1.msra.mxu0 0.0
        %2847 = vmatprep.subr.mxu0 0.0
        %2848 = vmatpush1.msra.mxu0 0.0
        %2849 = vmatprep.subr.mxu0 0.0
        %2850 = vmatpush1.msra.mxu0 0.0
        %2851 = vmatprep.subr.mxu0 0.0
        %2852 = vmatpush1.msra.mxu0 0.0
        %2853 = vmatprep.subr.mxu0 0.0
        %2854 = vmatpush1.msra.mxu0 0.0
        %2855 = vmatprep.subr.mxu0 0.0
        %2856 = vmatpush1.msra.mxu0 0.0
        %2857 = vmatprep.subr.mxu0 0.0
        %2858 = vmatpush1.msra.mxu0 0.0
        %2859 = vmatprep.subr.mxu0 0.0
        %2860 = vmatpush1.msra.mxu0 0.0
        %2861 = vmatprep.subr.mxu0 0.0
        %2862 = vmatpush1.msra.mxu0 0.0
        %2863 = vmatprep.subr.mxu0 %v2622
        %2864 = vmatpush1.msra.mxu0 %v2621
        %2865 = vmatprep.subr.mxu0 %v2620
        %2866 = vmatpush1.msra.mxu0 %v2619
        %2867 = vmatprep.subr.mxu0 %v2618
        %2868 = vmatpush1.msra.mxu0 %v2617
        %2869 = vmatprep.subr.mxu0 %v2616
        %2870 = vmatpush1.msra.mxu0 %v2615
        %2871 = vmatprep.subr.mxu0 0.0
        %2872 = vmatpush2.msra.mxu0 0.0
        %2873 = vmatprep.subr.mxu0 0.0
        %2874 = vmatpush2.msra.mxu0 0.0
        %2875 = vmatprep.subr.mxu0 0.0
        %2876 = vmatpush2.msra.mxu0 0.0
        %2877 = vmatprep.subr.mxu0 0.0
        %2878 = vmatpush2.msra.mxu0 0.0
        %2879 = vmatprep.subr.mxu0 0.0
        %2880 = vmatpush2.msra.mxu0 0.0
        %2881 = vmatprep.subr.mxu0 0.0
        %2882 = vmatpush2.msra.mxu0 0.0
        %2883 = vmatprep.subr.mxu0 0.0
        %2884 = vmatpush2.msra.mxu0 0.0
        %2885 = vmatprep.subr.mxu0 0.0
        %2886 = vmatpush2.msra.mxu0 0.0
        %2887 = vmatprep.subr.mxu0 0.0
        %2888 = vmatpush2.msra.mxu0 0.0
        %2889 = vmatprep.subr.mxu0 0.0
        %2890 = vmatpush2.msra.mxu0 0.0
        %2891 = vmatprep.subr.mxu0 0.0
        %2892 = vmatpush2.msra.mxu0 0.0
        %2893 = vmatprep.subr.mxu0 0.0
        %2894 = vmatpush2.msra.mxu0 0.0
        %2895 = vmatprep.subr.mxu0 0.0
        %2896 = vmatpush2.msra.mxu0 0.0
        %2897 = vmatprep.subr.mxu0 0.0
        %2898 = vmatpush2.msra.mxu0 0.0
        %2899 = vmatprep.subr.mxu0 0.0
        %2900 = vmatpush2.msra.mxu0 0.0
        %2901 = vmatprep.subr.mxu0 0.0
        %2902 = vmatpush2.msra.mxu0 0.0
        %2903 = vmatprep.mubr.f32.mxu0 0.0
        %2904 = vmatmul.mubr.f32.gmra.mxu0 %v2837
        %v2905 = vpop.f32.mrf.mxu0
        %v2906 = vadd.f32 0.0, %v2905
        %v2907 = vpop.f32.mrf.mxu0
        %v2908 = vadd.f32 0.0, %v2907
        %2909 = vdwg.mxu0
        %v2910 = vlaneseq
        %v2911 = vshrl.u32 %v2910, 7
        %v2912 = vsub.s32 0, %v2911
        %v2913 = vrot.slane %v2906, %v2912
        %v2914 = vlaneseq
        %v2915 = vshrl.u32 %v2914, 7
        %v2916 = vsub.s32 0, %v2915
        %v2917 = vrot.slane %v2908, %v2916
        %v2918 = vmul.f32 %v2705, %v2913
        %v2919 = vmul.f32 %v2706, %v2917
        %v2920 = vmul.f32 %v2707, %v2913
        %v2921 = vmul.f32 %v2708, %v2917
        %v2922 = vmul.f32 %v2709, %v2913
        %v2923 = vmul.f32 %v2710, %v2917
        %v2924 = vmul.f32 %v2711, %v2913
        %v2925 = vmul.f32 %v2712, %v2917
        %v2926 = vmul.f32 %v2713, %v2913
        %v2927 = vmul.f32 %v2714, %v2917
        %v2928 = vmul.f32 %v2715, %v2913
        %v2929 = vmul.f32 %v2716, %v2917
        %v2930 = vmul.f32 %v2717, %v2913
        %v2931 = vmul.f32 %v2718, %v2917
        %v2932 = vmul.f32 %v2719, %v2913
        %v2933 = vmul.f32 %v2720, %v2917
        %vm2934 = vcmp.gt.f32.partialorder %v2918, 0.0
        %vm2935 = vcmp.gt.f32.partialorder %v2919, 0.0
        %vm2936 = vcmp.gt.f32.partialorder %v2920, 0.0
        %vm2937 = vcmp.gt.f32.partialorder %v2921, 0.0
        %vm2938 = vcmp.gt.f32.partialorder %v2922, 0.0
        %vm2939 = vcmp.gt.f32.partialorder %v2923, 0.0
        %vm2940 = vcmp.gt.f32.partialorder %v2924, 0.0
        %vm2941 = vcmp.gt.f32.partialorder %v2925, 0.0
        %vm2942 = vcmp.gt.f32.partialorder %v2926, 0.0
        %vm2943 = vcmp.gt.f32.partialorder %v2927, 0.0
        %vm2944 = vcmp.gt.f32.partialorder %v2928, 0.0
        %vm2945 = vcmp.gt.f32.partialorder %v2929, 0.0
        %vm2946 = vcmp.gt.f32.partialorder %v2930, 0.0
        %vm2947 = vcmp.gt.f32.partialorder %v2931, 0.0
        %vm2948 = vcmp.gt.f32.partialorder %v2932, 0.0
        %vm2949 = vcmp.gt.f32.partialorder %v2933, 0.0
        %v2950 = vstv %s456
        %v2951 = vmul.f32 %v2950, %v2918
        %v2952 = vmul.f32 %v2950, %v2919
        %v2953 = vmul.f32 %v2950, %v2920
        %v2954 = vmul.f32 %v2950, %v2921
        %v2955 = vmul.f32 %v2950, %v2922
        %v2956 = vmul.f32 %v2950, %v2923
        %v2957 = vmul.f32 %v2950, %v2924
        %v2958 = vmul.f32 %v2950, %v2925
        %v2959 = vmul.f32 %v2950, %v2926
        %v2960 = vmul.f32 %v2950, %v2927
        %v2961 = vmul.f32 %v2950, %v2928
        %v2962 = vmul.f32 %v2950, %v2929
        %v2963 = vmul.f32 %v2950, %v2930
        %v2964 = vmul.f32 %v2950, %v2931
        %v2965 = vmul.f32 %v2950, %v2932
        %v2966 = vmul.f32 %v2950, %v2933
        %v2967 = vsel %vm2934, %v2918, %v2951
        %v2968 = vsel %vm2935, %v2919, %v2952
        %v2969 = vsel %vm2936, %v2920, %v2953
        %v2970 = vsel %vm2937, %v2921, %v2954
        %v2971 = vsel %vm2938, %v2922, %v2955
        %v2972 = vsel %vm2939, %v2923, %v2956
        %v2973 = vsel %vm2940, %v2924, %v2957
        %v2974 = vsel %vm2941, %v2925, %v2958
        %v2975 = vsel %vm2942, %v2926, %v2959
        %v2976 = vsel %vm2943, %v2927, %v2960
        %v2977 = vsel %vm2944, %v2928, %v2961
        %v2978 = vsel %vm2945, %v2929, %v2962
        %v2979 = vsel %vm2946, %v2930, %v2963
        %v2980 = vsel %vm2947, %v2931, %v2964
        %v2981 = vsel %vm2948, %v2932, %v2965
        %v2982 = vsel %vm2949, %v2933, %v2966
        %2983 = vst [vmem:[#allocation3] sm:$0xff] 0
        %2984 = vst [vmem:[#allocation3 + $0x8] sm:$0x11] 0
        %2985 = vst [vmem:[#allocation3 + $0x10] sm:$0xff] 0
        %2986 = vst [vmem:[#allocation3 + $0x18] sm:$0x11] 0
        %2987 = vst [vmem:[#allocation3 + $0x20] sm:$0xff] 0
        %2988 = vst [vmem:[#allocation3 + $0x28] sm:$0x11] 0
        %2989 = vst [vmem:[#allocation3 + $0x30] sm:$0xff] 0
        %2990 = vst [vmem:[#allocation3 + $0x38] sm:$0x11] 0
        %2991 = vst [vmem:[#allocation3 + $0x40] sm:$0xff] 0
        %2992 = vst [vmem:[#allocation3 + $0x48] sm:$0x11] 0
        %2993 = vst [vmem:[#allocation3 + $0x50] sm:$0xff] 0
        %2994 = vst [vmem:[#allocation3 + $0x58] sm:$0x11] 0
        %2995 = vst [vmem:[#allocation3 + $0x60] sm:$0xff] 0
        %2996 = vst [vmem:[#allocation3 + $0x68] sm:$0x11] 0
        %2997 = vst [vmem:[#allocation3 + $0x70] sm:$0xff] 0
        %2998 = vst [vmem:[#allocation3 + $0x78] sm:$0x11] 0
        %2999 = vst [vmem:[#allocation3 + $0x80] sm:$0xff] 0
        %3000 = vst [vmem:[#allocation3 + $0x88] sm:$0x11] 0
        %3001 = vst [vmem:[#allocation3 + $0x90] sm:$0xff] 0
        %3002 = vst [vmem:[#allocation3 + $0x98] sm:$0x11] 0
        %v3003 = vpack.c.bf16 %v2969, %v2967
        %v3004 = vpack.c.bf16 %v2970, %v2968
        %v3005 = vpack.c.bf16 %v2973, %v2971
        %v3006 = vpack.c.bf16 %v2974, %v2972
        %v3007 = vpack.c.bf16 %v2977, %v2975
        %v3008 = vpack.c.bf16 %v2978, %v2976
        %v3009 = vpack.c.bf16 %v2981, %v2979
        %v3010 = vpack.c.bf16 %v2982, %v2980
        %v3019 = vunpack.c.l.b16 %v3003
        %v3020 = vunpack.c.l.b16 %v3004
        %v3021 = vunpack.c.h.b16 %v3003
        %v3022 = vunpack.c.h.b16 %v3004
        %v3023 = vunpack.c.l.b16 %v3005
        %v3024 = vunpack.c.l.b16 %v3006
        %v3025 = vunpack.c.h.b16 %v3005
        %v3026 = vunpack.c.h.b16 %v3006
        %v3027 = vunpack.c.l.b16 %v3007
        %v3028 = vunpack.c.l.b16 %v3008
        %v3029 = vunpack.c.h.b16 %v3007
        %v3030 = vunpack.c.h.b16 %v3008
        %v3031 = vunpack.c.l.b16 %v3009
        %v3032 = vunpack.c.l.b16 %v3010
        %v3033 = vunpack.c.h.b16 %v3009
        %v3034 = vunpack.c.h.b16 %v3010
        %v3035 = vpack.c.b16 %v3020, %v3019
        %v3036 = vpack.c.b16 %v3022, %v3021
        %v3037 = vpack.c.b16 %v3024, %v3023
        %v3038 = vpack.c.b16 %v3026, %v3025
        %v3039 = vpack.c.b16 %v3028, %v3027
        %v3040 = vpack.c.b16 %v3030, %v3029
        %v3041 = vpack.c.b16 %v3032, %v3031
        %v3042 = vpack.c.b16 %v3034, %v3033
        %v3044 = vshrl.u32 %v3035, 16
        %v3046 = vrot.slane %v3044, 7
        %v3047 = vshll.u32 %v3035, 16
        %v3049 = vor.u32 %v3046, %v3047
        %v3050 = vrot.slane %v3046, 4
        %v3052 = vshrl.u32 %v3036, 16
        %v3054 = vrot.slane %v3052, 7
        %v3055 = vshll.u32 %v3036, 16
        %v3057 = vor.u32 %v3054, %v3055
        %v3058 = vrot.slane %v3054, 4
        %v3060 = vshrl.u32 %v3037, 16
        %v3062 = vrot.slane %v3060, 7
        %v3063 = vshll.u32 %v3037, 16
        %v3065 = vor.u32 %v3062, %v3063
        %v3066 = vrot.slane %v3062, 4
        %v3068 = vshrl.u32 %v3038, 16
        %v3070 = vrot.slane %v3068, 7
        %v3071 = vshll.u32 %v3038, 16
        %v3073 = vor.u32 %v3070, %v3071
        %v3074 = vrot.slane %v3070, 4
        %v3076 = vshrl.u32 %v3039, 16
        %v3078 = vrot.slane %v3076, 7
        %v3079 = vshll.u32 %v3039, 16
        %v3081 = vor.u32 %v3078, %v3079
        %v3082 = vrot.slane %v3078, 4
        %v3084 = vshrl.u32 %v3040, 16
        %v3086 = vrot.slane %v3084, 7
        %v3087 = vshll.u32 %v3040, 16
        %v3089 = vor.u32 %v3086, %v3087
        %v3090 = vrot.slane %v3086, 4
        %v3092 = vshrl.u32 %v3041, 16
        %v3094 = vrot.slane %v3092, 7
        %v3095 = vshll.u32 %v3041, 16
        %v3097 = vor.u32 %v3094, %v3095
        %v3098 = vrot.slane %v3094, 4
        %v3100 = vshrl.u32 %v3042, 16
        %v3102 = vrot.slane %v3100, 7
        %v3103 = vshll.u32 %v3042, 16
        %v3105 = vor.u32 %v3102, %v3103
        %v3106 = vrot.slane %v3102, 4
        %s3123 = scalar_lea.vmem [#allocation3], 16
        %vm3124 = vcmask 1043456
        %vm3125 = vmand %vm3124, %vm570
        %vm3126 = vcmask 1047556
        %vm3127 = vsmask.f32 7954
        %vm3128 = vmand %vm3126, %vm3127
        %vm3129 = vmor %vm3128, %vm3125
        %v3130 = vld [vmem:[%s3123] sm:$0xff]
        %v3131 = vsel %vm3129, %v3049, %v3130
        %3132 = vst [vmem:[%s3123] sm:$0xff] %v3131
        %vm3133 = vcmask 1040384
        %vm3134 = vmand %vm3133, %vm576
        %vm3135 = vcmask 1044484
        %vm3136 = vsmask.f32 4352
        %vm3137 = vmand %vm3135, %vm3136
        %vm3138 = vmor %vm3137, %vm3134
        %v3139 = vld [vmem:[%s3123 + $0x8] sm:$0x11]
        %v3140 = vsel %vm3138, %v3050, %v3139
        %3141 = vst [vmem:[%s3123 + $0x8] sm:$0x11] %v3140
        %v3142 = vld [vmem:[%s3123 + $0x10] sm:$0xff]
        %v3143 = vsel %vm3129, %v3057, %v3142
        %3144 = vst [vmem:[%s3123 + $0x10] sm:$0xff] %v3143
        %v3145 = vld [vmem:[%s3123 + $0x18] sm:$0x11]
        %v3146 = vsel %vm3138, %v3058, %v3145
        %3147 = vst [vmem:[%s3123 + $0x18] sm:$0x11] %v3146
        %v3148 = vld [vmem:[%s3123 + $0x20] sm:$0xff]
        %v3149 = vsel %vm3129, %v3065, %v3148
        %3150 = vst [vmem:[%s3123 + $0x20] sm:$0xff] %v3149
        %v3151 = vld [vmem:[%s3123 + $0x28] sm:$0x11]
        %v3152 = vsel %vm3138, %v3066, %v3151
        %3153 = vst [vmem:[%s3123 + $0x28] sm:$0x11] %v3152
        %v3154 = vld [vmem:[%s3123 + $0x30] sm:$0xff]
        %v3155 = vsel %vm3129, %v3073, %v3154
        %3156 = vst [vmem:[%s3123 + $0x30] sm:$0xff] %v3155
        %v3157 = vld [vmem:[%s3123 + $0x38] sm:$0x11]
        %v3158 = vsel %vm3138, %v3074, %v3157
        %3159 = vst [vmem:[%s3123 + $0x38] sm:$0x11] %v3158
        %v3160 = vld [vmem:[%s3123 + $0x40] sm:$0xff]
        %v3161 = vsel %vm3129, %v3081, %v3160
        %3162 = vst [vmem:[%s3123 + $0x40] sm:$0xff] %v3161
        %v3163 = vld [vmem:[%s3123 + $0x48] sm:$0x11]
        %v3164 = vsel %vm3138, %v3082, %v3163
        %3165 = vst [vmem:[%s3123 + $0x48] sm:$0x11] %v3164
        %v3166 = vld [vmem:[%s3123 + $0x50] sm:$0xff]
        %v3167 = vsel %vm3129, %v3089, %v3166
        %3168 = vst [vmem:[%s3123 + $0x50] sm:$0xff] %v3167
        %v3169 = vld [vmem:[%s3123 + $0x58] sm:$0x11]
        %v3170 = vsel %vm3138, %v3090, %v3169
        %3171 = vst [vmem:[%s3123 + $0x58] sm:$0x11] %v3170
        %v3172 = vld [vmem:[%s3123 + $0x60] sm:$0xff]
        %v3173 = vsel %vm3129, %v3097, %v3172
        %3174 = vst [vmem:[%s3123 + $0x60] sm:$0xff] %v3173
        %v3175 = vld [vmem:[%s3123 + $0x68] sm:$0x11]
        %v3176 = vsel %vm3138, %v3098, %v3175
        %3177 = vst [vmem:[%s3123 + $0x68] sm:$0x11] %v3176
        %v3178 = vld [vmem:[%s3123 + $0x70] sm:$0xff]
        %v3179 = vsel %vm3129, %v3105, %v3178
        %3180 = vst [vmem:[%s3123 + $0x70] sm:$0xff] %v3179
        %v3181 = vld [vmem:[%s3123 + $0x78] sm:$0x11]
        %v3182 = vsel %vm3138, %v3106, %v3181
        %3183 = vst [vmem:[%s3123 + $0x78] sm:$0x11] %v3182
        %v3184 = vld [vmem:[%s5] sm:$0x3]
        %v3186 = vlaneseq
        %v3187 = vshrl.u32 %v3186, 7
        %v3188 = vsub.s32 0, %v3187
        %v3189 = vrot.slane %v3184, %v3188
        %v3190 = vlaneseq
        %v3191 = vshrl.u32 %v3190, 7
        %v3192 = vsub.s32 1, %v3191
        %v3193 = vrot.slane %v3184, %v3192
        %v3196 = vadd.f32 %v3189, 0.0
        %v3197 = vadd.f32 %v3193, 0.0
        %v3198 = vld [vmem:[#allocation3] sm:$0xff]
        %v3199 = vld [vmem:[#allocation3 + $0x10] sm:$0xff]
        %v3200 = vld [vmem:[#allocation3 + $0x20] sm:$0xff]
        %v3201 = vld [vmem:[#allocation3 + $0x30] sm:$0xff]
        %v3202 = vld [vmem:[#allocation3 + $0x40] sm:$0xff]
        %v3203 = vld [vmem:[#allocation3 + $0x50] sm:$0xff]
        %v3204 = vld [vmem:[#allocation3 + $0x60] sm:$0xff]
        %v3205 = vld [vmem:[#allocation3 + $0x70] sm:$0xff]
        %v3206 = vld [vmem:[%s4] sm:$0xff]
        %v3207 = vld [vmem:[%s4 + $0x8] sm:$0xff]
        %v3208 = vld [vmem:[%s4 + $0x10] sm:$0xff]
        %v3209 = vld [vmem:[%s4 + $0x18] sm:$0xff]
        %v3210 = vld [vmem:[%s4 + $0x20] sm:$0xff]
        %v3211 = vld [vmem:[%s4 + $0x28] sm:$0xff]
        %v3212 = vld [vmem:[%s4 + $0x30] sm:$0xff]
        %v3213 = vld [vmem:[%s4 + $0x38] sm:$0xff]
        %v3214 = vld [vmem:[%s4 + $0x40] sm:$0xff]
        %v3215 = vld [vmem:[%s4 + $0x48] sm:$0xff]
        %v3216 = vld [vmem:[%s4 + $0x50] sm:$0xff]
        %v3217 = vld [vmem:[%s4 + $0x58] sm:$0xff]
        %v3218 = vld [vmem:[%s4 + $0x60] sm:$0xff]
        %v3219 = vld [vmem:[%s4 + $0x68] sm:$0xff]
        %v3220 = vld [vmem:[%s4 + $0x70] sm:$0xff]
        %v3221 = vld [vmem:[%s4 + $0x78] sm:$0xff]
        %v3222 = vld [vmem:[%s4 + $0x80] sm:$0xff]
        %v3223 = vld [vmem:[%s4 + $0x88] sm:$0xff]
        %v3224 = vld [vmem:[%s4 + $0x90] sm:$0xff]
        %v3225 = vld [vmem:[%s4 + $0x98] sm:$0xff]
        %v3226 = vld [vmem:[%s4 + $0xa0] sm:$0xff]
        %v3227 = vld [vmem:[%s4 + $0xa8] sm:$0xff]
        %v3228 = vld [vmem:[%s4 + $0xb0] sm:$0xff]
        %v3229 = vld [vmem:[%s4 + $0xb8] sm:$0xff]
        %v3230 = vld [vmem:[%s4 + $0xc0] sm:$0xff]
        %v3231 = vld [vmem:[%s4 + $0xc8] sm:$0xff]
        %v3232 = vld [vmem:[%s4 + $0xd0] sm:$0xff]
        %v3233 = vld [vmem:[%s4 + $0xd8] sm:$0xff]
        %v3234 = vld [vmem:[%s4 + $0xe0] sm:$0xff]
        %v3235 = vld [vmem:[%s4 + $0xe8] sm:$0xff]
        %v3236 = vld [vmem:[%s4 + $0xf0] sm:$0xff]
        %v3237 = vld [vmem:[%s4 + $0xf8] sm:$0xff]
        %v3246 = vunpack.c.l.b16 %v3198
        %v3247 = vunpack.c.h.b16 %v3198
        %v3248 = vunpack.c.l.b16 %v3199
        %v3249 = vunpack.c.h.b16 %v3199
        %v3250 = vunpack.c.l.b16 %v3200
        %v3251 = vunpack.c.h.b16 %v3200
        %v3252 = vunpack.c.l.b16 %v3201
        %v3253 = vunpack.c.h.b16 %v3201
        %v3254 = vunpack.c.l.b16 %v3202
        %v3255 = vunpack.c.h.b16 %v3202
        %v3256 = vunpack.c.l.b16 %v3203
        %v3257 = vunpack.c.h.b16 %v3203
        %v3258 = vunpack.c.l.b16 %v3204
        %v3259 = vunpack.c.h.b16 %v3204
        %v3260 = vunpack.c.l.b16 %v3205
        %v3261 = vunpack.c.h.b16 %v3205
        %v3262 = vpack.c.b16 %v3248, %v3246
        %v3263 = vpack.c.b16 %v3249, %v3247
        %v3264 = vpack.c.b16 %v3252, %v3250
        %v3265 = vpack.c.b16 %v3253, %v3251
        %v3266 = vpack.c.b16 %v3256, %v3254
        %v3267 = vpack.c.b16 %v3257, %v3255
        %v3268 = vpack.c.b16 %v3260, %v3258
        %v3269 = vpack.c.b16 %v3261, %v3259
        %v3310 = vunpack.c.l.b16 %v3206
        %v3311 = vunpack.c.h.b16 %v3206
        %v3312 = vunpack.c.l.b16 %v3207
        %v3313 = vunpack.c.h.b16 %v3207
        %v3314 = vunpack.c.l.b16 %v3208
        %v3315 = vunpack.c.h.b16 %v3208
        %v3316 = vunpack.c.l.b16 %v3209
        %v3317 = vunpack.c.h.b16 %v3209
        %v3318 = vunpack.c.l.b16 %v3210
        %v3319 = vunpack.c.h.b16 %v3210
        %v3320 = vunpack.c.l.b16 %v3211
        %v3321 = vunpack.c.h.b16 %v3211
        %v3322 = vunpack.c.l.b16 %v3212
        %v3323 = vunpack.c.h.b16 %v3212
        %v3324 = vunpack.c.l.b16 %v3213
        %v3325 = vunpack.c.h.b16 %v3213
        %v3326 = vunpack.c.l.b16 %v3214
        %v3327 = vunpack.c.h.b16 %v3214
        %v3328 = vunpack.c.l.b16 %v3215
        %v3329 = vunpack.c.h.b16 %v3215
        %v3330 = vunpack.c.l.b16 %v3216
        %v3331 = vunpack.c.h.b16 %v3216
        %v3332 = vunpack.c.l.b16 %v3217
        %v3333 = vunpack.c.h.b16 %v3217
        %v3334 = vunpack.c.l.b16 %v3218
        %v3335 = vunpack.c.h.b16 %v3218
        %v3336 = vunpack.c.l.b16 %v3219
        %v3337 = vunpack.c.h.b16 %v3219
        %v3338 = vunpack.c.l.b16 %v3220
        %v3339 = vunpack.c.h.b16 %v3220
        %v3340 = vunpack.c.l.b16 %v3221
        %v3341 = vunpack.c.h.b16 %v3221
        %v3342 = vunpack.c.l.b16 %v3222
        %v3343 = vunpack.c.h.b16 %v3222
        %v3344 = vunpack.c.l.b16 %v3223
        %v3345 = vunpack.c.h.b16 %v3223
        %v3346 = vunpack.c.l.b16 %v3224
        %v3347 = vunpack.c.h.b16 %v3224
        %v3348 = vunpack.c.l.b16 %v3225
        %v3349 = vunpack.c.h.b16 %v3225
        %v3350 = vunpack.c.l.b16 %v3226
        %v3351 = vunpack.c.h.b16 %v3226
        %v3352 = vunpack.c.l.b16 %v3227
        %v3353 = vunpack.c.h.b16 %v3227
        %v3354 = vunpack.c.l.b16 %v3228
        %v3355 = vunpack.c.h.b16 %v3228
        %v3356 = vunpack.c.l.b16 %v3229
        %v3357 = vunpack.c.h.b16 %v3229
        %v3358 = vunpack.c.l.b16 %v3230
        %v3359 = vunpack.c.h.b16 %v3230
        %v3360 = vunpack.c.l.b16 %v3231
        %v3361 = vunpack.c.h.b16 %v3231
        %v3362 = vunpack.c.l.b16 %v3232
        %v3363 = vunpack.c.h.b16 %v3232
        %v3364 = vunpack.c.l.b16 %v3233
        %v3365 = vunpack.c.h.b16 %v3233
        %v3366 = vunpack.c.l.b16 %v3234
        %v3367 = vunpack.c.h.b16 %v3234
        %v3368 = vunpack.c.l.b16 %v3235
        %v3369 = vunpack.c.h.b16 %v3235
        %v3370 = vunpack.c.l.b16 %v3236
        %v3371 = vunpack.c.h.b16 %v3236
        %v3372 = vunpack.c.l.b16 %v3237
        %v3373 = vunpack.c.h.b16 %v3237
        %v3374 = vpack.c.b16 %v3312, %v3310
        %v3375 = vpack.c.b16 %v3313, %v3311
        %v3376 = vpack.c.b16 %v3316, %v3314
        %v3377 = vpack.c.b16 %v3317, %v3315
        %v3378 = vpack.c.b16 %v3320, %v3318
        %v3379 = vpack.c.b16 %v3321, %v3319
        %v3380 = vpack.c.b16 %v3324, %v3322
        %v3381 = vpack.c.b16 %v3325, %v3323
        %v3382 = vpack.c.b16 %v3328, %v3326
        %v3383 = vpack.c.b16 %v3329, %v3327
        %v3384 = vpack.c.b16 %v3332, %v3330
        %v3385 = vpack.c.b16 %v3333, %v3331
        %v3386 = vpack.c.b16 %v3336, %v3334
        %v3387 = vpack.c.b16 %v3337, %v3335
        %v3388 = vpack.c.b16 %v3340, %v3338
        %v3389 = vpack.c.b16 %v3341, %v3339
        %v3390 = vpack.c.b16 %v3344, %v3342
        %v3391 = vpack.c.b16 %v3345, %v3343
        %v3392 = vpack.c.b16 %v3348, %v3346
        %v3393 = vpack.c.b16 %v3349, %v3347
        %v3394 = vpack.c.b16 %v3352, %v3350
        %v3395 = vpack.c.b16 %v3353, %v3351
        %v3396 = vpack.c.b16 %v3356, %v3354
        %v3397 = vpack.c.b16 %v3357, %v3355
        %v3398 = vpack.c.b16 %v3360, %v3358
        %v3399 = vpack.c.b16 %v3361, %v3359
        %v3400 = vpack.c.b16 %v3364, %v3362
        %v3401 = vpack.c.b16 %v3365, %v3363
        %v3402 = vpack.c.b16 %v3368, %v3366
        %v3403 = vpack.c.b16 %v3369, %v3367
        %v3404 = vpack.c.b16 %v3372, %v3370
        %v3405 = vpack.c.b16 %v3373, %v3371
        %3438 = vmatprep.subr.bf16.mxu0 %v3389
        %3439 = vmatpush1.bf16.msra.mxu0 %v3388
        %3440 = vmatprep.subr.bf16.mxu0 %v3387
        %3441 = vmatpush1.bf16.msra.mxu0 %v3386
        %3442 = vmatprep.subr.bf16.mxu0 %v3385
        %3443 = vmatpush1.bf16.msra.mxu0 %v3384
        %3444 = vmatprep.subr.bf16.mxu0 %v3383
        %3445 = vmatpush1.bf16.msra.mxu0 %v3382
        %3446 = vmatprep.subr.bf16.mxu0 %v3381
        %3447 = vmatpush1.bf16.msra.mxu0 %v3380
        %3448 = vmatprep.subr.bf16.mxu0 %v3379
        %3449 = vmatpush1.bf16.msra.mxu0 %v3378
        %3450 = vmatprep.subr.bf16.mxu0 %v3377
        %3451 = vmatpush1.bf16.msra.mxu0 %v3376
        %3452 = vmatprep.subr.bf16.mxu0 %v3375
        %3453 = vmatpush1.bf16.msra.mxu0 %v3374
        %3454 = vmatprep.subr.bf16.mxu0 %v3405
        %3455 = vmatpush2.bf16.msra.mxu0 %v3404
        %3456 = vmatprep.subr.bf16.mxu0 %v3403
        %3457 = vmatpush2.bf16.msra.mxu0 %v3402
        %3458 = vmatprep.subr.bf16.mxu0 %v3401
        %3459 = vmatpush2.bf16.msra.mxu0 %v3400
        %3460 = vmatprep.subr.bf16.mxu0 %v3399
        %3461 = vmatpush2.bf16.msra.mxu0 %v3398
        %3462 = vmatprep.subr.bf16.mxu0 %v3397
        %3463 = vmatpush2.bf16.msra.mxu0 %v3396
        %3464 = vmatprep.subr.bf16.mxu0 %v3395
        %3465 = vmatpush2.bf16.msra.mxu0 %v3394
        %3466 = vmatprep.subr.bf16.mxu0 %v3393
        %3467 = vmatpush2.bf16.msra.mxu0 %v3392
        %3468 = vmatprep.subr.bf16.mxu0 %v3391
        %3469 = vmatpush2.bf16.msra.mxu0 %v3390
        %3470 = vmatprep.mubr.bf16.mxu0 %v3263
        %3471 = vmatmul.mubr.bf16.gmra.mxu0 %v3262
        %v3472 = vpop.f32.mrf.mxu0
        %v3473 = vadd.f32 0.0, %v3472
        %v3474 = vpop.f32.mrf.mxu0
        %v3475 = vadd.f32 0.0, %v3474
        %v3476 = vpop.f32.mrf.mxu0
        %v3477 = vadd.f32 0.0, %v3476
        %v3478 = vpop.f32.mrf.mxu0
        %v3479 = vadd.f32 0.0, %v3478
        %3480 = vmatprep.mubr.bf16.mxu0 %v3265
        %3481 = vmatmul.mubr.bf16.gmra.mxu0 %v3264
        %v3482 = vpop.f32.mrf.mxu0
        %v3483 = vadd.f32 0.0, %v3482
        %v3484 = vpop.f32.mrf.mxu0
        %v3485 = vadd.f32 0.0, %v3484
        %v3486 = vpop.f32.mrf.mxu0
        %v3487 = vadd.f32 0.0, %v3486
        %v3488 = vpop.f32.mrf.mxu0
        %v3489 = vadd.f32 0.0, %v3488
        %3490 = vmatprep.mubr.bf16.mxu0 %v3267
        %3491 = vmatmul.mubr.bf16.gmra.mxu0 %v3266
        %v3492 = vpop.f32.mrf.mxu0
        %v3493 = vadd.f32 0.0, %v3492
        %v3494 = vpop.f32.mrf.mxu0
        %v3495 = vadd.f32 0.0, %v3494
        %v3496 = vpop.f32.mrf.mxu0
        %v3497 = vadd.f32 0.0, %v3496
        %v3498 = vpop.f32.mrf.mxu0
        %v3499 = vadd.f32 0.0, %v3498
        %3500 = vmatprep.mubr.bf16.mxu0 %v3269
        %3501 = vmatmul.mubr.bf16.gmra.mxu0 %v3268
        %v3502 = vpop.f32.mrf.mxu0
        %v3503 = vadd.f32 0.0, %v3502
        %v3504 = vpop.f32.mrf.mxu0
        %v3505 = vadd.f32 0.0, %v3504
        %v3506 = vpop.f32.mrf.mxu0
        %v3507 = vadd.f32 0.0, %v3506
        %v3508 = vpop.f32.mrf.mxu0
        %v3509 = vadd.f32 0.0, %v3508
        %3510 = vdwg.mxu0
        %v3511 = vadd.f32 %v3196, %v3473
        %v3512 = vadd.f32 %v3197, %v3475
        %v3513 = vadd.f32 %v3196, %v3477
        %v3514 = vadd.f32 %v3197, %v3479
        %v3515 = vadd.f32 %v3196, %v3483
        %v3516 = vadd.f32 %v3197, %v3485
        %v3517 = vadd.f32 %v3196, %v3487
        %v3518 = vadd.f32 %v3197, %v3489
        %v3519 = vadd.f32 %v3196, %v3493
        %v3520 = vadd.f32 %v3197, %v3495
        %v3521 = vadd.f32 %v3196, %v3497
        %v3522 = vadd.f32 %v3197, %v3499
        %v3523 = vadd.f32 %v3196, %v3503
        %v3524 = vadd.f32 %v3197, %v3505
        %v3525 = vadd.f32 %v3196, %v3507
        %v3526 = vadd.f32 %v3197, %v3509
        %v3527 = vld [vmem:[#allocation3] sm:$0xff]
        %v3528 = vld [vmem:[#allocation3 + $0x8] sm:$0x11]
        %v3529 = vld [vmem:[#allocation3 + $0x10] sm:$0xff]
        %v3530 = vld [vmem:[#allocation3 + $0x18] sm:$0x11]
        %v3531 = vld [vmem:[#allocation3 + $0x20] sm:$0xff]
        %v3532 = vld [vmem:[#allocation3 + $0x28] sm:$0x11]
        %v3533 = vld [vmem:[#allocation3 + $0x30] sm:$0xff]
        %v3534 = vld [vmem:[#allocation3 + $0x38] sm:$0x11]
        %v3535 = vld [vmem:[#allocation3 + $0x40] sm:$0xff]
        %v3536 = vld [vmem:[#allocation3 + $0x48] sm:$0x11]
        %v3537 = vld [vmem:[#allocation3 + $0x50] sm:$0xff]
        %v3538 = vld [vmem:[#allocation3 + $0x58] sm:$0x11]
        %v3539 = vld [vmem:[#allocation3 + $0x60] sm:$0xff]
        %v3540 = vld [vmem:[#allocation3 + $0x68] sm:$0x11]
        %v3541 = vld [vmem:[#allocation3 + $0x70] sm:$0xff]
        %v3542 = vld [vmem:[#allocation3 + $0x78] sm:$0x11]
        %v3544 = vshrl.u32 %v3527, 16
        %v3546 = vrot.slane %v3544, 4
        %v3547 = vshll.u32 %v3527, 16
        %v3549 = vrot.slane %v3547, 5
        %v3550 = vor.u32 %v3546, %v3549
        %v3551 = vrot.slane %v3550, 4
        %v3553 = vshll.u32 %v3528, 16
        %v3555 = vrot.slane %v3553, 5
        %v3556 = vsel %vm809, %v3551, %v3555
        %v3558 = vshrl.u32 %v3529, 16
        %v3560 = vrot.slane %v3558, 4
        %v3561 = vshll.u32 %v3529, 16
        %v3563 = vrot.slane %v3561, 5
        %v3564 = vor.u32 %v3560, %v3563
        %v3565 = vrot.slane %v3564, 4
        %v3567 = vshll.u32 %v3530, 16
        %v3569 = vrot.slane %v3567, 5
        %v3570 = vsel %vm809, %v3565, %v3569
        %v3572 = vshrl.u32 %v3531, 16
        %v3574 = vrot.slane %v3572, 4
        %v3575 = vshll.u32 %v3531, 16
        %v3577 = vrot.slane %v3575, 5
        %v3578 = vor.u32 %v3574, %v3577
        %v3579 = vrot.slane %v3578, 4
        %v3581 = vshll.u32 %v3532, 16
        %v3583 = vrot.slane %v3581, 5
        %v3584 = vsel %vm809, %v3579, %v3583
        %v3586 = vshrl.u32 %v3533, 16
        %v3588 = vrot.slane %v3586, 4
        %v3589 = vshll.u32 %v3533, 16
        %v3591 = vrot.slane %v3589, 5
        %v3592 = vor.u32 %v3588, %v3591
        %v3593 = vrot.slane %v3592, 4
        %v3595 = vshll.u32 %v3534, 16
        %v3597 = vrot.slane %v3595, 5
        %v3598 = vsel %vm809, %v3593, %v3597
        %v3600 = vshrl.u32 %v3535, 16
        %v3602 = vrot.slane %v3600, 4
        %v3603 = vshll.u32 %v3535, 16
        %v3605 = vrot.slane %v3603, 5
        %v3606 = vor.u32 %v3602, %v3605
        %v3607 = vrot.slane %v3606, 4
        %v3609 = vshll.u32 %v3536, 16
        %v3611 = vrot.slane %v3609, 5
        %v3612 = vsel %vm809, %v3607, %v3611
        %v3614 = vshrl.u32 %v3537, 16
        %v3616 = vrot.slane %v3614, 4
        %v3617 = vshll.u32 %v3537, 16
        %v3619 = vrot.slane %v3617, 5
        %v3620 = vor.u32 %v3616, %v3619
        %v3621 = vrot.slane %v3620, 4
        %v3623 = vshll.u32 %v3538, 16
        %v3625 = vrot.slane %v3623, 5
        %v3626 = vsel %vm809, %v3621, %v3625
        %v3628 = vshrl.u32 %v3539, 16
        %v3630 = vrot.slane %v3628, 4
        %v3631 = vshll.u32 %v3539, 16
        %v3633 = vrot.slane %v3631, 5
        %v3634 = vor.u32 %v3630, %v3633
        %v3635 = vrot.slane %v3634, 4
        %v3637 = vshll.u32 %v3540, 16
        %v3639 = vrot.slane %v3637, 5
        %v3640 = vsel %vm809, %v3635, %v3639
        %v3642 = vshrl.u32 %v3541, 16
        %v3644 = vrot.slane %v3642, 4
        %v3645 = vshll.u32 %v3541, 16
        %v3647 = vrot.slane %v3645, 5
        %v3648 = vor.u32 %v3644, %v3647
        %v3649 = vrot.slane %v3648, 4
        %v3651 = vshll.u32 %v3542, 16
        %v3653 = vrot.slane %v3651, 5
        %v3654 = vsel %vm809, %v3649, %v3653
        %s3655 = scalar_lea.vmem %s4, 256
        %v3656 = vld [vmem:[%s3655] sm:$0xff]
        %v3657 = vld [vmem:[%s3655 + $0x8] sm:$0xff]
        %v3658 = vld [vmem:[%s3655 + $0x10] sm:$0xff]
        %v3659 = vld [vmem:[%s3655 + $0x18] sm:$0xff]
        %v3660 = vld [vmem:[%s3655 + $0x20] sm:$0xff]
        %v3661 = vld [vmem:[%s3655 + $0x28] sm:$0xff]
        %v3662 = vld [vmem:[%s3655 + $0x30] sm:$0xff]
        %v3663 = vld [vmem:[%s3655 + $0x38] sm:$0xff]
        %v3664 = vld [vmem:[%s3655 + $0x40] sm:$0xff]
        %v3665 = vld [vmem:[%s3655 + $0x48] sm:$0xff]
        %v3666 = vld [vmem:[%s3655 + $0x50] sm:$0xff]
        %v3667 = vld [vmem:[%s3655 + $0x58] sm:$0xff]
        %v3668 = vld [vmem:[%s3655 + $0x60] sm:$0xff]
        %v3669 = vld [vmem:[%s3655 + $0x68] sm:$0xff]
        %v3670 = vld [vmem:[%s3655 + $0x70] sm:$0xff]
        %v3671 = vld [vmem:[%s3655 + $0x78] sm:$0xff]
        %v3672 = vld [vmem:[%s3655 + $0x80] sm:$0xff]
        %v3673 = vld [vmem:[%s3655 + $0x88] sm:$0xff]
        %v3674 = vld [vmem:[%s3655 + $0x90] sm:$0xff]
        %v3675 = vld [vmem:[%s3655 + $0x98] sm:$0xff]
        %v3676 = vld [vmem:[%s3655 + $0xa0] sm:$0xff]
        %v3677 = vld [vmem:[%s3655 + $0xa8] sm:$0xff]
        %v3678 = vld [vmem:[%s3655 + $0xb0] sm:$0xff]
        %v3679 = vld [vmem:[%s3655 + $0xb8] sm:$0xff]
        %v3680 = vld [vmem:[%s3655 + $0xc0] sm:$0xff]
        %v3681 = vld [vmem:[%s3655 + $0xc8] sm:$0xff]
        %v3682 = vld [vmem:[%s3655 + $0xd0] sm:$0xff]
        %v3683 = vld [vmem:[%s3655 + $0xd8] sm:$0xff]
        %v3684 = vld [vmem:[%s3655 + $0xe0] sm:$0xff]
        %v3685 = vld [vmem:[%s3655 + $0xe8] sm:$0xff]
        %v3686 = vld [vmem:[%s3655 + $0xf0] sm:$0xff]
        %v3687 = vld [vmem:[%s3655 + $0xf8] sm:$0xff]
        %v3688 = vunpack.c.l.b16 %v3556
        %v3689 = vunpack.c.h.b16 %v3556
        %v3690 = vunpack.c.l.b16 %v3570
        %v3691 = vunpack.c.h.b16 %v3570
        %v3692 = vunpack.c.l.b16 %v3584
        %v3693 = vunpack.c.h.b16 %v3584
        %v3694 = vunpack.c.l.b16 %v3598
        %v3695 = vunpack.c.h.b16 %v3598
        %v3696 = vunpack.c.l.b16 %v3612
        %v3697 = vunpack.c.h.b16 %v3612
        %v3698 = vunpack.c.l.b16 %v3626
        %v3699 = vunpack.c.h.b16 %v3626
        %v3700 = vunpack.c.l.b16 %v3640
        %v3701 = vunpack.c.h.b16 %v3640
        %v3702 = vunpack.c.l.b16 %v3654
        %v3703 = vunpack.c.h.b16 %v3654
        %v3704 = vpack.c.b16 %v3690, %v3688
        %v3705 = vpack.c.b16 %v3691, %v3689
        %v3706 = vpack.c.b16 %v3694, %v3692
        %v3707 = vpack.c.b16 %v3695, %v3693
        %v3708 = vpack.c.b16 %v3698, %v3696
        %v3709 = vpack.c.b16 %v3699, %v3697
        %v3710 = vpack.c.b16 %v3702, %v3700
        %v3711 = vpack.c.b16 %v3703, %v3701
        %v3752 = vunpack.c.l.b16 %v3656
        %v3753 = vunpack.c.h.b16 %v3656
        %v3754 = vunpack.c.l.b16 %v3657
        %v3755 = vunpack.c.h.b16 %v3657
        %v3756 = vunpack.c.l.b16 %v3658
        %v3757 = vunpack.c.h.b16 %v3658
        %v3758 = vunpack.c.l.b16 %v3659
        %v3759 = vunpack.c.h.b16 %v3659
        %v3760 = vunpack.c.l.b16 %v3660
        %v3761 = vunpack.c.h.b16 %v3660
        %v3762 = vunpack.c.l.b16 %v3661
        %v3763 = vunpack.c.h.b16 %v3661
        %v3764 = vunpack.c.l.b16 %v3662
        %v3765 = vunpack.c.h.b16 %v3662
        %v3766 = vunpack.c.l.b16 %v3663
        %v3767 = vunpack.c.h.b16 %v3663
        %v3768 = vunpack.c.l.b16 %v3664
        %v3769 = vunpack.c.h.b16 %v3664
        %v3770 = vunpack.c.l.b16 %v3665
        %v3771 = vunpack.c.h.b16 %v3665
        %v3772 = vunpack.c.l.b16 %v3666
        %v3773 = vunpack.c.h.b16 %v3666
        %v3774 = vunpack.c.l.b16 %v3667
        %v3775 = vunpack.c.h.b16 %v3667
        %v3776 = vunpack.c.l.b16 %v3668
        %v3777 = vunpack.c.h.b16 %v3668
        %v3778 = vunpack.c.l.b16 %v3669
        %v3779 = vunpack.c.h.b16 %v3669
        %v3780 = vunpack.c.l.b16 %v3670
        %v3781 = vunpack.c.h.b16 %v3670
        %v3782 = vunpack.c.l.b16 %v3671
        %v3783 = vunpack.c.h.b16 %v3671
        %v3784 = vunpack.c.l.b16 %v3672
        %v3785 = vunpack.c.h.b16 %v3672
        %v3786 = vunpack.c.l.b16 %v3673
        %v3787 = vunpack.c.h.b16 %v3673
        %v3788 = vunpack.c.l.b16 %v3674
        %v3789 = vunpack.c.h.b16 %v3674
        %v3790 = vunpack.c.l.b16 %v3675
        %v3791 = vunpack.c.h.b16 %v3675
        %v3792 = vunpack.c.l.b16 %v3676
        %v3793 = vunpack.c.h.b16 %v3676
        %v3794 = vunpack.c.l.b16 %v3677
        %v3795 = vunpack.c.h.b16 %v3677
        %v3796 = vunpack.c.l.b16 %v3678
        %v3797 = vunpack.c.h.b16 %v3678
        %v3798 = vunpack.c.l.b16 %v3679
        %v3799 = vunpack.c.h.b16 %v3679
        %v3800 = vunpack.c.l.b16 %v3680
        %v3801 = vunpack.c.h.b16 %v3680
        %v3802 = vunpack.c.l.b16 %v3681
        %v3803 = vunpack.c.h.b16 %v3681
        %v3804 = vunpack.c.l.b16 %v3682
        %v3805 = vunpack.c.h.b16 %v3682
        %v3806 = vunpack.c.l.b16 %v3683
        %v3807 = vunpack.c.h.b16 %v3683
        %v3808 = vunpack.c.l.b16 %v3684
        %v3809 = vunpack.c.h.b16 %v3684
        %v3810 = vunpack.c.l.b16 %v3685
        %v3811 = vunpack.c.h.b16 %v3685
        %v3812 = vunpack.c.l.b16 %v3686
        %v3813 = vunpack.c.h.b16 %v3686
        %v3814 = vunpack.c.l.b16 %v3687
        %v3815 = vunpack.c.h.b16 %v3687
        %v3816 = vpack.c.b16 %v3754, %v3752
        %v3817 = vpack.c.b16 %v3755, %v3753
        %v3818 = vpack.c.b16 %v3758, %v3756
        %v3819 = vpack.c.b16 %v3759, %v3757
        %v3820 = vpack.c.b16 %v3762, %v3760
        %v3821 = vpack.c.b16 %v3763, %v3761
        %v3822 = vpack.c.b16 %v3766, %v3764
        %v3823 = vpack.c.b16 %v3767, %v3765
        %v3824 = vpack.c.b16 %v3770, %v3768
        %v3825 = vpack.c.b16 %v3771, %v3769
        %v3826 = vpack.c.b16 %v3774, %v3772
        %v3827 = vpack.c.b16 %v3775, %v3773
        %v3828 = vpack.c.b16 %v3778, %v3776
        %v3829 = vpack.c.b16 %v3779, %v3777
        %v3830 = vpack.c.b16 %v3782, %v3780
        %v3831 = vpack.c.b16 %v3783, %v3781
        %v3832 = vpack.c.b16 %v3786, %v3784
        %v3833 = vpack.c.b16 %v3787, %v3785
        %v3834 = vpack.c.b16 %v3790, %v3788
        %v3835 = vpack.c.b16 %v3791, %v3789
        %v3836 = vpack.c.b16 %v3794, %v3792
        %v3837 = vpack.c.b16 %v3795, %v3793
        %v3838 = vpack.c.b16 %v3798, %v3796
        %v3839 = vpack.c.b16 %v3799, %v3797
        %v3840 = vpack.c.b16 %v3802, %v3800
        %v3841 = vpack.c.b16 %v3803, %v3801
        %v3842 = vpack.c.b16 %v3806, %v3804
        %v3843 = vpack.c.b16 %v3807, %v3805
        %v3844 = vpack.c.b16 %v3810, %v3808
        %v3845 = vpack.c.b16 %v3811, %v3809
        %v3846 = vpack.c.b16 %v3814, %v3812
        %v3847 = vpack.c.b16 %v3815, %v3813
        %3880 = vmatprep.subr.bf16.mxu0 %v3831
        %3881 = vmatpush1.bf16.msra.mxu0 %v3830
        %3882 = vmatprep.subr.bf16.mxu0 %v3829
        %3883 = vmatpush1.bf16.msra.mxu0 %v3828
        %3884 = vmatprep.subr.bf16.mxu0 %v3827
        %3885 = vmatpush1.bf16.msra.mxu0 %v3826
        %3886 = vmatprep.subr.bf16.mxu0 %v3825
        %3887 = vmatpush1.bf16.msra.mxu0 %v3824
        %3888 = vmatprep.subr.bf16.mxu0 %v3823
        %3889 = vmatpush1.bf16.msra.mxu0 %v3822
        %3890 = vmatprep.subr.bf16.mxu0 %v3821
        %3891 = vmatpush1.bf16.msra.mxu0 %v3820
        %3892 = vmatprep.subr.bf16.mxu0 %v3819
        %3893 = vmatpush1.bf16.msra.mxu0 %v3818
        %3894 = vmatprep.subr.bf16.mxu0 %v3817
        %3895 = vmatpush1.bf16.msra.mxu0 %v3816
        %3896 = vmatprep.subr.bf16.mxu0 %v3847
        %3897 = vmatpush2.bf16.msra.mxu0 %v3846
        %3898 = vmatprep.subr.bf16.mxu0 %v3845
        %3899 = vmatpush2.bf16.msra.mxu0 %v3844
        %3900 = vmatprep.subr.bf16.mxu0 %v3843
        %3901 = vmatpush2.bf16.msra.mxu0 %v3842
        %3902 = vmatprep.subr.bf16.mxu0 %v3841
        %3903 = vmatpush2.bf16.msra.mxu0 %v3840
        %3904 = vmatprep.subr.bf16.mxu0 %v3839
        %3905 = vmatpush2.bf16.msra.mxu0 %v3838
        %3906 = vmatprep.subr.bf16.mxu0 %v3837
        %3907 = vmatpush2.bf16.msra.mxu0 %v3836
        %3908 = vmatprep.subr.bf16.mxu0 %v3835
        %3909 = vmatpush2.bf16.msra.mxu0 %v3834
        %3910 = vmatprep.subr.bf16.mxu0 %v3833
        %3911 = vmatpush2.bf16.msra.mxu0 %v3832
        %3912 = vmatprep.mubr.bf16.mxu0 %v3705
        %3913 = vmatmul.mubr.bf16.gmra.mxu0 %v3704
        %v3914 = vpop.f32.mrf.mxu0
        %v3915 = vadd.f32 0.0, %v3914
        %v3916 = vpop.f32.mrf.mxu0
        %v3917 = vadd.f32 0.0, %v3916
        %v3918 = vpop.f32.mrf.mxu0
        %v3919 = vadd.f32 0.0, %v3918
        %v3920 = vpop.f32.mrf.mxu0
        %v3921 = vadd.f32 0.0, %v3920
        %3922 = vmatprep.mubr.bf16.mxu0 %v3707
        %3923 = vmatmul.mubr.bf16.gmra.mxu0 %v3706
        %v3924 = vpop.f32.mrf.mxu0
        %v3925 = vadd.f32 0.0, %v3924
        %v3926 = vpop.f32.mrf.mxu0
        %v3927 = vadd.f32 0.0, %v3926
        %v3928 = vpop.f32.mrf.mxu0
        %v3929 = vadd.f32 0.0, %v3928
        %v3930 = vpop.f32.mrf.mxu0
        %v3931 = vadd.f32 0.0, %v3930
        %3932 = vmatprep.mubr.bf16.mxu0 %v3709
        %3933 = vmatmul.mubr.bf16.gmra.mxu0 %v3708
        %v3934 = vpop.f32.mrf.mxu0
        %v3935 = vadd.f32 0.0, %v3934
        %v3936 = vpop.f32.mrf.mxu0
        %v3937 = vadd.f32 0.0, %v3936
        %v3938 = vpop.f32.mrf.mxu0
        %v3939 = vadd.f32 0.0, %v3938
        %v3940 = vpop.f32.mrf.mxu0
        %v3941 = vadd.f32 0.0, %v3940
        %3942 = vmatprep.mubr.bf16.mxu0 %v3711
        %3943 = vmatmul.mubr.bf16.gmra.mxu0 %v3710
        %v3944 = vpop.f32.mrf.mxu0
        %v3945 = vadd.f32 0.0, %v3944
        %v3946 = vpop.f32.mrf.mxu0
        %v3947 = vadd.f32 0.0, %v3946
        %v3948 = vpop.f32.mrf.mxu0
        %v3949 = vadd.f32 0.0, %v3948
        %v3950 = vpop.f32.mrf.mxu0
        %v3951 = vadd.f32 0.0, %v3950
        %3952 = vdwg.mxu0
        %v3953 = vadd.f32 %v3511, %v3915
        %v3954 = vadd.f32 %v3512, %v3917
        %v3955 = vadd.f32 %v3513, %v3919
        %v3956 = vadd.f32 %v3514, %v3921
        %v3957 = vadd.f32 %v3515, %v3925
        %v3958 = vadd.f32 %v3516, %v3927
        %v3959 = vadd.f32 %v3517, %v3929
        %v3960 = vadd.f32 %v3518, %v3931
        %v3961 = vadd.f32 %v3519, %v3935
        %v3962 = vadd.f32 %v3520, %v3937
        %v3963 = vadd.f32 %v3521, %v3939
        %v3964 = vadd.f32 %v3522, %v3941
        %v3965 = vadd.f32 %v3523, %v3945
        %v3966 = vadd.f32 %v3524, %v3947
        %v3967 = vadd.f32 %v3525, %v3949
        %v3968 = vadd.f32 %v3526, %v3951
        %v3969 = vld [vmem:[#allocation3] sm:$0xee]
        %v3970 = vld [vmem:[#allocation3 + $0x10] sm:$0xee]
        %v3971 = vld [vmem:[#allocation3 + $0x20] sm:$0xee]
        %v3972 = vld [vmem:[#allocation3 + $0x30] sm:$0xee]
        %v3973 = vld [vmem:[#allocation3 + $0x40] sm:$0xee]
        %v3974 = vld [vmem:[#allocation3 + $0x50] sm:$0xee]
        %v3975 = vld [vmem:[#allocation3 + $0x60] sm:$0xee]
        %v3976 = vld [vmem:[#allocation3 + $0x70] sm:$0xee]
        %v3993 = vrot.slane %v3969, 5
        %v3994 = vrot.slane %v3993, 4
        %v3995 = vrot.slane %v3528, 5
        %v3996 = vsel %vm1086, %v3994, %v3995
        %v3997 = vrot.slane %v3970, 5
        %v3998 = vrot.slane %v3997, 4
        %v3999 = vrot.slane %v3530, 5
        %v4000 = vsel %vm1086, %v3998, %v3999
        %v4001 = vrot.slane %v3971, 5
        %v4002 = vrot.slane %v4001, 4
        %v4003 = vrot.slane %v3532, 5
        %v4004 = vsel %vm1086, %v4002, %v4003
        %v4005 = vrot.slane %v3972, 5
        %v4006 = vrot.slane %v4005, 4
        %v4007 = vrot.slane %v3534, 5
        %v4008 = vsel %vm1086, %v4006, %v4007
        %v4009 = vrot.slane %v3973, 5
        %v4010 = vrot.slane %v4009, 4
        %v4011 = vrot.slane %v3536, 5
        %v4012 = vsel %vm1086, %v4010, %v4011
        %v4013 = vrot.slane %v3974, 5
        %v4014 = vrot.slane %v4013, 4
        %v4015 = vrot.slane %v3538, 5
        %v4016 = vsel %vm1086, %v4014, %v4015
        %v4017 = vrot.slane %v3975, 5
        %v4018 = vrot.slane %v4017, 4
        %v4019 = vrot.slane %v3540, 5
        %v4020 = vsel %vm1086, %v4018, %v4019
        %v4021 = vrot.slane %v3976, 5
        %v4022 = vrot.slane %v4021, 4
        %v4023 = vrot.slane %v3542, 5
        %v4024 = vsel %vm1086, %v4022, %v4023
        %s4025 = scalar_lea.vmem %s4, 512
        %v4026 = vld [vmem:[%s4025] sm:$0xff]
        %v4027 = vld [vmem:[%s4025 + $0x8] sm:$0xff]
        %v4028 = vld [vmem:[%s4025 + $0x10] sm:$0xff]
        %v4029 = vld [vmem:[%s4025 + $0x18] sm:$0xff]
        %v4030 = vld [vmem:[%s4025 + $0x20] sm:$0xff]
        %v4031 = vld [vmem:[%s4025 + $0x28] sm:$0xff]
        %v4032 = vld [vmem:[%s4025 + $0x30] sm:$0xff]
        %v4033 = vld [vmem:[%s4025 + $0x38] sm:$0xff]
        %v4034 = vld [vmem:[%s4025 + $0x40] sm:$0xff]
        %v4035 = vld [vmem:[%s4025 + $0x48] sm:$0xff]
        %v4036 = vld [vmem:[%s4025 + $0x50] sm:$0xff]
        %v4037 = vld [vmem:[%s4025 + $0x58] sm:$0xff]
        %v4038 = vld [vmem:[%s4025 + $0x60] sm:$0xff]
        %v4039 = vld [vmem:[%s4025 + $0x68] sm:$0xff]
        %v4040 = vld [vmem:[%s4025 + $0x70] sm:$0xff]
        %v4041 = vld [vmem:[%s4025 + $0x78] sm:$0xff]
        %v4042 = vld [vmem:[%s4025 + $0x80] sm:$0xff]
        %v4043 = vld [vmem:[%s4025 + $0x88] sm:$0xff]
        %v4044 = vld [vmem:[%s4025 + $0x90] sm:$0xff]
        %v4045 = vld [vmem:[%s4025 + $0x98] sm:$0xff]
        %v4046 = vld [vmem:[%s4025 + $0xa0] sm:$0xff]
        %v4047 = vld [vmem:[%s4025 + $0xa8] sm:$0xff]
        %v4048 = vld [vmem:[%s4025 + $0xb0] sm:$0xff]
        %v4049 = vld [vmem:[%s4025 + $0xb8] sm:$0xff]
        %v4050 = vld [vmem:[%s4025 + $0xc0] sm:$0xff]
        %v4051 = vld [vmem:[%s4025 + $0xc8] sm:$0xff]
        %v4052 = vld [vmem:[%s4025 + $0xd0] sm:$0xff]
        %v4053 = vld [vmem:[%s4025 + $0xd8] sm:$0xff]
        %v4054 = vld [vmem:[%s4025 + $0xe0] sm:$0xff]
        %v4055 = vld [vmem:[%s4025 + $0xe8] sm:$0xff]
        %v4056 = vld [vmem:[%s4025 + $0xf0] sm:$0xff]
        %v4057 = vld [vmem:[%s4025 + $0xf8] sm:$0xff]
        %v4058 = vunpack.c.l.b16 %v3996
        %v4059 = vunpack.c.h.b16 %v3996
        %v4060 = vunpack.c.l.b16 %v4000
        %v4061 = vunpack.c.h.b16 %v4000
        %v4062 = vunpack.c.l.b16 %v4004
        %v4063 = vunpack.c.h.b16 %v4004
        %v4064 = vunpack.c.l.b16 %v4008
        %v4065 = vunpack.c.h.b16 %v4008
        %v4066 = vunpack.c.l.b16 %v4012
        %v4067 = vunpack.c.h.b16 %v4012
        %v4068 = vunpack.c.l.b16 %v4016
        %v4069 = vunpack.c.h.b16 %v4016
        %v4070 = vunpack.c.l.b16 %v4020
        %v4071 = vunpack.c.h.b16 %v4020
        %v4072 = vunpack.c.l.b16 %v4024
        %v4073 = vunpack.c.h.b16 %v4024
        %v4074 = vpack.c.b16 %v4060, %v4058
        %v4075 = vpack.c.b16 %v4061, %v4059
        %v4076 = vpack.c.b16 %v4064, %v4062
        %v4077 = vpack.c.b16 %v4065, %v4063
        %v4078 = vpack.c.b16 %v4068, %v4066
        %v4079 = vpack.c.b16 %v4069, %v4067
        %v4080 = vpack.c.b16 %v4072, %v4070
        %v4081 = vpack.c.b16 %v4073, %v4071
        %v4122 = vunpack.c.l.b16 %v4026
        %v4123 = vunpack.c.h.b16 %v4026
        %v4124 = vunpack.c.l.b16 %v4027
        %v4125 = vunpack.c.h.b16 %v4027
        %v4126 = vunpack.c.l.b16 %v4028
        %v4127 = vunpack.c.h.b16 %v4028
        %v4128 = vunpack.c.l.b16 %v4029
        %v4129 = vunpack.c.h.b16 %v4029
        %v4130 = vunpack.c.l.b16 %v4030
        %v4131 = vunpack.c.h.b16 %v4030
        %v4132 = vunpack.c.l.b16 %v4031
        %v4133 = vunpack.c.h.b16 %v4031
        %v4134 = vunpack.c.l.b16 %v4032
        %v4135 = vunpack.c.h.b16 %v4032
        %v4136 = vunpack.c.l.b16 %v4033
        %v4137 = vunpack.c.h.b16 %v4033
        %v4138 = vunpack.c.l.b16 %v4034
        %v4139 = vunpack.c.h.b16 %v4034
        %v4140 = vunpack.c.l.b16 %v4035
        %v4141 = vunpack.c.h.b16 %v4035
        %v4142 = vunpack.c.l.b16 %v4036
        %v4143 = vunpack.c.h.b16 %v4036
        %v4144 = vunpack.c.l.b16 %v4037
        %v4145 = vunpack.c.h.b16 %v4037
        %v4146 = vunpack.c.l.b16 %v4038
        %v4147 = vunpack.c.h.b16 %v4038
        %v4148 = vunpack.c.l.b16 %v4039
        %v4149 = vunpack.c.h.b16 %v4039
        %v4150 = vunpack.c.l.b16 %v4040
        %v4151 = vunpack.c.h.b16 %v4040
        %v4152 = vunpack.c.l.b16 %v4041
        %v4153 = vunpack.c.h.b16 %v4041
        %v4154 = vunpack.c.l.b16 %v4042
        %v4155 = vunpack.c.h.b16 %v4042
        %v4156 = vunpack.c.l.b16 %v4043
        %v4157 = vunpack.c.h.b16 %v4043
        %v4158 = vunpack.c.l.b16 %v4044
        %v4159 = vunpack.c.h.b16 %v4044
        %v4160 = vunpack.c.l.b16 %v4045
        %v4161 = vunpack.c.h.b16 %v4045
        %v4162 = vunpack.c.l.b16 %v4046
        %v4163 = vunpack.c.h.b16 %v4046
        %v4164 = vunpack.c.l.b16 %v4047
        %v4165 = vunpack.c.h.b16 %v4047
        %v4166 = vunpack.c.l.b16 %v4048
        %v4167 = vunpack.c.h.b16 %v4048
        %v4168 = vunpack.c.l.b16 %v4049
        %v4169 = vunpack.c.h.b16 %v4049
        %v4170 = vunpack.c.l.b16 %v4050
        %v4171 = vunpack.c.h.b16 %v4050
        %v4172 = vunpack.c.l.b16 %v4051
        %v4173 = vunpack.c.h.b16 %v4051
        %v4174 = vunpack.c.l.b16 %v4052
        %v4175 = vunpack.c.h.b16 %v4052
        %v4176 = vunpack.c.l.b16 %v4053
        %v4177 = vunpack.c.h.b16 %v4053
        %v4178 = vunpack.c.l.b16 %v4054
        %v4179 = vunpack.c.h.b16 %v4054
        %v4180 = vunpack.c.l.b16 %v4055
        %v4181 = vunpack.c.h.b16 %v4055
        %v4182 = vunpack.c.l.b16 %v4056
        %v4183 = vunpack.c.h.b16 %v4056
        %v4184 = vunpack.c.l.b16 %v4057
        %v4185 = vunpack.c.h.b16 %v4057
        %v4186 = vpack.c.b16 %v4124, %v4122
        %v4187 = vpack.c.b16 %v4125, %v4123
        %v4188 = vpack.c.b16 %v4128, %v4126
        %v4189 = vpack.c.b16 %v4129, %v4127
        %v4190 = vpack.c.b16 %v4132, %v4130
        %v4191 = vpack.c.b16 %v4133, %v4131
        %v4192 = vpack.c.b16 %v4136, %v4134
        %v4193 = vpack.c.b16 %v4137, %v4135
        %v4194 = vpack.c.b16 %v4140, %v4138
        %v4195 = vpack.c.b16 %v4141, %v4139
        %v4196 = vpack.c.b16 %v4144, %v4142
        %v4197 = vpack.c.b16 %v4145, %v4143
        %v4198 = vpack.c.b16 %v4148, %v4146
        %v4199 = vpack.c.b16 %v4149, %v4147
        %v4200 = vpack.c.b16 %v4152, %v4150
        %v4201 = vpack.c.b16 %v4153, %v4151
        %v4202 = vpack.c.b16 %v4156, %v4154
        %v4203 = vpack.c.b16 %v4157, %v4155
        %v4204 = vpack.c.b16 %v4160, %v4158
        %v4205 = vpack.c.b16 %v4161, %v4159
        %v4206 = vpack.c.b16 %v4164, %v4162
        %v4207 = vpack.c.b16 %v4165, %v4163
        %v4208 = vpack.c.b16 %v4168, %v4166
        %v4209 = vpack.c.b16 %v4169, %v4167
        %v4210 = vpack.c.b16 %v4172, %v4170
        %v4211 = vpack.c.b16 %v4173, %v4171
        %v4212 = vpack.c.b16 %v4176, %v4174
        %v4213 = vpack.c.b16 %v4177, %v4175
        %v4214 = vpack.c.b16 %v4180, %v4178
        %v4215 = vpack.c.b16 %v4181, %v4179
        %v4216 = vpack.c.b16 %v4184, %v4182
        %v4217 = vpack.c.b16 %v4185, %v4183
        %4250 = vmatprep.subr.bf16.mxu0 %v4201
        %4251 = vmatpush1.bf16.msra.mxu0 %v4200
        %4252 = vmatprep.subr.bf16.mxu0 %v4199
        %4253 = vmatpush1.bf16.msra.mxu0 %v4198
        %4254 = vmatprep.subr.bf16.mxu0 %v4197
        %4255 = vmatpush1.bf16.msra.mxu0 %v4196
        %4256 = vmatprep.subr.bf16.mxu0 %v4195
        %4257 = vmatpush1.bf16.msra.mxu0 %v4194
        %4258 = vmatprep.subr.bf16.mxu0 %v4193
        %4259 = vmatpush1.bf16.msra.mxu0 %v4192
        %4260 = vmatprep.subr.bf16.mxu0 %v4191
        %4261 = vmatpush1.bf16.msra.mxu0 %v4190
        %4262 = vmatprep.subr.bf16.mxu0 %v4189
        %4263 = vmatpush1.bf16.msra.mxu0 %v4188
        %4264 = vmatprep.subr.bf16.mxu0 %v4187
        %4265 = vmatpush1.bf16.msra.mxu0 %v4186
        %4266 = vmatprep.subr.bf16.mxu0 %v4217
        %4267 = vmatpush2.bf16.msra.mxu0 %v4216
        %4268 = vmatprep.subr.bf16.mxu0 %v4215
        %4269 = vmatpush2.bf16.msra.mxu0 %v4214
        %4270 = vmatprep.subr.bf16.mxu0 %v4213
        %4271 = vmatpush2.bf16.msra.mxu0 %v4212
        %4272 = vmatprep.subr.bf16.mxu0 %v4211
        %4273 = vmatpush2.bf16.msra.mxu0 %v4210
        %4274 = vmatprep.subr.bf16.mxu0 %v4209
        %4275 = vmatpush2.bf16.msra.mxu0 %v4208
        %4276 = vmatprep.subr.bf16.mxu0 %v4207
        %4277 = vmatpush2.bf16.msra.mxu0 %v4206
        %4278 = vmatprep.subr.bf16.mxu0 %v4205
        %4279 = vmatpush2.bf16.msra.mxu0 %v4204
        %4280 = vmatprep.subr.bf16.mxu0 %v4203
        %4281 = vmatpush2.bf16.msra.mxu0 %v4202
        %4282 = vmatprep.mubr.bf16.mxu0 %v4075
        %4283 = vmatmul.mubr.bf16.gmra.mxu0 %v4074
        %v4284 = vpop.f32.mrf.mxu0
        %v4285 = vadd.f32 0.0, %v4284
        %v4286 = vpop.f32.mrf.mxu0
        %v4287 = vadd.f32 0.0, %v4286
        %v4288 = vpop.f32.mrf.mxu0
        %v4289 = vadd.f32 0.0, %v4288
        %v4290 = vpop.f32.mrf.mxu0
        %v4291 = vadd.f32 0.0, %v4290
        %4292 = vmatprep.mubr.bf16.mxu0 %v4077
        %4293 = vmatmul.mubr.bf16.gmra.mxu0 %v4076
        %v4294 = vpop.f32.mrf.mxu0
        %v4295 = vadd.f32 0.0, %v4294
        %v4296 = vpop.f32.mrf.mxu0
        %v4297 = vadd.f32 0.0, %v4296
        %v4298 = vpop.f32.mrf.mxu0
        %v4299 = vadd.f32 0.0, %v4298
        %v4300 = vpop.f32.mrf.mxu0
        %v4301 = vadd.f32 0.0, %v4300
        %4302 = vmatprep.mubr.bf16.mxu0 %v4079
        %4303 = vmatmul.mubr.bf16.gmra.mxu0 %v4078
        %v4304 = vpop.f32.mrf.mxu0
        %v4305 = vadd.f32 0.0, %v4304
        %v4306 = vpop.f32.mrf.mxu0
        %v4307 = vadd.f32 0.0, %v4306
        %v4308 = vpop.f32.mrf.mxu0
        %v4309 = vadd.f32 0.0, %v4308
        %v4310 = vpop.f32.mrf.mxu0
        %v4311 = vadd.f32 0.0, %v4310
        %4312 = vmatprep.mubr.bf16.mxu0 %v4081
        %4313 = vmatmul.mubr.bf16.gmra.mxu0 %v4080
        %v4314 = vpop.f32.mrf.mxu0
        %v4315 = vadd.f32 0.0, %v4314
        %v4316 = vpop.f32.mrf.mxu0
        %v4317 = vadd.f32 0.0, %v4316
        %v4318 = vpop.f32.mrf.mxu0
        %v4319 = vadd.f32 0.0, %v4318
        %v4320 = vpop.f32.mrf.mxu0
        %v4321 = vadd.f32 0.0, %v4320
        %4322 = vdwg.mxu0
        %v4323 = vadd.f32 %v3953, %v4285
        %v4324 = vadd.f32 %v3954, %v4287
        %v4325 = vadd.f32 %v3955, %v4289
        %v4326 = vadd.f32 %v3956, %v4291
        %v4327 = vadd.f32 %v3957, %v4295
        %v4328 = vadd.f32 %v3958, %v4297
        %v4329 = vadd.f32 %v3959, %v4299
        %v4330 = vadd.f32 %v3960, %v4301
        %v4331 = vadd.f32 %v3961, %v4305
        %v4332 = vadd.f32 %v3962, %v4307
        %v4333 = vadd.f32 %v3963, %v4309
        %v4334 = vadd.f32 %v3964, %v4311
        %v4335 = vadd.f32 %v3965, %v4315
        %v4336 = vadd.f32 %v3966, %v4317
        %v4337 = vadd.f32 %v3967, %v4319
        %v4338 = vadd.f32 %v3968, %v4321
        %v4339 = vld [vmem:[%s3123] sm:$0xff]
        %v4340 = vld [vmem:[%s3123 + $0x10] sm:$0xff]
        %v4341 = vld [vmem:[%s3123 + $0x20] sm:$0xff]
        %v4342 = vld [vmem:[%s3123 + $0x30] sm:$0xff]
        %v4343 = vld [vmem:[%s3123 + $0x40] sm:$0xff]
        %v4344 = vld [vmem:[%s3123 + $0x50] sm:$0xff]
        %v4345 = vld [vmem:[%s3123 + $0x60] sm:$0xff]
        %v4346 = vld [vmem:[%s3123 + $0x70] sm:$0xff]
        %s4347 = scalar_lea.vmem %s4, 768
        %v4348 = vld [vmem:[%s4347] sm:$0xff]
        %v4349 = vld [vmem:[%s4347 + $0x8] sm:$0xff]
        %v4350 = vld [vmem:[%s4347 + $0x10] sm:$0xff]
        %v4351 = vld [vmem:[%s4347 + $0x18] sm:$0xff]
        %v4352 = vld [vmem:[%s4347 + $0x20] sm:$0xff]
        %v4353 = vld [vmem:[%s4347 + $0x28] sm:$0xff]
        %v4354 = vld [vmem:[%s4347 + $0x30] sm:$0xff]
        %v4355 = vld [vmem:[%s4347 + $0x38] sm:$0xff]
        %v4356 = vld [vmem:[%s4347 + $0x40] sm:$0xff]
        %v4357 = vld [vmem:[%s4347 + $0x48] sm:$0xff]
        %v4358 = vld [vmem:[%s4347 + $0x50] sm:$0xff]
        %v4359 = vld [vmem:[%s4347 + $0x58] sm:$0xff]
        %v4360 = vld [vmem:[%s4347 + $0x60] sm:$0xff]
        %v4361 = vld [vmem:[%s4347 + $0x68] sm:$0xff]
        %v4362 = vld [vmem:[%s4347 + $0x70] sm:$0xff]
        %v4363 = vld [vmem:[%s4347 + $0x78] sm:$0xff]
        %v4364 = vld [vmem:[%s4347 + $0x80] sm:$0xff]
        %v4365 = vld [vmem:[%s4347 + $0x88] sm:$0xff]
        %v4366 = vld [vmem:[%s4347 + $0x90] sm:$0xff]
        %v4367 = vld [vmem:[%s4347 + $0x98] sm:$0xff]
        %v4368 = vld [vmem:[%s4347 + $0xa0] sm:$0xff]
        %v4369 = vld [vmem:[%s4347 + $0xa8] sm:$0xff]
        %v4370 = vld [vmem:[%s4347 + $0xb0] sm:$0xff]
        %v4371 = vld [vmem:[%s4347 + $0xb8] sm:$0xff]
        %v4372 = vld [vmem:[%s4347 + $0xc0] sm:$0xff]
        %v4373 = vld [vmem:[%s4347 + $0xc8] sm:$0xff]
        %v4374 = vld [vmem:[%s4347 + $0xd0] sm:$0xff]
        %v4375 = vld [vmem:[%s4347 + $0xd8] sm:$0xff]
        %v4376 = vld [vmem:[%s4347 + $0xe0] sm:$0xff]
        %v4377 = vld [vmem:[%s4347 + $0xe8] sm:$0xff]
        %v4378 = vld [vmem:[%s4347 + $0xf0] sm:$0xff]
        %v4379 = vld [vmem:[%s4347 + $0xf8] sm:$0xff]
        %v4388 = vunpack.c.l.b16 %v4339
        %v4389 = vunpack.c.h.b16 %v4339
        %v4390 = vunpack.c.l.b16 %v4340
        %v4391 = vunpack.c.h.b16 %v4340
        %v4392 = vunpack.c.l.b16 %v4341
        %v4393 = vunpack.c.h.b16 %v4341
        %v4394 = vunpack.c.l.b16 %v4342
        %v4395 = vunpack.c.h.b16 %v4342
        %v4396 = vunpack.c.l.b16 %v4343
        %v4397 = vunpack.c.h.b16 %v4343
        %v4398 = vunpack.c.l.b16 %v4344
        %v4399 = vunpack.c.h.b16 %v4344
        %v4400 = vunpack.c.l.b16 %v4345
        %v4401 = vunpack.c.h.b16 %v4345
        %v4402 = vunpack.c.l.b16 %v4346
        %v4403 = vunpack.c.h.b16 %v4346
        %v4404 = vpack.c.b16 %v4390, %v4388
        %v4405 = vpack.c.b16 %v4391, %v4389
        %v4406 = vpack.c.b16 %v4394, %v4392
        %v4407 = vpack.c.b16 %v4395, %v4393
        %v4408 = vpack.c.b16 %v4398, %v4396
        %v4409 = vpack.c.b16 %v4399, %v4397
        %v4410 = vpack.c.b16 %v4402, %v4400
        %v4411 = vpack.c.b16 %v4403, %v4401
        %v4452 = vunpack.c.l.b16 %v4348
        %v4453 = vunpack.c.h.b16 %v4348
        %v4454 = vunpack.c.l.b16 %v4349
        %v4455 = vunpack.c.h.b16 %v4349
        %v4456 = vunpack.c.l.b16 %v4350
        %v4457 = vunpack.c.h.b16 %v4350
        %v4458 = vunpack.c.l.b16 %v4351
        %v4459 = vunpack.c.h.b16 %v4351
        %v4460 = vunpack.c.l.b16 %v4352
        %v4461 = vunpack.c.h.b16 %v4352
        %v4462 = vunpack.c.l.b16 %v4353
        %v4463 = vunpack.c.h.b16 %v4353
        %v4464 = vunpack.c.l.b16 %v4354
        %v4465 = vunpack.c.h.b16 %v4354
        %v4466 = vunpack.c.l.b16 %v4355
        %v4467 = vunpack.c.h.b16 %v4355
        %v4468 = vunpack.c.l.b16 %v4356
        %v4469 = vunpack.c.h.b16 %v4356
        %v4470 = vunpack.c.l.b16 %v4357
        %v4471 = vunpack.c.h.b16 %v4357
        %v4472 = vunpack.c.l.b16 %v4358
        %v4473 = vunpack.c.h.b16 %v4358
        %v4474 = vunpack.c.l.b16 %v4359
        %v4475 = vunpack.c.h.b16 %v4359
        %v4476 = vunpack.c.l.b16 %v4360
        %v4477 = vunpack.c.h.b16 %v4360
        %v4478 = vunpack.c.l.b16 %v4361
        %v4479 = vunpack.c.h.b16 %v4361
        %v4480 = vunpack.c.l.b16 %v4362
        %v4481 = vunpack.c.h.b16 %v4362
        %v4482 = vunpack.c.l.b16 %v4363
        %v4483 = vunpack.c.h.b16 %v4363
        %v4484 = vunpack.c.l.b16 %v4364
        %v4485 = vunpack.c.h.b16 %v4364
        %v4486 = vunpack.c.l.b16 %v4365
        %v4487 = vunpack.c.h.b16 %v4365
        %v4488 = vunpack.c.l.b16 %v4366
        %v4489 = vunpack.c.h.b16 %v4366
        %v4490 = vunpack.c.l.b16 %v4367
        %v4491 = vunpack.c.h.b16 %v4367
        %v4492 = vunpack.c.l.b16 %v4368
        %v4493 = vunpack.c.h.b16 %v4368
        %v4494 = vunpack.c.l.b16 %v4369
        %v4495 = vunpack.c.h.b16 %v4369
        %v4496 = vunpack.c.l.b16 %v4370
        %v4497 = vunpack.c.h.b16 %v4370
        %v4498 = vunpack.c.l.b16 %v4371
        %v4499 = vunpack.c.h.b16 %v4371
        %v4500 = vunpack.c.l.b16 %v4372
        %v4501 = vunpack.c.h.b16 %v4372
        %v4502 = vunpack.c.l.b16 %v4373
        %v4503 = vunpack.c.h.b16 %v4373
        %v4504 = vunpack.c.l.b16 %v4374
        %v4505 = vunpack.c.h.b16 %v4374
        %v4506 = vunpack.c.l.b16 %v4375
        %v4507 = vunpack.c.h.b16 %v4375
        %v4508 = vunpack.c.l.b16 %v4376
        %v4509 = vunpack.c.h.b16 %v4376
        %v4510 = vunpack.c.l.b16 %v4377
        %v4511 = vunpack.c.h.b16 %v4377
        %v4512 = vunpack.c.l.b16 %v4378
        %v4513 = vunpack.c.h.b16 %v4378
        %v4514 = vunpack.c.l.b16 %v4379
        %v4515 = vunpack.c.h.b16 %v4379
        %v4516 = vpack.c.b16 %v4454, %v4452
        %v4517 = vpack.c.b16 %v4455, %v4453
        %v4518 = vpack.c.b16 %v4458, %v4456
        %v4519 = vpack.c.b16 %v4459, %v4457
        %v4520 = vpack.c.b16 %v4462, %v4460
        %v4521 = vpack.c.b16 %v4463, %v4461
        %v4522 = vpack.c.b16 %v4466, %v4464
        %v4523 = vpack.c.b16 %v4467, %v4465
        %v4524 = vpack.c.b16 %v4470, %v4468
        %v4525 = vpack.c.b16 %v4471, %v4469
        %v4526 = vpack.c.b16 %v4474, %v4472
        %v4527 = vpack.c.b16 %v4475, %v4473
        %v4528 = vpack.c.b16 %v4478, %v4476
        %v4529 = vpack.c.b16 %v4479, %v4477
        %v4530 = vpack.c.b16 %v4482, %v4480
        %v4531 = vpack.c.b16 %v4483, %v4481
        %v4532 = vpack.c.b16 %v4486, %v4484
        %v4533 = vpack.c.b16 %v4487, %v4485
        %v4534 = vpack.c.b16 %v4490, %v4488
        %v4535 = vpack.c.b16 %v4491, %v4489
        %v4536 = vpack.c.b16 %v4494, %v4492
        %v4537 = vpack.c.b16 %v4495, %v4493
        %v4538 = vpack.c.b16 %v4498, %v4496
        %v4539 = vpack.c.b16 %v4499, %v4497
        %v4540 = vpack.c.b16 %v4502, %v4500
        %v4541 = vpack.c.b16 %v4503, %v4501
        %v4542 = vpack.c.b16 %v4506, %v4504
        %v4543 = vpack.c.b16 %v4507, %v4505
        %v4544 = vpack.c.b16 %v4510, %v4508
        %v4545 = vpack.c.b16 %v4511, %v4509
        %v4546 = vpack.c.b16 %v4514, %v4512
        %v4547 = vpack.c.b16 %v4515, %v4513
        %4580 = vmatprep.subr.bf16.mxu0 %v4531
        %4581 = vmatpush1.bf16.msra.mxu0 %v4530
        %4582 = vmatprep.subr.bf16.mxu0 %v4529
        %4583 = vmatpush1.bf16.msra.mxu0 %v4528
        %4584 = vmatprep.subr.bf16.mxu0 %v4527
        %4585 = vmatpush1.bf16.msra.mxu0 %v4526
        %4586 = vmatprep.subr.bf16.mxu0 %v4525
        %4587 = vmatpush1.bf16.msra.mxu0 %v4524
        %4588 = vmatprep.subr.bf16.mxu0 %v4523
        %4589 = vmatpush1.bf16.msra.mxu0 %v4522
        %4590 = vmatprep.subr.bf16.mxu0 %v4521
        %4591 = vmatpush1.bf16.msra.mxu0 %v4520
        %4592 = vmatprep.subr.bf16.mxu0 %v4519
        %4593 = vmatpush1.bf16.msra.mxu0 %v4518
        %4594 = vmatprep.subr.bf16.mxu0 %v4517
        %4595 = vmatpush1.bf16.msra.mxu0 %v4516
        %4596 = vmatprep.subr.bf16.mxu0 %v4547
        %4597 = vmatpush2.bf16.msra.mxu0 %v4546
        %4598 = vmatprep.subr.bf16.mxu0 %v4545
        %4599 = vmatpush2.bf16.msra.mxu0 %v4544
        %4600 = vmatprep.subr.bf16.mxu0 %v4543
        %4601 = vmatpush2.bf16.msra.mxu0 %v4542
        %4602 = vmatprep.subr.bf16.mxu0 %v4541
        %4603 = vmatpush2.bf16.msra.mxu0 %v4540
        %4604 = vmatprep.subr.bf16.mxu0 %v4539
        %4605 = vmatpush2.bf16.msra.mxu0 %v4538
        %4606 = vmatprep.subr.bf16.mxu0 %v4537
        %4607 = vmatpush2.bf16.msra.mxu0 %v4536
        %4608 = vmatprep.subr.bf16.mxu0 %v4535
        %4609 = vmatpush2.bf16.msra.mxu0 %v4534
        %4610 = vmatprep.subr.bf16.mxu0 %v4533
        %4611 = vmatpush2.bf16.msra.mxu0 %v4532
        %4612 = vmatprep.mubr.bf16.mxu0 %v4405
        %4613 = vmatmul.mubr.bf16.gmra.mxu0 %v4404
        %v4614 = vpop.f32.mrf.mxu0
        %v4615 = vadd.f32 0.0, %v4614
        %v4616 = vpop.f32.mrf.mxu0
        %v4617 = vadd.f32 0.0, %v4616
        %v4618 = vpop.f32.mrf.mxu0
        %v4619 = vadd.f32 0.0, %v4618
        %v4620 = vpop.f32.mrf.mxu0
        %v4621 = vadd.f32 0.0, %v4620
        %4622 = vmatprep.mubr.bf16.mxu0 %v4407
        %4623 = vmatmul.mubr.bf16.gmra.mxu0 %v4406
        %v4624 = vpop.f32.mrf.mxu0
        %v4625 = vadd.f32 0.0, %v4624
        %v4626 = vpop.f32.mrf.mxu0
        %v4627 = vadd.f32 0.0, %v4626
        %v4628 = vpop.f32.mrf.mxu0
        %v4629 = vadd.f32 0.0, %v4628
        %v4630 = vpop.f32.mrf.mxu0
        %v4631 = vadd.f32 0.0, %v4630
        %4632 = vmatprep.mubr.bf16.mxu0 %v4409
        %4633 = vmatmul.mubr.bf16.gmra.mxu0 %v4408
        %v4634 = vpop.f32.mrf.mxu0
        %v4635 = vadd.f32 0.0, %v4634
        %v4636 = vpop.f32.mrf.mxu0
        %v4637 = vadd.f32 0.0, %v4636
        %v4638 = vpop.f32.mrf.mxu0
        %v4639 = vadd.f32 0.0, %v4638
        %v4640 = vpop.f32.mrf.mxu0
        %v4641 = vadd.f32 0.0, %v4640
        %4642 = vmatprep.mubr.bf16.mxu0 %v4411
        %4643 = vmatmul.mubr.bf16.gmra.mxu0 %v4410
        %v4644 = vpop.f32.mrf.mxu0
        %v4645 = vadd.f32 0.0, %v4644
        %v4646 = vpop.f32.mrf.mxu0
        %v4647 = vadd.f32 0.0, %v4646
        %v4648 = vpop.f32.mrf.mxu0
        %v4649 = vadd.f32 0.0, %v4648
        %v4650 = vpop.f32.mrf.mxu0
        %v4651 = vadd.f32 0.0, %v4650
        %4652 = vdwg.mxu0
        %v4653 = vadd.f32 %v4323, %v4615
        %v4654 = vadd.f32 %v4324, %v4617
        %v4655 = vadd.f32 %v4325, %v4619
        %v4656 = vadd.f32 %v4326, %v4621
        %v4657 = vadd.f32 %v4327, %v4625
        %v4658 = vadd.f32 %v4328, %v4627
        %v4659 = vadd.f32 %v4329, %v4629
        %v4660 = vadd.f32 %v4330, %v4631
        %v4661 = vadd.f32 %v4331, %v4635
        %v4662 = vadd.f32 %v4332, %v4637
        %v4663 = vadd.f32 %v4333, %v4639
        %v4664 = vadd.f32 %v4334, %v4641
        %v4665 = vadd.f32 %v4335, %v4645
        %v4666 = vadd.f32 %v4336, %v4647
        %v4667 = vadd.f32 %v4337, %v4649
        %v4668 = vadd.f32 %v4338, %v4651
        %v4669 = vld [vmem:[%s3123] sm:$0xff]
        %v4670 = vld [vmem:[%s3123 + $0x8] sm:$0x11]
        %v4671 = vld [vmem:[%s3123 + $0x10] sm:$0xff]
        %v4672 = vld [vmem:[%s3123 + $0x18] sm:$0x11]
        %v4673 = vld [vmem:[%s3123 + $0x20] sm:$0xff]
        %v4674 = vld [vmem:[%s3123 + $0x28] sm:$0x11]
        %v4675 = vld [vmem:[%s3123 + $0x30] sm:$0xff]
        %v4676 = vld [vmem:[%s3123 + $0x38] sm:$0x11]
        %v4677 = vld [vmem:[%s3123 + $0x40] sm:$0xff]
        %v4678 = vld [vmem:[%s3123 + $0x48] sm:$0x11]
        %v4679 = vld [vmem:[%s3123 + $0x50] sm:$0xff]
        %v4680 = vld [vmem:[%s3123 + $0x58] sm:$0x11]
        %v4681 = vld [vmem:[%s3123 + $0x60] sm:$0xff]
        %v4682 = vld [vmem:[%s3123 + $0x68] sm:$0x11]
        %v4683 = vld [vmem:[%s3123 + $0x70] sm:$0xff]
        %v4684 = vld [vmem:[%s3123 + $0x78] sm:$0x11]
        %v4686 = vshrl.u32 %v4669, 16
        %v4688 = vrot.slane %v4686, 4
        %v4689 = vshll.u32 %v4669, 16
        %v4691 = vrot.slane %v4689, 5
        %v4692 = vor.u32 %v4688, %v4691
        %v4693 = vrot.slane %v4692, 4
        %v4695 = vshll.u32 %v4670, 16
        %v4697 = vrot.slane %v4695, 5
        %v4698 = vsel %vm809, %v4693, %v4697
        %v4700 = vshrl.u32 %v4671, 16
        %v4702 = vrot.slane %v4700, 4
        %v4703 = vshll.u32 %v4671, 16
        %v4705 = vrot.slane %v4703, 5
        %v4706 = vor.u32 %v4702, %v4705
        %v4707 = vrot.slane %v4706, 4
        %v4709 = vshll.u32 %v4672, 16
        %v4711 = vrot.slane %v4709, 5
        %v4712 = vsel %vm809, %v4707, %v4711
        %v4714 = vshrl.u32 %v4673, 16
        %v4716 = vrot.slane %v4714, 4
        %v4717 = vshll.u32 %v4673, 16
        %v4719 = vrot.slane %v4717, 5
        %v4720 = vor.u32 %v4716, %v4719
        %v4721 = vrot.slane %v4720, 4
        %v4723 = vshll.u32 %v4674, 16
        %v4725 = vrot.slane %v4723, 5
        %v4726 = vsel %vm809, %v4721, %v4725
        %v4728 = vshrl.u32 %v4675, 16
        %v4730 = vrot.slane %v4728, 4
        %v4731 = vshll.u32 %v4675, 16
        %v4733 = vrot.slane %v4731, 5
        %v4734 = vor.u32 %v4730, %v4733
        %v4735 = vrot.slane %v4734, 4
        %v4737 = vshll.u32 %v4676, 16
        %v4739 = vrot.slane %v4737, 5
        %v4740 = vsel %vm809, %v4735, %v4739
        %v4742 = vshrl.u32 %v4677, 16
        %v4744 = vrot.slane %v4742, 4
        %v4745 = vshll.u32 %v4677, 16
        %v4747 = vrot.slane %v4745, 5
        %v4748 = vor.u32 %v4744, %v4747
        %v4749 = vrot.slane %v4748, 4
        %v4751 = vshll.u32 %v4678, 16
        %v4753 = vrot.slane %v4751, 5
        %v4754 = vsel %vm809, %v4749, %v4753
        %v4756 = vshrl.u32 %v4679, 16
        %v4758 = vrot.slane %v4756, 4
        %v4759 = vshll.u32 %v4679, 16
        %v4761 = vrot.slane %v4759, 5
        %v4762 = vor.u32 %v4758, %v4761
        %v4763 = vrot.slane %v4762, 4
        %v4765 = vshll.u32 %v4680, 16
        %v4767 = vrot.slane %v4765, 5
        %v4768 = vsel %vm809, %v4763, %v4767
        %v4770 = vshrl.u32 %v4681, 16
        %v4772 = vrot.slane %v4770, 4
        %v4773 = vshll.u32 %v4681, 16
        %v4775 = vrot.slane %v4773, 5
        %v4776 = vor.u32 %v4772, %v4775
        %v4777 = vrot.slane %v4776, 4
        %v4779 = vshll.u32 %v4682, 16
        %v4781 = vrot.slane %v4779, 5
        %v4782 = vsel %vm809, %v4777, %v4781
        %v4784 = vshrl.u32 %v4683, 16
        %v4786 = vrot.slane %v4784, 4
        %v4787 = vshll.u32 %v4683, 16
        %v4789 = vrot.slane %v4787, 5
        %v4790 = vor.u32 %v4786, %v4789
        %v4791 = vrot.slane %v4790, 4
        %v4793 = vshll.u32 %v4684, 16
        %v4795 = vrot.slane %v4793, 5
        %v4796 = vsel %vm809, %v4791, %v4795
        %s4797 = scalar_lea.vmem %s4, 1024
        %v4798 = vld [vmem:[%s4797] sm:$0xff]
        %v4799 = vld [vmem:[%s4797 + $0x8] sm:$0xff]
        %v4800 = vld [vmem:[%s4797 + $0x10] sm:$0xff]
        %v4801 = vld [vmem:[%s4797 + $0x18] sm:$0xff]
        %v4802 = vld [vmem:[%s4797 + $0x20] sm:$0xff]
        %v4803 = vld [vmem:[%s4797 + $0x28] sm:$0xff]
        %v4804 = vld [vmem:[%s4797 + $0x30] sm:$0xff]
        %v4805 = vld [vmem:[%s4797 + $0x38] sm:$0xff]
        %v4806 = vld [vmem:[%s4797 + $0x40] sm:$0xff]
        %v4807 = vld [vmem:[%s4797 + $0x48] sm:$0xff]
        %v4808 = vld [vmem:[%s4797 + $0x50] sm:$0xff]
        %v4809 = vld [vmem:[%s4797 + $0x58] sm:$0xff]
        %v4810 = vld [vmem:[%s4797 + $0x60] sm:$0xff]
        %v4811 = vld [vmem:[%s4797 + $0x68] sm:$0xff]
        %v4812 = vld [vmem:[%s4797 + $0x70] sm:$0xff]
        %v4813 = vld [vmem:[%s4797 + $0x78] sm:$0xff]
        %v4814 = vld [vmem:[%s4797 + $0x80] sm:$0xff]
        %v4815 = vld [vmem:[%s4797 + $0x88] sm:$0xff]
        %v4816 = vld [vmem:[%s4797 + $0x90] sm:$0xff]
        %v4817 = vld [vmem:[%s4797 + $0x98] sm:$0xff]
        %v4818 = vld [vmem:[%s4797 + $0xa0] sm:$0xff]
        %v4819 = vld [vmem:[%s4797 + $0xa8] sm:$0xff]
        %v4820 = vld [vmem:[%s4797 + $0xb0] sm:$0xff]
        %v4821 = vld [vmem:[%s4797 + $0xb8] sm:$0xff]
        %v4822 = vld [vmem:[%s4797 + $0xc0] sm:$0xff]
        %v4823 = vld [vmem:[%s4797 + $0xc8] sm:$0xff]
        %v4824 = vld [vmem:[%s4797 + $0xd0] sm:$0xff]
        %v4825 = vld [vmem:[%s4797 + $0xd8] sm:$0xff]
        %v4826 = vld [vmem:[%s4797 + $0xe0] sm:$0xff]
        %v4827 = vld [vmem:[%s4797 + $0xe8] sm:$0xff]
        %v4828 = vld [vmem:[%s4797 + $0xf0] sm:$0xff]
        %v4829 = vld [vmem:[%s4797 + $0xf8] sm:$0xff]
        %v4830 = vunpack.c.l.b16 %v4698
        %v4831 = vunpack.c.h.b16 %v4698
        %v4832 = vunpack.c.l.b16 %v4712
        %v4833 = vunpack.c.h.b16 %v4712
        %v4834 = vunpack.c.l.b16 %v4726
        %v4835 = vunpack.c.h.b16 %v4726
        %v4836 = vunpack.c.l.b16 %v4740
        %v4837 = vunpack.c.h.b16 %v4740
        %v4838 = vunpack.c.l.b16 %v4754
        %v4839 = vunpack.c.h.b16 %v4754
        %v4840 = vunpack.c.l.b16 %v4768
        %v4841 = vunpack.c.h.b16 %v4768
        %v4842 = vunpack.c.l.b16 %v4782
        %v4843 = vunpack.c.h.b16 %v4782
        %v4844 = vunpack.c.l.b16 %v4796
        %v4845 = vunpack.c.h.b16 %v4796
        %v4846 = vpack.c.b16 %v4832, %v4830
        %v4847 = vpack.c.b16 %v4833, %v4831
        %v4848 = vpack.c.b16 %v4836, %v4834
        %v4849 = vpack.c.b16 %v4837, %v4835
        %v4850 = vpack.c.b16 %v4840, %v4838
        %v4851 = vpack.c.b16 %v4841, %v4839
        %v4852 = vpack.c.b16 %v4844, %v4842
        %v4853 = vpack.c.b16 %v4845, %v4843
        %v4894 = vunpack.c.l.b16 %v4798
        %v4895 = vunpack.c.h.b16 %v4798
        %v4896 = vunpack.c.l.b16 %v4799
        %v4897 = vunpack.c.h.b16 %v4799
        %v4898 = vunpack.c.l.b16 %v4800
        %v4899 = vunpack.c.h.b16 %v4800
        %v4900 = vunpack.c.l.b16 %v4801
        %v4901 = vunpack.c.h.b16 %v4801
        %v4902 = vunpack.c.l.b16 %v4802
        %v4903 = vunpack.c.h.b16 %v4802
        %v4904 = vunpack.c.l.b16 %v4803
        %v4905 = vunpack.c.h.b16 %v4803
        %v4906 = vunpack.c.l.b16 %v4804
        %v4907 = vunpack.c.h.b16 %v4804
        %v4908 = vunpack.c.l.b16 %v4805
        %v4909 = vunpack.c.h.b16 %v4805
        %v4910 = vunpack.c.l.b16 %v4806
        %v4911 = vunpack.c.h.b16 %v4806
        %v4912 = vunpack.c.l.b16 %v4807
        %v4913 = vunpack.c.h.b16 %v4807
        %v4914 = vunpack.c.l.b16 %v4808
        %v4915 = vunpack.c.h.b16 %v4808
        %v4916 = vunpack.c.l.b16 %v4809
        %v4917 = vunpack.c.h.b16 %v4809
        %v4918 = vunpack.c.l.b16 %v4810
        %v4919 = vunpack.c.h.b16 %v4810
        %v4920 = vunpack.c.l.b16 %v4811
        %v4921 = vunpack.c.h.b16 %v4811
        %v4922 = vunpack.c.l.b16 %v4812
        %v4923 = vunpack.c.h.b16 %v4812
        %v4924 = vunpack.c.l.b16 %v4813
        %v4925 = vunpack.c.h.b16 %v4813
        %v4926 = vunpack.c.l.b16 %v4814
        %v4927 = vunpack.c.h.b16 %v4814
        %v4928 = vunpack.c.l.b16 %v4815
        %v4929 = vunpack.c.h.b16 %v4815
        %v4930 = vunpack.c.l.b16 %v4816
        %v4931 = vunpack.c.h.b16 %v4816
        %v4932 = vunpack.c.l.b16 %v4817
        %v4933 = vunpack.c.h.b16 %v4817
        %v4934 = vunpack.c.l.b16 %v4818
        %v4935 = vunpack.c.h.b16 %v4818
        %v4936 = vunpack.c.l.b16 %v4819
        %v4937 = vunpack.c.h.b16 %v4819
        %v4938 = vunpack.c.l.b16 %v4820
        %v4939 = vunpack.c.h.b16 %v4820
        %v4940 = vunpack.c.l.b16 %v4821
        %v4941 = vunpack.c.h.b16 %v4821
        %v4942 = vunpack.c.l.b16 %v4822
        %v4943 = vunpack.c.h.b16 %v4822
        %v4944 = vunpack.c.l.b16 %v4823
        %v4945 = vunpack.c.h.b16 %v4823
        %v4946 = vunpack.c.l.b16 %v4824
        %v4947 = vunpack.c.h.b16 %v4824
        %v4948 = vunpack.c.l.b16 %v4825
        %v4949 = vunpack.c.h.b16 %v4825
        %v4950 = vunpack.c.l.b16 %v4826
        %v4951 = vunpack.c.h.b16 %v4826
        %v4952 = vunpack.c.l.b16 %v4827
        %v4953 = vunpack.c.h.b16 %v4827
        %v4954 = vunpack.c.l.b16 %v4828
        %v4955 = vunpack.c.h.b16 %v4828
        %v4956 = vunpack.c.l.b16 %v4829
        %v4957 = vunpack.c.h.b16 %v4829
        %v4958 = vpack.c.b16 %v4896, %v4894
        %v4959 = vpack.c.b16 %v4897, %v4895
        %v4960 = vpack.c.b16 %v4900, %v4898
        %v4961 = vpack.c.b16 %v4901, %v4899
        %v4962 = vpack.c.b16 %v4904, %v4902
        %v4963 = vpack.c.b16 %v4905, %v4903
        %v4964 = vpack.c.b16 %v4908, %v4906
        %v4965 = vpack.c.b16 %v4909, %v4907
        %v4966 = vpack.c.b16 %v4912, %v4910
        %v4967 = vpack.c.b16 %v4913, %v4911
        %v4968 = vpack.c.b16 %v4916, %v4914
        %v4969 = vpack.c.b16 %v4917, %v4915
        %v4970 = vpack.c.b16 %v4920, %v4918
        %v4971 = vpack.c.b16 %v4921, %v4919
        %v4972 = vpack.c.b16 %v4924, %v4922
        %v4973 = vpack.c.b16 %v4925, %v4923
        %v4974 = vpack.c.b16 %v4928, %v4926
        %v4975 = vpack.c.b16 %v4929, %v4927
        %v4976 = vpack.c.b16 %v4932, %v4930
        %v4977 = vpack.c.b16 %v4933, %v4931
        %v4978 = vpack.c.b16 %v4936, %v4934
        %v4979 = vpack.c.b16 %v4937, %v4935
        %v4980 = vpack.c.b16 %v4940, %v4938
        %v4981 = vpack.c.b16 %v4941, %v4939
        %v4982 = vpack.c.b16 %v4944, %v4942
        %v4983 = vpack.c.b16 %v4945, %v4943
        %v4984 = vpack.c.b16 %v4948, %v4946
        %v4985 = vpack.c.b16 %v4949, %v4947
        %v4986 = vpack.c.b16 %v4952, %v4950
        %v4987 = vpack.c.b16 %v4953, %v4951
        %v4988 = vpack.c.b16 %v4956, %v4954
        %v4989 = vpack.c.b16 %v4957, %v4955
        %5022 = vmatprep.subr.bf16.mxu0 %v4973
        %5023 = vmatpush1.bf16.msra.mxu0 %v4972
        %5024 = vmatprep.subr.bf16.mxu0 %v4971
        %5025 = vmatpush1.bf16.msra.mxu0 %v4970
        %5026 = vmatprep.subr.bf16.mxu0 %v4969
        %5027 = vmatpush1.bf16.msra.mxu0 %v4968
        %5028 = vmatprep.subr.bf16.mxu0 %v4967
        %5029 = vmatpush1.bf16.msra.mxu0 %v4966
        %5030 = vmatprep.subr.bf16.mxu0 %v4965
        %5031 = vmatpush1.bf16.msra.mxu0 %v4964
        %5032 = vmatprep.subr.bf16.mxu0 %v4963
        %5033 = vmatpush1.bf16.msra.mxu0 %v4962
        %5034 = vmatprep.subr.bf16.mxu0 %v4961
        %5035 = vmatpush1.bf16.msra.mxu0 %v4960
        %5036 = vmatprep.subr.bf16.mxu0 %v4959
        %5037 = vmatpush1.bf16.msra.mxu0 %v4958
        %5038 = vmatprep.subr.bf16.mxu0 %v4989
        %5039 = vmatpush2.bf16.msra.mxu0 %v4988
        %5040 = vmatprep.subr.bf16.mxu0 %v4987
        %5041 = vmatpush2.bf16.msra.mxu0 %v4986
        %5042 = vmatprep.subr.bf16.mxu0 %v4985
        %5043 = vmatpush2.bf16.msra.mxu0 %v4984
        %5044 = vmatprep.subr.bf16.mxu0 %v4983
        %5045 = vmatpush2.bf16.msra.mxu0 %v4982
        %5046 = vmatprep.subr.bf16.mxu0 %v4981
        %5047 = vmatpush2.bf16.msra.mxu0 %v4980
        %5048 = vmatprep.subr.bf16.mxu0 %v4979
        %5049 = vmatpush2.bf16.msra.mxu0 %v4978
        %5050 = vmatprep.subr.bf16.mxu0 %v4977
        %5051 = vmatpush2.bf16.msra.mxu0 %v4976
        %5052 = vmatprep.subr.bf16.mxu0 %v4975
        %5053 = vmatpush2.bf16.msra.mxu0 %v4974
        %5054 = vmatprep.mubr.bf16.mxu0 %v4847
        %5055 = vmatmul.mubr.bf16.gmra.mxu0 %v4846
        %v5056 = vpop.f32.mrf.mxu0
        %v5057 = vadd.f32 0.0, %v5056
        %v5058 = vpop.f32.mrf.mxu0
        %v5059 = vadd.f32 0.0, %v5058
        %v5060 = vpop.f32.mrf.mxu0
        %v5061 = vadd.f32 0.0, %v5060
        %v5062 = vpop.f32.mrf.mxu0
        %v5063 = vadd.f32 0.0, %v5062
        %5064 = vmatprep.mubr.bf16.mxu0 %v4849
        %5065 = vmatmul.mubr.bf16.gmra.mxu0 %v4848
        %v5066 = vpop.f32.mrf.mxu0
        %v5067 = vadd.f32 0.0, %v5066
        %v5068 = vpop.f32.mrf.mxu0
        %v5069 = vadd.f32 0.0, %v5068
        %v5070 = vpop.f32.mrf.mxu0
        %v5071 = vadd.f32 0.0, %v5070
        %v5072 = vpop.f32.mrf.mxu0
        %v5073 = vadd.f32 0.0, %v5072
        %5074 = vmatprep.mubr.bf16.mxu0 %v4851
        %5075 = vmatmul.mubr.bf16.gmra.mxu0 %v4850
        %v5076 = vpop.f32.mrf.mxu0
        %v5077 = vadd.f32 0.0, %v5076
        %v5078 = vpop.f32.mrf.mxu0
        %v5079 = vadd.f32 0.0, %v5078
        %v5080 = vpop.f32.mrf.mxu0
        %v5081 = vadd.f32 0.0, %v5080
        %v5082 = vpop.f32.mrf.mxu0
        %v5083 = vadd.f32 0.0, %v5082
        %5084 = vmatprep.mubr.bf16.mxu0 %v4853
        %5085 = vmatmul.mubr.bf16.gmra.mxu0 %v4852
        %v5086 = vpop.f32.mrf.mxu0
        %v5087 = vadd.f32 0.0, %v5086
        %v5088 = vpop.f32.mrf.mxu0
        %v5089 = vadd.f32 0.0, %v5088
        %v5090 = vpop.f32.mrf.mxu0
        %v5091 = vadd.f32 0.0, %v5090
        %v5092 = vpop.f32.mrf.mxu0
        %v5093 = vadd.f32 0.0, %v5092
        %5094 = vdwg.mxu0
        %v5095 = vadd.f32 %v4653, %v5057
        %v5096 = vadd.f32 %v4654, %v5059
        %v5097 = vadd.f32 %v4655, %v5061
        %v5098 = vadd.f32 %v4656, %v5063
        %v5099 = vadd.f32 %v4657, %v5067
        %v5100 = vadd.f32 %v4658, %v5069
        %v5101 = vadd.f32 %v4659, %v5071
        %v5102 = vadd.f32 %v4660, %v5073
        %v5103 = vadd.f32 %v4661, %v5077
        %v5104 = vadd.f32 %v4662, %v5079
        %v5105 = vadd.f32 %v4663, %v5081
        %v5106 = vadd.f32 %v4664, %v5083
        %v5107 = vadd.f32 %v4665, %v5087
        %v5108 = vadd.f32 %v4666, %v5089
        %v5109 = vadd.f32 %v4667, %v5091
        %v5110 = vadd.f32 %v4668, %v5093
        %v5111 = vld [vmem:[%s3123] sm:$0xee]
        %v5112 = vld [vmem:[%s3123 + $0x10] sm:$0xee]
        %v5113 = vld [vmem:[%s3123 + $0x20] sm:$0xee]
        %v5114 = vld [vmem:[%s3123 + $0x30] sm:$0xee]
        %v5115 = vld [vmem:[%s3123 + $0x40] sm:$0xee]
        %v5116 = vld [vmem:[%s3123 + $0x50] sm:$0xee]
        %v5117 = vld [vmem:[%s3123 + $0x60] sm:$0xee]
        %v5118 = vld [vmem:[%s3123 + $0x70] sm:$0xee]
        %v5135 = vrot.slane %v5111, 5
        %v5136 = vrot.slane %v5135, 4
        %v5137 = vrot.slane %v4670, 5
        %v5138 = vsel %vm1086, %v5136, %v5137
        %v5139 = vrot.slane %v5112, 5
        %v5140 = vrot.slane %v5139, 4
        %v5141 = vrot.slane %v4672, 5
        %v5142 = vsel %vm1086, %v5140, %v5141
        %v5143 = vrot.slane %v5113, 5
        %v5144 = vrot.slane %v5143, 4
        %v5145 = vrot.slane %v4674, 5
        %v5146 = vsel %vm1086, %v5144, %v5145
        %v5147 = vrot.slane %v5114, 5
        %v5148 = vrot.slane %v5147, 4
        %v5149 = vrot.slane %v4676, 5
        %v5150 = vsel %vm1086, %v5148, %v5149
        %v5151 = vrot.slane %v5115, 5
        %v5152 = vrot.slane %v5151, 4
        %v5153 = vrot.slane %v4678, 5
        %v5154 = vsel %vm1086, %v5152, %v5153
        %v5155 = vrot.slane %v5116, 5
        %v5156 = vrot.slane %v5155, 4
        %v5157 = vrot.slane %v4680, 5
        %v5158 = vsel %vm1086, %v5156, %v5157
        %v5159 = vrot.slane %v5117, 5
        %v5160 = vrot.slane %v5159, 4
        %v5161 = vrot.slane %v4682, 5
        %v5162 = vsel %vm1086, %v5160, %v5161
        %v5163 = vrot.slane %v5118, 5
        %v5164 = vrot.slane %v5163, 4
        %v5165 = vrot.slane %v4684, 5
        %v5166 = vsel %vm1086, %v5164, %v5165
        %s5167 = scalar_lea.vmem %s4, 1280
        %v5168 = vld [vmem:[%s5167] sm:$0xff]
        %v5169 = vld [vmem:[%s5167 + $0x8] sm:$0xff]
        %v5170 = vld [vmem:[%s5167 + $0x10] sm:$0xff]
        %v5171 = vld [vmem:[%s5167 + $0x18] sm:$0xff]
        %v5172 = vld [vmem:[%s5167 + $0x20] sm:$0xff]
        %v5173 = vld [vmem:[%s5167 + $0x28] sm:$0xff]
        %v5174 = vld [vmem:[%s5167 + $0x30] sm:$0xff]
        %v5175 = vld [vmem:[%s5167 + $0x38] sm:$0xff]
        %v5176 = vld [vmem:[%s5167 + $0x40] sm:$0xff]
        %v5177 = vld [vmem:[%s5167 + $0x48] sm:$0xff]
        %v5178 = vld [vmem:[%s5167 + $0x50] sm:$0xff]
        %v5179 = vld [vmem:[%s5167 + $0x58] sm:$0xff]
        %v5180 = vld [vmem:[%s5167 + $0x60] sm:$0xff]
        %v5181 = vld [vmem:[%s5167 + $0x68] sm:$0xff]
        %v5182 = vld [vmem:[%s5167 + $0x70] sm:$0xff]
        %v5183 = vld [vmem:[%s5167 + $0x78] sm:$0xff]
        %v5184 = vld [vmem:[%s5167 + $0x80] sm:$0xff]
        %v5185 = vld [vmem:[%s5167 + $0x88] sm:$0xff]
        %v5186 = vld [vmem:[%s5167 + $0x90] sm:$0xff]
        %v5187 = vld [vmem:[%s5167 + $0x98] sm:$0xff]
        %v5188 = vld [vmem:[%s5167 + $0xa0] sm:$0xff]
        %v5189 = vld [vmem:[%s5167 + $0xa8] sm:$0xff]
        %v5190 = vld [vmem:[%s5167 + $0xb0] sm:$0xff]
        %v5191 = vld [vmem:[%s5167 + $0xb8] sm:$0xff]
        %v5192 = vld [vmem:[%s5167 + $0xc0] sm:$0xff]
        %v5193 = vld [vmem:[%s5167 + $0xc8] sm:$0xff]
        %v5194 = vld [vmem:[%s5167 + $0xd0] sm:$0xff]
        %v5195 = vld [vmem:[%s5167 + $0xd8] sm:$0xff]
        %v5196 = vld [vmem:[%s5167 + $0xe0] sm:$0xff]
        %v5197 = vld [vmem:[%s5167 + $0xe8] sm:$0xff]
        %v5198 = vld [vmem:[%s5167 + $0xf0] sm:$0xff]
        %v5199 = vld [vmem:[%s5167 + $0xf8] sm:$0xff]
        %v5200 = vunpack.c.l.b16 %v5138
        %v5201 = vunpack.c.h.b16 %v5138
        %v5202 = vunpack.c.l.b16 %v5142
        %v5203 = vunpack.c.h.b16 %v5142
        %v5204 = vunpack.c.l.b16 %v5146
        %v5205 = vunpack.c.h.b16 %v5146
        %v5206 = vunpack.c.l.b16 %v5150
        %v5207 = vunpack.c.h.b16 %v5150
        %v5208 = vunpack.c.l.b16 %v5154
        %v5209 = vunpack.c.h.b16 %v5154
        %v5210 = vunpack.c.l.b16 %v5158
        %v5211 = vunpack.c.h.b16 %v5158
        %v5212 = vunpack.c.l.b16 %v5162
        %v5213 = vunpack.c.h.b16 %v5162
        %v5214 = vunpack.c.l.b16 %v5166
        %v5215 = vunpack.c.h.b16 %v5166
        %v5216 = vpack.c.b16 %v5202, %v5200
        %v5217 = vpack.c.b16 %v5203, %v5201
        %v5218 = vpack.c.b16 %v5206, %v5204
        %v5219 = vpack.c.b16 %v5207, %v5205
        %v5220 = vpack.c.b16 %v5210, %v5208
        %v5221 = vpack.c.b16 %v5211, %v5209
        %v5222 = vpack.c.b16 %v5214, %v5212
        %v5223 = vpack.c.b16 %v5215, %v5213
        %v5264 = vunpack.c.l.b16 %v5168
        %v5265 = vunpack.c.h.b16 %v5168
        %v5266 = vunpack.c.l.b16 %v5169
        %v5267 = vunpack.c.h.b16 %v5169
        %v5268 = vunpack.c.l.b16 %v5170
        %v5269 = vunpack.c.h.b16 %v5170
        %v5270 = vunpack.c.l.b16 %v5171
        %v5271 = vunpack.c.h.b16 %v5171
        %v5272 = vunpack.c.l.b16 %v5172
        %v5273 = vunpack.c.h.b16 %v5172
        %v5274 = vunpack.c.l.b16 %v5173
        %v5275 = vunpack.c.h.b16 %v5173
        %v5276 = vunpack.c.l.b16 %v5174
        %v5277 = vunpack.c.h.b16 %v5174
        %v5278 = vunpack.c.l.b16 %v5175
        %v5279 = vunpack.c.h.b16 %v5175
        %v5280 = vunpack.c.l.b16 %v5176
        %v5281 = vunpack.c.h.b16 %v5176
        %v5282 = vunpack.c.l.b16 %v5177
        %v5283 = vunpack.c.h.b16 %v5177
        %v5284 = vunpack.c.l.b16 %v5178
        %v5285 = vunpack.c.h.b16 %v5178
        %v5286 = vunpack.c.l.b16 %v5179
        %v5287 = vunpack.c.h.b16 %v5179
        %v5288 = vunpack.c.l.b16 %v5180
        %v5289 = vunpack.c.h.b16 %v5180
        %v5290 = vunpack.c.l.b16 %v5181
        %v5291 = vunpack.c.h.b16 %v5181
        %v5292 = vunpack.c.l.b16 %v5182
        %v5293 = vunpack.c.h.b16 %v5182
        %v5294 = vunpack.c.l.b16 %v5183
        %v5295 = vunpack.c.h.b16 %v5183
        %v5296 = vunpack.c.l.b16 %v5184
        %v5297 = vunpack.c.h.b16 %v5184
        %v5298 = vunpack.c.l.b16 %v5185
        %v5299 = vunpack.c.h.b16 %v5185
        %v5300 = vunpack.c.l.b16 %v5186
        %v5301 = vunpack.c.h.b16 %v5186
        %v5302 = vunpack.c.l.b16 %v5187
        %v5303 = vunpack.c.h.b16 %v5187
        %v5304 = vunpack.c.l.b16 %v5188
        %v5305 = vunpack.c.h.b16 %v5188
        %v5306 = vunpack.c.l.b16 %v5189
        %v5307 = vunpack.c.h.b16 %v5189
        %v5308 = vunpack.c.l.b16 %v5190
        %v5309 = vunpack.c.h.b16 %v5190
        %v5310 = vunpack.c.l.b16 %v5191
        %v5311 = vunpack.c.h.b16 %v5191
        %v5312 = vunpack.c.l.b16 %v5192
        %v5313 = vunpack.c.h.b16 %v5192
        %v5314 = vunpack.c.l.b16 %v5193
        %v5315 = vunpack.c.h.b16 %v5193
        %v5316 = vunpack.c.l.b16 %v5194
        %v5317 = vunpack.c.h.b16 %v5194
        %v5318 = vunpack.c.l.b16 %v5195
        %v5319 = vunpack.c.h.b16 %v5195
        %v5320 = vunpack.c.l.b16 %v5196
        %v5321 = vunpack.c.h.b16 %v5196
        %v5322 = vunpack.c.l.b16 %v5197
        %v5323 = vunpack.c.h.b16 %v5197
        %v5324 = vunpack.c.l.b16 %v5198
        %v5325 = vunpack.c.h.b16 %v5198
        %v5326 = vunpack.c.l.b16 %v5199
        %v5327 = vunpack.c.h.b16 %v5199
        %v5328 = vpack.c.b16 %v5266, %v5264
        %v5329 = vpack.c.b16 %v5267, %v5265
        %v5330 = vpack.c.b16 %v5270, %v5268
        %v5331 = vpack.c.b16 %v5271, %v5269
        %v5332 = vpack.c.b16 %v5274, %v5272
        %v5333 = vpack.c.b16 %v5275, %v5273
        %v5334 = vpack.c.b16 %v5278, %v5276
        %v5335 = vpack.c.b16 %v5279, %v5277
        %v5336 = vpack.c.b16 %v5282, %v5280
        %v5337 = vpack.c.b16 %v5283, %v5281
        %v5338 = vpack.c.b16 %v5286, %v5284
        %v5339 = vpack.c.b16 %v5287, %v5285
        %v5340 = vpack.c.b16 %v5290, %v5288
        %v5341 = vpack.c.b16 %v5291, %v5289
        %v5342 = vpack.c.b16 %v5294, %v5292
        %v5343 = vpack.c.b16 %v5295, %v5293
        %v5344 = vpack.c.b16 %v5298, %v5296
        %v5345 = vpack.c.b16 %v5299, %v5297
        %v5346 = vpack.c.b16 %v5302, %v5300
        %v5347 = vpack.c.b16 %v5303, %v5301
        %v5348 = vpack.c.b16 %v5306, %v5304
        %v5349 = vpack.c.b16 %v5307, %v5305
        %v5350 = vpack.c.b16 %v5310, %v5308
        %v5351 = vpack.c.b16 %v5311, %v5309
        %v5352 = vpack.c.b16 %v5314, %v5312
        %v5353 = vpack.c.b16 %v5315, %v5313
        %v5354 = vpack.c.b16 %v5318, %v5316
        %v5355 = vpack.c.b16 %v5319, %v5317
        %v5356 = vpack.c.b16 %v5322, %v5320
        %v5357 = vpack.c.b16 %v5323, %v5321
        %v5358 = vpack.c.b16 %v5326, %v5324
        %v5359 = vpack.c.b16 %v5327, %v5325
        %5392 = vmatprep.subr.bf16.mxu0 %v5343
        %5393 = vmatpush1.bf16.msra.mxu0 %v5342
        %5394 = vmatprep.subr.bf16.mxu0 %v5341
        %5395 = vmatpush1.bf16.msra.mxu0 %v5340
        %5396 = vmatprep.subr.bf16.mxu0 %v5339
        %5397 = vmatpush1.bf16.msra.mxu0 %v5338
        %5398 = vmatprep.subr.bf16.mxu0 %v5337
        %5399 = vmatpush1.bf16.msra.mxu0 %v5336
        %5400 = vmatprep.subr.bf16.mxu0 %v5335
        %5401 = vmatpush1.bf16.msra.mxu0 %v5334
        %5402 = vmatprep.subr.bf16.mxu0 %v5333
        %5403 = vmatpush1.bf16.msra.mxu0 %v5332
        %5404 = vmatprep.subr.bf16.mxu0 %v5331
        %5405 = vmatpush1.bf16.msra.mxu0 %v5330
        %5406 = vmatprep.subr.bf16.mxu0 %v5329
        %5407 = vmatpush1.bf16.msra.mxu0 %v5328
        %5408 = vmatprep.subr.bf16.mxu0 %v5359
        %5409 = vmatpush2.bf16.msra.mxu0 %v5358
        %5410 = vmatprep.subr.bf16.mxu0 %v5357
        %5411 = vmatpush2.bf16.msra.mxu0 %v5356
        %5412 = vmatprep.subr.bf16.mxu0 %v5355
        %5413 = vmatpush2.bf16.msra.mxu0 %v5354
        %5414 = vmatprep.subr.bf16.mxu0 %v5353
        %5415 = vmatpush2.bf16.msra.mxu0 %v5352
        %5416 = vmatprep.subr.bf16.mxu0 %v5351
        %5417 = vmatpush2.bf16.msra.mxu0 %v5350
        %5418 = vmatprep.subr.bf16.mxu0 %v5349
        %5419 = vmatpush2.bf16.msra.mxu0 %v5348
        %5420 = vmatprep.subr.bf16.mxu0 %v5347
        %5421 = vmatpush2.bf16.msra.mxu0 %v5346
        %5422 = vmatprep.subr.bf16.mxu0 %v5345
        %5423 = vmatpush2.bf16.msra.mxu0 %v5344
        %5424 = vmatprep.mubr.bf16.mxu0 %v5217
        %5425 = vmatmul.mubr.bf16.gmra.mxu0 %v5216
        %v5426 = vpop.f32.mrf.mxu0
        %v5427 = vadd.f32 0.0, %v5426
        %v5428 = vpop.f32.mrf.mxu0
        %v5429 = vadd.f32 0.0, %v5428
        %v5430 = vpop.f32.mrf.mxu0
        %v5431 = vadd.f32 0.0, %v5430
        %v5432 = vpop.f32.mrf.mxu0
        %v5433 = vadd.f32 0.0, %v5432
        %5434 = vmatprep.mubr.bf16.mxu0 %v5219
        %5435 = vmatmul.mubr.bf16.gmra.mxu0 %v5218
        %v5436 = vpop.f32.mrf.mxu0
        %v5437 = vadd.f32 0.0, %v5436
        %v5438 = vpop.f32.mrf.mxu0
        %v5439 = vadd.f32 0.0, %v5438
        %v5440 = vpop.f32.mrf.mxu0
        %v5441 = vadd.f32 0.0, %v5440
        %v5442 = vpop.f32.mrf.mxu0
        %v5443 = vadd.f32 0.0, %v5442
        %5444 = vmatprep.mubr.bf16.mxu0 %v5221
        %5445 = vmatmul.mubr.bf16.gmra.mxu0 %v5220
        %v5446 = vpop.f32.mrf.mxu0
        %v5447 = vadd.f32 0.0, %v5446
        %v5448 = vpop.f32.mrf.mxu0
        %v5449 = vadd.f32 0.0, %v5448
        %v5450 = vpop.f32.mrf.mxu0
        %v5451 = vadd.f32 0.0, %v5450
        %v5452 = vpop.f32.mrf.mxu0
        %v5453 = vadd.f32 0.0, %v5452
        %5454 = vmatprep.mubr.bf16.mxu0 %v5223
        %5455 = vmatmul.mubr.bf16.gmra.mxu0 %v5222
        %v5456 = vpop.f32.mrf.mxu0
        %v5457 = vadd.f32 0.0, %v5456
        %v5458 = vpop.f32.mrf.mxu0
        %v5459 = vadd.f32 0.0, %v5458
        %v5460 = vpop.f32.mrf.mxu0
        %v5461 = vadd.f32 0.0, %v5460
        %v5462 = vpop.f32.mrf.mxu0
        %v5463 = vadd.f32 0.0, %v5462
        %5464 = vdwg.mxu0
        %v5465 = vadd.f32 %v5095, %v5427
        %v5466 = vadd.f32 %v5096, %v5429
        %v5467 = vadd.f32 %v5097, %v5431
        %v5468 = vadd.f32 %v5098, %v5433
        %v5469 = vadd.f32 %v5099, %v5437
        %v5470 = vadd.f32 %v5100, %v5439
        %v5471 = vadd.f32 %v5101, %v5441
        %v5472 = vadd.f32 %v5102, %v5443
        %v5473 = vadd.f32 %v5103, %v5447
        %v5474 = vadd.f32 %v5104, %v5449
        %v5475 = vadd.f32 %v5105, %v5451
        %v5476 = vadd.f32 %v5106, %v5453
        %v5477 = vadd.f32 %v5107, %v5457
        %v5478 = vadd.f32 %v5108, %v5459
        %v5479 = vadd.f32 %v5109, %v5461
        %v5480 = vadd.f32 %v5110, %v5463
        %s5481 = scalar_lea.vmem [#allocation3], 32
        %v5482 = vld [vmem:[%s5481] sm:$0xff]
        %v5483 = vld [vmem:[%s5481 + $0x10] sm:$0xff]
        %v5484 = vld [vmem:[%s5481 + $0x20] sm:$0xff]
        %v5485 = vld [vmem:[%s5481 + $0x30] sm:$0xff]
        %v5486 = vld [vmem:[%s5481 + $0x40] sm:$0xff]
        %v5487 = vld [vmem:[%s5481 + $0x50] sm:$0xff]
        %v5488 = vld [vmem:[%s5481 + $0x60] sm:$0xff]
        %v5489 = vld [vmem:[%s5481 + $0x70] sm:$0xff]
        %s5490 = scalar_lea.vmem %s4, 1536
        %v5491 = vld [vmem:[%s5490] sm:$0xff]
        %v5492 = vld [vmem:[%s5490 + $0x8] sm:$0xff]
        %v5493 = vld [vmem:[%s5490 + $0x10] sm:$0xff]
        %v5494 = vld [vmem:[%s5490 + $0x18] sm:$0xff]
        %v5495 = vld [vmem:[%s5490 + $0x20] sm:$0xff]
        %v5496 = vld [vmem:[%s5490 + $0x28] sm:$0xff]
        %v5497 = vld [vmem:[%s5490 + $0x30] sm:$0xff]
        %v5498 = vld [vmem:[%s5490 + $0x38] sm:$0xff]
        %v5499 = vld [vmem:[%s5490 + $0x40] sm:$0xff]
        %v5500 = vld [vmem:[%s5490 + $0x48] sm:$0xff]
        %v5501 = vld [vmem:[%s5490 + $0x50] sm:$0xff]
        %v5502 = vld [vmem:[%s5490 + $0x58] sm:$0xff]
        %v5503 = vld [vmem:[%s5490 + $0x60] sm:$0xff]
        %v5504 = vld [vmem:[%s5490 + $0x68] sm:$0xff]
        %v5505 = vld [vmem:[%s5490 + $0x70] sm:$0xff]
        %v5506 = vld [vmem:[%s5490 + $0x78] sm:$0xff]
        %v5507 = vld [vmem:[%s5490 + $0x80] sm:$0xff]
        %v5508 = vld [vmem:[%s5490 + $0x88] sm:$0xff]
        %v5509 = vld [vmem:[%s5490 + $0x90] sm:$0xff]
        %v5510 = vld [vmem:[%s5490 + $0x98] sm:$0xff]
        %v5511 = vld [vmem:[%s5490 + $0xa0] sm:$0xff]
        %v5512 = vld [vmem:[%s5490 + $0xa8] sm:$0xff]
        %v5513 = vld [vmem:[%s5490 + $0xb0] sm:$0xff]
        %v5514 = vld [vmem:[%s5490 + $0xb8] sm:$0xff]
        %v5515 = vld [vmem:[%s5490 + $0xc0] sm:$0xff]
        %v5516 = vld [vmem:[%s5490 + $0xc8] sm:$0xff]
        %v5517 = vld [vmem:[%s5490 + $0xd0] sm:$0xff]
        %v5518 = vld [vmem:[%s5490 + $0xd8] sm:$0xff]
        %v5519 = vld [vmem:[%s5490 + $0xe0] sm:$0xff]
        %v5520 = vld [vmem:[%s5490 + $0xe8] sm:$0xff]
        %v5521 = vld [vmem:[%s5490 + $0xf0] sm:$0xff]
        %v5522 = vld [vmem:[%s5490 + $0xf8] sm:$0xff]
        %v5531 = vunpack.c.l.b16 %v5482
        %v5532 = vunpack.c.h.b16 %v5482
        %v5533 = vunpack.c.l.b16 %v5483
        %v5534 = vunpack.c.h.b16 %v5483
        %v5535 = vunpack.c.l.b16 %v5484
        %v5536 = vunpack.c.h.b16 %v5484
        %v5537 = vunpack.c.l.b16 %v5485
        %v5538 = vunpack.c.h.b16 %v5485
        %v5539 = vunpack.c.l.b16 %v5486
        %v5540 = vunpack.c.h.b16 %v5486
        %v5541 = vunpack.c.l.b16 %v5487
        %v5542 = vunpack.c.h.b16 %v5487
        %v5543 = vunpack.c.l.b16 %v5488
        %v5544 = vunpack.c.h.b16 %v5488
        %v5545 = vunpack.c.l.b16 %v5489
        %v5546 = vunpack.c.h.b16 %v5489
        %v5547 = vpack.c.b16 %v5533, %v5531
        %v5548 = vpack.c.b16 %v5534, %v5532
        %v5549 = vpack.c.b16 %v5537, %v5535
        %v5550 = vpack.c.b16 %v5538, %v5536
        %v5551 = vpack.c.b16 %v5541, %v5539
        %v5552 = vpack.c.b16 %v5542, %v5540
        %v5553 = vpack.c.b16 %v5545, %v5543
        %v5554 = vpack.c.b16 %v5546, %v5544
        %v5595 = vunpack.c.l.b16 %v5491
        %v5596 = vunpack.c.h.b16 %v5491
        %v5597 = vunpack.c.l.b16 %v5492
        %v5598 = vunpack.c.h.b16 %v5492
        %v5599 = vunpack.c.l.b16 %v5493
        %v5600 = vunpack.c.h.b16 %v5493
        %v5601 = vunpack.c.l.b16 %v5494
        %v5602 = vunpack.c.h.b16 %v5494
        %v5603 = vunpack.c.l.b16 %v5495
        %v5604 = vunpack.c.h.b16 %v5495
        %v5605 = vunpack.c.l.b16 %v5496
        %v5606 = vunpack.c.h.b16 %v5496
        %v5607 = vunpack.c.l.b16 %v5497
        %v5608 = vunpack.c.h.b16 %v5497
        %v5609 = vunpack.c.l.b16 %v5498
        %v5610 = vunpack.c.h.b16 %v5498
        %v5611 = vunpack.c.l.b16 %v5499
        %v5612 = vunpack.c.h.b16 %v5499
        %v5613 = vunpack.c.l.b16 %v5500
        %v5614 = vunpack.c.h.b16 %v5500
        %v5615 = vunpack.c.l.b16 %v5501
        %v5616 = vunpack.c.h.b16 %v5501
        %v5617 = vunpack.c.l.b16 %v5502
        %v5618 = vunpack.c.h.b16 %v5502
        %v5619 = vunpack.c.l.b16 %v5503
        %v5620 = vunpack.c.h.b16 %v5503
        %v5621 = vunpack.c.l.b16 %v5504
        %v5622 = vunpack.c.h.b16 %v5504
        %v5623 = vunpack.c.l.b16 %v5505
        %v5624 = vunpack.c.h.b16 %v5505
        %v5625 = vunpack.c.l.b16 %v5506
        %v5626 = vunpack.c.h.b16 %v5506
        %v5627 = vunpack.c.l.b16 %v5507
        %v5628 = vunpack.c.h.b16 %v5507
        %v5629 = vunpack.c.l.b16 %v5508
        %v5630 = vunpack.c.h.b16 %v5508
        %v5631 = vunpack.c.l.b16 %v5509
        %v5632 = vunpack.c.h.b16 %v5509
        %v5633 = vunpack.c.l.b16 %v5510
        %v5634 = vunpack.c.h.b16 %v5510
        %v5635 = vunpack.c.l.b16 %v5511
        %v5636 = vunpack.c.h.b16 %v5511
        %v5637 = vunpack.c.l.b16 %v5512
        %v5638 = vunpack.c.h.b16 %v5512
        %v5639 = vunpack.c.l.b16 %v5513
        %v5640 = vunpack.c.h.b16 %v5513
        %v5641 = vunpack.c.l.b16 %v5514
        %v5642 = vunpack.c.h.b16 %v5514
        %v5643 = vunpack.c.l.b16 %v5515
        %v5644 = vunpack.c.h.b16 %v5515
        %v5645 = vunpack.c.l.b16 %v5516
        %v5646 = vunpack.c.h.b16 %v5516
        %v5647 = vunpack.c.l.b16 %v5517
        %v5648 = vunpack.c.h.b16 %v5517
        %v5649 = vunpack.c.l.b16 %v5518
        %v5650 = vunpack.c.h.b16 %v5518
        %v5651 = vunpack.c.l.b16 %v5519
        %v5652 = vunpack.c.h.b16 %v5519
        %v5653 = vunpack.c.l.b16 %v5520
        %v5654 = vunpack.c.h.b16 %v5520
        %v5655 = vunpack.c.l.b16 %v5521
        %v5656 = vunpack.c.h.b16 %v5521
        %v5657 = vunpack.c.l.b16 %v5522
        %v5658 = vunpack.c.h.b16 %v5522
        %v5659 = vpack.c.b16 %v5597, %v5595
        %v5660 = vpack.c.b16 %v5598, %v5596
        %v5661 = vpack.c.b16 %v5601, %v5599
        %v5662 = vpack.c.b16 %v5602, %v5600
        %v5663 = vpack.c.b16 %v5605, %v5603
        %v5664 = vpack.c.b16 %v5606, %v5604
        %v5665 = vpack.c.b16 %v5609, %v5607
        %v5666 = vpack.c.b16 %v5610, %v5608
        %v5667 = vpack.c.b16 %v5613, %v5611
        %v5668 = vpack.c.b16 %v5614, %v5612
        %v5669 = vpack.c.b16 %v5617, %v5615
        %v5670 = vpack.c.b16 %v5618, %v5616
        %v5671 = vpack.c.b16 %v5621, %v5619
        %v5672 = vpack.c.b16 %v5622, %v5620
        %v5673 = vpack.c.b16 %v5625, %v5623
        %v5674 = vpack.c.b16 %v5626, %v5624
        %v5675 = vpack.c.b16 %v5629, %v5627
        %v5676 = vpack.c.b16 %v5630, %v5628
        %v5677 = vpack.c.b16 %v5633, %v5631
        %v5678 = vpack.c.b16 %v5634, %v5632
        %v5679 = vpack.c.b16 %v5637, %v5635
        %v5680 = vpack.c.b16 %v5638, %v5636
        %v5681 = vpack.c.b16 %v5641, %v5639
        %v5682 = vpack.c.b16 %v5642, %v5640
        %v5683 = vpack.c.b16 %v5645, %v5643
        %v5684 = vpack.c.b16 %v5646, %v5644
        %v5685 = vpack.c.b16 %v5649, %v5647
        %v5686 = vpack.c.b16 %v5650, %v5648
        %v5687 = vpack.c.b16 %v5653, %v5651
        %v5688 = vpack.c.b16 %v5654, %v5652
        %v5689 = vpack.c.b16 %v5657, %v5655
        %v5690 = vpack.c.b16 %v5658, %v5656
        %5723 = vmatprep.subr.bf16.mxu0 %v5674
        %5724 = vmatpush1.bf16.msra.mxu0 %v5673
        %5725 = vmatprep.subr.bf16.mxu0 %v5672
        %5726 = vmatpush1.bf16.msra.mxu0 %v5671
        %5727 = vmatprep.subr.bf16.mxu0 %v5670
        %5728 = vmatpush1.bf16.msra.mxu0 %v5669
        %5729 = vmatprep.subr.bf16.mxu0 %v5668
        %5730 = vmatpush1.bf16.msra.mxu0 %v5667
        %5731 = vmatprep.subr.bf16.mxu0 %v5666
        %5732 = vmatpush1.bf16.msra.mxu0 %v5665
        %5733 = vmatprep.subr.bf16.mxu0 %v5664
        %5734 = vmatpush1.bf16.msra.mxu0 %v5663
        %5735 = vmatprep.subr.bf16.mxu0 %v5662
        %5736 = vmatpush1.bf16.msra.mxu0 %v5661
        %5737 = vmatprep.subr.bf16.mxu0 %v5660
        %5738 = vmatpush1.bf16.msra.mxu0 %v5659
        %5739 = vmatprep.subr.bf16.mxu0 %v5690
        %5740 = vmatpush2.bf16.msra.mxu0 %v5689
        %5741 = vmatprep.subr.bf16.mxu0 %v5688
        %5742 = vmatpush2.bf16.msra.mxu0 %v5687
        %5743 = vmatprep.subr.bf16.mxu0 %v5686
        %5744 = vmatpush2.bf16.msra.mxu0 %v5685
        %5745 = vmatprep.subr.bf16.mxu0 %v5684
        %5746 = vmatpush2.bf16.msra.mxu0 %v5683
        %5747 = vmatprep.subr.bf16.mxu0 %v5682
        %5748 = vmatpush2.bf16.msra.mxu0 %v5681
        %5749 = vmatprep.subr.bf16.mxu0 %v5680
        %5750 = vmatpush2.bf16.msra.mxu0 %v5679
        %5751 = vmatprep.subr.bf16.mxu0 %v5678
        %5752 = vmatpush2.bf16.msra.mxu0 %v5677
        %5753 = vmatprep.subr.bf16.mxu0 %v5676
        %5754 = vmatpush2.bf16.msra.mxu0 %v5675
        %5755 = vmatprep.mubr.bf16.mxu0 %v5548
        %5756 = vmatmul.mubr.bf16.gmra.mxu0 %v5547
        %v5757 = vpop.f32.mrf.mxu0
        %v5758 = vadd.f32 0.0, %v5757
        %v5759 = vpop.f32.mrf.mxu0
        %v5760 = vadd.f32 0.0, %v5759
        %v5761 = vpop.f32.mrf.mxu0
        %v5762 = vadd.f32 0.0, %v5761
        %v5763 = vpop.f32.mrf.mxu0
        %v5764 = vadd.f32 0.0, %v5763
        %5765 = vmatprep.mubr.bf16.mxu0 %v5550
        %5766 = vmatmul.mubr.bf16.gmra.mxu0 %v5549
        %v5767 = vpop.f32.mrf.mxu0
        %v5768 = vadd.f32 0.0, %v5767
        %v5769 = vpop.f32.mrf.mxu0
        %v5770 = vadd.f32 0.0, %v5769
        %v5771 = vpop.f32.mrf.mxu0
        %v5772 = vadd.f32 0.0, %v5771
        %v5773 = vpop.f32.mrf.mxu0
        %v5774 = vadd.f32 0.0, %v5773
        %5775 = vmatprep.mubr.bf16.mxu0 %v5552
        %5776 = vmatmul.mubr.bf16.gmra.mxu0 %v5551
        %v5777 = vpop.f32.mrf.mxu0
        %v5778 = vadd.f32 0.0, %v5777
        %v5779 = vpop.f32.mrf.mxu0
        %v5780 = vadd.f32 0.0, %v5779
        %v5781 = vpop.f32.mrf.mxu0
        %v5782 = vadd.f32 0.0, %v5781
        %v5783 = vpop.f32.mrf.mxu0
        %v5784 = vadd.f32 0.0, %v5783
        %5785 = vmatprep.mubr.bf16.mxu0 %v5554
        %5786 = vmatmul.mubr.bf16.gmra.mxu0 %v5553
        %v5787 = vpop.f32.mrf.mxu0
        %v5788 = vadd.f32 0.0, %v5787
        %v5789 = vpop.f32.mrf.mxu0
        %v5790 = vadd.f32 0.0, %v5789
        %v5791 = vpop.f32.mrf.mxu0
        %v5792 = vadd.f32 0.0, %v5791
        %v5793 = vpop.f32.mrf.mxu0
        %v5794 = vadd.f32 0.0, %v5793
        %5795 = vdwg.mxu0
        %v5796 = vadd.f32 %v5465, %v5758
        %v5797 = vadd.f32 %v5466, %v5760
        %v5798 = vadd.f32 %v5467, %v5762
        %v5799 = vadd.f32 %v5468, %v5764
        %v5800 = vadd.f32 %v5469, %v5768
        %v5801 = vadd.f32 %v5470, %v5770
        %v5802 = vadd.f32 %v5471, %v5772
        %v5803 = vadd.f32 %v5472, %v5774
        %v5804 = vadd.f32 %v5473, %v5778
        %v5805 = vadd.f32 %v5474, %v5780
        %v5806 = vadd.f32 %v5475, %v5782
        %v5807 = vadd.f32 %v5476, %v5784
        %v5808 = vadd.f32 %v5477, %v5788
        %v5809 = vadd.f32 %v5478, %v5790
        %v5810 = vadd.f32 %v5479, %v5792
        %v5811 = vadd.f32 %v5480, %v5794
        %v5812 = vld [vmem:[%s5481] sm:$0xff]
        %v5813 = vld [vmem:[%s5481 + $0x8] sm:$0x11]
        %v5814 = vld [vmem:[%s5481 + $0x10] sm:$0xff]
        %v5815 = vld [vmem:[%s5481 + $0x18] sm:$0x11]
        %v5816 = vld [vmem:[%s5481 + $0x20] sm:$0xff]
        %v5817 = vld [vmem:[%s5481 + $0x28] sm:$0x11]
        %v5818 = vld [vmem:[%s5481 + $0x30] sm:$0xff]
        %v5819 = vld [vmem:[%s5481 + $0x38] sm:$0x11]
        %v5820 = vld [vmem:[%s5481 + $0x40] sm:$0xff]
        %v5821 = vld [vmem:[%s5481 + $0x48] sm:$0x11]
        %v5822 = vld [vmem:[%s5481 + $0x50] sm:$0xff]
        %v5823 = vld [vmem:[%s5481 + $0x58] sm:$0x11]
        %v5824 = vld [vmem:[%s5481 + $0x60] sm:$0xff]
        %v5825 = vld [vmem:[%s5481 + $0x68] sm:$0x11]
        %v5826 = vld [vmem:[%s5481 + $0x70] sm:$0xff]
        %v5827 = vld [vmem:[%s5481 + $0x78] sm:$0x11]
        %v5829 = vshrl.u32 %v5812, 16
        %v5831 = vrot.slane %v5829, 4
        %v5832 = vshll.u32 %v5812, 16
        %v5834 = vrot.slane %v5832, 5
        %v5835 = vor.u32 %v5831, %v5834
        %v5836 = vrot.slane %v5835, 4
        %v5838 = vshll.u32 %v5813, 16
        %v5840 = vrot.slane %v5838, 5
        %v5841 = vsel %vm809, %v5836, %v5840
        %v5843 = vshrl.u32 %v5814, 16
        %v5845 = vrot.slane %v5843, 4
        %v5846 = vshll.u32 %v5814, 16
        %v5848 = vrot.slane %v5846, 5
        %v5849 = vor.u32 %v5845, %v5848
        %v5850 = vrot.slane %v5849, 4
        %v5852 = vshll.u32 %v5815, 16
        %v5854 = vrot.slane %v5852, 5
        %v5855 = vsel %vm809, %v5850, %v5854
        %v5857 = vshrl.u32 %v5816, 16
        %v5859 = vrot.slane %v5857, 4
        %v5860 = vshll.u32 %v5816, 16
        %v5862 = vrot.slane %v5860, 5
        %v5863 = vor.u32 %v5859, %v5862
        %v5864 = vrot.slane %v5863, 4
        %v5866 = vshll.u32 %v5817, 16
        %v5868 = vrot.slane %v5866, 5
        %v5869 = vsel %vm809, %v5864, %v5868
        %v5871 = vshrl.u32 %v5818, 16
        %v5873 = vrot.slane %v5871, 4
        %v5874 = vshll.u32 %v5818, 16
        %v5876 = vrot.slane %v5874, 5
        %v5877 = vor.u32 %v5873, %v5876
        %v5878 = vrot.slane %v5877, 4
        %v5880 = vshll.u32 %v5819, 16
        %v5882 = vrot.slane %v5880, 5
        %v5883 = vsel %vm809, %v5878, %v5882
        %v5885 = vshrl.u32 %v5820, 16
        %v5887 = vrot.slane %v5885, 4
        %v5888 = vshll.u32 %v5820, 16
        %v5890 = vrot.slane %v5888, 5
        %v5891 = vor.u32 %v5887, %v5890
        %v5892 = vrot.slane %v5891, 4
        %v5894 = vshll.u32 %v5821, 16
        %v5896 = vrot.slane %v5894, 5
        %v5897 = vsel %vm809, %v5892, %v5896
        %v5899 = vshrl.u32 %v5822, 16
        %v5901 = vrot.slane %v5899, 4
        %v5902 = vshll.u32 %v5822, 16
        %v5904 = vrot.slane %v5902, 5
        %v5905 = vor.u32 %v5901, %v5904
        %v5906 = vrot.slane %v5905, 4
        %v5908 = vshll.u32 %v5823, 16
        %v5910 = vrot.slane %v5908, 5
        %v5911 = vsel %vm809, %v5906, %v5910
        %v5913 = vshrl.u32 %v5824, 16
        %v5915 = vrot.slane %v5913, 4
        %v5916 = vshll.u32 %v5824, 16
        %v5918 = vrot.slane %v5916, 5
        %v5919 = vor.u32 %v5915, %v5918
        %v5920 = vrot.slane %v5919, 4
        %v5922 = vshll.u32 %v5825, 16
        %v5924 = vrot.slane %v5922, 5
        %v5925 = vsel %vm809, %v5920, %v5924
        %v5927 = vshrl.u32 %v5826, 16
        %v5929 = vrot.slane %v5927, 4
        %v5930 = vshll.u32 %v5826, 16
        %v5932 = vrot.slane %v5930, 5
        %v5933 = vor.u32 %v5929, %v5932
        %v5934 = vrot.slane %v5933, 4
        %v5936 = vshll.u32 %v5827, 16
        %v5938 = vrot.slane %v5936, 5
        %v5939 = vsel %vm809, %v5934, %v5938
        %s5940 = scalar_lea.vmem %s4, 1792
        %v5941 = vld [vmem:[%s5940] sm:$0xff]
        %v5942 = vld [vmem:[%s5940 + $0x8] sm:$0xff]
        %v5943 = vld [vmem:[%s5940 + $0x10] sm:$0xff]
        %v5944 = vld [vmem:[%s5940 + $0x18] sm:$0xff]
        %v5945 = vld [vmem:[%s5940 + $0x20] sm:$0xff]
        %v5946 = vld [vmem:[%s5940 + $0x28] sm:$0xff]
        %v5947 = vld [vmem:[%s5940 + $0x30] sm:$0xff]
        %v5948 = vld [vmem:[%s5940 + $0x38] sm:$0xff]
        %v5949 = vld [vmem:[%s5940 + $0x40] sm:$0xff]
        %v5950 = vld [vmem:[%s5940 + $0x48] sm:$0xff]
        %v5951 = vld [vmem:[%s5940 + $0x50] sm:$0xff]
        %v5952 = vld [vmem:[%s5940 + $0x58] sm:$0xff]
        %v5953 = vld [vmem:[%s5940 + $0x60] sm:$0xff]
        %v5954 = vld [vmem:[%s5940 + $0x68] sm:$0xff]
        %v5955 = vld [vmem:[%s5940 + $0x70] sm:$0xff]
        %v5956 = vld [vmem:[%s5940 + $0x78] sm:$0xff]
        %v5957 = vld [vmem:[%s5940 + $0x80] sm:$0xff]
        %v5958 = vld [vmem:[%s5940 + $0x88] sm:$0xff]
        %v5959 = vld [vmem:[%s5940 + $0x90] sm:$0xff]
        %v5960 = vld [vmem:[%s5940 + $0x98] sm:$0xff]
        %v5961 = vld [vmem:[%s5940 + $0xa0] sm:$0xff]
        %v5962 = vld [vmem:[%s5940 + $0xa8] sm:$0xff]
        %v5963 = vld [vmem:[%s5940 + $0xb0] sm:$0xff]
        %v5964 = vld [vmem:[%s5940 + $0xb8] sm:$0xff]
        %v5965 = vld [vmem:[%s5940 + $0xc0] sm:$0xff]
        %v5966 = vld [vmem:[%s5940 + $0xc8] sm:$0xff]
        %v5967 = vld [vmem:[%s5940 + $0xd0] sm:$0xff]
        %v5968 = vld [vmem:[%s5940 + $0xd8] sm:$0xff]
        %v5969 = vld [vmem:[%s5940 + $0xe0] sm:$0xff]
        %v5970 = vld [vmem:[%s5940 + $0xe8] sm:$0xff]
        %v5971 = vld [vmem:[%s5940 + $0xf0] sm:$0xff]
        %v5972 = vld [vmem:[%s5940 + $0xf8] sm:$0xff]
        %v5973 = vunpack.c.l.b16 %v5841
        %v5974 = vunpack.c.h.b16 %v5841
        %v5975 = vunpack.c.l.b16 %v5855
        %v5976 = vunpack.c.h.b16 %v5855
        %v5977 = vunpack.c.l.b16 %v5869
        %v5978 = vunpack.c.h.b16 %v5869
        %v5979 = vunpack.c.l.b16 %v5883
        %v5980 = vunpack.c.h.b16 %v5883
        %v5981 = vunpack.c.l.b16 %v5897
        %v5982 = vunpack.c.h.b16 %v5897
        %v5983 = vunpack.c.l.b16 %v5911
        %v5984 = vunpack.c.h.b16 %v5911
        %v5985 = vunpack.c.l.b16 %v5925
        %v5986 = vunpack.c.h.b16 %v5925
        %v5987 = vunpack.c.l.b16 %v5939
        %v5988 = vunpack.c.h.b16 %v5939
        %v5989 = vpack.c.b16 %v5975, %v5973
        %v5990 = vpack.c.b16 %v5976, %v5974
        %v5991 = vpack.c.b16 %v5979, %v5977
        %v5992 = vpack.c.b16 %v5980, %v5978
        %v5993 = vpack.c.b16 %v5983, %v5981
        %v5994 = vpack.c.b16 %v5984, %v5982
        %v5995 = vpack.c.b16 %v5987, %v5985
        %v5996 = vpack.c.b16 %v5988, %v5986
        %v6037 = vunpack.c.l.b16 %v5941
        %v6038 = vunpack.c.h.b16 %v5941
        %v6039 = vunpack.c.l.b16 %v5942
        %v6040 = vunpack.c.h.b16 %v5942
        %v6041 = vunpack.c.l.b16 %v5943
        %v6042 = vunpack.c.h.b16 %v5943
        %v6043 = vunpack.c.l.b16 %v5944
        %v6044 = vunpack.c.h.b16 %v5944
        %v6045 = vunpack.c.l.b16 %v5945
        %v6046 = vunpack.c.h.b16 %v5945
        %v6047 = vunpack.c.l.b16 %v5946
        %v6048 = vunpack.c.h.b16 %v5946
        %v6049 = vunpack.c.l.b16 %v5947
        %v6050 = vunpack.c.h.b16 %v5947
        %v6051 = vunpack.c.l.b16 %v5948
        %v6052 = vunpack.c.h.b16 %v5948
        %v6053 = vunpack.c.l.b16 %v5949
        %v6054 = vunpack.c.h.b16 %v5949
        %v6055 = vunpack.c.l.b16 %v5950
        %v6056 = vunpack.c.h.b16 %v5950
        %v6057 = vunpack.c.l.b16 %v5951
        %v6058 = vunpack.c.h.b16 %v5951
        %v6059 = vunpack.c.l.b16 %v5952
        %v6060 = vunpack.c.h.b16 %v5952
        %v6061 = vunpack.c.l.b16 %v5953
        %v6062 = vunpack.c.h.b16 %v5953
        %v6063 = vunpack.c.l.b16 %v5954
        %v6064 = vunpack.c.h.b16 %v5954
        %v6065 = vunpack.c.l.b16 %v5955
        %v6066 = vunpack.c.h.b16 %v5955
        %v6067 = vunpack.c.l.b16 %v5956
        %v6068 = vunpack.c.h.b16 %v5956
        %v6069 = vunpack.c.l.b16 %v5957
        %v6070 = vunpack.c.h.b16 %v5957
        %v6071 = vunpack.c.l.b16 %v5958
        %v6072 = vunpack.c.h.b16 %v5958
        %v6073 = vunpack.c.l.b16 %v5959
        %v6074 = vunpack.c.h.b16 %v5959
        %v6075 = vunpack.c.l.b16 %v5960
        %v6076 = vunpack.c.h.b16 %v5960
        %v6077 = vunpack.c.l.b16 %v5961
        %v6078 = vunpack.c.h.b16 %v5961
        %v6079 = vunpack.c.l.b16 %v5962
        %v6080 = vunpack.c.h.b16 %v5962
        %v6081 = vunpack.c.l.b16 %v5963
        %v6082 = vunpack.c.h.b16 %v5963
        %v6083 = vunpack.c.l.b16 %v5964
        %v6084 = vunpack.c.h.b16 %v5964
        %v6085 = vunpack.c.l.b16 %v5965
        %v6086 = vunpack.c.h.b16 %v5965
        %v6087 = vunpack.c.l.b16 %v5966
        %v6088 = vunpack.c.h.b16 %v5966
        %v6089 = vunpack.c.l.b16 %v5967
        %v6090 = vunpack.c.h.b16 %v5967
        %v6091 = vunpack.c.l.b16 %v5968
        %v6092 = vunpack.c.h.b16 %v5968
        %v6093 = vunpack.c.l.b16 %v5969
        %v6094 = vunpack.c.h.b16 %v5969
        %v6095 = vunpack.c.l.b16 %v5970
        %v6096 = vunpack.c.h.b16 %v5970
        %v6097 = vunpack.c.l.b16 %v5971
        %v6098 = vunpack.c.h.b16 %v5971
        %v6099 = vunpack.c.l.b16 %v5972
        %v6100 = vunpack.c.h.b16 %v5972
        %v6101 = vpack.c.b16 %v6039, %v6037
        %v6102 = vpack.c.b16 %v6040, %v6038
        %v6103 = vpack.c.b16 %v6043, %v6041
        %v6104 = vpack.c.b16 %v6044, %v6042
        %v6105 = vpack.c.b16 %v6047, %v6045
        %v6106 = vpack.c.b16 %v6048, %v6046
        %v6107 = vpack.c.b16 %v6051, %v6049
        %v6108 = vpack.c.b16 %v6052, %v6050
        %v6109 = vpack.c.b16 %v6055, %v6053
        %v6110 = vpack.c.b16 %v6056, %v6054
        %v6111 = vpack.c.b16 %v6059, %v6057
        %v6112 = vpack.c.b16 %v6060, %v6058
        %v6113 = vpack.c.b16 %v6063, %v6061
        %v6114 = vpack.c.b16 %v6064, %v6062
        %v6115 = vpack.c.b16 %v6067, %v6065
        %v6116 = vpack.c.b16 %v6068, %v6066
        %v6117 = vpack.c.b16 %v6071, %v6069
        %v6118 = vpack.c.b16 %v6072, %v6070
        %v6119 = vpack.c.b16 %v6075, %v6073
        %v6120 = vpack.c.b16 %v6076, %v6074
        %v6121 = vpack.c.b16 %v6079, %v6077
        %v6122 = vpack.c.b16 %v6080, %v6078
        %v6123 = vpack.c.b16 %v6083, %v6081
        %v6124 = vpack.c.b16 %v6084, %v6082
        %v6125 = vpack.c.b16 %v6087, %v6085
        %v6126 = vpack.c.b16 %v6088, %v6086
        %v6127 = vpack.c.b16 %v6091, %v6089
        %v6128 = vpack.c.b16 %v6092, %v6090
        %v6129 = vpack.c.b16 %v6095, %v6093
        %v6130 = vpack.c.b16 %v6096, %v6094
        %v6131 = vpack.c.b16 %v6099, %v6097
        %v6132 = vpack.c.b16 %v6100, %v6098
        %6165 = vmatprep.subr.bf16.mxu0 %v6116
        %6166 = vmatpush1.bf16.msra.mxu0 %v6115
        %6167 = vmatprep.subr.bf16.mxu0 %v6114
        %6168 = vmatpush1.bf16.msra.mxu0 %v6113
        %6169 = vmatprep.subr.bf16.mxu0 %v6112
        %6170 = vmatpush1.bf16.msra.mxu0 %v6111
        %6171 = vmatprep.subr.bf16.mxu0 %v6110
        %6172 = vmatpush1.bf16.msra.mxu0 %v6109
        %6173 = vmatprep.subr.bf16.mxu0 %v6108
        %6174 = vmatpush1.bf16.msra.mxu0 %v6107
        %6175 = vmatprep.subr.bf16.mxu0 %v6106
        %6176 = vmatpush1.bf16.msra.mxu0 %v6105
        %6177 = vmatprep.subr.bf16.mxu0 %v6104
        %6178 = vmatpush1.bf16.msra.mxu0 %v6103
        %6179 = vmatprep.subr.bf16.mxu0 %v6102
        %6180 = vmatpush1.bf16.msra.mxu0 %v6101
        %6181 = vmatprep.subr.bf16.mxu0 %v6132
        %6182 = vmatpush2.bf16.msra.mxu0 %v6131
        %6183 = vmatprep.subr.bf16.mxu0 %v6130
        %6184 = vmatpush2.bf16.msra.mxu0 %v6129
        %6185 = vmatprep.subr.bf16.mxu0 %v6128
        %6186 = vmatpush2.bf16.msra.mxu0 %v6127
        %6187 = vmatprep.subr.bf16.mxu0 %v6126
        %6188 = vmatpush2.bf16.msra.mxu0 %v6125
        %6189 = vmatprep.subr.bf16.mxu0 %v6124
        %6190 = vmatpush2.bf16.msra.mxu0 %v6123
        %6191 = vmatprep.subr.bf16.mxu0 %v6122
        %6192 = vmatpush2.bf16.msra.mxu0 %v6121
        %6193 = vmatprep.subr.bf16.mxu0 %v6120
        %6194 = vmatpush2.bf16.msra.mxu0 %v6119
        %6195 = vmatprep.subr.bf16.mxu0 %v6118
        %6196 = vmatpush2.bf16.msra.mxu0 %v6117
        %6197 = vmatprep.mubr.bf16.mxu0 %v5990
        %6198 = vmatmul.mubr.bf16.gmra.mxu0 %v5989
        %v6199 = vpop.f32.mrf.mxu0
        %v6200 = vadd.f32 0.0, %v6199
        %v6201 = vpop.f32.mrf.mxu0
        %v6202 = vadd.f32 0.0, %v6201
        %v6203 = vpop.f32.mrf.mxu0
        %v6204 = vadd.f32 0.0, %v6203
        %v6205 = vpop.f32.mrf.mxu0
        %v6206 = vadd.f32 0.0, %v6205
        %6207 = vmatprep.mubr.bf16.mxu0 %v5992
        %6208 = vmatmul.mubr.bf16.gmra.mxu0 %v5991
        %v6209 = vpop.f32.mrf.mxu0
        %v6210 = vadd.f32 0.0, %v6209
        %v6211 = vpop.f32.mrf.mxu0
        %v6212 = vadd.f32 0.0, %v6211
        %v6213 = vpop.f32.mrf.mxu0
        %v6214 = vadd.f32 0.0, %v6213
        %v6215 = vpop.f32.mrf.mxu0
        %v6216 = vadd.f32 0.0, %v6215
        %6217 = vmatprep.mubr.bf16.mxu0 %v5994
        %6218 = vmatmul.mubr.bf16.gmra.mxu0 %v5993
        %v6219 = vpop.f32.mrf.mxu0
        %v6220 = vadd.f32 0.0, %v6219
        %v6221 = vpop.f32.mrf.mxu0
        %v6222 = vadd.f32 0.0, %v6221
        %v6223 = vpop.f32.mrf.mxu0
        %v6224 = vadd.f32 0.0, %v6223
        %v6225 = vpop.f32.mrf.mxu0
        %v6226 = vadd.f32 0.0, %v6225
        %6227 = vmatprep.mubr.bf16.mxu0 %v5996
        %6228 = vmatmul.mubr.bf16.gmra.mxu0 %v5995
        %v6229 = vpop.f32.mrf.mxu0
        %v6230 = vadd.f32 0.0, %v6229
        %v6231 = vpop.f32.mrf.mxu0
        %v6232 = vadd.f32 0.0, %v6231
        %v6233 = vpop.f32.mrf.mxu0
        %v6234 = vadd.f32 0.0, %v6233
        %v6235 = vpop.f32.mrf.mxu0
        %v6236 = vadd.f32 0.0, %v6235
        %6237 = vdwg.mxu0
        %v6238 = vadd.f32 %v5796, %v6200
        %v6239 = vadd.f32 %v5797, %v6202
        %v6240 = vadd.f32 %v5798, %v6204
        %v6241 = vadd.f32 %v5799, %v6206
        %v6242 = vadd.f32 %v5800, %v6210
        %v6243 = vadd.f32 %v5801, %v6212
        %v6244 = vadd.f32 %v5802, %v6214
        %v6245 = vadd.f32 %v5803, %v6216
        %v6246 = vadd.f32 %v5804, %v6220
        %v6247 = vadd.f32 %v5805, %v6222
        %v6248 = vadd.f32 %v5806, %v6224
        %v6249 = vadd.f32 %v5807, %v6226
        %v6250 = vadd.f32 %v5808, %v6230
        %v6251 = vadd.f32 %v5809, %v6232
        %v6252 = vadd.f32 %v5810, %v6234
        %v6253 = vadd.f32 %v5811, %v6236
        %v6254 = vld [vmem:[%s5481] sm:$0xee]
        %v6255 = vld [vmem:[%s5481 + $0x10] sm:$0xee]
        %v6256 = vld [vmem:[%s5481 + $0x20] sm:$0xee]
        %v6257 = vld [vmem:[%s5481 + $0x30] sm:$0xee]
        %v6258 = vld [vmem:[%s5481 + $0x40] sm:$0xee]
        %v6259 = vld [vmem:[%s5481 + $0x50] sm:$0xee]
        %v6260 = vld [vmem:[%s5481 + $0x60] sm:$0xee]
        %v6261 = vld [vmem:[%s5481 + $0x70] sm:$0xee]
        %v6278 = vrot.slane %v6254, 5
        %v6279 = vrot.slane %v6278, 4
        %v6280 = vrot.slane %v5813, 5
        %v6281 = vsel %vm1086, %v6279, %v6280
        %v6282 = vrot.slane %v6255, 5
        %v6283 = vrot.slane %v6282, 4
        %v6284 = vrot.slane %v5815, 5
        %v6285 = vsel %vm1086, %v6283, %v6284
        %v6286 = vrot.slane %v6256, 5
        %v6287 = vrot.slane %v6286, 4
        %v6288 = vrot.slane %v5817, 5
        %v6289 = vsel %vm1086, %v6287, %v6288
        %v6290 = vrot.slane %v6257, 5
        %v6291 = vrot.slane %v6290, 4
        %v6292 = vrot.slane %v5819, 5
        %v6293 = vsel %vm1086, %v6291, %v6292
        %v6294 = vrot.slane %v6258, 5
        %v6295 = vrot.slane %v6294, 4
        %v6296 = vrot.slane %v5821, 5
        %v6297 = vsel %vm1086, %v6295, %v6296
        %v6298 = vrot.slane %v6259, 5
        %v6299 = vrot.slane %v6298, 4
        %v6300 = vrot.slane %v5823, 5
        %v6301 = vsel %vm1086, %v6299, %v6300
        %v6302 = vrot.slane %v6260, 5
        %v6303 = vrot.slane %v6302, 4
        %v6304 = vrot.slane %v5825, 5
        %v6305 = vsel %vm1086, %v6303, %v6304
        %v6306 = vrot.slane %v6261, 5
        %v6307 = vrot.slane %v6306, 4
        %v6308 = vrot.slane %v5827, 5
        %v6309 = vsel %vm1086, %v6307, %v6308
        %s6310 = scalar_lea.vmem %s4, 2048
        %v6311 = vld [vmem:[%s6310] sm:$0xff]
        %v6312 = vld [vmem:[%s6310 + $0x8] sm:$0xff]
        %v6313 = vld [vmem:[%s6310 + $0x10] sm:$0xff]
        %v6314 = vld [vmem:[%s6310 + $0x18] sm:$0xff]
        %v6315 = vld [vmem:[%s6310 + $0x20] sm:$0xff]
        %v6316 = vld [vmem:[%s6310 + $0x28] sm:$0xff]
        %v6317 = vld [vmem:[%s6310 + $0x30] sm:$0xff]
        %v6318 = vld [vmem:[%s6310 + $0x38] sm:$0xff]
        %v6319 = vld [vmem:[%s6310 + $0x40] sm:$0xff]
        %v6320 = vld [vmem:[%s6310 + $0x48] sm:$0xff]
        %v6321 = vld [vmem:[%s6310 + $0x50] sm:$0xff]
        %v6322 = vld [vmem:[%s6310 + $0x58] sm:$0xff]
        %v6323 = vld [vmem:[%s6310 + $0x60] sm:$0xff]
        %v6324 = vld [vmem:[%s6310 + $0x68] sm:$0xff]
        %v6325 = vld [vmem:[%s6310 + $0x70] sm:$0xff]
        %v6326 = vld [vmem:[%s6310 + $0x78] sm:$0xff]
        %v6327 = vld [vmem:[%s6310 + $0x80] sm:$0xff]
        %v6328 = vld [vmem:[%s6310 + $0x88] sm:$0xff]
        %v6329 = vld [vmem:[%s6310 + $0x90] sm:$0xff]
        %v6330 = vld [vmem:[%s6310 + $0x98] sm:$0xff]
        %v6331 = vld [vmem:[%s6310 + $0xa0] sm:$0xff]
        %v6332 = vld [vmem:[%s6310 + $0xa8] sm:$0xff]
        %v6333 = vld [vmem:[%s6310 + $0xb0] sm:$0xff]
        %v6334 = vld [vmem:[%s6310 + $0xb8] sm:$0xff]
        %v6335 = vld [vmem:[%s6310 + $0xc0] sm:$0xff]
        %v6336 = vld [vmem:[%s6310 + $0xc8] sm:$0xff]
        %v6337 = vld [vmem:[%s6310 + $0xd0] sm:$0xff]
        %v6338 = vld [vmem:[%s6310 + $0xd8] sm:$0xff]
        %v6339 = vld [vmem:[%s6310 + $0xe0] sm:$0xff]
        %v6340 = vld [vmem:[%s6310 + $0xe8] sm:$0xff]
        %v6341 = vld [vmem:[%s6310 + $0xf0] sm:$0xff]
        %v6342 = vld [vmem:[%s6310 + $0xf8] sm:$0xff]
        %v6343 = vunpack.c.l.b16 %v6281
        %v6344 = vunpack.c.h.b16 %v6281
        %v6345 = vunpack.c.l.b16 %v6285
        %v6346 = vunpack.c.h.b16 %v6285
        %v6347 = vunpack.c.l.b16 %v6289
        %v6348 = vunpack.c.h.b16 %v6289
        %v6349 = vunpack.c.l.b16 %v6293
        %v6350 = vunpack.c.h.b16 %v6293
        %v6351 = vunpack.c.l.b16 %v6297
        %v6352 = vunpack.c.h.b16 %v6297
        %v6353 = vunpack.c.l.b16 %v6301
        %v6354 = vunpack.c.h.b16 %v6301
        %v6355 = vunpack.c.l.b16 %v6305
        %v6356 = vunpack.c.h.b16 %v6305
        %v6357 = vunpack.c.l.b16 %v6309
        %v6358 = vunpack.c.h.b16 %v6309
        %v6359 = vpack.c.b16 %v6345, %v6343
        %v6360 = vpack.c.b16 %v6346, %v6344
        %v6361 = vpack.c.b16 %v6349, %v6347
        %v6362 = vpack.c.b16 %v6350, %v6348
        %v6363 = vpack.c.b16 %v6353, %v6351
        %v6364 = vpack.c.b16 %v6354, %v6352
        %v6365 = vpack.c.b16 %v6357, %v6355
        %v6366 = vpack.c.b16 %v6358, %v6356
        %v6407 = vunpack.c.l.b16 %v6311
        %v6408 = vunpack.c.h.b16 %v6311
        %v6409 = vunpack.c.l.b16 %v6312
        %v6410 = vunpack.c.h.b16 %v6312
        %v6411 = vunpack.c.l.b16 %v6313
        %v6412 = vunpack.c.h.b16 %v6313
        %v6413 = vunpack.c.l.b16 %v6314
        %v6414 = vunpack.c.h.b16 %v6314
        %v6415 = vunpack.c.l.b16 %v6315
        %v6416 = vunpack.c.h.b16 %v6315
        %v6417 = vunpack.c.l.b16 %v6316
        %v6418 = vunpack.c.h.b16 %v6316
        %v6419 = vunpack.c.l.b16 %v6317
        %v6420 = vunpack.c.h.b16 %v6317
        %v6421 = vunpack.c.l.b16 %v6318
        %v6422 = vunpack.c.h.b16 %v6318
        %v6423 = vunpack.c.l.b16 %v6319
        %v6424 = vunpack.c.h.b16 %v6319
        %v6425 = vunpack.c.l.b16 %v6320
        %v6426 = vunpack.c.h.b16 %v6320
        %v6427 = vunpack.c.l.b16 %v6321
        %v6428 = vunpack.c.h.b16 %v6321
        %v6429 = vunpack.c.l.b16 %v6322
        %v6430 = vunpack.c.h.b16 %v6322
        %v6431 = vunpack.c.l.b16 %v6323
        %v6432 = vunpack.c.h.b16 %v6323
        %v6433 = vunpack.c.l.b16 %v6324
        %v6434 = vunpack.c.h.b16 %v6324
        %v6435 = vunpack.c.l.b16 %v6325
        %v6436 = vunpack.c.h.b16 %v6325
        %v6437 = vunpack.c.l.b16 %v6326
        %v6438 = vunpack.c.h.b16 %v6326
        %v6439 = vunpack.c.l.b16 %v6327
        %v6440 = vunpack.c.h.b16 %v6327
        %v6441 = vunpack.c.l.b16 %v6328
        %v6442 = vunpack.c.h.b16 %v6328
        %v6443 = vunpack.c.l.b16 %v6329
        %v6444 = vunpack.c.h.b16 %v6329
        %v6445 = vunpack.c.l.b16 %v6330
        %v6446 = vunpack.c.h.b16 %v6330
        %v6447 = vunpack.c.l.b16 %v6331
        %v6448 = vunpack.c.h.b16 %v6331
        %v6449 = vunpack.c.l.b16 %v6332
        %v6450 = vunpack.c.h.b16 %v6332
        %v6451 = vunpack.c.l.b16 %v6333
        %v6452 = vunpack.c.h.b16 %v6333
        %v6453 = vunpack.c.l.b16 %v6334
        %v6454 = vunpack.c.h.b16 %v6334
        %v6455 = vunpack.c.l.b16 %v6335
        %v6456 = vunpack.c.h.b16 %v6335
        %v6457 = vunpack.c.l.b16 %v6336
        %v6458 = vunpack.c.h.b16 %v6336
        %v6459 = vunpack.c.l.b16 %v6337
        %v6460 = vunpack.c.h.b16 %v6337
        %v6461 = vunpack.c.l.b16 %v6338
        %v6462 = vunpack.c.h.b16 %v6338
        %v6463 = vunpack.c.l.b16 %v6339
        %v6464 = vunpack.c.h.b16 %v6339
        %v6465 = vunpack.c.l.b16 %v6340
        %v6466 = vunpack.c.h.b16 %v6340
        %v6467 = vunpack.c.l.b16 %v6341
        %v6468 = vunpack.c.h.b16 %v6341
        %v6469 = vunpack.c.l.b16 %v6342
        %v6470 = vunpack.c.h.b16 %v6342
        %v6471 = vpack.c.b16 %v6409, %v6407
        %v6472 = vpack.c.b16 %v6410, %v6408
        %v6473 = vpack.c.b16 %v6413, %v6411
        %v6474 = vpack.c.b16 %v6414, %v6412
        %v6475 = vpack.c.b16 %v6417, %v6415
        %v6476 = vpack.c.b16 %v6418, %v6416
        %v6477 = vpack.c.b16 %v6421, %v6419
        %v6478 = vpack.c.b16 %v6422, %v6420
        %v6479 = vpack.c.b16 %v6425, %v6423
        %v6480 = vpack.c.b16 %v6426, %v6424
        %v6481 = vpack.c.b16 %v6429, %v6427
        %v6482 = vpack.c.b16 %v6430, %v6428
        %v6483 = vpack.c.b16 %v6433, %v6431
        %v6484 = vpack.c.b16 %v6434, %v6432
        %v6485 = vpack.c.b16 %v6437, %v6435
        %v6486 = vpack.c.b16 %v6438, %v6436
        %v6487 = vpack.c.b16 %v6441, %v6439
        %v6488 = vpack.c.b16 %v6442, %v6440
        %v6489 = vpack.c.b16 %v6445, %v6443
        %v6490 = vpack.c.b16 %v6446, %v6444
        %v6491 = vpack.c.b16 %v6449, %v6447
        %v6492 = vpack.c.b16 %v6450, %v6448
        %v6493 = vpack.c.b16 %v6453, %v6451
        %v6494 = vpack.c.b16 %v6454, %v6452
        %v6495 = vpack.c.b16 %v6457, %v6455
        %v6496 = vpack.c.b16 %v6458, %v6456
        %v6497 = vpack.c.b16 %v6461, %v6459
        %v6498 = vpack.c.b16 %v6462, %v6460
        %v6499 = vpack.c.b16 %v6465, %v6463
        %v6500 = vpack.c.b16 %v6466, %v6464
        %v6501 = vpack.c.b16 %v6469, %v6467
        %v6502 = vpack.c.b16 %v6470, %v6468
        %6535 = vmatprep.subr.bf16.mxu0 %v6486
        %6536 = vmatpush1.bf16.msra.mxu0 %v6485
        %6537 = vmatprep.subr.bf16.mxu0 %v6484
        %6538 = vmatpush1.bf16.msra.mxu0 %v6483
        %6539 = vmatprep.subr.bf16.mxu0 %v6482
        %6540 = vmatpush1.bf16.msra.mxu0 %v6481
        %6541 = vmatprep.subr.bf16.mxu0 %v6480
        %6542 = vmatpush1.bf16.msra.mxu0 %v6479
        %6543 = vmatprep.subr.bf16.mxu0 %v6478
        %6544 = vmatpush1.bf16.msra.mxu0 %v6477
        %6545 = vmatprep.subr.bf16.mxu0 %v6476
        %6546 = vmatpush1.bf16.msra.mxu0 %v6475
        %6547 = vmatprep.subr.bf16.mxu0 %v6474
        %6548 = vmatpush1.bf16.msra.mxu0 %v6473
        %6549 = vmatprep.subr.bf16.mxu0 %v6472
        %6550 = vmatpush1.bf16.msra.mxu0 %v6471
        %6551 = vmatprep.subr.bf16.mxu0 %v6502
        %6552 = vmatpush2.bf16.msra.mxu0 %v6501
        %6553 = vmatprep.subr.bf16.mxu0 %v6500
        %6554 = vmatpush2.bf16.msra.mxu0 %v6499
        %6555 = vmatprep.subr.bf16.mxu0 %v6498
        %6556 = vmatpush2.bf16.msra.mxu0 %v6497
        %6557 = vmatprep.subr.bf16.mxu0 %v6496
        %6558 = vmatpush2.bf16.msra.mxu0 %v6495
        %6559 = vmatprep.subr.bf16.mxu0 %v6494
        %6560 = vmatpush2.bf16.msra.mxu0 %v6493
        %6561 = vmatprep.subr.bf16.mxu0 %v6492
        %6562 = vmatpush2.bf16.msra.mxu0 %v6491
        %6563 = vmatprep.subr.bf16.mxu0 %v6490
        %6564 = vmatpush2.bf16.msra.mxu0 %v6489
        %6565 = vmatprep.subr.bf16.mxu0 %v6488
        %6566 = vmatpush2.bf16.msra.mxu0 %v6487
        %6567 = vmatprep.mubr.bf16.mxu0 %v6360
        %6568 = vmatmul.mubr.bf16.gmra.mxu0 %v6359
        %v6569 = vpop.f32.mrf.mxu0
        %v6570 = vadd.f32 0.0, %v6569
        %v6571 = vpop.f32.mrf.mxu0
        %v6572 = vadd.f32 0.0, %v6571
        %v6573 = vpop.f32.mrf.mxu0
        %v6574 = vadd.f32 0.0, %v6573
        %v6575 = vpop.f32.mrf.mxu0
        %v6576 = vadd.f32 0.0, %v6575
        %6577 = vmatprep.mubr.bf16.mxu0 %v6362
        %6578 = vmatmul.mubr.bf16.gmra.mxu0 %v6361
        %v6579 = vpop.f32.mrf.mxu0
        %v6580 = vadd.f32 0.0, %v6579
        %v6581 = vpop.f32.mrf.mxu0
        %v6582 = vadd.f32 0.0, %v6581
        %v6583 = vpop.f32.mrf.mxu0
        %v6584 = vadd.f32 0.0, %v6583
        %v6585 = vpop.f32.mrf.mxu0
        %v6586 = vadd.f32 0.0, %v6585
        %6587 = vmatprep.mubr.bf16.mxu0 %v6364
        %6588 = vmatmul.mubr.bf16.gmra.mxu0 %v6363
        %v6589 = vpop.f32.mrf.mxu0
        %v6590 = vadd.f32 0.0, %v6589
        %v6591 = vpop.f32.mrf.mxu0
        %v6592 = vadd.f32 0.0, %v6591
        %v6593 = vpop.f32.mrf.mxu0
        %v6594 = vadd.f32 0.0, %v6593
        %v6595 = vpop.f32.mrf.mxu0
        %v6596 = vadd.f32 0.0, %v6595
        %6597 = vmatprep.mubr.bf16.mxu0 %v6366
        %6598 = vmatmul.mubr.bf16.gmra.mxu0 %v6365
        %v6599 = vpop.f32.mrf.mxu0
        %v6600 = vadd.f32 0.0, %v6599
        %v6601 = vpop.f32.mrf.mxu0
        %v6602 = vadd.f32 0.0, %v6601
        %v6603 = vpop.f32.mrf.mxu0
        %v6604 = vadd.f32 0.0, %v6603
        %v6605 = vpop.f32.mrf.mxu0
        %v6606 = vadd.f32 0.0, %v6605
        %6607 = vdwg.mxu0
        %v6608 = vadd.f32 %v6238, %v6570
        %v6609 = vadd.f32 %v6239, %v6572
        %v6610 = vadd.f32 %v6240, %v6574
        %v6611 = vadd.f32 %v6241, %v6576
        %v6612 = vadd.f32 %v6242, %v6580
        %v6613 = vadd.f32 %v6243, %v6582
        %v6614 = vadd.f32 %v6244, %v6584
        %v6615 = vadd.f32 %v6245, %v6586
        %v6616 = vadd.f32 %v6246, %v6590
        %v6617 = vadd.f32 %v6247, %v6592
        %v6618 = vadd.f32 %v6248, %v6594
        %v6619 = vadd.f32 %v6249, %v6596
        %v6620 = vadd.f32 %v6250, %v6600
        %v6621 = vadd.f32 %v6251, %v6602
        %v6622 = vadd.f32 %v6252, %v6604
        %v6623 = vadd.f32 %v6253, %v6606
        %v6624 = vadd.f32 %v6608, %v6610
        %v6625 = vadd.f32 %v6624, %v6612
        %v6626 = vadd.f32 %v6625, %v6614
        %v6627 = vadd.f32 %v6626, %v6616
        %v6628 = vadd.f32 %v6627, %v6618
        %v6629 = vadd.f32 %v6628, %v6620
        %v6630 = vadd.f32 %v6629, %v6622
        %v6631 = vrot.slane %v6630, 4
        %v6632 = vadd.f32 %v6630, %v6631
        %v6633 = vrot.slane %v6632, 2
        %v6634 = vadd.f32 %v6632, %v6633
        %v6635 = vrot.slane %v6634, 1
        %v6636 = vadd.f32 %v6634, %v6635
        %v6637 = vadd.f32 %v6609, %v6611
        %v6638 = vadd.f32 %v6637, %v6613
        %v6639 = vadd.f32 %v6638, %v6615
        %v6640 = vadd.f32 %v6639, %v6617
        %v6641 = vadd.f32 %v6640, %v6619
        %v6642 = vadd.f32 %v6641, %v6621
        %v6643 = vadd.f32 %v6642, %v6623
        %v6644 = vrot.slane %v6643, 4
        %v6645 = vadd.f32 %v6643, %v6644
        %v6646 = vrot.slane %v6645, 2
        %v6647 = vadd.f32 %v6645, %v6646
        %v6648 = vrot.slane %v6647, 1
        %v6649 = vadd.f32 %v6647, %v6648
        %v6650 = vld [vmem:[%s6] sm:$0xff]
        %v6651 = vld [vmem:[%s6 + $0x8] sm:$0xff]
        %v6652 = vld [vmem:[%s6 + $0x10] sm:$0xff]
        %v6653 = vld [vmem:[%s6 + $0x18] sm:$0xff]
        %v6654 = vld [vmem:[%s6 + $0x20] sm:$0xff]
        %v6655 = vld [vmem:[%s6 + $0x28] sm:$0xff]
        %v6656 = vld [vmem:[%s6 + $0x30] sm:$0xff]
        %v6657 = vld [vmem:[%s6 + $0x38] sm:$0xff]
        %v6658 = vld [vmem:[%s6 + $0x40] sm:$0xff]
        %v6659 = vld [vmem:[%s6 + $0x48] sm:$0xff]
        %v6660 = vld [vmem:[%s6 + $0x50] sm:$0xff]
        %v6661 = vld [vmem:[%s6 + $0x58] sm:$0xff]
        %v6662 = vld [vmem:[%s6 + $0x60] sm:$0xff]
        %v6663 = vld [vmem:[%s6 + $0x68] sm:$0xff]
        %v6664 = vld [vmem:[%s6 + $0x70] sm:$0xff]
        %v6665 = vld [vmem:[%s6 + $0x78] sm:$0xff]
        %v6666 = vld [vmem:[%s6 + $0x80] sm:$0xff]
        %v6667 = vld [vmem:[%s6 + $0x88] sm:$0xff]
        %v6668 = vld [vmem:[%s6 + $0x90] sm:$0xff]
        %v6669 = vld [vmem:[%s6 + $0x98] sm:$0xff]
        %v6670 = vld [vmem:[%s6 + $0xa0] sm:$0xff]
        %v6671 = vld [vmem:[%s6 + $0xa8] sm:$0xff]
        %v6672 = vld [vmem:[%s6 + $0xb0] sm:$0xff]
        %v6673 = vld [vmem:[%s6 + $0xb8] sm:$0xff]
        %v6674 = vld [vmem:[%s6 + $0xc0] sm:$0xff]
        %v6675 = vld [vmem:[%s6 + $0xc8] sm:$0xff]
        %v6676 = vld [vmem:[%s6 + $0xd0] sm:$0xff]
        %v6677 = vld [vmem:[%s6 + $0xd8] sm:$0xff]
        %v6678 = vld [vmem:[%s6 + $0xe0] sm:$0xff]
        %v6679 = vld [vmem:[%s6 + $0xe8] sm:$0xff]
        %v6680 = vld [vmem:[%s6 + $0xf0] sm:$0xff]
        %v6681 = vld [vmem:[%s6 + $0xf8] sm:$0xff]
        %6682 = vmatprep.subr.mxu0 0.0
        %6683 = vmatpush1.msra.mxu0 %v6665
        %6684 = vmatprep.subr.mxu0 0.0
        %6685 = vmatpush1.msra.mxu0 %v6664
        %6686 = vmatprep.subr.mxu0 0.0
        %6687 = vmatpush1.msra.mxu0 %v6663
        %6688 = vmatprep.subr.mxu0 0.0
        %6689 = vmatpush1.msra.mxu0 %v6662
        %6690 = vmatprep.subr.mxu0 0.0
        %6691 = vmatpush1.msra.mxu0 %v6661
        %6692 = vmatprep.subr.mxu0 0.0
        %6693 = vmatpush1.msra.mxu0 %v6660
        %6694 = vmatprep.subr.mxu0 0.0
        %6695 = vmatpush1.msra.mxu0 %v6659
        %6696 = vmatprep.subr.mxu0 0.0
        %6697 = vmatpush1.msra.mxu0 %v6658
        %6698 = vmatprep.subr.mxu0 0.0
        %6699 = vmatpush1.msra.mxu0 %v6657
        %6700 = vmatprep.subr.mxu0 0.0
        %6701 = vmatpush1.msra.mxu0 %v6656
        %6702 = vmatprep.subr.mxu0 0.0
        %6703 = vmatpush1.msra.mxu0 %v6655
        %6704 = vmatprep.subr.mxu0 0.0
        %6705 = vmatpush1.msra.mxu0 %v6654
        %6706 = vmatprep.subr.mxu0 0.0
        %6707 = vmatpush1.msra.mxu0 %v6653
        %6708 = vmatprep.subr.mxu0 0.0
        %6709 = vmatpush1.msra.mxu0 %v6652
        %6710 = vmatprep.subr.mxu0 0.0
        %6711 = vmatpush1.msra.mxu0 %v6651
        %6712 = vmatprep.subr.mxu0 0.0
        %6713 = vmatpush1.msra.mxu0 %v6650
        %6714 = vmatprep.subr.mxu0 0.0
        %6715 = vmatpush2.msra.mxu0 %v6681
        %6716 = vmatprep.subr.mxu0 0.0
        %6717 = vmatpush2.msra.mxu0 %v6680
        %6718 = vmatprep.subr.mxu0 0.0
        %6719 = vmatpush2.msra.mxu0 %v6679
        %6720 = vmatprep.subr.mxu0 0.0
        %6721 = vmatpush2.msra.mxu0 %v6678
        %6722 = vmatprep.subr.mxu0 0.0
        %6723 = vmatpush2.msra.mxu0 %v6677
        %6724 = vmatprep.subr.mxu0 0.0
        %6725 = vmatpush2.msra.mxu0 %v6676
        %6726 = vmatprep.subr.mxu0 0.0
        %6727 = vmatpush2.msra.mxu0 %v6675
        %6728 = vmatprep.subr.mxu0 0.0
        %6729 = vmatpush2.msra.mxu0 %v6674
        %6730 = vmatprep.subr.mxu0 0.0
        %6731 = vmatpush2.msra.mxu0 %v6673
        %6732 = vmatprep.subr.mxu0 0.0
        %6733 = vmatpush2.msra.mxu0 %v6672
        %6734 = vmatprep.subr.mxu0 0.0
        %6735 = vmatpush2.msra.mxu0 %v6671
        %6736 = vmatprep.subr.mxu0 0.0
        %6737 = vmatpush2.msra.mxu0 %v6670
        %6738 = vmatprep.subr.mxu0 0.0
        %6739 = vmatpush2.msra.mxu0 %v6669
        %6740 = vmatprep.subr.mxu0 0.0
        %6741 = vmatpush2.msra.mxu0 %v6668
        %6742 = vmatprep.subr.mxu0 0.0
        %6743 = vmatpush2.msra.mxu0 %v6667
        %6744 = vmatprep.subr.mxu0 0.0
        %6745 = vmatpush2.msra.mxu0 %v6666
        %6746 = vmatprep.mubr.f32.mxu0 %v6649
        %6747 = vmatmul.mubr.f32.gmra.mxu0 %v6636
        %v6748 = vpop.f32.mrf.mxu0
        %v6749 = vadd.f32 0.0, %v6748
        %v6750 = vpop.f32.mrf.mxu0
        %6751 = vdwg.mxu0
        %v6752 = vmul.f32 %v6749, 0.001953125
        %v6753 = vld [vmem:[%s7] sm:$0xff]
        %v6754 = vld [vmem:[%s7 + $0x8] sm:$0xff]
        %v6755 = vld [vmem:[%s7 + $0x10] sm:$0xff]
        %v6756 = vld [vmem:[%s7 + $0x18] sm:$0xff]
        %v6757 = vld [vmem:[%s7 + $0x20] sm:$0xff]
        %v6758 = vld [vmem:[%s7 + $0x28] sm:$0xff]
        %v6759 = vld [vmem:[%s7 + $0x30] sm:$0xff]
        %v6760 = vld [vmem:[%s7 + $0x38] sm:$0xff]
        %v6762 = vsel %vm689, %v6752, 0
        %6764 = vmatprep.subr.mxu0 0.0
        %6765 = vmatpush1.msra.mxu0 0.0
        %6766 = vmatprep.subr.mxu0 0.0
        %6767 = vmatpush1.msra.mxu0 0.0
        %6768 = vmatprep.subr.mxu0 0.0
        %6769 = vmatpush1.msra.mxu0 0.0
        %6770 = vmatprep.subr.mxu0 0.0
        %6771 = vmatpush1.msra.mxu0 0.0
        %6772 = vmatprep.subr.mxu0 0.0
        %6773 = vmatpush1.msra.mxu0 0.0
        %6774 = vmatprep.subr.mxu0 0.0
        %6775 = vmatpush1.msra.mxu0 0.0
        %6776 = vmatprep.subr.mxu0 0.0
        %6777 = vmatpush1.msra.mxu0 0.0
        %6778 = vmatprep.subr.mxu0 0.0
        %6779 = vmatpush1.msra.mxu0 0.0
        %6780 = vmatprep.subr.mxu0 0.0
        %6781 = vmatpush1.msra.mxu0 0.0
        %6782 = vmatprep.subr.mxu0 0.0
        %6783 = vmatpush1.msra.mxu0 0.0
        %6784 = vmatprep.subr.mxu0 0.0
        %6785 = vmatpush1.msra.mxu0 0.0
        %6786 = vmatprep.subr.mxu0 0.0
        %6787 = vmatpush1.msra.mxu0 0.0
        %6788 = vmatprep.subr.mxu0 %v6760
        %6789 = vmatpush1.msra.mxu0 %v6759
        %6790 = vmatprep.subr.mxu0 %v6758
        %6791 = vmatpush1.msra.mxu0 %v6757
        %6792 = vmatprep.subr.mxu0 %v6756
        %6793 = vmatpush1.msra.mxu0 %v6755
        %6794 = vmatprep.subr.mxu0 %v6754
        %6795 = vmatpush1.msra.mxu0 %v6753
        %6796 = vmatprep.subr.mxu0 0.0
        %6797 = vmatpush2.msra.mxu0 0.0
        %6798 = vmatprep.subr.mxu0 0.0
        %6799 = vmatpush2.msra.mxu0 0.0
        %6800 = vmatprep.subr.mxu0 0.0
        %6801 = vmatpush2.msra.mxu0 0.0
        %6802 = vmatprep.subr.mxu0 0.0
        %6803 = vmatpush2.msra.mxu0 0.0
        %6804 = vmatprep.subr.mxu0 0.0
        %6805 = vmatpush2.msra.mxu0 0.0
        %6806 = vmatprep.subr.mxu0 0.0
        %6807 = vmatpush2.msra.mxu0 0.0
        %6808 = vmatprep.subr.mxu0 0.0
        %6809 = vmatpush2.msra.mxu0 0.0
        %6810 = vmatprep.subr.mxu0 0.0
        %6811 = vmatpush2.msra.mxu0 0.0
        %6812 = vmatprep.subr.mxu0 0.0
        %6813 = vmatpush2.msra.mxu0 0.0
        %6814 = vmatprep.subr.mxu0 0.0
        %6815 = vmatpush2.msra.mxu0 0.0
        %6816 = vmatprep.subr.mxu0 0.0
        %6817 = vmatpush2.msra.mxu0 0.0
        %6818 = vmatprep.subr.mxu0 0.0
        %6819 = vmatpush2.msra.mxu0 0.0
        %6820 = vmatprep.subr.mxu0 0.0
        %6821 = vmatpush2.msra.mxu0 0.0
        %6822 = vmatprep.subr.mxu0 0.0
        %6823 = vmatpush2.msra.mxu0 0.0
        %6824 = vmatprep.subr.mxu0 0.0
        %6825 = vmatpush2.msra.mxu0 0.0
        %6826 = vmatprep.subr.mxu0 0.0
        %6827 = vmatpush2.msra.mxu0 0.0
        %6828 = vmatprep.mubr.f32.mxu0 0.0
        %6829 = vmatmul.mubr.f32.gmra.mxu0 %v6762
        %v6830 = vpop.f32.mrf.mxu0
        %v6831 = vadd.f32 0.0, %v6830
        %v6832 = vpop.f32.mrf.mxu0
        %v6833 = vadd.f32 0.0, %v6832
        %6834 = vdwg.mxu0
        %v6835 = vlaneseq
        %v6836 = vshrl.u32 %v6835, 7
        %v6837 = vsub.s32 0, %v6836
        %v6838 = vrot.slane %v6831, %v6837
        %v6839 = vlaneseq
        %v6840 = vshrl.u32 %v6839, 7
        %v6841 = vsub.s32 0, %v6840
        %v6842 = vrot.slane %v6833, %v6841
        %v6843 = vsub.f32 %v6608, %v6838
        %v6844 = vsub.f32 %v6609, %v6842
        %v6845 = vsub.f32 %v6610, %v6838
        %v6846 = vsub.f32 %v6611, %v6842
        %v6847 = vsub.f32 %v6612, %v6838
        %v6848 = vsub.f32 %v6613, %v6842
        %v6849 = vsub.f32 %v6614, %v6838
        %v6850 = vsub.f32 %v6615, %v6842
        %v6851 = vsub.f32 %v6616, %v6838
        %v6852 = vsub.f32 %v6617, %v6842
        %v6853 = vsub.f32 %v6618, %v6838
        %v6854 = vsub.f32 %v6619, %v6842
        %v6855 = vsub.f32 %v6620, %v6838
        %v6856 = vsub.f32 %v6621, %v6842
        %v6857 = vsub.f32 %v6622, %v6838
        %v6858 = vsub.f32 %v6623, %v6842
        %v6859 = vmul.f32 %v6843, %v6843
        %v6860 = vmul.f32 %v6844, %v6844
        %v6861 = vmul.f32 %v6845, %v6845
        %v6862 = vmul.f32 %v6846, %v6846
        %v6863 = vmul.f32 %v6847, %v6847
        %v6864 = vmul.f32 %v6848, %v6848
        %v6865 = vmul.f32 %v6849, %v6849
        %v6866 = vmul.f32 %v6850, %v6850
        %v6867 = vmul.f32 %v6851, %v6851
        %v6868 = vmul.f32 %v6852, %v6852
        %v6869 = vmul.f32 %v6853, %v6853
        %v6870 = vmul.f32 %v6854, %v6854
        %v6871 = vmul.f32 %v6855, %v6855
        %v6872 = vmul.f32 %v6856, %v6856
        %v6873 = vmul.f32 %v6857, %v6857
        %v6874 = vmul.f32 %v6858, %v6858
        %v6875 = vadd.f32 %v6859, %v6861
        %v6876 = vadd.f32 %v6875, %v6863
        %v6877 = vadd.f32 %v6876, %v6865
        %v6878 = vadd.f32 %v6877, %v6867
        %v6879 = vadd.f32 %v6878, %v6869
        %v6880 = vadd.f32 %v6879, %v6871
        %v6881 = vadd.f32 %v6880, %v6873
        %v6882 = vrot.slane %v6881, 4
        %v6883 = vadd.f32 %v6881, %v6882
        %v6884 = vrot.slane %v6883, 2
        %v6885 = vadd.f32 %v6883, %v6884
        %v6886 = vrot.slane %v6885, 1
        %v6887 = vadd.f32 %v6885, %v6886
        %v6888 = vadd.f32 %v6860, %v6862
        %v6889 = vadd.f32 %v6888, %v6864
        %v6890 = vadd.f32 %v6889, %v6866
        %v6891 = vadd.f32 %v6890, %v6868
        %v6892 = vadd.f32 %v6891, %v6870
        %v6893 = vadd.f32 %v6892, %v6872
        %v6894 = vadd.f32 %v6893, %v6874
        %v6895 = vrot.slane %v6894, 4
        %v6896 = vadd.f32 %v6894, %v6895
        %v6897 = vrot.slane %v6896, 2
        %v6898 = vadd.f32 %v6896, %v6897
        %v6899 = vrot.slane %v6898, 1
        %v6900 = vadd.f32 %v6898, %v6899
        %6901 = vmatprep.subr.mxu0 0.0
        %6902 = vmatpush1.msra.mxu0 %v6665
        %6903 = vmatprep.subr.mxu0 0.0
        %6904 = vmatpush1.msra.mxu0 %v6664
        %6905 = vmatprep.subr.mxu0 0.0
        %6906 = vmatpush1.msra.mxu0 %v6663
        %6907 = vmatprep.subr.mxu0 0.0
        %6908 = vmatpush1.msra.mxu0 %v6662
        %6909 = vmatprep.subr.mxu0 0.0
        %6910 = vmatpush1.msra.mxu0 %v6661
        %6911 = vmatprep.subr.mxu0 0.0
        %6912 = vmatpush1.msra.mxu0 %v6660
        %6913 = vmatprep.subr.mxu0 0.0
        %6914 = vmatpush1.msra.mxu0 %v6659
        %6915 = vmatprep.subr.mxu0 0.0
        %6916 = vmatpush1.msra.mxu0 %v6658
        %6917 = vmatprep.subr.mxu0 0.0
        %6918 = vmatpush1.msra.mxu0 %v6657
        %6919 = vmatprep.subr.mxu0 0.0
        %6920 = vmatpush1.msra.mxu0 %v6656
        %6921 = vmatprep.subr.mxu0 0.0
        %6922 = vmatpush1.msra.mxu0 %v6655
        %6923 = vmatprep.subr.mxu0 0.0
        %6924 = vmatpush1.msra.mxu0 %v6654
        %6925 = vmatprep.subr.mxu0 0.0
        %6926 = vmatpush1.msra.mxu0 %v6653
        %6927 = vmatprep.subr.mxu0 0.0
        %6928 = vmatpush1.msra.mxu0 %v6652
        %6929 = vmatprep.subr.mxu0 0.0
        %6930 = vmatpush1.msra.mxu0 %v6651
        %6931 = vmatprep.subr.mxu0 0.0
        %6932 = vmatpush1.msra.mxu0 %v6650
        %6933 = vmatprep.subr.mxu0 0.0
        %6934 = vmatpush2.msra.mxu0 %v6681
        %6935 = vmatprep.subr.mxu0 0.0
        %6936 = vmatpush2.msra.mxu0 %v6680
        %6937 = vmatprep.subr.mxu0 0.0
        %6938 = vmatpush2.msra.mxu0 %v6679
        %6939 = vmatprep.subr.mxu0 0.0
        %6940 = vmatpush2.msra.mxu0 %v6678
        %6941 = vmatprep.subr.mxu0 0.0
        %6942 = vmatpush2.msra.mxu0 %v6677
        %6943 = vmatprep.subr.mxu0 0.0
        %6944 = vmatpush2.msra.mxu0 %v6676
        %6945 = vmatprep.subr.mxu0 0.0
        %6946 = vmatpush2.msra.mxu0 %v6675
        %6947 = vmatprep.subr.mxu0 0.0
        %6948 = vmatpush2.msra.mxu0 %v6674
        %6949 = vmatprep.subr.mxu0 0.0
        %6950 = vmatpush2.msra.mxu0 %v6673
        %6951 = vmatprep.subr.mxu0 0.0
        %6952 = vmatpush2.msra.mxu0 %v6672
        %6953 = vmatprep.subr.mxu0 0.0
        %6954 = vmatpush2.msra.mxu0 %v6671
        %6955 = vmatprep.subr.mxu0 0.0
        %6956 = vmatpush2.msra.mxu0 %v6670
        %6957 = vmatprep.subr.mxu0 0.0
        %6958 = vmatpush2.msra.mxu0 %v6669
        %6959 = vmatprep.subr.mxu0 0.0
        %6960 = vmatpush2.msra.mxu0 %v6668
        %6961 = vmatprep.subr.mxu0 0.0
        %6962 = vmatpush2.msra.mxu0 %v6667
        %6963 = vmatprep.subr.mxu0 0.0
        %6964 = vmatpush2.msra.mxu0 %v6666
        %6965 = vmatprep.mubr.f32.mxu0 %v6900
        %6966 = vmatmul.mubr.f32.gmra.mxu0 %v6887
        %v6967 = vpop.f32.mrf.mxu0
        %v6968 = vadd.f32 0.0, %v6967
        %v6969 = vpop.f32.mrf.mxu0
        %6970 = vdwg.mxu0
        %v6971 = vmul.f32 %v6968, 0.001953125
        %v6972 = vadd.f32 %v6971, 1e-05
        %v6973 = vrsqrt.pop %v6972
        %v6975 = vsel %vm689, %v6973, 0
        %6977 = vmatprep.subr.mxu0 0.0
        %6978 = vmatpush1.msra.mxu0 0.0
        %6979 = vmatprep.subr.mxu0 0.0
        %6980 = vmatpush1.msra.mxu0 0.0
        %6981 = vmatprep.subr.mxu0 0.0
        %6982 = vmatpush1.msra.mxu0 0.0
        %6983 = vmatprep.subr.mxu0 0.0
        %6984 = vmatpush1.msra.mxu0 0.0
        %6985 = vmatprep.subr.mxu0 0.0
        %6986 = vmatpush1.msra.mxu0 0.0
        %6987 = vmatprep.subr.mxu0 0.0
        %6988 = vmatpush1.msra.mxu0 0.0
        %6989 = vmatprep.subr.mxu0 0.0
        %6990 = vmatpush1.msra.mxu0 0.0
        %6991 = vmatprep.subr.mxu0 0.0
        %6992 = vmatpush1.msra.mxu0 0.0
        %6993 = vmatprep.subr.mxu0 0.0
        %6994 = vmatpush1.msra.mxu0 0.0
        %6995 = vmatprep.subr.mxu0 0.0
        %6996 = vmatpush1.msra.mxu0 0.0
        %6997 = vmatprep.subr.mxu0 0.0
        %6998 = vmatpush1.msra.mxu0 0.0
        %6999 = vmatprep.subr.mxu0 0.0
        %7000 = vmatpush1.msra.mxu0 0.0
        %7001 = vmatprep.subr.mxu0 %v6760
        %7002 = vmatpush1.msra.mxu0 %v6759
        %7003 = vmatprep.subr.mxu0 %v6758
        %7004 = vmatpush1.msra.mxu0 %v6757
        %7005 = vmatprep.subr.mxu0 %v6756
        %7006 = vmatpush1.msra.mxu0 %v6755
        %7007 = vmatprep.subr.mxu0 %v6754
        %7008 = vmatpush1.msra.mxu0 %v6753
        %7009 = vmatprep.subr.mxu0 0.0
        %7010 = vmatpush2.msra.mxu0 0.0
        %7011 = vmatprep.subr.mxu0 0.0
        %7012 = vmatpush2.msra.mxu0 0.0
        %7013 = vmatprep.subr.mxu0 0.0
        %7014 = vmatpush2.msra.mxu0 0.0
        %7015 = vmatprep.subr.mxu0 0.0
        %7016 = vmatpush2.msra.mxu0 0.0
        %7017 = vmatprep.subr.mxu0 0.0
        %7018 = vmatpush2.msra.mxu0 0.0
        %7019 = vmatprep.subr.mxu0 0.0
        %7020 = vmatpush2.msra.mxu0 0.0
        %7021 = vmatprep.subr.mxu0 0.0
        %7022 = vmatpush2.msra.mxu0 0.0
        %7023 = vmatprep.subr.mxu0 0.0
        %7024 = vmatpush2.msra.mxu0 0.0
        %7025 = vmatprep.subr.mxu0 0.0
        %7026 = vmatpush2.msra.mxu0 0.0
        %7027 = vmatprep.subr.mxu0 0.0
        %7028 = vmatpush2.msra.mxu0 0.0
        %7029 = vmatprep.subr.mxu0 0.0
        %7030 = vmatpush2.msra.mxu0 0.0
        %7031 = vmatprep.subr.mxu0 0.0
        %7032 = vmatpush2.msra.mxu0 0.0
        %7033 = vmatprep.subr.mxu0 0.0
        %7034 = vmatpush2.msra.mxu0 0.0
        %7035 = vmatprep.subr.mxu0 0.0
        %7036 = vmatpush2.msra.mxu0 0.0
        %7037 = vmatprep.subr.mxu0 0.0
        %7038 = vmatpush2.msra.mxu0 0.0
        %7039 = vmatprep.subr.mxu0 0.0
        %7040 = vmatpush2.msra.mxu0 0.0
        %7041 = vmatprep.mubr.f32.mxu0 0.0
        %7042 = vmatmul.mubr.f32.gmra.mxu0 %v6975
        %v7043 = vpop.f32.mrf.mxu0
        %v7044 = vadd.f32 0.0, %v7043
        %v7045 = vpop.f32.mrf.mxu0
        %v7046 = vadd.f32 0.0, %v7045
        %7047 = vdwg.mxu0
        %v7048 = vlaneseq
        %v7049 = vshrl.u32 %v7048, 7
        %v7050 = vsub.s32 0, %v7049
        %v7051 = vrot.slane %v7044, %v7050
        %v7052 = vlaneseq
        %v7053 = vshrl.u32 %v7052, 7
        %v7054 = vsub.s32 0, %v7053
        %v7055 = vrot.slane %v7046, %v7054
        %v7056 = vmul.f32 %v6843, %v7051
        %v7057 = vmul.f32 %v6844, %v7055
        %v7058 = vmul.f32 %v6845, %v7051
        %v7059 = vmul.f32 %v6846, %v7055
        %v7060 = vmul.f32 %v6847, %v7051
        %v7061 = vmul.f32 %v6848, %v7055
        %v7062 = vmul.f32 %v6849, %v7051
        %v7063 = vmul.f32 %v6850, %v7055
        %v7064 = vmul.f32 %v6851, %v7051
        %v7065 = vmul.f32 %v6852, %v7055
        %v7066 = vmul.f32 %v6853, %v7051
        %v7067 = vmul.f32 %v6854, %v7055
        %v7068 = vmul.f32 %v6855, %v7051
        %v7069 = vmul.f32 %v6856, %v7055
        %v7070 = vmul.f32 %v6857, %v7051
        %v7071 = vmul.f32 %v6858, %v7055
        %v7072 = vld [vmem:[%s449] sm:$0xf]
        %v7073 = vld [vmem:[%s449 + $0x4] sm:$0xf]
        %v7074 = vld [vmem:[%s449 + $0x8] sm:$0xf]
        %v7075 = vld [vmem:[%s449 + $0xc] sm:$0xf]
        %v7076 = vld [vmem:[%s449 + $0x10] sm:$0xf]
        %v7077 = vld [vmem:[%s449 + $0x14] sm:$0xf]
        %v7078 = vld [vmem:[%s449 + $0x18] sm:$0xf]
        %v7079 = vld [vmem:[%s449 + $0x1c] sm:$0xf]
        %v7080 = vld [vmem:[%s8] sm:$0xff]
        %v7081 = vld [vmem:[%s8 + $0x8] sm:$0xff]
        %v7082 = vld [vmem:[%s8 + $0x10] sm:$0xff]
        %v7083 = vld [vmem:[%s8 + $0x18] sm:$0xff]
        %v7084 = vld [vmem:[%s9] sm:$0x3]
        %v7086 = vlaneseq
        %v7087 = vshrl.u32 %v7086, 7
        %v7088 = vsub.s32 0, %v7087
        %v7089 = vrot.slane %v7084, %v7088
        %v7090 = vlaneseq
        %v7091 = vshrl.u32 %v7090, 7
        %v7092 = vsub.s32 1, %v7091
        %v7093 = vrot.slane %v7084, %v7092
        %v7104 = vunpack.c.l.b16 %v7072
        %v7105 = vunpack.c.l.b16 %v7073
        %v7106 = vunpack.c.l.b16 %v7074
        %v7107 = vunpack.c.l.b16 %v7075
        %v7108 = vunpack.c.l.b16 %v7076
        %v7109 = vunpack.c.l.b16 %v7077
        %v7110 = vunpack.c.l.b16 %v7078
        %v7111 = vunpack.c.l.b16 %v7079
        %v7112 = vpack.c.b16 %v7105, %v7104
        %v7113 = vpack.c.b16 %v7107, %v7106
        %v7114 = vpack.c.b16 %v7109, %v7108
        %v7115 = vpack.c.b16 %v7111, %v7110
        %v7120 = vunpack.c.l.b16 %v7080
        %v7121 = vunpack.c.h.b16 %v7080
        %v7122 = vunpack.c.l.b16 %v7081
        %v7123 = vunpack.c.h.b16 %v7081
        %v7124 = vunpack.c.l.b16 %v7082
        %v7125 = vunpack.c.h.b16 %v7082
        %v7126 = vunpack.c.l.b16 %v7083
        %v7127 = vunpack.c.h.b16 %v7083
        %v7128 = vpack.c.b16 %v7122, %v7120
        %v7129 = vpack.c.b16 %v7123, %v7121
        %v7130 = vpack.c.b16 %v7126, %v7124
        %v7131 = vpack.c.b16 %v7127, %v7125
        %v7137 = vsel %vm689, %v7112, 0
        %v7140 = vsel %vm689, %v7113, 0
        %v7143 = vsel %vm689, %v7114, 0
        %v7146 = vsel %vm689, %v7115, 0
        %7148 = vmatprep.subr.bf16.mxu0 0
        %7149 = vmatpush1.bf16.msra.mxu0 0
        %7150 = vmatprep.subr.bf16.mxu0 0
        %7151 = vmatpush1.bf16.msra.mxu0 0
        %7152 = vmatprep.subr.bf16.mxu0 0
        %7153 = vmatpush1.bf16.msra.mxu0 0
        %7154 = vmatprep.subr.bf16.mxu0 0
        %7155 = vmatpush1.bf16.msra.mxu0 0
        %7156 = vmatprep.subr.bf16.mxu0 0
        %7157 = vmatpush1.bf16.msra.mxu0 0
        %7158 = vmatprep.subr.bf16.mxu0 0
        %7159 = vmatpush1.bf16.msra.mxu0 0
        %7160 = vmatprep.subr.bf16.mxu0 %v7131
        %7161 = vmatpush1.bf16.msra.mxu0 %v7130
        %7162 = vmatprep.subr.bf16.mxu0 %v7129
        %7163 = vmatpush1.bf16.msra.mxu0 %v7128
        %7164 = vmatprep.subr.bf16.mxu0 0
        %7165 = vmatpush2.bf16.msra.mxu0 0
        %7166 = vmatprep.subr.bf16.mxu0 0
        %7167 = vmatpush2.bf16.msra.mxu0 0
        %7168 = vmatprep.subr.bf16.mxu0 0
        %7169 = vmatpush2.bf16.msra.mxu0 0
        %7170 = vmatprep.subr.bf16.mxu0 0
        %7171 = vmatpush2.bf16.msra.mxu0 0
        %7172 = vmatprep.subr.bf16.mxu0 0
        %7173 = vmatpush2.bf16.msra.mxu0 0
        %7174 = vmatprep.subr.bf16.mxu0 0
        %7175 = vmatpush2.bf16.msra.mxu0 0
        %7176 = vmatprep.subr.bf16.mxu0 0
        %7177 = vmatpush2.bf16.msra.mxu0 0
        %7178 = vmatprep.subr.bf16.mxu0 0
        %7179 = vmatpush2.bf16.msra.mxu0 0
        %7180 = vmatprep.mubr.bf16.mxu0 0
        %7181 = vmatmul.mubr.bf16.gmra.mxu0 %v7137
        %v7182 = vpop.f32.mrf.mxu0
        %v7183 = vadd.f32 %v7089, %v7182
        %v7184 = vpop.f32.mrf.mxu0
        %v7185 = vadd.f32 %v7093, %v7184
        %v7186 = vpop.f32.mrf.mxu0
        %v7187 = vadd.f32 %v7089, %v7186
        %v7188 = vpop.f32.mrf.mxu0
        %v7189 = vadd.f32 %v7093, %v7188
        %7190 = vmatprep.mubr.bf16.mxu0 0
        %7191 = vmatmul.mubr.bf16.gmra.mxu0 %v7140
        %v7192 = vpop.f32.mrf.mxu0
        %v7193 = vadd.f32 %v7089, %v7192
        %v7194 = vpop.f32.mrf.mxu0
        %v7195 = vadd.f32 %v7093, %v7194
        %v7196 = vpop.f32.mrf.mxu0
        %v7197 = vadd.f32 %v7089, %v7196
        %v7198 = vpop.f32.mrf.mxu0
        %v7199 = vadd.f32 %v7093, %v7198
        %7200 = vmatprep.mubr.bf16.mxu0 0
        %7201 = vmatmul.mubr.bf16.gmra.mxu0 %v7143
        %v7202 = vpop.f32.mrf.mxu0
        %v7203 = vadd.f32 %v7089, %v7202
        %v7204 = vpop.f32.mrf.mxu0
        %v7205 = vadd.f32 %v7093, %v7204
        %v7206 = vpop.f32.mrf.mxu0
        %v7207 = vadd.f32 %v7089, %v7206
        %v7208 = vpop.f32.mrf.mxu0
        %v7209 = vadd.f32 %v7093, %v7208
        %7210 = vmatprep.mubr.bf16.mxu0 0
        %7211 = vmatmul.mubr.bf16.gmra.mxu0 %v7146
        %v7212 = vpop.f32.mrf.mxu0
        %v7213 = vadd.f32 %v7089, %v7212
        %v7214 = vpop.f32.mrf.mxu0
        %v7215 = vadd.f32 %v7093, %v7214
        %v7216 = vpop.f32.mrf.mxu0
        %v7217 = vadd.f32 %v7089, %v7216
        %v7218 = vpop.f32.mrf.mxu0
        %v7219 = vadd.f32 %v7093, %v7218
        %7220 = vdwg.mxu0
        %v7221 = vadd.f32 %v7056, %v7183
        %v7222 = vadd.f32 %v7057, %v7185
        %v7223 = vadd.f32 %v7058, %v7187
        %v7224 = vadd.f32 %v7059, %v7189
        %v7225 = vadd.f32 %v7060, %v7193
        %v7226 = vadd.f32 %v7061, %v7195
        %v7227 = vadd.f32 %v7062, %v7197
        %v7228 = vadd.f32 %v7063, %v7199
        %v7229 = vadd.f32 %v7064, %v7203
        %v7230 = vadd.f32 %v7065, %v7205
        %v7231 = vadd.f32 %v7066, %v7207
        %v7232 = vadd.f32 %v7067, %v7209
        %v7233 = vadd.f32 %v7068, %v7213
        %v7234 = vadd.f32 %v7069, %v7215
        %v7235 = vadd.f32 %v7070, %v7217
        %v7236 = vadd.f32 %v7071, %v7219
        %vm7237 = vcmp.gt.f32.partialorder %v7221, 0.0
        %vm7238 = vcmp.gt.f32.partialorder %v7222, 0.0
        %vm7239 = vcmp.gt.f32.partialorder %v7223, 0.0
        %vm7240 = vcmp.gt.f32.partialorder %v7224, 0.0
        %vm7241 = vcmp.gt.f32.partialorder %v7225, 0.0
        %vm7242 = vcmp.gt.f32.partialorder %v7226, 0.0
        %vm7243 = vcmp.gt.f32.partialorder %v7227, 0.0
        %vm7244 = vcmp.gt.f32.partialorder %v7228, 0.0
        %vm7245 = vcmp.gt.f32.partialorder %v7229, 0.0
        %vm7246 = vcmp.gt.f32.partialorder %v7230, 0.0
        %vm7247 = vcmp.gt.f32.partialorder %v7231, 0.0
        %vm7248 = vcmp.gt.f32.partialorder %v7232, 0.0
        %vm7249 = vcmp.gt.f32.partialorder %v7233, 0.0
        %vm7250 = vcmp.gt.f32.partialorder %v7234, 0.0
        %vm7251 = vcmp.gt.f32.partialorder %v7235, 0.0
        %vm7252 = vcmp.gt.f32.partialorder %v7236, 0.0
        %v7253 = vstv %s457
        %v7254 = vmul.f32 %v7253, %v7221
        %v7255 = vmul.f32 %v7253, %v7222
        %v7256 = vmul.f32 %v7253, %v7223
        %v7257 = vmul.f32 %v7253, %v7224
        %v7258 = vmul.f32 %v7253, %v7225
        %v7259 = vmul.f32 %v7253, %v7226
        %v7260 = vmul.f32 %v7253, %v7227
        %v7261 = vmul.f32 %v7253, %v7228
        %v7262 = vmul.f32 %v7253, %v7229
        %v7263 = vmul.f32 %v7253, %v7230
        %v7264 = vmul.f32 %v7253, %v7231
        %v7265 = vmul.f32 %v7253, %v7232
        %v7266 = vmul.f32 %v7253, %v7233
        %v7267 = vmul.f32 %v7253, %v7234
        %v7268 = vmul.f32 %v7253, %v7235
        %v7269 = vmul.f32 %v7253, %v7236
        %v7270 = vsel %vm7237, %v7221, %v7254
        %v7271 = vsel %vm7238, %v7222, %v7255
        %v7272 = vsel %vm7239, %v7223, %v7256
        %v7273 = vsel %vm7240, %v7224, %v7257
        %v7274 = vsel %vm7241, %v7225, %v7258
        %v7275 = vsel %vm7242, %v7226, %v7259
        %v7276 = vsel %vm7243, %v7227, %v7260
        %v7277 = vsel %vm7244, %v7228, %v7261
        %v7278 = vsel %vm7245, %v7229, %v7262
        %v7279 = vsel %vm7246, %v7230, %v7263
        %v7280 = vsel %vm7247, %v7231, %v7264
        %v7281 = vsel %vm7248, %v7232, %v7265
        %v7282 = vsel %vm7249, %v7233, %v7266
        %v7283 = vsel %vm7250, %v7234, %v7267
        %v7284 = vsel %vm7251, %v7235, %v7268
        %v7285 = vsel %vm7252, %v7236, %v7269
        %v7286 = vpack.c.bf16 %v7272, %v7270
        %v7287 = vpack.c.bf16 %v7273, %v7271
        %v7288 = vpack.c.bf16 %v7276, %v7274
        %v7289 = vpack.c.bf16 %v7277, %v7275
        %v7290 = vpack.c.bf16 %v7280, %v7278
        %v7291 = vpack.c.bf16 %v7281, %v7279
        %v7292 = vpack.c.bf16 %v7284, %v7282
        %v7293 = vpack.c.bf16 %v7285, %v7283
        %v7294 = vld [vmem:[%s12] sm:$0x1]
        %v7296 = vlaneseq
        %v7297 = vshrl.u32 %v7296, 7
        %v7298 = vsub.s32 0, %v7297
        %v7299 = vrot.slane %v7294, %v7298
        %v7301 = vadd.f32 %v7299, 0.0
        %v7302 = vld [vmem:[%s10] sm:$0xf]
        %v7303 = vld [vmem:[%s10 + $0x4] sm:$0xf]
        %v7306 = vunpack.c.l.b16 %v7302
        %v7307 = vunpack.c.l.b16 %v7303
        %v7308 = vpack.c.b16 %v7307, %v7306
        %vm7309 = vcmask 523264
        %v7311 = vsel %vm7309, %v7308, 0
        %7313 = vmatprep.subr.bf16.mxu0 0
        %7314 = vmatpush1.bf16.msra.mxu0 0
        %7315 = vmatprep.subr.bf16.mxu0 0
        %7316 = vmatpush1.bf16.msra.mxu0 0
        %7317 = vmatprep.subr.bf16.mxu0 0
        %7318 = vmatpush1.bf16.msra.mxu0 0
        %7319 = vmatprep.subr.bf16.mxu0 0
        %7320 = vmatpush1.bf16.msra.mxu0 0
        %7321 = vmatprep.subr.bf16.mxu0 %v7293
        %7322 = vmatpush1.bf16.msra.mxu0 %v7292
        %7323 = vmatprep.subr.bf16.mxu0 %v7291
        %7324 = vmatpush1.bf16.msra.mxu0 %v7290
        %7325 = vmatprep.subr.bf16.mxu0 %v7289
        %7326 = vmatpush1.bf16.msra.mxu0 %v7288
        %7327 = vmatprep.subr.bf16.mxu0 %v7287
        %7328 = vmatpush1.bf16.msra.mxu0 %v7286
        %7329 = vmatprep.subr.bf16.mxu0 0
        %7330 = vmatpush2.bf16.msra.mxu0 0
        %7331 = vmatprep.subr.bf16.mxu0 0
        %7332 = vmatpush2.bf16.msra.mxu0 0
        %7333 = vmatprep.subr.bf16.mxu0 0
        %7334 = vmatpush2.bf16.msra.mxu0 0
        %7335 = vmatprep.subr.bf16.mxu0 0
        %7336 = vmatpush2.bf16.msra.mxu0 0
        %7337 = vmatprep.subr.bf16.mxu0 0
        %7338 = vmatpush2.bf16.msra.mxu0 0
        %7339 = vmatprep.subr.bf16.mxu0 0
        %7340 = vmatpush2.bf16.msra.mxu0 0
        %7341 = vmatprep.subr.bf16.mxu0 0
        %7342 = vmatpush2.bf16.msra.mxu0 0
        %7343 = vmatprep.subr.bf16.mxu0 0
        %7344 = vmatpush2.bf16.msra.mxu0 0
        %7345 = vmatprep.mubr.bf16.mxu0 0
        %7346 = vmatmul.mubr.bf16.gmra.mxu0 %v7311
        %v7347 = vpop.f32.mrf.mxu0
        %v7348 = vadd.f32 0.0, %v7347
        %v7349 = vpop.f32.mrf.mxu0
        %v7350 = vadd.f32 0.0, %v7349
        %v7351 = vpop.f32.mrf.mxu0
        %v7352 = vadd.f32 0.0, %v7351
        %v7353 = vpop.f32.mrf.mxu0
        %v7354 = vadd.f32 0.0, %v7353
        %7355 = vdwg.mxu0
        %v7356 = vpack.c.bf16 %v7352, %v7348
        %v7357 = vpack.c.bf16 %v7354, %v7350
        %v7358 = vld [vmem:[%s11] sm:$0xf]
        %v7359 = vld [vmem:[%s11 + $0x4] sm:$0xf]
        %v7360 = vld [vmem:[%s11 + $0x8] sm:$0xf]
        %v7361 = vld [vmem:[%s11 + $0xc] sm:$0xf]
        %v7362 = vld [vmem:[%s11 + $0x10] sm:$0xf]
        %v7363 = vld [vmem:[%s11 + $0x14] sm:$0xf]
        %v7364 = vld [vmem:[%s11 + $0x18] sm:$0xf]
        %v7365 = vld [vmem:[%s11 + $0x1c] sm:$0xf]
        %v7366 = vld [vmem:[%s11 + $0x20] sm:$0xf]
        %v7367 = vld [vmem:[%s11 + $0x24] sm:$0xf]
        %v7368 = vld [vmem:[%s11 + $0x28] sm:$0xf]
        %v7369 = vld [vmem:[%s11 + $0x2c] sm:$0xf]
        %v7370 = vld [vmem:[%s11 + $0x30] sm:$0xf]
        %v7371 = vld [vmem:[%s11 + $0x34] sm:$0xf]
        %v7372 = vld [vmem:[%s11 + $0x38] sm:$0xf]
        %v7373 = vld [vmem:[%s11 + $0x3c] sm:$0xf]
        %v7374 = vld [vmem:[%s11 + $0x40] sm:$0xf]
        %v7375 = vld [vmem:[%s11 + $0x44] sm:$0xf]
        %v7376 = vld [vmem:[%s11 + $0x48] sm:$0xf]
        %v7377 = vld [vmem:[%s11 + $0x4c] sm:$0xf]
        %v7378 = vld [vmem:[%s11 + $0x50] sm:$0xf]
        %v7379 = vld [vmem:[%s11 + $0x54] sm:$0xf]
        %v7380 = vld [vmem:[%s11 + $0x58] sm:$0xf]
        %v7381 = vld [vmem:[%s11 + $0x5c] sm:$0xf]
        %v7382 = vld [vmem:[%s11 + $0x60] sm:$0xf]
        %v7383 = vld [vmem:[%s11 + $0x64] sm:$0xf]
        %v7384 = vld [vmem:[%s11 + $0x68] sm:$0xf]
        %v7385 = vld [vmem:[%s11 + $0x6c] sm:$0xf]
        %v7386 = vld [vmem:[%s11 + $0x70] sm:$0xf]
        %v7387 = vld [vmem:[%s11 + $0x74] sm:$0xf]
        %v7388 = vld [vmem:[%s11 + $0x78] sm:$0xf]
        %v7389 = vld [vmem:[%s11 + $0x7c] sm:$0xf]
        %v7422 = vunpack.c.l.b16 %v7358
        %v7423 = vunpack.c.l.b16 %v7359
        %v7424 = vunpack.c.l.b16 %v7360
        %v7425 = vunpack.c.l.b16 %v7361
        %v7426 = vunpack.c.l.b16 %v7362
        %v7427 = vunpack.c.l.b16 %v7363
        %v7428 = vunpack.c.l.b16 %v7364
        %v7429 = vunpack.c.l.b16 %v7365
        %v7430 = vunpack.c.l.b16 %v7366
        %v7431 = vunpack.c.l.b16 %v7367
        %v7432 = vunpack.c.l.b16 %v7368
        %v7433 = vunpack.c.l.b16 %v7369
        %v7434 = vunpack.c.l.b16 %v7370
        %v7435 = vunpack.c.l.b16 %v7371
        %v7436 = vunpack.c.l.b16 %v7372
        %v7437 = vunpack.c.l.b16 %v7373
        %v7438 = vunpack.c.l.b16 %v7374
        %v7439 = vunpack.c.l.b16 %v7375
        %v7440 = vunpack.c.l.b16 %v7376
        %v7441 = vunpack.c.l.b16 %v7377
        %v7442 = vunpack.c.l.b16 %v7378
        %v7443 = vunpack.c.l.b16 %v7379
        %v7444 = vunpack.c.l.b16 %v7380
        %v7445 = vunpack.c.l.b16 %v7381
        %v7446 = vunpack.c.l.b16 %v7382
        %v7447 = vunpack.c.l.b16 %v7383
        %v7448 = vunpack.c.l.b16 %v7384
        %v7449 = vunpack.c.l.b16 %v7385
        %v7450 = vunpack.c.l.b16 %v7386
        %v7451 = vunpack.c.l.b16 %v7387
        %v7452 = vunpack.c.l.b16 %v7388
        %v7453 = vunpack.c.l.b16 %v7389
        %v7454 = vpack.c.b16 %v7423, %v7422
        %v7455 = vpack.c.b16 %v7425, %v7424
        %v7456 = vpack.c.b16 %v7427, %v7426
        %v7457 = vpack.c.b16 %v7429, %v7428
        %v7458 = vpack.c.b16 %v7431, %v7430
        %v7459 = vpack.c.b16 %v7433, %v7432
        %v7460 = vpack.c.b16 %v7435, %v7434
        %v7461 = vpack.c.b16 %v7437, %v7436
        %v7462 = vpack.c.b16 %v7439, %v7438
        %v7463 = vpack.c.b16 %v7441, %v7440
        %v7464 = vpack.c.b16 %v7443, %v7442
        %v7465 = vpack.c.b16 %v7445, %v7444
        %v7466 = vpack.c.b16 %v7447, %v7446
        %v7467 = vpack.c.b16 %v7449, %v7448
        %v7468 = vpack.c.b16 %v7451, %v7450
        %v7469 = vpack.c.b16 %v7453, %v7452
        %7486 = vmatprep.subr.bf16.mxu0 0
        %7487 = vmatpush1.bf16.msra.mxu0 %v7461
        %7488 = vmatprep.subr.bf16.mxu0 0
        %7489 = vmatpush1.bf16.msra.mxu0 %v7460
        %7490 = vmatprep.subr.bf16.mxu0 0
        %7491 = vmatpush1.bf16.msra.mxu0 %v7459
        %7492 = vmatprep.subr.bf16.mxu0 0
        %7493 = vmatpush1.bf16.msra.mxu0 %v7458
        %7494 = vmatprep.subr.bf16.mxu0 0
        %7495 = vmatpush1.bf16.msra.mxu0 %v7457
        %7496 = vmatprep.subr.bf16.mxu0 0
        %7497 = vmatpush1.bf16.msra.mxu0 %v7456
        %7498 = vmatprep.subr.bf16.mxu0 0
        %7499 = vmatpush1.bf16.msra.mxu0 %v7455
        %7500 = vmatprep.subr.bf16.mxu0 0
        %7501 = vmatpush1.bf16.msra.mxu0 %v7454
        %7502 = vmatprep.subr.bf16.mxu0 0
        %7503 = vmatpush2.bf16.msra.mxu0 %v7469
        %7504 = vmatprep.subr.bf16.mxu0 0
        %7505 = vmatpush2.bf16.msra.mxu0 %v7468
        %7506 = vmatprep.subr.bf16.mxu0 0
        %7507 = vmatpush2.bf16.msra.mxu0 %v7467
        %7508 = vmatprep.subr.bf16.mxu0 0
        %7509 = vmatpush2.bf16.msra.mxu0 %v7466
        %7510 = vmatprep.subr.bf16.mxu0 0
        %7511 = vmatpush2.bf16.msra.mxu0 %v7465
        %7512 = vmatprep.subr.bf16.mxu0 0
        %7513 = vmatpush2.bf16.msra.mxu0 %v7464
        %7514 = vmatprep.subr.bf16.mxu0 0
        %7515 = vmatpush2.bf16.msra.mxu0 %v7463
        %7516 = vmatprep.subr.bf16.mxu0 0
        %7517 = vmatpush2.bf16.msra.mxu0 %v7462
        %7518 = vmatprep.mubr.bf16.mxu0 %v7357
        %7519 = vmatmul.mubr.bf16.gmra.mxu0 %v7356
        %v7520 = vpop.f32.mrf.mxu0
        %v7521 = vadd.f32 0.0, %v7520
        %v7522 = vpop.f32.mrf.mxu0
        %v7523 = vpop.f32.mrf.mxu0
        %v7524 = vadd.f32 0.0, %v7523
        %v7525 = vpop.f32.mrf.mxu0
        %7526 = vdwg.mxu0
        %v7527 = vadd.f32 %v7301, %v7521
        %v7528 = vadd.f32 %v7301, %v7524
        %s7529 = scalar_lea.vmem %s10, 8
        %v7530 = vld [vmem:[%s7529] sm:$0xf]
        %v7531 = vld [vmem:[%s7529 + $0x4] sm:$0xf]
        %v7534 = vunpack.c.l.b16 %v7530
        %v7535 = vunpack.c.l.b16 %v7531
        %v7536 = vpack.c.b16 %v7535, %v7534
        %v7538 = vsel %vm7309, %v7536, 0
        %7540 = vmatprep.subr.bf16.mxu0 0
        %7541 = vmatpush1.bf16.msra.mxu0 0
        %7542 = vmatprep.subr.bf16.mxu0 0
        %7543 = vmatpush1.bf16.msra.mxu0 0
        %7544 = vmatprep.subr.bf16.mxu0 0
        %7545 = vmatpush1.bf16.msra.mxu0 0
        %7546 = vmatprep.subr.bf16.mxu0 0
        %7547 = vmatpush1.bf16.msra.mxu0 0
        %7548 = vmatprep.subr.bf16.mxu0 %v7293
        %7549 = vmatpush1.bf16.msra.mxu0 %v7292
        %7550 = vmatprep.subr.bf16.mxu0 %v7291
        %7551 = vmatpush1.bf16.msra.mxu0 %v7290
        %7552 = vmatprep.subr.bf16.mxu0 %v7289
        %7553 = vmatpush1.bf16.msra.mxu0 %v7288
        %7554 = vmatprep.subr.bf16.mxu0 %v7287
        %7555 = vmatpush1.bf16.msra.mxu0 %v7286
        %7556 = vmatprep.subr.bf16.mxu0 0
        %7557 = vmatpush2.bf16.msra.mxu0 0
        %7558 = vmatprep.subr.bf16.mxu0 0
        %7559 = vmatpush2.bf16.msra.mxu0 0
        %7560 = vmatprep.subr.bf16.mxu0 0
        %7561 = vmatpush2.bf16.msra.mxu0 0
        %7562 = vmatprep.subr.bf16.mxu0 0
        %7563 = vmatpush2.bf16.msra.mxu0 0
        %7564 = vmatprep.subr.bf16.mxu0 0
        %7565 = vmatpush2.bf16.msra.mxu0 0
        %7566 = vmatprep.subr.bf16.mxu0 0
        %7567 = vmatpush2.bf16.msra.mxu0 0
        %7568 = vmatprep.subr.bf16.mxu0 0
        %7569 = vmatpush2.bf16.msra.mxu0 0
        %7570 = vmatprep.subr.bf16.mxu0 0
        %7571 = vmatpush2.bf16.msra.mxu0 0
        %7572 = vmatprep.mubr.bf16.mxu0 0
        %7573 = vmatmul.mubr.bf16.gmra.mxu0 %v7538
        %v7574 = vpop.f32.mrf.mxu0
        %v7575 = vadd.f32 0.0, %v7574
        %v7576 = vpop.f32.mrf.mxu0
        %v7577 = vadd.f32 0.0, %v7576
        %v7578 = vpop.f32.mrf.mxu0
        %v7579 = vadd.f32 0.0, %v7578
        %v7580 = vpop.f32.mrf.mxu0
        %v7581 = vadd.f32 0.0, %v7580
        %7582 = vdwg.mxu0
        %v7583 = vpack.c.bf16 %v7579, %v7575
        %v7584 = vpack.c.bf16 %v7581, %v7577
        %s7585 = scalar_lea.vmem %s11, 128
        %v7586 = vld [vmem:[%s7585] sm:$0xf]
        %v7587 = vld [vmem:[%s7585 + $0x4] sm:$0xf]
        %v7588 = vld [vmem:[%s7585 + $0x8] sm:$0xf]
        %v7589 = vld [vmem:[%s7585 + $0xc] sm:$0xf]
        %v7590 = vld [vmem:[%s7585 + $0x10] sm:$0xf]
        %v7591 = vld [vmem:[%s7585 + $0x14] sm:$0xf]
        %v7592 = vld [vmem:[%s7585 + $0x18] sm:$0xf]
        %v7593 = vld [vmem:[%s7585 + $0x1c] sm:$0xf]
        %v7594 = vld [vmem:[%s7585 + $0x20] sm:$0xf]
        %v7595 = vld [vmem:[%s7585 + $0x24] sm:$0xf]
        %v7596 = vld [vmem:[%s7585 + $0x28] sm:$0xf]
        %v7597 = vld [vmem:[%s7585 + $0x2c] sm:$0xf]
        %v7598 = vld [vmem:[%s7585 + $0x30] sm:$0xf]
        %v7599 = vld [vmem:[%s7585 + $0x34] sm:$0xf]
        %v7600 = vld [vmem:[%s7585 + $0x38] sm:$0xf]
        %v7601 = vld [vmem:[%s7585 + $0x3c] sm:$0xf]
        %v7602 = vld [vmem:[%s7585 + $0x40] sm:$0xf]
        %v7603 = vld [vmem:[%s7585 + $0x44] sm:$0xf]
        %v7604 = vld [vmem:[%s7585 + $0x48] sm:$0xf]
        %v7605 = vld [vmem:[%s7585 + $0x4c] sm:$0xf]
        %v7606 = vld [vmem:[%s7585 + $0x50] sm:$0xf]
        %v7607 = vld [vmem:[%s7585 + $0x54] sm:$0xf]
        %v7608 = vld [vmem:[%s7585 + $0x58] sm:$0xf]
        %v7609 = vld [vmem:[%s7585 + $0x5c] sm:$0xf]
        %v7610 = vld [vmem:[%s7585 + $0x60] sm:$0xf]
        %v7611 = vld [vmem:[%s7585 + $0x64] sm:$0xf]
        %v7612 = vld [vmem:[%s7585 + $0x68] sm:$0xf]
        %v7613 = vld [vmem:[%s7585 + $0x6c] sm:$0xf]
        %v7614 = vld [vmem:[%s7585 + $0x70] sm:$0xf]
        %v7615 = vld [vmem:[%s7585 + $0x74] sm:$0xf]
        %v7616 = vld [vmem:[%s7585 + $0x78] sm:$0xf]
        %v7617 = vld [vmem:[%s7585 + $0x7c] sm:$0xf]
        %v7650 = vunpack.c.l.b16 %v7586
        %v7651 = vunpack.c.l.b16 %v7587
        %v7652 = vunpack.c.l.b16 %v7588
        %v7653 = vunpack.c.l.b16 %v7589
        %v7654 = vunpack.c.l.b16 %v7590
        %v7655 = vunpack.c.l.b16 %v7591
        %v7656 = vunpack.c.l.b16 %v7592
        %v7657 = vunpack.c.l.b16 %v7593
        %v7658 = vunpack.c.l.b16 %v7594
        %v7659 = vunpack.c.l.b16 %v7595
        %v7660 = vunpack.c.l.b16 %v7596
        %v7661 = vunpack.c.l.b16 %v7597
        %v7662 = vunpack.c.l.b16 %v7598
        %v7663 = vunpack.c.l.b16 %v7599
        %v7664 = vunpack.c.l.b16 %v7600
        %v7665 = vunpack.c.l.b16 %v7601
        %v7666 = vunpack.c.l.b16 %v7602
        %v7667 = vunpack.c.l.b16 %v7603
        %v7668 = vunpack.c.l.b16 %v7604
        %v7669 = vunpack.c.l.b16 %v7605
        %v7670 = vunpack.c.l.b16 %v7606
        %v7671 = vunpack.c.l.b16 %v7607
        %v7672 = vunpack.c.l.b16 %v7608
        %v7673 = vunpack.c.l.b16 %v7609
        %v7674 = vunpack.c.l.b16 %v7610
        %v7675 = vunpack.c.l.b16 %v7611
        %v7676 = vunpack.c.l.b16 %v7612
        %v7677 = vunpack.c.l.b16 %v7613
        %v7678 = vunpack.c.l.b16 %v7614
        %v7679 = vunpack.c.l.b16 %v7615
        %v7680 = vunpack.c.l.b16 %v7616
        %v7681 = vunpack.c.l.b16 %v7617
        %v7682 = vpack.c.b16 %v7651, %v7650
        %v7683 = vpack.c.b16 %v7653, %v7652
        %v7684 = vpack.c.b16 %v7655, %v7654
        %v7685 = vpack.c.b16 %v7657, %v7656
        %v7686 = vpack.c.b16 %v7659, %v7658
        %v7687 = vpack.c.b16 %v7661, %v7660
        %v7688 = vpack.c.b16 %v7663, %v7662
        %v7689 = vpack.c.b16 %v7665, %v7664
        %v7690 = vpack.c.b16 %v7667, %v7666
        %v7691 = vpack.c.b16 %v7669, %v7668
        %v7692 = vpack.c.b16 %v7671, %v7670
        %v7693 = vpack.c.b16 %v7673, %v7672
        %v7694 = vpack.c.b16 %v7675, %v7674
        %v7695 = vpack.c.b16 %v7677, %v7676
        %v7696 = vpack.c.b16 %v7679, %v7678
        %v7697 = vpack.c.b16 %v7681, %v7680
        %7714 = vmatprep.subr.bf16.mxu0 0
        %7715 = vmatpush1.bf16.msra.mxu0 %v7689
        %7716 = vmatprep.subr.bf16.mxu0 0
        %7717 = vmatpush1.bf16.msra.mxu0 %v7688
        %7718 = vmatprep.subr.bf16.mxu0 0
        %7719 = vmatpush1.bf16.msra.mxu0 %v7687
        %7720 = vmatprep.subr.bf16.mxu0 0
        %7721 = vmatpush1.bf16.msra.mxu0 %v7686
        %7722 = vmatprep.subr.bf16.mxu0 0
        %7723 = vmatpush1.bf16.msra.mxu0 %v7685
        %7724 = vmatprep.subr.bf16.mxu0 0
        %7725 = vmatpush1.bf16.msra.mxu0 %v7684
        %7726 = vmatprep.subr.bf16.mxu0 0
        %7727 = vmatpush1.bf16.msra.mxu0 %v7683
        %7728 = vmatprep.subr.bf16.mxu0 0
        %7729 = vmatpush1.bf16.msra.mxu0 %v7682
        %7730 = vmatprep.subr.bf16.mxu0 0
        %7731 = vmatpush2.bf16.msra.mxu0 %v7697
        %7732 = vmatprep.subr.bf16.mxu0 0
        %7733 = vmatpush2.bf16.msra.mxu0 %v7696
        %7734 = vmatprep.subr.bf16.mxu0 0
        %7735 = vmatpush2.bf16.msra.mxu0 %v7695
        %7736 = vmatprep.subr.bf16.mxu0 0
        %7737 = vmatpush2.bf16.msra.mxu0 %v7694
        %7738 = vmatprep.subr.bf16.mxu0 0
        %7739 = vmatpush2.bf16.msra.mxu0 %v7693
        %7740 = vmatprep.subr.bf16.mxu0 0
        %7741 = vmatpush2.bf16.msra.mxu0 %v7692
        %7742 = vmatprep.subr.bf16.mxu0 0
        %7743 = vmatpush2.bf16.msra.mxu0 %v7691
        %7744 = vmatprep.subr.bf16.mxu0 0
        %7745 = vmatpush2.bf16.msra.mxu0 %v7690
        %7746 = vmatprep.mubr.bf16.mxu0 %v7584
        %7747 = vmatmul.mubr.bf16.gmra.mxu0 %v7583
        %v7748 = vpop.f32.mrf.mxu0
        %v7749 = vadd.f32 0.0, %v7748
        %v7750 = vpop.f32.mrf.mxu0
        %v7751 = vpop.f32.mrf.mxu0
        %v7752 = vadd.f32 0.0, %v7751
        %v7753 = vpop.f32.mrf.mxu0
        %7754 = vdwg.mxu0
        %v7755 = vadd.f32 %v7527, %v7749
        %v7756 = vadd.f32 %v7528, %v7752
        %s7757 = scalar_lea.vmem %s10, 16
        %v7758 = vld [vmem:[%s7757] sm:$0xf]
        %v7759 = vld [vmem:[%s7757 + $0x4] sm:$0xf]
        %v7762 = vunpack.c.l.b16 %v7758
        %v7763 = vunpack.c.l.b16 %v7759
        %v7764 = vpack.c.b16 %v7763, %v7762
        %v7766 = vsel %vm7309, %v7764, 0
        %7768 = vmatprep.subr.bf16.mxu0 0
        %7769 = vmatpush1.bf16.msra.mxu0 0
        %7770 = vmatprep.subr.bf16.mxu0 0
        %7771 = vmatpush1.bf16.msra.mxu0 0
        %7772 = vmatprep.subr.bf16.mxu0 0
        %7773 = vmatpush1.bf16.msra.mxu0 0
        %7774 = vmatprep.subr.bf16.mxu0 0
        %7775 = vmatpush1.bf16.msra.mxu0 0
        %7776 = vmatprep.subr.bf16.mxu0 %v7293
        %7777 = vmatpush1.bf16.msra.mxu0 %v7292
        %7778 = vmatprep.subr.bf16.mxu0 %v7291
        %7779 = vmatpush1.bf16.msra.mxu0 %v7290
        %7780 = vmatprep.subr.bf16.mxu0 %v7289
        %7781 = vmatpush1.bf16.msra.mxu0 %v7288
        %7782 = vmatprep.subr.bf16.mxu0 %v7287
        %7783 = vmatpush1.bf16.msra.mxu0 %v7286
        %7784 = vmatprep.subr.bf16.mxu0 0
        %7785 = vmatpush2.bf16.msra.mxu0 0
        %7786 = vmatprep.subr.bf16.mxu0 0
        %7787 = vmatpush2.bf16.msra.mxu0 0
        %7788 = vmatprep.subr.bf16.mxu0 0
        %7789 = vmatpush2.bf16.msra.mxu0 0
        %7790 = vmatprep.subr.bf16.mxu0 0
        %7791 = vmatpush2.bf16.msra.mxu0 0
        %7792 = vmatprep.subr.bf16.mxu0 0
        %7793 = vmatpush2.bf16.msra.mxu0 0
        %7794 = vmatprep.subr.bf16.mxu0 0
        %7795 = vmatpush2.bf16.msra.mxu0 0
        %7796 = vmatprep.subr.bf16.mxu0 0
        %7797 = vmatpush2.bf16.msra.mxu0 0
        %7798 = vmatprep.subr.bf16.mxu0 0
        %7799 = vmatpush2.bf16.msra.mxu0 0
        %7800 = vmatprep.mubr.bf16.mxu0 0
        %7801 = vmatmul.mubr.bf16.gmra.mxu0 %v7766
        %v7802 = vpop.f32.mrf.mxu0
        %v7803 = vadd.f32 0.0, %v7802
        %v7804 = vpop.f32.mrf.mxu0
        %v7805 = vadd.f32 0.0, %v7804
        %v7806 = vpop.f32.mrf.mxu0
        %v7807 = vadd.f32 0.0, %v7806
        %v7808 = vpop.f32.mrf.mxu0
        %v7809 = vadd.f32 0.0, %v7808
        %7810 = vdwg.mxu0
        %v7811 = vpack.c.bf16 %v7807, %v7803
        %v7812 = vpack.c.bf16 %v7809, %v7805
        %s7813 = scalar_lea.vmem %s11, 256
        %v7814 = vld [vmem:[%s7813] sm:$0xf]
        %v7815 = vld [vmem:[%s7813 + $0x4] sm:$0xf]
        %v7816 = vld [vmem:[%s7813 + $0x8] sm:$0xf]
        %v7817 = vld [vmem:[%s7813 + $0xc] sm:$0xf]
        %v7818 = vld [vmem:[%s7813 + $0x10] sm:$0xf]
        %v7819 = vld [vmem:[%s7813 + $0x14] sm:$0xf]
        %v7820 = vld [vmem:[%s7813 + $0x18] sm:$0xf]
        %v7821 = vld [vmem:[%s7813 + $0x1c] sm:$0xf]
        %v7822 = vld [vmem:[%s7813 + $0x20] sm:$0xf]
        %v7823 = vld [vmem:[%s7813 + $0x24] sm:$0xf]
        %v7824 = vld [vmem:[%s7813 + $0x28] sm:$0xf]
        %v7825 = vld [vmem:[%s7813 + $0x2c] sm:$0xf]
        %v7826 = vld [vmem:[%s7813 + $0x30] sm:$0xf]
        %v7827 = vld [vmem:[%s7813 + $0x34] sm:$0xf]
        %v7828 = vld [vmem:[%s7813 + $0x38] sm:$0xf]
        %v7829 = vld [vmem:[%s7813 + $0x3c] sm:$0xf]
        %v7830 = vld [vmem:[%s7813 + $0x40] sm:$0xf]
        %v7831 = vld [vmem:[%s7813 + $0x44] sm:$0xf]
        %v7832 = vld [vmem:[%s7813 + $0x48] sm:$0xf]
        %v7833 = vld [vmem:[%s7813 + $0x4c] sm:$0xf]
        %v7834 = vld [vmem:[%s7813 + $0x50] sm:$0xf]
        %v7835 = vld [vmem:[%s7813 + $0x54] sm:$0xf]
        %v7836 = vld [vmem:[%s7813 + $0x58] sm:$0xf]
        %v7837 = vld [vmem:[%s7813 + $0x5c] sm:$0xf]
        %v7838 = vld [vmem:[%s7813 + $0x60] sm:$0xf]
        %v7839 = vld [vmem:[%s7813 + $0x64] sm:$0xf]
        %v7840 = vld [vmem:[%s7813 + $0x68] sm:$0xf]
        %v7841 = vld [vmem:[%s7813 + $0x6c] sm:$0xf]
        %v7842 = vld [vmem:[%s7813 + $0x70] sm:$0xf]
        %v7843 = vld [vmem:[%s7813 + $0x74] sm:$0xf]
        %v7844 = vld [vmem:[%s7813 + $0x78] sm:$0xf]
        %v7845 = vld [vmem:[%s7813 + $0x7c] sm:$0xf]
        %v7878 = vunpack.c.l.b16 %v7814
        %v7879 = vunpack.c.l.b16 %v7815
        %v7880 = vunpack.c.l.b16 %v7816
        %v7881 = vunpack.c.l.b16 %v7817
        %v7882 = vunpack.c.l.b16 %v7818
        %v7883 = vunpack.c.l.b16 %v7819
        %v7884 = vunpack.c.l.b16 %v7820
        %v7885 = vunpack.c.l.b16 %v7821
        %v7886 = vunpack.c.l.b16 %v7822
        %v7887 = vunpack.c.l.b16 %v7823
        %v7888 = vunpack.c.l.b16 %v7824
        %v7889 = vunpack.c.l.b16 %v7825
        %v7890 = vunpack.c.l.b16 %v7826
        %v7891 = vunpack.c.l.b16 %v7827
        %v7892 = vunpack.c.l.b16 %v7828
        %v7893 = vunpack.c.l.b16 %v7829
        %v7894 = vunpack.c.l.b16 %v7830
        %v7895 = vunpack.c.l.b16 %v7831
        %v7896 = vunpack.c.l.b16 %v7832
        %v7897 = vunpack.c.l.b16 %v7833
        %v7898 = vunpack.c.l.b16 %v7834
        %v7899 = vunpack.c.l.b16 %v7835
        %v7900 = vunpack.c.l.b16 %v7836
        %v7901 = vunpack.c.l.b16 %v7837
        %v7902 = vunpack.c.l.b16 %v7838
        %v7903 = vunpack.c.l.b16 %v7839
        %v7904 = vunpack.c.l.b16 %v7840
        %v7905 = vunpack.c.l.b16 %v7841
        %v7906 = vunpack.c.l.b16 %v7842
        %v7907 = vunpack.c.l.b16 %v7843
        %v7908 = vunpack.c.l.b16 %v7844
        %v7909 = vunpack.c.l.b16 %v7845
        %v7910 = vpack.c.b16 %v7879, %v7878
        %v7911 = vpack.c.b16 %v7881, %v7880
        %v7912 = vpack.c.b16 %v7883, %v7882
        %v7913 = vpack.c.b16 %v7885, %v7884
        %v7914 = vpack.c.b16 %v7887, %v7886
        %v7915 = vpack.c.b16 %v7889, %v7888
        %v7916 = vpack.c.b16 %v7891, %v7890
        %v7917 = vpack.c.b16 %v7893, %v7892
        %v7918 = vpack.c.b16 %v7895, %v7894
        %v7919 = vpack.c.b16 %v7897, %v7896
        %v7920 = vpack.c.b16 %v7899, %v7898
        %v7921 = vpack.c.b16 %v7901, %v7900
        %v7922 = vpack.c.b16 %v7903, %v7902
        %v7923 = vpack.c.b16 %v7905, %v7904
        %v7924 = vpack.c.b16 %v7907, %v7906
        %v7925 = vpack.c.b16 %v7909, %v7908
        %7942 = vmatprep.subr.bf16.mxu0 0
        %7943 = vmatpush1.bf16.msra.mxu0 %v7917
        %7944 = vmatprep.subr.bf16.mxu0 0
        %7945 = vmatpush1.bf16.msra.mxu0 %v7916
        %7946 = vmatprep.subr.bf16.mxu0 0
        %7947 = vmatpush1.bf16.msra.mxu0 %v7915
        %7948 = vmatprep.subr.bf16.mxu0 0
        %7949 = vmatpush1.bf16.msra.mxu0 %v7914
        %7950 = vmatprep.subr.bf16.mxu0 0
        %7951 = vmatpush1.bf16.msra.mxu0 %v7913
        %7952 = vmatprep.subr.bf16.mxu0 0
        %7953 = vmatpush1.bf16.msra.mxu0 %v7912
        %7954 = vmatprep.subr.bf16.mxu0 0
        %7955 = vmatpush1.bf16.msra.mxu0 %v7911
        %7956 = vmatprep.subr.bf16.mxu0 0
        %7957 = vmatpush1.bf16.msra.mxu0 %v7910
        %7958 = vmatprep.subr.bf16.mxu0 0
        %7959 = vmatpush2.bf16.msra.mxu0 %v7925
        %7960 = vmatprep.subr.bf16.mxu0 0
        %7961 = vmatpush2.bf16.msra.mxu0 %v7924
        %7962 = vmatprep.subr.bf16.mxu0 0
        %7963 = vmatpush2.bf16.msra.mxu0 %v7923
        %7964 = vmatprep.subr.bf16.mxu0 0
        %7965 = vmatpush2.bf16.msra.mxu0 %v7922
        %7966 = vmatprep.subr.bf16.mxu0 0
        %7967 = vmatpush2.bf16.msra.mxu0 %v7921
        %7968 = vmatprep.subr.bf16.mxu0 0
        %7969 = vmatpush2.bf16.msra.mxu0 %v7920
        %7970 = vmatprep.subr.bf16.mxu0 0
        %7971 = vmatpush2.bf16.msra.mxu0 %v7919
        %7972 = vmatprep.subr.bf16.mxu0 0
        %7973 = vmatpush2.bf16.msra.mxu0 %v7918
        %7974 = vmatprep.mubr.bf16.mxu0 %v7812
        %7975 = vmatmul.mubr.bf16.gmra.mxu0 %v7811
        %v7976 = vpop.f32.mrf.mxu0
        %v7977 = vadd.f32 0.0, %v7976
        %v7978 = vpop.f32.mrf.mxu0
        %v7979 = vpop.f32.mrf.mxu0
        %v7980 = vadd.f32 0.0, %v7979
        %v7981 = vpop.f32.mrf.mxu0
        %7982 = vdwg.mxu0
        %v7983 = vadd.f32 %v7755, %v7977
        %v7984 = vadd.f32 %v7756, %v7980
        %s7985 = scalar_lea.vmem %s10, 24
        %v7986 = vld [vmem:[%s7985] sm:$0xf]
        %v7987 = vld [vmem:[%s7985 + $0x4] sm:$0xf]
        %v7990 = vunpack.c.l.b16 %v7986
        %v7991 = vunpack.c.l.b16 %v7987
        %v7992 = vpack.c.b16 %v7991, %v7990
        %v7994 = vsel %vm7309, %v7992, 0
        %7996 = vmatprep.subr.bf16.mxu0 0
        %7997 = vmatpush1.bf16.msra.mxu0 0
        %7998 = vmatprep.subr.bf16.mxu0 0
        %7999 = vmatpush1.bf16.msra.mxu0 0
        %8000 = vmatprep.subr.bf16.mxu0 0
        %8001 = vmatpush1.bf16.msra.mxu0 0
        %8002 = vmatprep.subr.bf16.mxu0 0
        %8003 = vmatpush1.bf16.msra.mxu0 0
        %8004 = vmatprep.subr.bf16.mxu0 %v7293
        %8005 = vmatpush1.bf16.msra.mxu0 %v7292
        %8006 = vmatprep.subr.bf16.mxu0 %v7291
        %8007 = vmatpush1.bf16.msra.mxu0 %v7290
        %8008 = vmatprep.subr.bf16.mxu0 %v7289
        %8009 = vmatpush1.bf16.msra.mxu0 %v7288
        %8010 = vmatprep.subr.bf16.mxu0 %v7287
        %8011 = vmatpush1.bf16.msra.mxu0 %v7286
        %8012 = vmatprep.subr.bf16.mxu0 0
        %8013 = vmatpush2.bf16.msra.mxu0 0
        %8014 = vmatprep.subr.bf16.mxu0 0
        %8015 = vmatpush2.bf16.msra.mxu0 0
        %8016 = vmatprep.subr.bf16.mxu0 0
        %8017 = vmatpush2.bf16.msra.mxu0 0
        %8018 = vmatprep.subr.bf16.mxu0 0
        %8019 = vmatpush2.bf16.msra.mxu0 0
        %8020 = vmatprep.subr.bf16.mxu0 0
        %8021 = vmatpush2.bf16.msra.mxu0 0
        %8022 = vmatprep.subr.bf16.mxu0 0
        %8023 = vmatpush2.bf16.msra.mxu0 0
        %8024 = vmatprep.subr.bf16.mxu0 0
        %8025 = vmatpush2.bf16.msra.mxu0 0
        %8026 = vmatprep.subr.bf16.mxu0 0
        %8027 = vmatpush2.bf16.msra.mxu0 0
        %8028 = vmatprep.mubr.bf16.mxu0 0
        %8029 = vmatmul.mubr.bf16.gmra.mxu0 %v7994
        %v8030 = vpop.f32.mrf.mxu0
        %v8031 = vadd.f32 0.0, %v8030
        %v8032 = vpop.f32.mrf.mxu0
        %v8033 = vadd.f32 0.0, %v8032
        %v8034 = vpop.f32.mrf.mxu0
        %v8035 = vadd.f32 0.0, %v8034
        %v8036 = vpop.f32.mrf.mxu0
        %v8037 = vadd.f32 0.0, %v8036
        %8038 = vdwg.mxu0
        %v8039 = vpack.c.bf16 %v8035, %v8031
        %v8040 = vpack.c.bf16 %v8037, %v8033
        %s8041 = scalar_lea.vmem %s11, 384
        %v8042 = vld [vmem:[%s8041] sm:$0xf]
        %v8043 = vld [vmem:[%s8041 + $0x4] sm:$0xf]
        %v8044 = vld [vmem:[%s8041 + $0x8] sm:$0xf]
        %v8045 = vld [vmem:[%s8041 + $0xc] sm:$0xf]
        %v8046 = vld [vmem:[%s8041 + $0x10] sm:$0xf]
        %v8047 = vld [vmem:[%s8041 + $0x14] sm:$0xf]
        %v8048 = vld [vmem:[%s8041 + $0x18] sm:$0xf]
        %v8049 = vld [vmem:[%s8041 + $0x1c] sm:$0xf]
        %v8050 = vld [vmem:[%s8041 + $0x20] sm:$0xf]
        %v8051 = vld [vmem:[%s8041 + $0x24] sm:$0xf]
        %v8052 = vld [vmem:[%s8041 + $0x28] sm:$0xf]
        %v8053 = vld [vmem:[%s8041 + $0x2c] sm:$0xf]
        %v8054 = vld [vmem:[%s8041 + $0x30] sm:$0xf]
        %v8055 = vld [vmem:[%s8041 + $0x34] sm:$0xf]
        %v8056 = vld [vmem:[%s8041 + $0x38] sm:$0xf]
        %v8057 = vld [vmem:[%s8041 + $0x3c] sm:$0xf]
        %v8058 = vld [vmem:[%s8041 + $0x40] sm:$0xf]
        %v8059 = vld [vmem:[%s8041 + $0x44] sm:$0xf]
        %v8060 = vld [vmem:[%s8041 + $0x48] sm:$0xf]
        %v8061 = vld [vmem:[%s8041 + $0x4c] sm:$0xf]
        %v8062 = vld [vmem:[%s8041 + $0x50] sm:$0xf]
        %v8063 = vld [vmem:[%s8041 + $0x54] sm:$0xf]
        %v8064 = vld [vmem:[%s8041 + $0x58] sm:$0xf]
        %v8065 = vld [vmem:[%s8041 + $0x5c] sm:$0xf]
        %v8066 = vld [vmem:[%s8041 + $0x60] sm:$0xf]
        %v8067 = vld [vmem:[%s8041 + $0x64] sm:$0xf]
        %v8068 = vld [vmem:[%s8041 + $0x68] sm:$0xf]
        %v8069 = vld [vmem:[%s8041 + $0x6c] sm:$0xf]
        %v8070 = vld [vmem:[%s8041 + $0x70] sm:$0xf]
        %v8071 = vld [vmem:[%s8041 + $0x74] sm:$0xf]
        %v8072 = vld [vmem:[%s8041 + $0x78] sm:$0xf]
        %v8073 = vld [vmem:[%s8041 + $0x7c] sm:$0xf]
        %v8106 = vunpack.c.l.b16 %v8042
        %v8107 = vunpack.c.l.b16 %v8043
        %v8108 = vunpack.c.l.b16 %v8044
        %v8109 = vunpack.c.l.b16 %v8045
        %v8110 = vunpack.c.l.b16 %v8046
        %v8111 = vunpack.c.l.b16 %v8047
        %v8112 = vunpack.c.l.b16 %v8048
        %v8113 = vunpack.c.l.b16 %v8049
        %v8114 = vunpack.c.l.b16 %v8050
        %v8115 = vunpack.c.l.b16 %v8051
        %v8116 = vunpack.c.l.b16 %v8052
        %v8117 = vunpack.c.l.b16 %v8053
        %v8118 = vunpack.c.l.b16 %v8054
        %v8119 = vunpack.c.l.b16 %v8055
        %v8120 = vunpack.c.l.b16 %v8056
        %v8121 = vunpack.c.l.b16 %v8057
        %v8122 = vunpack.c.l.b16 %v8058
        %v8123 = vunpack.c.l.b16 %v8059
        %v8124 = vunpack.c.l.b16 %v8060
        %v8125 = vunpack.c.l.b16 %v8061
        %v8126 = vunpack.c.l.b16 %v8062
        %v8127 = vunpack.c.l.b16 %v8063
        %v8128 = vunpack.c.l.b16 %v8064
        %v8129 = vunpack.c.l.b16 %v8065
        %v8130 = vunpack.c.l.b16 %v8066
        %v8131 = vunpack.c.l.b16 %v8067
        %v8132 = vunpack.c.l.b16 %v8068
        %v8133 = vunpack.c.l.b16 %v8069
        %v8134 = vunpack.c.l.b16 %v8070
        %v8135 = vunpack.c.l.b16 %v8071
        %v8136 = vunpack.c.l.b16 %v8072
        %v8137 = vunpack.c.l.b16 %v8073
        %v8138 = vpack.c.b16 %v8107, %v8106
        %v8139 = vpack.c.b16 %v8109, %v8108
        %v8140 = vpack.c.b16 %v8111, %v8110
        %v8141 = vpack.c.b16 %v8113, %v8112
        %v8142 = vpack.c.b16 %v8115, %v8114
        %v8143 = vpack.c.b16 %v8117, %v8116
        %v8144 = vpack.c.b16 %v8119, %v8118
        %v8145 = vpack.c.b16 %v8121, %v8120
        %v8146 = vpack.c.b16 %v8123, %v8122
        %v8147 = vpack.c.b16 %v8125, %v8124
        %v8148 = vpack.c.b16 %v8127, %v8126
        %v8149 = vpack.c.b16 %v8129, %v8128
        %v8150 = vpack.c.b16 %v8131, %v8130
        %v8151 = vpack.c.b16 %v8133, %v8132
        %v8152 = vpack.c.b16 %v8135, %v8134
        %v8153 = vpack.c.b16 %v8137, %v8136
        %8170 = vmatprep.subr.bf16.mxu0 0
        %8171 = vmatpush1.bf16.msra.mxu0 %v8145
        %8172 = vmatprep.subr.bf16.mxu0 0
        %8173 = vmatpush1.bf16.msra.mxu0 %v8144
        %8174 = vmatprep.subr.bf16.mxu0 0
        %8175 = vmatpush1.bf16.msra.mxu0 %v8143
        %8176 = vmatprep.subr.bf16.mxu0 0
        %8177 = vmatpush1.bf16.msra.mxu0 %v8142
        %8178 = vmatprep.subr.bf16.mxu0 0
        %8179 = vmatpush1.bf16.msra.mxu0 %v8141
        %8180 = vmatprep.subr.bf16.mxu0 0
        %8181 = vmatpush1.bf16.msra.mxu0 %v8140
        %8182 = vmatprep.subr.bf16.mxu0 0
        %8183 = vmatpush1.bf16.msra.mxu0 %v8139
        %8184 = vmatprep.subr.bf16.mxu0 0
        %8185 = vmatpush1.bf16.msra.mxu0 %v8138
        %8186 = vmatprep.subr.bf16.mxu0 0
        %8187 = vmatpush2.bf16.msra.mxu0 %v8153
        %8188 = vmatprep.subr.bf16.mxu0 0
        %8189 = vmatpush2.bf16.msra.mxu0 %v8152
        %8190 = vmatprep.subr.bf16.mxu0 0
        %8191 = vmatpush2.bf16.msra.mxu0 %v8151
        %8192 = vmatprep.subr.bf16.mxu0 0
        %8193 = vmatpush2.bf16.msra.mxu0 %v8150
        %8194 = vmatprep.subr.bf16.mxu0 0
        %8195 = vmatpush2.bf16.msra.mxu0 %v8149
        %8196 = vmatprep.subr.bf16.mxu0 0
        %8197 = vmatpush2.bf16.msra.mxu0 %v8148
        %8198 = vmatprep.subr.bf16.mxu0 0
        %8199 = vmatpush2.bf16.msra.mxu0 %v8147
        %8200 = vmatprep.subr.bf16.mxu0 0
        %8201 = vmatpush2.bf16.msra.mxu0 %v8146
        %8202 = vmatprep.mubr.bf16.mxu0 %v8040
        %8203 = vmatmul.mubr.bf16.gmra.mxu0 %v8039
        %v8204 = vpop.f32.mrf.mxu0
        %v8205 = vadd.f32 0.0, %v8204
        %v8206 = vpop.f32.mrf.mxu0
        %v8207 = vpop.f32.mrf.mxu0
        %v8208 = vadd.f32 0.0, %v8207
        %v8209 = vpop.f32.mrf.mxu0
        %8210 = vdwg.mxu0
        %v8211 = vadd.f32 %v7983, %v8205
        %v8212 = vadd.f32 %v7984, %v8208
        %8213 = vst [vmem:[%s454] sm:$0xff] %v8211
        %8214 = vst [vmem:[%s454 + $0x8] sm:$0xff] %v8212
        %p8215 = scmp.lt.s32.totalorder %s25, 1
        %s8216 = scalar_select %p8215, %s25, 1
        %s8217 = smul.addr %s8216, 2
        %s8218 = smul.addr %s8217, 8
        %s8219 = scalar_lea.vmem %s13, %s8218
        // Predicated region
        $region77: #{encoder_block.1} parent=71 // pred_check
          %p8220 = pneg %p321
        $region78: #{encoder_block.1} parent=71 // pred_check_branch
          %8222 = sbr.rel (%p8220) target = $region80
        $region79: #{encoder_block.1} parent=71 // pred_region
          _
        $region80: #{encoder_block.1} parent=71 // pred_fallthru
          _
      $region72: #{encoder_block.1} parent=5 // pred_fallthru
        _
      %p8223 = scmp.le.s32.totalorder 2, %s20
      // Predicated region
      $region81: #{encoder_block.1} parent=5 // pred_check
        %p8224 = pneg %p8223
      $region82: #{encoder_block.1} parent=5 // pred_check_branch
        %8226 = sbr.rel (%p8224) target = $region84
      $region83: #{encoder_block.1} parent=5 // pred_region
        %s8227 = ssub.s32 %s20, 2
        // Predicated region
        $region85: #{encoder_block.1} parent=83 // pred_check
          %p8228 = pneg %p327
        $region86: #{encoder_block.1} parent=83 // pred_check_branch
          %8230 = sbr.rel (%p8228) target = $region88
        $region87: #{encoder_block.1} parent=83 // pred_region
          %p8231 = scmp.lt.s32.totalorder %s26, 1
          %s8232 = scalar_select %p8231, %s26, 1
          %s8233 = smul.addr %s8232, 2
          %s8234 = smul.addr %s8233, 8
          %s8235 = scalar_lea.vmem %s13, %s8234
        $region88: #{encoder_block.1} parent=83 // pred_fallthru
          _
      $region84: #{encoder_block.1} parent=5 // pred_fallthru
        _
    $region6: #{encoder_block.1} parent=1 // loop_footer
      %s24 = sadd.s32 1, %s20
    $region7: #{encoder_block.1} parent=1 // loop_footer_branch
      %19 = sbr.rel target = $region3
    $region8: #{encoder_block.1} parent=1 // loop_exit
      _
    %8236 = vsyncpa [#allocation5], 1
    %s8237 = scalar_lea.sflag [#allocation5], 1
    %8238 = vsyncpa %s8237, 1

</llo_original>
